<compile_context>
chip_gen: v7x
topology: tpu7x:2x2x1
jax: 0.10.0
libtpu: 0.0.40
codegen_flags: <defaults>
</compile_context>

<pallas_src>
import functools

import jax
import jax.numpy as jnp
from jax.experimental import pallas as pl
from jax.experimental.pallas import tpu as pltpu


COMPUTE_DTYPE = jnp.bfloat16   # MXU operand dtype on v5e/v6e/v7x; accumulation is f32.


def _pick_node_tile(n_nodes, ehid, target=128, vmem_budget_bytes=24 << 20):
    """Node tile (rows of the aggregation matmul) for the fused ECC kernel.

    Prefers the largest multiple of 8 that divides n_nodes and is <= target
    (128 fills the v5e MXU rows; v6e/v7x are happy up to 256) while keeping the
    per-step VMEM footprint (double-buffered, lane-padded blocks + scratch)
    under a conservative budget that also fits v7x's 64 MiB VMEM.
    """
    # approx VMEM bytes per target-node row held per grid step:
    #   edge block + transposed mask block (lane padded to 128, double buffered,
    #   bf16) + wide scratch row + small per-row blocks (root/out/mask).
    per_row = 2 * 2 * (2 * n_nodes * 128) + 2 * n_nodes * ehid + 8 * 128 * 4
    cands = [t for t in range(8, min(target, n_nodes) + 1, 8) if n_nodes % t == 0]
    if n_nodes <= target:
        cands.append(n_nodes)
    if not cands:
        return n_nodes
    fitting = [t for t in cands if t * per_row <= vmem_budget_bytes]
    return max(fitting) if fitting else min(cands)


# ----------------------------------------------------------------------------
# Pallas kernels
# ----------------------------------------------------------------------------

def pallas_linear(x, w, b, relu=False, tm=512, out_dtype=jnp.float32):
    """y = (relu)(x @ w + b).  bf16 operands on the MXU, f32 accumulation."""
    M, K = x.shape
    Kw, Nf = w.shape
    assert K == Kw and tm % 8 == 0
    xc = x.astype(COMPUTE_DTYPE)
    wc = w.astype(COMPUTE_DTYPE)
    b2 = b.reshape(1, Nf).astype(jnp.float32)
    tm_eff = M if M <= tm else tm            # full block or multiple of 8
    grid_m = pl.cdiv(M, tm_eff)

    def kernel(x_ref, w_ref, b_ref, o_ref):
        y = jnp.dot(x_ref[...], w_ref[...], preferred_element_type=jnp.float32)
        y = y + b_ref[...]
        if relu:
            y = jnp.maximum(y, 0.0)
        o_ref[...] = y.astype(o_ref.dtype)

    return pl.pallas_call(
        kernel,
        out_shape=jax.ShapeDtypeStruct((M, Nf), out_dtype),
        grid=(grid_m,),
        in_specs=[pl.BlockSpec((tm_eff, K), lambda i: (i, 0)),
                  pl.BlockSpec((K, Nf), lambda i: (0, 0)),
                  pl.BlockSpec((1, Nf), lambda i: (0, 0))],
        out_specs=pl.BlockSpec((tm_eff, Nf), lambda i: (i, 0)),
        compiler_params=pltpu.CompilerParams(dimension_semantics=("parallel",)),
        cost_estimate=pl.CostEstimate(
            flops=2 * M * K * Nf, transcendentals=0,
            bytes_accessed=2 * (M * K + K * Nf) + 4 * (M * Nf + Nf)),
    )(xc, wc, b2)


def pallas_node_factors(h2d, w_root, b_root, w_m, w_bh, tm=1024):
    """One fused node-side matmul producing, per node j:

        root[j, o]          = sum_c h[j,c] * W_root[c,o] + b_root[o]      (f32)
        M[j, k*Cout + o]    = sum_c h[j,c] * w_last[k, o*Cin + c]         (bf16)
        Bh[j, o]            = sum_c h[j,c] * b_last[o*Cin + c]            (bf16)

    i.e. the edge-net's final projection is applied on the node side so the
    huge theta tensor never exists.  bf16 MXU operands, f32 accumulation, no
    column-slice copies (three separate lane-contiguous outputs).
    """
    M_rows, cin = h2d.shape
    cout = w_root.shape[1]
    mcols = w_m.shape[1]
    assert tm % 8 == 0
    xc = h2d.astype(COMPUTE_DTYPE)
    wr = w_root.astype(COMPUTE_DTYPE)
    wm = w_m.astype(COMPUTE_DTYPE)
    wb = w_bh.astype(COMPUTE_DTYPE)
    br = b_root.reshape(1, cout).astype(jnp.float32)
    tm_eff = M_rows if M_rows <= tm else tm
    grid_m = pl.cdiv(M_rows, tm_eff)

    def kernel(x_ref, wr_ref, br_ref, wm_ref, wb_ref, root_ref, m_ref, bh_ref):
        xv = x_ref[...]
        root_ref[...] = (jnp.dot(xv, wr_ref[...], preferred_element_type=jnp.float32)
                         + br_ref[...]).astype(root_ref.dtype)
        m_ref[...] = jnp.dot(xv, wm_ref[...],
                             preferred_element_type=jnp.float32).astype(m_ref.dtype)
        bh_ref[...] = jnp.dot(xv, wb_ref[...],
                              preferred_element_type=jnp.float32).astype(bh_ref.dtype)

    return pl.pallas_call(
        kernel,
        out_shape=(jax.ShapeDtypeStruct((M_rows, cout), jnp.float32),
                   jax.ShapeDtypeStruct((M_rows, mcols), COMPUTE_DTYPE),
                   jax.ShapeDtypeStruct((M_rows, cout), COMPUTE_DTYPE)),
        grid=(grid_m,),
        in_specs=[pl.BlockSpec((tm_eff, cin), lambda i: (i, 0)),
                  pl.BlockSpec((cin, cout), lambda i: (0, 0)),
                  pl.BlockSpec((1, cout), lambda i: (0, 0)),
                  pl.BlockSpec((cin, mcols), lambda i: (0, 0)),
                  pl.BlockSpec((cin, cout), lambda i: (0, 0))],
        out_specs=(pl.BlockSpec((tm_eff, cout), lambda i: (i, 0)),
                   pl.BlockSpec((tm_eff, mcols), lambda i: (i, 0)),
                   pl.BlockSpec((tm_eff, cout), lambda i: (i, 0))),
        compiler_params=pltpu.CompilerParams(dimension_semantics=("parallel",)),
        cost_estimate=pl.CostEstimate(
            flops=2 * M_rows * cin * (mcols + 2 * cout), transcendentals=0,
            bytes_accessed=2 * M_rows * (cin + mcols + cout)
                           + 4 * M_rows * cout + 2 * cin * (mcols + 2 * cout)),
    )(xc, wr, br, wm, wb)


def pallas_ecc_fused_aggregate(edge_attr_t, edge_mask_t, edge_mask_c,
                               m_flat, bh, root, node_mask3,
                               hidden_ws, hidden_bs, tile_target=128):
    """Fused edge-net hidden MLP + masked ECC aggregation.

    Per (batch b, target-node tile i):
      for each source node j:                    (unrolled; N is static & small)
        eh_j   = ReLU-MLP(edge_attr[b, i_tile, j, :])          -> (tile_i, Ehid)
        wide[:, j*Ehid:(j+1)*Ehid] = edge_mask[b, i_tile, j] * eh_j   (VMEM only)
      agg  = wide @ M[b] + edge_mask[b, i_tile, :] @ Bh[b]     (full-K MXU matmuls)
      out  = relu(node_mask * (root + agg))

    The (B*N*N*Ehid) edge activations never touch HBM; M/Bh stay VMEM-resident
    across the node-tile axis of a batch.
    """
    B, N, _, Fe = edge_attr_t.shape
    cout = m_flat.shape[-1]
    ehid = m_flat.shape[1] // N
    nh = len(hidden_ws)
    tile_i = _pick_node_tile(N, ehid, target=tile_target)
    grid = (B, N // tile_i)

    def kernel(*refs):
        e_ref, emt_ref, em_ref, m_ref, bh_ref, root_ref, nm_ref = refs[:7]
        w_refs = refs[7:7 + nh]
        b_refs = refs[7 + nh:7 + 2 * nh]
        o_ref = refs[7 + 2 * nh]
        wide_ref = refs[7 + 2 * nh + 1]

        # Edge-net hidden MLP per source node j; masked result laid out
        # lane-dense as (tile_i, N*Ehid), ready for one full-K contraction.
        # TODO(synk): for very large N switch this Python unroll to lax.fori_loop.
        for j in range(N):
            xj = e_ref[0, j]                              # (tile_i, Fe) bf16
            for li in range(nh):
                yj = jnp.dot(xj, w_refs[li][...],
                             preferred_element_type=jnp.float32)
                xj = jnp.maximum(yj + b_refs[li][...], 0.0).astype(COMPUTE_DTYPE)
            wide_ref[:, j * ehid:(j + 1) * ehid] = xj * emt_ref[0, j]

        # agg[i,o] = sum_{j,k} (em*eh)[i,(j,k)] * M[(j,k),o] + sum_j em[i,j]*Bh[j,o]
        agg = jnp.dot(wide_ref[...], m_ref[0], preferred_element_type=jnp.float32)
        agg = agg + jnp.dot(em_ref[0], bh_ref[0], preferred_element_type=jnp.float32)
        o_ref[0] = jnp.maximum(nm_ref[0] * (root_ref[0] + agg), 0.0
                               ).astype(o_ref.dtype)

    in_specs = [
        pl.BlockSpec((1, N, tile_i, Fe), lambda b, i: (b, 0, i, 0)),   # edge attr  (j, i_tile)
        pl.BlockSpec((1, N, tile_i, 1), lambda b, i: (b, 0, i, 0)),    # edge mask  (j, i_tile)
        pl.BlockSpec((1, tile_i, N), lambda b, i: (b, i, 0)),          # edge mask  (i_tile, j)
        pl.BlockSpec((1, N * ehid, cout), lambda b, i: (b, 0, 0)),     # M,  resident per batch
        pl.BlockSpec((1, N, cout), lambda b, i: (b, 0, 0)),            # Bh, resident per batch
        pl.BlockSpec((1, tile_i, cout), lambda b, i: (b, i, 0)),       # root
        pl.BlockSpec((1, tile_i, 1), lambda b, i: (b, i, 0)),          # node mask
    ]
    for w in hidden_ws:
        in_specs.append(pl.BlockSpec(tuple(w.shape), lambda b, i: (0, 0)))
    for bb in hidden_bs:
        in_specs.append(pl.BlockSpec(tuple(bb.shape), lambda b, i: (0, 0)))

    mlp_flops = 2 * B * N * N * sum(int(w.shape[0]) * int(w.shape[1]) for w in hidden_ws)
    agg_flops = 2 * B * N * N * (ehid + 1) * cout
    bytes_accessed = (2 * B * N * N * (Fe + 2) + 2 * B * N * (ehid + 1) * cout
                      + 4 * B * N * (2 * cout + 1))

    return pl.pallas_call(
        kernel,
        out_shape=jax.ShapeDtypeStruct((B, N, cout), jnp.float32),
        grid=grid,
        in_specs=in_specs,
        out_specs=pl.BlockSpec((1, tile_i, cout), lambda b, i: (b, i, 0)),
        scratch_shapes=[pltpu.VMEM((tile_i, N * ehid), COMPUTE_DTYPE)],
        compiler_params=pltpu.CompilerParams(
            # both axes parallel: with B >= 2 the grid shards across v7x's 2 TCs
            dimension_semantics=("parallel", "parallel")),
        cost_estimate=pl.CostEstimate(flops=mlp_flops + agg_flops, transcendentals=0,
                                      bytes_accessed=bytes_accessed),
    )(edge_attr_t, edge_mask_t, edge_mask_c, m_flat, bh, root, node_mask3,
      *hidden_ws, *hidden_bs)


def pallas_global_sum_pool(x):
    """x:[B, N, F] -> [B, F]; tiled over B so pipelining stays alive and VMEM
    never has to hold the whole activation (padded nodes are already zero)."""
    B, N, F = x.shape

    def kernel(x_ref, o_ref):
        o_ref[...] = jnp.sum(x_ref[...], axis=1, keepdims=True)

    out = pl.pallas_call(
        kernel,
        out_shape=jax.ShapeDtypeStruct((B, 1, F), jnp.float32),
        grid=(B,),
        in_specs=[pl.BlockSpec((1, N, F), lambda b: (b, 0, 0))],
        out_specs=pl.BlockSpec((1, 1, F), lambda b: (b, 0, 0)),
        compiler_params=pltpu.CompilerParams(dimension_semantics=("parallel",)),
    )(x.astype(jnp.float32))
    return out.reshape(B, F)


def pallas_softmax(x, tb_max=256):
    """Row softmax over dim=1 of x:[B, C], tiled over rows."""
    B, C = x.shape
    tb = B if B <= tb_max else tb_max

    def kernel(x_ref, o_ref):
        v = x_ref[...]
        m = jnp.max(v, axis=1, keepdims=True)
        e = jnp.exp(v - m)
        o_ref[...] = e / jnp.sum(e, axis=1, keepdims=True)

    return pl.pallas_call(
        kernel,
        out_shape=jax.ShapeDtypeStruct((B, C), jnp.float32),
        grid=(pl.cdiv(B, tb),),
        in_specs=[pl.BlockSpec((tb, C), lambda i: (i, 0))],
        out_specs=pl.BlockSpec((tb, C), lambda i: (i, 0)),
        compiler_params=pltpu.CompilerParams(dimension_semantics=("parallel",)),
    )(x.astype(jnp.float32))


# ----------------------------------------------------------------------------
# Parameter construction (deterministic, synthetic)
# ----------------------------------------------------------------------------

def _init_linear(key, fan_in, fan_out):
    kw, kb = jax.random.split(key)
    scale = 1.0 / jnp.sqrt(jnp.float32(fan_in))
    w = jax.random.normal(kw, (fan_in, fan_out), jnp.float32) * scale
    b = jax.random.normal(kb, (fan_out,), jnp.float32) * 0.01
    return w, b


def init_params(key, node_input_features, edge_input_features, num_conv_layers,
                conv_output_dims, num_edge_net_layers, edge_net_output_dims,
                num_fc_layers, fc_output_dims):
    params = {"conv": [], "fc": []}
    in_dim = node_input_features
    for layer_idx in range(num_conv_layers):
        out_dim = conv_output_dims[layer_idx]
        lkey = jax.random.fold_in(key, 100 + layer_idx)
        root_w, root_b = _init_linear(jax.random.fold_in(lkey, 0), in_dim, out_dim)
        edge_net = []
        e_in = edge_input_features
        for e_idx in range(num_edge_net_layers):
            e_out = edge_net_output_dims[e_idx]
            edge_net.append(_init_linear(jax.random.fold_in(lkey, 10 + e_idx), e_in, e_out))
            e_in = e_out
        # final edge-net projection -> flattened (out_dim x in_dim) filter matrix
        # TODO(synk): torch_geometric NNConv uses the (in_dim, out_dim) reshape
        # convention; loading a real checkpoint would need a transpose here.
        edge_net.append(_init_linear(jax.random.fold_in(lkey, 99), e_in, out_dim * in_dim))
        params["conv"].append({"root_w": root_w, "root_b": root_b, "edge_net": edge_net})
        in_dim = out_dim
    fc_in = conv_output_dims[-1]
    for f_idx in range(num_fc_layers):
        fc_out = fc_output_dims[f_idx]
        params["fc"].append(_init_linear(jax.random.fold_in(key, 500 + f_idx), fc_in, fc_out))
        fc_in = fc_out
    return params


# ----------------------------------------------------------------------------
# Forward pass (glue in JAX, hot path in Pallas)
# ----------------------------------------------------------------------------

def _conv_layer(layer, h, edge_attr_t, edge_mask_t, edge_mask_c, node_mask3):
    B, N, cin = h.shape
    cout = layer["root_w"].shape[1]
    w_last, b_last = layer["edge_net"][-1]          # [ehid, cout*cin], [cout*cin]
    ehid = w_last.shape[0]

    # Fold the edge-net's final projection into node-side right factors.
    w_m = w_last.reshape(ehid, cout, cin).transpose(2, 0, 1).reshape(cin, ehid * cout)
    w_bh = b_last.reshape(cout, cin).T

    root2, m2, bh2 = pallas_node_factors(h.reshape(B * N, cin),
                                         layer["root_w"], layer["root_b"],
                                         w_m, w_bh)
    root = root2.reshape(B, N, cout)
    m_flat = m2.reshape(B, N * ehid, cout)           # free reshapes in HBM
    bh = bh2.reshape(B, N, cout)

    hidden_ws = [w.astype(COMPUTE_DTYPE) for (w, _) in layer["edge_net"][:-1]]
    hidden_bs = [b.reshape(1, -1).astype(jnp.float32) for (_, b) in layer["edge_net"][:-1]]

    return pallas_ecc_fused_aggregate(edge_attr_t, edge_mask_t, edge_mask_c,
                                      m_flat, bh, root, node_mask3,
                                      hidden_ws, hidden_bs)


def edge_conditioned_conv_forward(params, node_attr, edge_attr, node_mask,
                                  edge_mask, mode="classification"):
    B, N, _ = node_attr.shape
    h = node_attr.astype(jnp.float32)

    # One-time layout plumbing, reused by every conv layer:
    #   edge_attr_t[b, j, i, :] = edge_attr[b, i, j, :]  (source-major so the
    #   fused kernel's per-j tiles are contiguous), same for the edge mask.
    edge_attr_t = jnp.transpose(edge_attr, (0, 2, 1, 3)).astype(COMPUTE_DTYPE)
    edge_mask_t = jnp.transpose(edge_mask, (0, 2, 1))[..., None].astype(COMPUTE_DTYPE)
    edge_mask_c = edge_mask.astype(COMPUTE_DTYPE)
    node_mask3 = node_mask.reshape(B, N, 1).astype(jnp.float32)

    for layer in params["conv"]:
        h = _conv_layer(layer, h, edge_attr_t, edge_mask_t, edge_mask_c, node_mask3)

    pooled = pallas_global_sum_pool(h)               # [B, conv_out[-1]]

    out = pooled
    for (w, b) in params["fc"][:-1]:
        out = pallas_linear(out, w, b, relu=True)
    w, b = params["fc"][-1]
    out = pallas_linear(out, w, b, relu=False)

    if mode == "classification":
        return pallas_softmax(out)
    if mode == "regression":
        assert out.shape[1] == 1
        return out
    raise ValueError(mode)


# ----------------------------------------------------------------------------
# Pure-JAX f32 reference (materializes theta) for correctness checking
# ----------------------------------------------------------------------------

def reference_forward(params, node_attr, edge_attr, node_mask, edge_mask,
                      mode="classification"):
    B, N, _ = node_attr.shape
    Fe = edge_attr.shape[-1]
    h = node_attr.astype(jnp.float32)
    e_flat = edge_attr.reshape(B * N * N, Fe).astype(jnp.float32)
    for layer in params["conv"]:
        cin = layer["root_w"].shape[0]
        cout = layer["root_w"].shape[1]
        e = e_flat
        for (w, b) in layer["edge_net"][:-1]:
            e = jax.nn.relu(e @ w + b)
        w_last, b_last = layer["edge_net"][-1]
        theta = (e @ w_last + b_last).reshape(B, N, N, cout, cin)
        msg = jnp.einsum("bij,bijoc,bjc->bio", edge_mask, theta, h)
        root = h @ layer["root_w"] + layer["root_b"]
        h = jax.nn.relu(node_mask[:, :, None] * (root + msg))
    out = jnp.sum(h, axis=1)
    for (w, b) in params["fc"][:-1]:
        out = jax.nn.relu(out @ w + b)
    w, b = params["fc"][-1]
    out = out @ w + b
    if mode == "classification":
        out = jax.nn.softmax(out, axis=1)
    return out


# ----------------------------------------------------------------------------
# Example
# ----------------------------------------------------------------------------

if __name__ == "__main__":
    # small, deterministic config
    B, N = 2, 8
    node_input_features = 4
    edge_input_features = 3
    num_conv_layers = 2
    conv_output_dims = [8, 16]
    num_edge_net_layers = 2
    edge_net_output_dims = [16, 16]
    num_fc_layers = 2
    fc_output_dims = [32, 5]

    key = jax.random.PRNGKey(0)
    k_na, k_ea, k_em, k_p = jax.random.split(key, 4)

    node_attr = jax.random.normal(k_na, (B, N, node_input_features), jnp.float32)
    edge_attr = jax.random.normal(k_ea, (B, N, N, edge_input_features), jnp.float32)

    # graph 0 has 6 real nodes, graph 1 has 8
    node_mask = jnp.stack([
        jnp.concatenate([jnp.ones((6,)), jnp.zeros((2,))]),
        jnp.ones((8,)),
    ]).astype(jnp.float32)
    edge_rand = jax.random.bernoulli(k_em, 0.5, (B, N, N)).astype(jnp.float32)
    edge_mask = edge_rand * node_mask[:, :, None] * node_mask[:, None, :]

    params = init_params(k_p, node_input_features, edge_input_features,
                         num_conv_layers, conv_output_dims,
                         num_edge_net_layers, edge_net_output_dims,
                         num_fc_layers, fc_output_dims)

    forward = jax.jit(functools.partial(edge_conditioned_conv_forward,
                                        mode="classification"))
    out = jax.block_until_ready(forward(params, node_attr, edge_attr,
                                        node_mask, edge_mask))

    ref = reference_forward(params, node_attr, edge_attr, node_mask, edge_mask,
                            mode="classification")

    assert out.shape == (B, fc_output_dims[-1])
    assert bool(jnp.all(jnp.isfinite(out)))
    assert bool(jnp.allclose(jnp.sum(out, axis=1), 1.0, atol=1e-5))
    # bf16 operands on the hot path vs f32 reference -> loose but meaningful tol
    assert bool(jnp.allclose(out, ref, atol=5e-2))
    print("KERNEL_OK")
</pallas_src>

<mosaic_0001>
module attributes {stable_mosaic.version = 11 : i64} {
  func.func @kernel(%arg0: i32, %arg1: memref<16x4xbf16, #tpu.memory_space<vmem>>, %arg2: memref<4x8xbf16, #tpu.memory_space<vmem>>, %arg3: memref<1x8xf32, #tpu.memory_space<vmem>>, %arg4: memref<4x128xbf16, #tpu.memory_space<vmem>>, %arg5: memref<4x8xbf16, #tpu.memory_space<vmem>>, %arg6: memref<16x8xf32, #tpu.memory_space<vmem>>, %arg7: memref<16x128xbf16, #tpu.memory_space<vmem>>, %arg8: memref<16x8xbf16, #tpu.memory_space<vmem>>) attributes {dimension_semantics = [#tpu.dimension_semantics<parallel>], iteration_bounds = array<i64: 1>, scalar_prefetch = 0 : i64, scratch_operands = 0 : i64, tpu.core_type = #tpu.core_type<tc>, window_params = [{transform_indices = @transform_0, window_bounds = array<i64: 16, 4>}, {pipeline_mode = #tpu.pipeline_mode<synchronous>, transform_indices = @transform_1, window_bounds = array<i64: 4, 8>}, {pipeline_mode = #tpu.pipeline_mode<synchronous>, transform_indices = @transform_2, window_bounds = array<i64: 1, 8>}, {pipeline_mode = #tpu.pipeline_mode<synchronous>, transform_indices = @transform_3, window_bounds = array<i64: 4, 128>}, {pipeline_mode = #tpu.pipeline_mode<synchronous>, transform_indices = @transform_4, window_bounds = array<i64: 4, 8>}, {transform_indices = @transform_5, window_bounds = array<i64: 16, 8>}, {transform_indices = @transform_6, window_bounds = array<i64: 16, 128>}, {transform_indices = @transform_7, window_bounds = array<i64: 16, 8>}]} {
    %c0 = arith.constant 0 : index
    %c0_0 = arith.constant 0 : index
    %0 = vector.load %arg1[%c0, %c0_0] : memref<16x4xbf16, #tpu.memory_space<vmem>>, vector<16x4xbf16>
    %c0_1 = arith.constant 0 : index
    %c0_2 = arith.constant 0 : index
    %1 = vector.load %arg2[%c0_1, %c0_2] : memref<4x8xbf16, #tpu.memory_space<vmem>>, vector<4x8xbf16>
    %cst = arith.constant dense<0.000000e+00> : vector<16x8xf32>
    %2 = tpu.matmul %0, %1, %cst {dimension_numbers = #tpu.dot_dimension_numbers<[1], [0], [0], [1], [0, 0, 1, 1], [], []>} : vector<16x4xbf16>, vector<4x8xbf16>, vector<16x8xf32> -> vector<16x8xf32>
    %c0_3 = arith.constant 0 : index
    %c0_4 = arith.constant 0 : index
    %3 = vector.load %arg3[%c0_3, %c0_4] : memref<1x8xf32, #tpu.memory_space<vmem>>, vector<1x8xf32>
    %4 = vector.broadcast %3 : vector<1x8xf32> to vector<16x8xf32>
    %5 = arith.addf %2, %4 : vector<16x8xf32>
    %c0_5 = arith.constant 0 : index
    %c0_6 = arith.constant 0 : index
    %6 = vector.load %arg6[%c0_5, %c0_6] : memref<16x8xf32, #tpu.memory_space<vmem>>, vector<16x8xf32>
    tpu.vector_store %arg6[%c0_5, %c0_6], %5 {strides = array<i32>} : memref<16x8xf32, #tpu.memory_space<vmem>>, vector<16x8xf32>,
    %c0_7 = arith.constant 0 : index
    %c0_8 = arith.constant 0 : index
    %7 = vector.load %arg4[%c0_7, %c0_8] : memref<4x128xbf16, #tpu.memory_space<vmem>>, vector<4x128xbf16>
    %cst_9 = arith.constant dense<0.000000e+00> : vector<16x128xf32>
    %8 = tpu.matmul %0, %7, %cst_9 {dimension_numbers = #tpu.dot_dimension_numbers<[1], [0], [0], [1], [0, 0, 1, 1], [], []>} : vector<16x4xbf16>, vector<4x128xbf16>, vector<16x128xf32> -> vector<16x128xf32>
    %9 = arith.truncf %8 : vector<16x128xf32> to vector<16x128xbf16>
    %c0_10 = arith.constant 0 : index
    %c0_11 = arith.constant 0 : index
    %10 = vector.load %arg7[%c0_10, %c0_11] : memref<16x128xbf16, #tpu.memory_space<vmem>>, vector<16x128xbf16>
    tpu.vector_store %arg7[%c0_10, %c0_11], %9 {strides = array<i32>} : memref<16x128xbf16, #tpu.memory_space<vmem>>, vector<16x128xbf16>,
    %c0_12 = arith.constant 0 : index
    %c0_13 = arith.constant 0 : index
    %11 = vector.load %arg5[%c0_12, %c0_13] : memref<4x8xbf16, #tpu.memory_space<vmem>>, vector<4x8xbf16>
    %cst_14 = arith.constant dense<0.000000e+00> : vector<16x8xf32>
    %12 = tpu.matmul %0, %11, %cst_14 {dimension_numbers = #tpu.dot_dimension_numbers<[1], [0], [0], [1], [0, 0, 1, 1], [], []>} : vector<16x4xbf16>, vector<4x8xbf16>, vector<16x8xf32> -> vector<16x8xf32>
    %13 = arith.truncf %12 : vector<16x8xf32> to vector<16x8xbf16>
    %c0_15 = arith.constant 0 : index
    %c0_16 = arith.constant 0 : index
    %14 = vector.load %arg8[%c0_15, %c0_16] : memref<16x8xbf16, #tpu.memory_space<vmem>>, vector<16x8xbf16>
    tpu.vector_store %arg8[%c0_15, %c0_16], %13 {strides = array<i32>} : memref<16x8xbf16, #tpu.memory_space<vmem>>, vector<16x8xbf16>,
    return
  }
  func.func @transform_0(%arg0: i32) -> (i32, i32) {
    %c0_i32 = arith.constant 0 : i32
    %c0_i32_0 = arith.constant 0 : i32
    return %arg0, %c0_i32 : i32, i32
  }
  func.func @transform_1(%arg0: i32) -> (i32, i32) {
    %c0_i32 = arith.constant 0 : i32
    %c0_i32_0 = arith.constant 0 : i32
    %c0_i32_1 = arith.constant 0 : i32
    return %c0_i32, %c0_i32_0 : i32, i32
  }
  func.func @transform_2(%arg0: i32) -> (i32, i32) {
    %c0_i32 = arith.constant 0 : i32
    %c0_i32_0 = arith.constant 0 : i32
    %c0_i32_1 = arith.constant 0 : i32
    return %c0_i32, %c0_i32_0 : i32, i32
  }
  func.func @transform_3(%arg0: i32) -> (i32, i32) {
    %c0_i32 = arith.constant 0 : i32
    %c0_i32_0 = arith.constant 0 : i32
    %c0_i32_1 = arith.constant 0 : i32
    return %c0_i32, %c0_i32_0 : i32, i32
  }
  func.func @transform_4(%arg0: i32) -> (i32, i32) {
    %c0_i32 = arith.constant 0 : i32
    %c0_i32_0 = arith.constant 0 : i32
    %c0_i32_1 = arith.constant 0 : i32
    return %c0_i32, %c0_i32_0 : i32, i32
  }
  func.func @transform_5(%arg0: i32) -> (i32, i32) {
    %c0_i32 = arith.constant 0 : i32
    %c0_i32_0 = arith.constant 0 : i32
    return %arg0, %c0_i32 : i32, i32
  }
  func.func @transform_6(%arg0: i32) -> (i32, i32) {
    %c0_i32 = arith.constant 0 : i32
    %c0_i32_0 = arith.constant 0 : i32
    return %arg0, %c0_i32 : i32, i32
  }
  func.func @transform_7(%arg0: i32) -> (i32, i32) {
    %c0_i32 = arith.constant 0 : i32
    %c0_i32_0 = arith.constant 0 : i32
    return %arg0, %c0_i32 : i32, i32
  }
}

module attributes {stable_mosaic.version = 11 : i64} {
  func.func @kernel(%arg0: i32, %arg1: i32, %arg2: memref<1x8x8x3xbf16, #tpu.memory_space<vmem>>, %arg3: memref<1x8x8x1xbf16, #tpu.memory_space<vmem>>, %arg4: memref<1x8x8xbf16, #tpu.memory_space<vmem>>, %arg5: memref<1x128x8xbf16, #tpu.memory_space<vmem>>, %arg6: memref<1x8x8xbf16, #tpu.memory_space<vmem>>, %arg7: memref<1x8x8xf32, #tpu.memory_space<vmem>>, %arg8: memref<1x8x1xf32, #tpu.memory_space<vmem>>, %arg9: memref<3x16xbf16, #tpu.memory_space<vmem>>, %arg10: memref<16x16xbf16, #tpu.memory_space<vmem>>, %arg11: memref<1x16xf32, #tpu.memory_space<vmem>>, %arg12: memref<1x16xf32, #tpu.memory_space<vmem>>, %arg13: memref<1x8x8xf32, #tpu.memory_space<vmem>>, %arg14: memref<8x128xbf16, #tpu.memory_space<vmem>>) attributes {dimension_semantics = [#tpu.dimension_semantics<parallel>, #tpu.dimension_semantics<parallel>], iteration_bounds = array<i64: 2, 1>, scalar_prefetch = 0 : i64, scratch_operands = 1 : i64, tpu.core_type = #tpu.core_type<tc>, window_params = [{transform_indices = @transform_0, window_bounds = array<i64: 1, 8, 8, 3>}, {transform_indices = @transform_1, window_bounds = array<i64: 1, 8, 8, 1>}, {transform_indices = @transform_2, window_bounds = array<i64: 1, 8, 8>}, {transform_indices = @transform_3, window_bounds = array<i64: 1, 128, 8>}, {transform_indices = @transform_4, window_bounds = array<i64: 1, 8, 8>}, {transform_indices = @transform_5, window_bounds = array<i64: 1, 8, 8>}, {transform_indices = @transform_6, window_bounds = array<i64: 1, 8, 1>}, {pipeline_mode = #tpu.pipeline_mode<synchronous>, transform_indices = @transform_7, window_bounds = array<i64: 3, 16>}, {pipeline_mode = #tpu.pipeline_mode<synchronous>, transform_indices = @transform_8, window_bounds = array<i64: 16, 16>}, {pipeline_mode = #tpu.pipeline_mode<synchronous>, transform_indices = @transform_9, window_bounds = array<i64: 1, 16>}, {pipeline_mode = #tpu.pipeline_mode<synchronous>, transform_indices = @transform_10, window_bounds = array<i64: 1, 16>}, {transform_indices = @transform_11, window_bounds = array<i64: 1, 8, 8>}]} {
    %c0 = arith.constant 0 : index
    %c0_0 = arith.constant 0 : index
    %c0_1 = arith.constant 0 : index
    %c0_2 = arith.constant 0 : index
    %0 = vector.load %arg2[%c0, %c0_0, %c0_1, %c0_2] : memref<1x8x8x3xbf16, #tpu.memory_space<vmem>>, vector<1x1x8x3xbf16>
    %1 = vector.shape_cast %0 : vector<1x1x8x3xbf16> to vector<8x3xbf16>
    %c0_3 = arith.constant 0 : index
    %c0_4 = arith.constant 0 : index
    %2 = vector.load %arg9[%c0_3, %c0_4] : memref<3x16xbf16, #tpu.memory_space<vmem>>, vector<3x16xbf16>
    %cst = arith.constant dense<0.000000e+00> : vector<8x16xf32>
    %3 = tpu.matmul %1, %2, %cst {dimension_numbers = #tpu.dot_dimension_numbers<[1], [0], [0], [1], [0, 0, 1, 1], [], []>} : vector<8x3xbf16>, vector<3x16xbf16>, vector<8x16xf32> -> vector<8x16xf32>
    %c0_5 = arith.constant 0 : index
    %c0_6 = arith.constant 0 : index
    %4 = vector.load %arg11[%c0_5, %c0_6] : memref<1x16xf32, #tpu.memory_space<vmem>>, vector<1x16xf32>
    %5 = vector.broadcast %4 : vector<1x16xf32> to vector<8x16xf32>
    %6 = arith.addf %3, %5 : vector<8x16xf32>
    %cst_7 = arith.constant 0.000000e+00 : f32
    %7 = vector.broadcast %cst_7 : f32 to vector<8x16xf32>
    %8 = arith.maximumf %6, %7 : vector<8x16xf32>
    %9 = arith.truncf %8 : vector<8x16xf32> to vector<8x16xbf16>
    %c0_8 = arith.constant 0 : index
    %c0_9 = arith.constant 0 : index
    %10 = vector.load %arg10[%c0_8, %c0_9] : memref<16x16xbf16, #tpu.memory_space<vmem>>, vector<16x16xbf16>
    %cst_10 = arith.constant dense<0.000000e+00> : vector<8x16xf32>
    %11 = tpu.matmul %9, %10, %cst_10 {dimension_numbers = #tpu.dot_dimension_numbers<[1], [0], [0], [1], [0, 0, 1, 1], [], []>} : vector<8x16xbf16>, vector<16x16xbf16>, vector<8x16xf32> -> vector<8x16xf32>
    %c0_11 = arith.constant 0 : index
    %c0_12 = arith.constant 0 : index
    %12 = vector.load %arg12[%c0_11, %c0_12] : memref<1x16xf32, #tpu.memory_space<vmem>>, vector<1x16xf32>
    %13 = vector.broadcast %12 : vector<1x16xf32> to vector<8x16xf32>
    %14 = arith.addf %11, %13 : vector<8x16xf32>
    %cst_13 = arith.constant 0.000000e+00 : f32
    %15 = vector.broadcast %cst_13 : f32 to vector<8x16xf32>
    %16 = arith.maximumf %14, %15 : vector<8x16xf32>
    %17 = arith.truncf %16 : vector<8x16xf32> to vector<8x16xbf16>
    %c0_14 = arith.constant 0 : index
    %c0_15 = arith.constant 0 : index
    %c0_16 = arith.constant 0 : index
    %c0_17 = arith.constant 0 : index
    %18 = vector.load %arg3[%c0_14, %c0_15, %c0_16, %c0_17] : memref<1x8x8x1xbf16, #tpu.memory_space<vmem>>, vector<1x1x8x1xbf16>
    %19 = vector.shape_cast %18 : vector<1x1x8x1xbf16> to vector<8x1xbf16>
    %20 = vector.broadcast %19 : vector<8x1xbf16> to vector<8x16xbf16>
    %21 = arith.mulf %17, %20 : vector<8x16xbf16>
    %c0_18 = arith.constant 0 : index
    %c0_19 = arith.constant 0 : index
    %22 = vector.load %arg14[%c0_18, %c0_19] : memref<8x128xbf16, #tpu.memory_space<vmem>>, vector<8x16xbf16>
    tpu.vector_store %arg14[%c0_18, %c0_19], %21 {strides = array<i32>} : memref<8x128xbf16, #tpu.memory_space<vmem>>, vector<8x16xbf16>,
    %c0_20 = arith.constant 0 : index
    %c1 = arith.constant 1 : index
    %c0_21 = arith.constant 0 : index
    %c0_22 = arith.constant 0 : index
    %23 = vector.load %arg2[%c0_20, %c1, %c0_21, %c0_22] : memref<1x8x8x3xbf16, #tpu.memory_space<vmem>>, vector<1x1x8x3xbf16>
    %24 = vector.shape_cast %23 : vector<1x1x8x3xbf16> to vector<8x3xbf16>
    %c0_23 = arith.constant 0 : index
    %c0_24 = arith.constant 0 : index
    %25 = vector.load %arg9[%c0_23, %c0_24] : memref<3x16xbf16, #tpu.memory_space<vmem>>, vector<3x16xbf16>
    %cst_25 = arith.constant dense<0.000000e+00> : vector<8x16xf32>
    %26 = tpu.matmul %24, %25, %cst_25 {dimension_numbers = #tpu.dot_dimension_numbers<[1], [0], [0], [1], [0, 0, 1, 1], [], []>} : vector<8x3xbf16>, vector<3x16xbf16>, vector<8x16xf32> -> vector<8x16xf32>
    %c0_26 = arith.constant 0 : index
    %c0_27 = arith.constant 0 : index
    %27 = vector.load %arg11[%c0_26, %c0_27] : memref<1x16xf32, #tpu.memory_space<vmem>>, vector<1x16xf32>
    %28 = vector.broadcast %27 : vector<1x16xf32> to vector<8x16xf32>
    %29 = arith.addf %26, %28 : vector<8x16xf32>
    %cst_28 = arith.constant 0.000000e+00 : f32
    %30 = vector.broadcast %cst_28 : f32 to vector<8x16xf32>
    %31 = arith.maximumf %29, %30 : vector<8x16xf32>
    %32 = arith.truncf %31 : vector<8x16xf32> to vector<8x16xbf16>
    %c0_29 = arith.constant 0 : index
    %c0_30 = arith.constant 0 : index
    %33 = vector.load %arg10[%c0_29, %c0_30] : memref<16x16xbf16, #tpu.memory_space<vmem>>, vector<16x16xbf16>
    %cst_31 = arith.constant dense<0.000000e+00> : vector<8x16xf32>
    %34 = tpu.matmul %32, %33, %cst_31 {dimension_numbers = #tpu.dot_dimension_numbers<[1], [0], [0], [1], [0, 0, 1, 1], [], []>} : vector<8x16xbf16>, vector<16x16xbf16>, vector<8x16xf32> -> vector<8x16xf32>
    %c0_32 = arith.constant 0 : index
    %c0_33 = arith.constant 0 : index
    %35 = vector.load %arg12[%c0_32, %c0_33] : memref<1x16xf32, #tpu.memory_space<vmem>>, vector<1x16xf32>
    %36 = vector.broadcast %35 : vector<1x16xf32> to vector<8x16xf32>
    %37 = arith.addf %34, %36 : vector<8x16xf32>
    %cst_34 = arith.constant 0.000000e+00 : f32
    %38 = vector.broadcast %cst_34 : f32 to vector<8x16xf32>
    %39 = arith.maximumf %37, %38 : vector<8x16xf32>
    %40 = arith.truncf %39 : vector<8x16xf32> to vector<8x16xbf16>
    %c0_35 = arith.constant 0 : index
    %c1_36 = arith.constant 1 : index
    %c0_37 = arith.constant 0 : index
    %c0_38 = arith.constant 0 : index
    %41 = vector.load %arg3[%c0_35, %c1_36, %c0_37, %c0_38] : memref<1x8x8x1xbf16, #tpu.memory_space<vmem>>, vector<1x1x8x1xbf16>
    %42 = vector.shape_cast %41 : vector<1x1x8x1xbf16> to vector<8x1xbf16>
    %43 = vector.broadcast %42 : vector<8x1xbf16> to vector<8x16xbf16>
    %44 = arith.mulf %40, %43 : vector<8x16xbf16>
    %c0_39 = arith.constant 0 : index
    %c16 = arith.constant 16 : index
    %45 = vector.load %arg14[%c0_39, %c16] : memref<8x128xbf16, #tpu.memory_space<vmem>>, vector<8x16xbf16>
    tpu.vector_store %arg14[%c0_39, %c16], %44 {strides = array<i32>} : memref<8x128xbf16, #tpu.memory_space<vmem>>, vector<8x16xbf16>,
    %c0_40 = arith.constant 0 : index
    %c2 = arith.constant 2 : index
    %c0_41 = arith.constant 0 : index
    %c0_42 = arith.constant 0 : index
    %46 = vector.load %arg2[%c0_40, %c2, %c0_41, %c0_42] : memref<1x8x8x3xbf16, #tpu.memory_space<vmem>>, vector<1x1x8x3xbf16>
    %47 = vector.shape_cast %46 : vector<1x1x8x3xbf16> to vector<8x3xbf16>
    %c0_43 = arith.constant 0 : index
    %c0_44 = arith.constant 0 : index
    %48 = vector.load %arg9[%c0_43, %c0_44] : memref<3x16xbf16, #tpu.memory_space<vmem>>, vector<3x16xbf16>
    %cst_45 = arith.constant dense<0.000000e+00> : vector<8x16xf32>
    %49 = tpu.matmul %47, %48, %cst_45 {dimension_numbers = #tpu.dot_dimension_numbers<[1], [0], [0], [1], [0, 0, 1, 1], [], []>} : vector<8x3xbf16>, vector<3x16xbf16>, vector<8x16xf32> -> vector<8x16xf32>
    %c0_46 = arith.constant 0 : index
    %c0_47 = arith.constant 0 : index
    %50 = vector.load %arg11[%c0_46, %c0_47] : memref<1x16xf32, #tpu.memory_space<vmem>>, vector<1x16xf32>
    %51 = vector.broadcast %50 : vector<1x16xf32> to vector<8x16xf32>
    %52 = arith.addf %49, %51 : vector<8x16xf32>
    %cst_48 = arith.constant 0.000000e+00 : f32
    %53 = vector.broadcast %cst_48 : f32 to vector<8x16xf32>
    %54 = arith.maximumf %52, %53 : vector<8x16xf32>
    %55 = arith.truncf %54 : vector<8x16xf32> to vector<8x16xbf16>
    %c0_49 = arith.constant 0 : index
    %c0_50 = arith.constant 0 : index
    %56 = vector.load %arg10[%c0_49, %c0_50] : memref<16x16xbf16, #tpu.memory_space<vmem>>, vector<16x16xbf16>
    %cst_51 = arith.constant dense<0.000000e+00> : vector<8x16xf32>
    %57 = tpu.matmul %55, %56, %cst_51 {dimension_numbers = #tpu.dot_dimension_numbers<[1], [0], [0], [1], [0, 0, 1, 1], [], []>} : vector<8x16xbf16>, vector<16x16xbf16>, vector<8x16xf32> -> vector<8x16xf32>
    %c0_52 = arith.constant 0 : index
    %c0_53 = arith.constant 0 : index
    %58 = vector.load %arg12[%c0_52, %c0_53] : memref<1x16xf32, #tpu.memory_space<vmem>>, vector<1x16xf32>
    %59 = vector.broadcast %58 : vector<1x16xf32> to vector<8x16xf32>
    %60 = arith.addf %57, %59 : vector<8x16xf32>
    %cst_54 = arith.constant 0.000000e+00 : f32
    %61 = vector.broadcast %cst_54 : f32 to vector<8x16xf32>
    %62 = arith.maximumf %60, %61 : vector<8x16xf32>
    %63 = arith.truncf %62 : vector<8x16xf32> to vector<8x16xbf16>
    %c0_55 = arith.constant 0 : index
    %c2_56 = arith.constant 2 : index
    %c0_57 = arith.constant 0 : index
    %c0_58 = arith.constant 0 : index
    %64 = vector.load %arg3[%c0_55, %c2_56, %c0_57, %c0_58] : memref<1x8x8x1xbf16, #tpu.memory_space<vmem>>, vector<1x1x8x1xbf16>
    %65 = vector.shape_cast %64 : vector<1x1x8x1xbf16> to vector<8x1xbf16>
    %66 = vector.broadcast %65 : vector<8x1xbf16> to vector<8x16xbf16>
    %67 = arith.mulf %63, %66 : vector<8x16xbf16>
    %c0_59 = arith.constant 0 : index
    %c32 = arith.constant 32 : index
    %68 = vector.load %arg14[%c0_59, %c32] : memref<8x128xbf16, #tpu.memory_space<vmem>>, vector<8x16xbf16>
    tpu.vector_store %arg14[%c0_59, %c32], %67 {strides = array<i32>} : memref<8x128xbf16, #tpu.memory_space<vmem>>, vector<8x16xbf16>,
    %c0_60 = arith.constant 0 : index
    %c3 = arith.constant 3 : index
    %c0_61 = arith.constant 0 : index
    %c0_62 = arith.constant 0 : index
    %69 = vector.load %arg2[%c0_60, %c3, %c0_61, %c0_62] : memref<1x8x8x3xbf16, #tpu.memory_space<vmem>>, vector<1x1x8x3xbf16>
    %70 = vector.shape_cast %69 : vector<1x1x8x3xbf16> to vector<8x3xbf16>
    %c0_63 = arith.constant 0 : index
    %c0_64 = arith.constant 0 : index
    %71 = vector.load %arg9[%c0_63, %c0_64] : memref<3x16xbf16, #tpu.memory_space<vmem>>, vector<3x16xbf16>
    %cst_65 = arith.constant dense<0.000000e+00> : vector<8x16xf32>
    %72 = tpu.matmul %70, %71, %cst_65 {dimension_numbers = #tpu.dot_dimension_numbers<[1], [0], [0], [1], [0, 0, 1, 1], [], []>} : vector<8x3xbf16>, vector<3x16xbf16>, vector<8x16xf32> -> vector<8x16xf32>
    %c0_66 = arith.constant 0 : index
    %c0_67 = arith.constant 0 : index
    %73 = vector.load %arg11[%c0_66, %c0_67] : memref<1x16xf32, #tpu.memory_space<vmem>>, vector<1x16xf32>
    %74 = vector.broadcast %73 : vector<1x16xf32> to vector<8x16xf32>
    %75 = arith.addf %72, %74 : vector<8x16xf32>
    %cst_68 = arith.constant 0.000000e+00 : f32
    %76 = vector.broadcast %cst_68 : f32 to vector<8x16xf32>
    %77 = arith.maximumf %75, %76 : vector<8x16xf32>
    %78 = arith.truncf %77 : vector<8x16xf32> to vector<8x16xbf16>
    %c0_69 = arith.constant 0 : index
    %c0_70 = arith.constant 0 : index
    %79 = vector.load %arg10[%c0_69, %c0_70] : memref<16x16xbf16, #tpu.memory_space<vmem>>, vector<16x16xbf16>
    %cst_71 = arith.constant dense<0.000000e+00> : vector<8x16xf32>
    %80 = tpu.matmul %78, %79, %cst_71 {dimension_numbers = #tpu.dot_dimension_numbers<[1], [0], [0], [1], [0, 0, 1, 1], [], []>} : vector<8x16xbf16>, vector<16x16xbf16>, vector<8x16xf32> -> vector<8x16xf32>
    %c0_72 = arith.constant 0 : index
    %c0_73 = arith.constant 0 : index
    %81 = vector.load %arg12[%c0_72, %c0_73] : memref<1x16xf32, #tpu.memory_space<vmem>>, vector<1x16xf32>
    %82 = vector.broadcast %81 : vector<1x16xf32> to vector<8x16xf32>
    %83 = arith.addf %80, %82 : vector<8x16xf32>
    %cst_74 = arith.constant 0.000000e+00 : f32
    %84 = vector.broadcast %cst_74 : f32 to vector<8x16xf32>
    %85 = arith.maximumf %83, %84 : vector<8x16xf32>
    %86 = arith.truncf %85 : vector<8x16xf32> to vector<8x16xbf16>
    %c0_75 = arith.constant 0 : index
    %c3_76 = arith.constant 3 : index
    %c0_77 = arith.constant 0 : index
    %c0_78 = arith.constant 0 : index
    %87 = vector.load %arg3[%c0_75, %c3_76, %c0_77, %c0_78] : memref<1x8x8x1xbf16, #tpu.memory_space<vmem>>, vector<1x1x8x1xbf16>
    %88 = vector.shape_cast %87 : vector<1x1x8x1xbf16> to vector<8x1xbf16>
    %89 = vector.broadcast %88 : vector<8x1xbf16> to vector<8x16xbf16>
    %90 = arith.mulf %86, %89 : vector<8x16xbf16>
    %c0_79 = arith.constant 0 : index
    %c48 = arith.constant 48 : index
    %91 = vector.load %arg14[%c0_79, %c48] : memref<8x128xbf16, #tpu.memory_space<vmem>>, vector<8x16xbf16>
    tpu.vector_store %arg14[%c0_79, %c48], %90 {strides = array<i32>} : memref<8x128xbf16, #tpu.memory_space<vmem>>, vector<8x16xbf16>,
    %c0_80 = arith.constant 0 : index
    %c4 = arith.constant 4 : index
    %c0_81 = arith.constant 0 : index
    %c0_82 = arith.constant 0 : index
    %92 = vector.load %arg2[%c0_80, %c4, %c0_81, %c0_82] : memref<1x8x8x3xbf16, #tpu.memory_space<vmem>>, vector<1x1x8x3xbf16>
    %93 = vector.shape_cast %92 : vector<1x1x8x3xbf16> to vector<8x3xbf16>
    %c0_83 = arith.constant 0 : index
    %c0_84 = arith.constant 0 : index
    %94 = vector.load %arg9[%c0_83, %c0_84] : memref<3x16xbf16, #tpu.memory_space<vmem>>, vector<3x16xbf16>
    %cst_85 = arith.constant dense<0.000000e+00> : vector<8x16xf32>
    %95 = tpu.matmul %93, %94, %cst_85 {dimension_numbers = #tpu.dot_dimension_numbers<[1], [0], [0], [1], [0, 0, 1, 1], [], []>} : vector<8x3xbf16>, vector<3x16xbf16>, vector<8x16xf32> -> vector<8x16xf32>
    %c0_86 = arith.constant 0 : index
    %c0_87 = arith.constant 0 : index
    %96 = vector.load %arg11[%c0_86, %c0_87] : memref<1x16xf32, #tpu.memory_space<vmem>>, vector<1x16xf32>
    %97 = vector.broadcast %96 : vector<1x16xf32> to vector<8x16xf32>
    %98 = arith.addf %95, %97 : vector<8x16xf32>
    %cst_88 = arith.constant 0.000000e+00 : f32
    %99 = vector.broadcast %cst_88 : f32 to vector<8x16xf32>
    %100 = arith.maximumf %98, %99 : vector<8x16xf32>
    %101 = arith.truncf %100 : vector<8x16xf32> to vector<8x16xbf16>
    %c0_89 = arith.constant 0 : index
    %c0_90 = arith.constant 0 : index
    %102 = vector.load %arg10[%c0_89, %c0_90] : memref<16x16xbf16, #tpu.memory_space<vmem>>, vector<16x16xbf16>
    %cst_91 = arith.constant dense<0.000000e+00> : vector<8x16xf32>
    %103 = tpu.matmul %101, %102, %cst_91 {dimension_numbers = #tpu.dot_dimension_numbers<[1], [0], [0], [1], [0, 0, 1, 1], [], []>} : vector<8x16xbf16>, vector<16x16xbf16>, vector<8x16xf32> -> vector<8x16xf32>
    %c0_92 = arith.constant 0 : index
    %c0_93 = arith.constant 0 : index
    %104 = vector.load %arg12[%c0_92, %c0_93] : memref<1x16xf32, #tpu.memory_space<vmem>>, vector<1x16xf32>
    %105 = vector.broadcast %104 : vector<1x16xf32> to vector<8x16xf32>
    %106 = arith.addf %103, %105 : vector<8x16xf32>
    %cst_94 = arith.constant 0.000000e+00 : f32
    %107 = vector.broadcast %cst_94 : f32 to vector<8x16xf32>
    %108 = arith.maximumf %106, %107 : vector<8x16xf32>
    %109 = arith.truncf %108 : vector<8x16xf32> to vector<8x16xbf16>
    %c0_95 = arith.constant 0 : index
    %c4_96 = arith.constant 4 : index
    %c0_97 = arith.constant 0 : index
    %c0_98 = arith.constant 0 : index
    %110 = vector.load %arg3[%c0_95, %c4_96, %c0_97, %c0_98] : memref<1x8x8x1xbf16, #tpu.memory_space<vmem>>, vector<1x1x8x1xbf16>
    %111 = vector.shape_cast %110 : vector<1x1x8x1xbf16> to vector<8x1xbf16>
    %112 = vector.broadcast %111 : vector<8x1xbf16> to vector<8x16xbf16>
    %113 = arith.mulf %109, %112 : vector<8x16xbf16>
    %c0_99 = arith.constant 0 : index
    %c64 = arith.constant 64 : index
    %114 = vector.load %arg14[%c0_99, %c64] : memref<8x128xbf16, #tpu.memory_space<vmem>>, vector<8x16xbf16>
    tpu.vector_store %arg14[%c0_99, %c64], %113 {strides = array<i32>} : memref<8x128xbf16, #tpu.memory_space<vmem>>, vector<8x16xbf16>,
    %c0_100 = arith.constant 0 : index
    %c5 = arith.constant 5 : index
    %c0_101 = arith.constant 0 : index
    %c0_102 = arith.constant 0 : index
    %115 = vector.load %arg2[%c0_100, %c5, %c0_101, %c0_102] : memref<1x8x8x3xbf16, #tpu.memory_space<vmem>>, vector<1x1x8x3xbf16>
    %116 = vector.shape_cast %115 : vector<1x1x8x3xbf16> to vector<8x3xbf16>
    %c0_103 = arith.constant 0 : index
    %c0_104 = arith.constant 0 : index
    %117 = vector.load %arg9[%c0_103, %c0_104] : memref<3x16xbf16, #tpu.memory_space<vmem>>, vector<3x16xbf16>
    %cst_105 = arith.constant dense<0.000000e+00> : vector<8x16xf32>
    %118 = tpu.matmul %116, %117, %cst_105 {dimension_numbers = #tpu.dot_dimension_numbers<[1], [0], [0], [1], [0, 0, 1, 1], [], []>} : vector<8x3xbf16>, vector<3x16xbf16>, vector<8x16xf32> -> vector<8x16xf32>
    %c0_106 = arith.constant 0 : index
    %c0_107 = arith.constant 0 : index
    %119 = vector.load %arg11[%c0_106, %c0_107] : memref<1x16xf32, #tpu.memory_space<vmem>>, vector<1x16xf32>
    %120 = vector.broadcast %119 : vector<1x16xf32> to vector<8x16xf32>
    %121 = arith.addf %118, %120 : vector<8x16xf32>
    %cst_108 = arith.constant 0.000000e+00 : f32
    %122 = vector.broadcast %cst_108 : f32 to vector<8x16xf32>
    %123 = arith.maximumf %121, %122 : vector<8x16xf32>
    %124 = arith.truncf %123 : vector<8x16xf32> to vector<8x16xbf16>
    %c0_109 = arith.constant 0 : index
    %c0_110 = arith.constant 0 : index
    %125 = vector.load %arg10[%c0_109, %c0_110] : memref<16x16xbf16, #tpu.memory_space<vmem>>, vector<16x16xbf16>
    %cst_111 = arith.constant dense<0.000000e+00> : vector<8x16xf32>
    %126 = tpu.matmul %124, %125, %cst_111 {dimension_numbers = #tpu.dot_dimension_numbers<[1], [0], [0], [1], [0, 0, 1, 1], [], []>} : vector<8x16xbf16>, vector<16x16xbf16>, vector<8x16xf32> -> vector<8x16xf32>
    %c0_112 = arith.constant 0 : index
    %c0_113 = arith.constant 0 : index
    %127 = vector.load %arg12[%c0_112, %c0_113] : memref<1x16xf32, #tpu.memory_space<vmem>>, vector<1x16xf32>
    %128 = vector.broadcast %127 : vector<1x16xf32> to vector<8x16xf32>
    %129 = arith.addf %126, %128 : vector<8x16xf32>
    %cst_114 = arith.constant 0.000000e+00 : f32
    %130 = vector.broadcast %cst_114 : f32 to vector<8x16xf32>
    %131 = arith.maximumf %129, %130 : vector<8x16xf32>
    %132 = arith.truncf %131 : vector<8x16xf32> to vector<8x16xbf16>
    %c0_115 = arith.constant 0 : index
    %c5_116 = arith.constant 5 : index
    %c0_117 = arith.constant 0 : index
    %c0_118 = arith.constant 0 : index
    %133 = vector.load %arg3[%c0_115, %c5_116, %c0_117, %c0_118] : memref<1x8x8x1xbf16, #tpu.memory_space<vmem>>, vector<1x1x8x1xbf16>
    %134 = vector.shape_cast %133 : vector<1x1x8x1xbf16> to vector<8x1xbf16>
    %135 = vector.broadcast %134 : vector<8x1xbf16> to vector<8x16xbf16>
    %136 = arith.mulf %132, %135 : vector<8x16xbf16>
    %c0_119 = arith.constant 0 : index
    %c80 = arith.constant 80 : index
    %137 = vector.load %arg14[%c0_119, %c80] : memref<8x128xbf16, #tpu.memory_space<vmem>>, vector<8x16xbf16>
    tpu.vector_store %arg14[%c0_119, %c80], %136 {strides = array<i32>} : memref<8x128xbf16, #tpu.memory_space<vmem>>, vector<8x16xbf16>,
    %c0_120 = arith.constant 0 : index
    %c6 = arith.constant 6 : index
    %c0_121 = arith.constant 0 : index
    %c0_122 = arith.constant 0 : index
    %138 = vector.load %arg2[%c0_120, %c6, %c0_121, %c0_122] : memref<1x8x8x3xbf16, #tpu.memory_space<vmem>>, vector<1x1x8x3xbf16>
    %139 = vector.shape_cast %138 : vector<1x1x8x3xbf16> to vector<8x3xbf16>
    %c0_123 = arith.constant 0 : index
    %c0_124 = arith.constant 0 : index
    %140 = vector.load %arg9[%c0_123, %c0_124] : memref<3x16xbf16, #tpu.memory_space<vmem>>, vector<3x16xbf16>
    %cst_125 = arith.constant dense<0.000000e+00> : vector<8x16xf32>
    %141 = tpu.matmul %139, %140, %cst_125 {dimension_numbers = #tpu.dot_dimension_numbers<[1], [0], [0], [1], [0, 0, 1, 1], [], []>} : vector<8x3xbf16>, vector<3x16xbf16>, vector<8x16xf32> -> vector<8x16xf32>
    %c0_126 = arith.constant 0 : index
    %c0_127 = arith.constant 0 : index
    %142 = vector.load %arg11[%c0_126, %c0_127] : memref<1x16xf32, #tpu.memory_space<vmem>>, vector<1x16xf32>
    %143 = vector.broadcast %142 : vector<1x16xf32> to vector<8x16xf32>
    %144 = arith.addf %141, %143 : vector<8x16xf32>
    %cst_128 = arith.constant 0.000000e+00 : f32
    %145 = vector.broadcast %cst_128 : f32 to vector<8x16xf32>
    %146 = arith.maximumf %144, %145 : vector<8x16xf32>
    %147 = arith.truncf %146 : vector<8x16xf32> to vector<8x16xbf16>
    %c0_129 = arith.constant 0 : index
    %c0_130 = arith.constant 0 : index
    %148 = vector.load %arg10[%c0_129, %c0_130] : memref<16x16xbf16, #tpu.memory_space<vmem>>, vector<16x16xbf16>
    %cst_131 = arith.constant dense<0.000000e+00> : vector<8x16xf32>
    %149 = tpu.matmul %147, %148, %cst_131 {dimension_numbers = #tpu.dot_dimension_numbers<[1], [0], [0], [1], [0, 0, 1, 1], [], []>} : vector<8x16xbf16>, vector<16x16xbf16>, vector<8x16xf32> -> vector<8x16xf32>
    %c0_132 = arith.constant 0 : index
    %c0_133 = arith.constant 0 : index
    %150 = vector.load %arg12[%c0_132, %c0_133] : memref<1x16xf32, #tpu.memory_space<vmem>>, vector<1x16xf32>
    %151 = vector.broadcast %150 : vector<1x16xf32> to vector<8x16xf32>
    %152 = arith.addf %149, %151 : vector<8x16xf32>
    %cst_134 = arith.constant 0.000000e+00 : f32
    %153 = vector.broadcast %cst_134 : f32 to vector<8x16xf32>
    %154 = arith.maximumf %152, %153 : vector<8x16xf32>
    %155 = arith.truncf %154 : vector<8x16xf32> to vector<8x16xbf16>
    %c0_135 = arith.constant 0 : index
    %c6_136 = arith.constant 6 : index
    %c0_137 = arith.constant 0 : index
    %c0_138 = arith.constant 0 : index
    %156 = vector.load %arg3[%c0_135, %c6_136, %c0_137, %c0_138] : memref<1x8x8x1xbf16, #tpu.memory_space<vmem>>, vector<1x1x8x1xbf16>
    %157 = vector.shape_cast %156 : vector<1x1x8x1xbf16> to vector<8x1xbf16>
    %158 = vector.broadcast %157 : vector<8x1xbf16> to vector<8x16xbf16>
    %159 = arith.mulf %155, %158 : vector<8x16xbf16>
    %c0_139 = arith.constant 0 : index
    %c96 = arith.constant 96 : index
    %160 = vector.load %arg14[%c0_139, %c96] : memref<8x128xbf16, #tpu.memory_space<vmem>>, vector<8x16xbf16>
    tpu.vector_store %arg14[%c0_139, %c96], %159 {strides = array<i32>} : memref<8x128xbf16, #tpu.memory_space<vmem>>, vector<8x16xbf16>,
    %c0_140 = arith.constant 0 : index
    %c7 = arith.constant 7 : index
    %c0_141 = arith.constant 0 : index
    %c0_142 = arith.constant 0 : index
    %161 = vector.load %arg2[%c0_140, %c7, %c0_141, %c0_142] : memref<1x8x8x3xbf16, #tpu.memory_space<vmem>>, vector<1x1x8x3xbf16>
    %162 = vector.shape_cast %161 : vector<1x1x8x3xbf16> to vector<8x3xbf16>
    %c0_143 = arith.constant 0 : index
    %c0_144 = arith.constant 0 : index
    %163 = vector.load %arg9[%c0_143, %c0_144] : memref<3x16xbf16, #tpu.memory_space<vmem>>, vector<3x16xbf16>
    %cst_145 = arith.constant dense<0.000000e+00> : vector<8x16xf32>
    %164 = tpu.matmul %162, %163, %cst_145 {dimension_numbers = #tpu.dot_dimension_numbers<[1], [0], [0], [1], [0, 0, 1, 1], [], []>} : vector<8x3xbf16>, vector<3x16xbf16>, vector<8x16xf32> -> vector<8x16xf32>
    %c0_146 = arith.constant 0 : index
    %c0_147 = arith.constant 0 : index
    %165 = vector.load %arg11[%c0_146, %c0_147] : memref<1x16xf32, #tpu.memory_space<vmem>>, vector<1x16xf32>
    %166 = vector.broadcast %165 : vector<1x16xf32> to vector<8x16xf32>
    %167 = arith.addf %164, %166 : vector<8x16xf32>
    %cst_148 = arith.constant 0.000000e+00 : f32
    %168 = vector.broadcast %cst_148 : f32 to vector<8x16xf32>
    %169 = arith.maximumf %167, %168 : vector<8x16xf32>
    %170 = arith.truncf %169 : vector<8x16xf32> to vector<8x16xbf16>
    %c0_149 = arith.constant 0 : index
    %c0_150 = arith.constant 0 : index
    %171 = vector.load %arg10[%c0_149, %c0_150] : memref<16x16xbf16, #tpu.memory_space<vmem>>, vector<16x16xbf16>
    %cst_151 = arith.constant dense<0.000000e+00> : vector<8x16xf32>
    %172 = tpu.matmul %170, %171, %cst_151 {dimension_numbers = #tpu.dot_dimension_numbers<[1], [0], [0], [1], [0, 0, 1, 1], [], []>} : vector<8x16xbf16>, vector<16x16xbf16>, vector<8x16xf32> -> vector<8x16xf32>
    %c0_152 = arith.constant 0 : index
    %c0_153 = arith.constant 0 : index
    %173 = vector.load %arg12[%c0_152, %c0_153] : memref<1x16xf32, #tpu.memory_space<vmem>>, vector<1x16xf32>
    %174 = vector.broadcast %173 : vector<1x16xf32> to vector<8x16xf32>
    %175 = arith.addf %172, %174 : vector<8x16xf32>
    %cst_154 = arith.constant 0.000000e+00 : f32
    %176 = vector.broadcast %cst_154 : f32 to vector<8x16xf32>
    %177 = arith.maximumf %175, %176 : vector<8x16xf32>
    %178 = arith.truncf %177 : vector<8x16xf32> to vector<8x16xbf16>
    %c0_155 = arith.constant 0 : index
    %c7_156 = arith.constant 7 : index
    %c0_157 = arith.constant 0 : index
    %c0_158 = arith.constant 0 : index
    %179 = vector.load %arg3[%c0_155, %c7_156, %c0_157, %c0_158] : memref<1x8x8x1xbf16, #tpu.memory_space<vmem>>, vector<1x1x8x1xbf16>
    %180 = vector.shape_cast %179 : vector<1x1x8x1xbf16> to vector<8x1xbf16>
    %181 = vector.broadcast %180 : vector<8x1xbf16> to vector<8x16xbf16>
    %182 = arith.mulf %178, %181 : vector<8x16xbf16>
    %c0_159 = arith.constant 0 : index
    %c112 = arith.constant 112 : index
    %183 = vector.load %arg14[%c0_159, %c112] : memref<8x128xbf16, #tpu.memory_space<vmem>>, vector<8x16xbf16>
    tpu.vector_store %arg14[%c0_159, %c112], %182 {strides = array<i32>} : memref<8x128xbf16, #tpu.memory_space<vmem>>, vector<8x16xbf16>,
    %c0_160 = arith.constant 0 : index
    %c0_161 = arith.constant 0 : index
    %184 = vector.load %arg14[%c0_160, %c0_161] : memref<8x128xbf16, #tpu.memory_space<vmem>>, vector<8x128xbf16>
    %c0_162 = arith.constant 0 : index
    %c0_163 = arith.constant 0 : index
    %c0_164 = arith.constant 0 : index
    %185 = vector.load %arg5[%c0_162, %c0_163, %c0_164] : memref<1x128x8xbf16, #tpu.memory_space<vmem>>, vector<1x128x8xbf16>
    %186 = vector.shape_cast %185 : vector<1x128x8xbf16> to vector<128x8xbf16>
    %cst_165 = arith.constant dense<0.000000e+00> : vector<8x8xf32>
    %187 = tpu.matmul %184, %186, %cst_165 {dimension_numbers = #tpu.dot_dimension_numbers<[1], [0], [0], [1], [0, 0, 1, 1], [], []>} : vector<8x128xbf16>, vector<128x8xbf16>, vector<8x8xf32> -> vector<8x8xf32>
    %c0_166 = arith.constant 0 : index
    %c0_167 = arith.constant 0 : index
    %c0_168 = arith.constant 0 : index
    %188 = vector.load %arg4[%c0_166, %c0_167, %c0_168] : memref<1x8x8xbf16, #tpu.memory_space<vmem>>, vector<1x8x8xbf16>
    %189 = vector.shape_cast %188 : vector<1x8x8xbf16> to vector<8x8xbf16>
    %c0_169 = arith.constant 0 : index
    %c0_170 = arith.constant 0 : index
    %c0_171 = arith.constant 0 : index
    %190 = vector.load %arg6[%c0_169, %c0_170, %c0_171] : memref<1x8x8xbf16, #tpu.memory_space<vmem>>, vector<1x8x8xbf16>
    %191 = vector.shape_cast %190 : vector<1x8x8xbf16> to vector<8x8xbf16>
    %cst_172 = arith.constant dense<0.000000e+00> : vector<8x8xf32>
    %192 = tpu.matmul %189, %191, %cst_172 {dimension_numbers = #tpu.dot_dimension_numbers<[1], [0], [0], [1], [0, 0, 1, 1], [], []>} : vector<8x8xbf16>, vector<8x8xbf16>, vector<8x8xf32> -> vector<8x8xf32>
    %193 = arith.addf %187, %192 : vector<8x8xf32>
    %c0_173 = arith.constant 0 : index
    %c0_174 = arith.constant 0 : index
    %c0_175 = arith.constant 0 : index
    %194 = vector.load %arg8[%c0_173, %c0_174, %c0_175] : memref<1x8x1xf32, #tpu.memory_space<vmem>>, vector<1x8x1xf32>
    %195 = vector.shape_cast %194 : vector<1x8x1xf32> to vector<8x1xf32>
    %c0_176 = arith.constant 0 : index
    %c0_177 = arith.constant 0 : index
    %c0_178 = arith.constant 0 : index
    %196 = vector.load %arg7[%c0_176, %c0_177, %c0_178] : memref<1x8x8xf32, #tpu.memory_space<vmem>>, vector<1x8x8xf32>
    %197 = vector.shape_cast %196 : vector<1x8x8xf32> to vector<8x8xf32>
    %198 = arith.addf %197, %193 : vector<8x8xf32>
    %199 = vector.broadcast %195 : vector<8x1xf32> to vector<8x8xf32>
    %200 = arith.mulf %199, %198 : vector<8x8xf32>
    %cst_179 = arith.constant 0.000000e+00 : f32
    %201 = vector.broadcast %cst_179 : f32 to vector<8x8xf32>
    %202 = arith.maximumf %200, %201 : vector<8x8xf32>
    %c0_180 = arith.constant 0 : index
    %c0_181 = arith.constant 0 : index
    %c0_182 = arith.constant 0 : index
    %203 = vector.load %arg13[%c0_180, %c0_181, %c0_182] : memref<1x8x8xf32, #tpu.memory_space<vmem>>, vector<1x8x8xf32>
    %204 = vector.shape_cast %203 : vector<1x8x8xf32> to vector<8x8xf32>
    %205 = vector.shape_cast %202 : vector<8x8xf32> to vector<1x8x8xf32>
    tpu.vector_store %arg13[%c0_180, %c0_181, %c0_182], %205 {strides = array<i32>} : memref<1x8x8xf32, #tpu.memory_space<vmem>>, vector<1x8x8xf32>,
    return
  }
  func.func @transform_0(%arg0: i32, %arg1: i32) -> (i32, i32, i32, i32) {
    %c0_i32 = arith.constant 0 : i32
    %c0_i32_0 = arith.constant 0 : i32
    %c0_i32_1 = arith.constant 0 : i32
    return %arg0, %c0_i32, %arg1, %c0_i32_0 : i32, i32, i32, i32
  }
  func.func @transform_1(%arg0: i32, %arg1: i32) -> (i32, i32, i32, i32) {
    %c0_i32 = arith.constant 0 : i32
    %c0_i32_0 = arith.constant 0 : i32
    %c0_i32_1 = arith.constant 0 : i32
    return %arg0, %c0_i32, %arg1, %c0_i32_0 : i32, i32, i32, i32
  }
  func.func @transform_2(%arg0: i32, %arg1: i32) -> (i32, i32, i32) {
    %c0_i32 = arith.constant 0 : i32
    %c0_i32_0 = arith.constant 0 : i32
    return %arg0, %arg1, %c0_i32 : i32, i32, i32
  }
  func.func @transform_3(%arg0: i32, %arg1: i32) -> (i32, i32, i32) {
    %c0_i32 = arith.constant 0 : i32
    %c0_i32_0 = arith.constant 0 : i32
    %c0_i32_1 = arith.constant 0 : i32
    return %arg0, %c0_i32, %c0_i32_0 : i32, i32, i32
  }
  func.func @transform_4(%arg0: i32, %arg1: i32) -> (i32, i32, i32) {
    %c0_i32 = arith.constant 0 : i32
    %c0_i32_0 = arith.constant 0 : i32
    %c0_i32_1 = arith.constant 0 : i32
    return %arg0, %c0_i32, %c0_i32_0 : i32, i32, i32
  }
  func.func @transform_5(%arg0: i32, %arg1: i32) -> (i32, i32, i32) {
    %c0_i32 = arith.constant 0 : i32
    %c0_i32_0 = arith.constant 0 : i32
    return %arg0, %arg1, %c0_i32 : i32, i32, i32
  }
  func.func @transform_6(%arg0: i32, %arg1: i32) -> (i32, i32, i32) {
    %c0_i32 = arith.constant 0 : i32
    %c0_i32_0 = arith.constant 0 : i32
    return %arg0, %arg1, %c0_i32 : i32, i32, i32
  }
  func.func @transform_7(%arg0: i32, %arg1: i32) -> (i32, i32) {
    %c0_i32 = arith.constant 0 : i32
    %c0_i32_0 = arith.constant 0 : i32
    %c0_i32_1 = arith.constant 0 : i32
    return %c0_i32, %c0_i32_0 : i32, i32
  }
  func.func @transform_8(%arg0: i32, %arg1: i32) -> (i32, i32) {
    %c0_i32 = arith.constant 0 : i32
    %c0_i32_0 = arith.constant 0 : i32
    %c0_i32_1 = arith.constant 0 : i32
    return %c0_i32, %c0_i32_0 : i32, i32
  }
  func.func @transform_9(%arg0: i32, %arg1: i32) -> (i32, i32) {
    %c0_i32 = arith.constant 0 : i32
    %c0_i32_0 = arith.constant 0 : i32
    %c0_i32_1 = arith.constant 0 : i32
    return %c0_i32, %c0_i32_0 : i32, i32
  }
  func.func @transform_10(%arg0: i32, %arg1: i32) -> (i32, i32) {
    %c0_i32 = arith.constant 0 : i32
    %c0_i32_0 = arith.constant 0 : i32
    %c0_i32_1 = arith.constant 0 : i32
    return %c0_i32, %c0_i32_0 : i32, i32
  }
  func.func @transform_11(%arg0: i32, %arg1: i32) -> (i32, i32, i32) {
    %c0_i32 = arith.constant 0 : i32
    %c0_i32_0 = arith.constant 0 : i32
    return %arg0, %arg1, %c0_i32 : i32, i32, i32
  }
}

module attributes {stable_mosaic.version = 11 : i64} {
  func.func @kernel(%arg0: i32, %arg1: memref<16x8xbf16, #tpu.memory_space<vmem>>, %arg2: memref<8x16xbf16, #tpu.memory_space<vmem>>, %arg3: memref<1x16xf32, #tpu.memory_space<vmem>>, %arg4: memref<8x256xbf16, #tpu.memory_space<vmem>>, %arg5: memref<8x16xbf16, #tpu.memory_space<vmem>>, %arg6: memref<16x16xf32, #tpu.memory_space<vmem>>, %arg7: memref<16x256xbf16, #tpu.memory_space<vmem>>, %arg8: memref<16x16xbf16, #tpu.memory_space<vmem>>) attributes {dimension_semantics = [#tpu.dimension_semantics<parallel>], iteration_bounds = array<i64: 1>, scalar_prefetch = 0 : i64, scratch_operands = 0 : i64, tpu.core_type = #tpu.core_type<tc>, window_params = [{transform_indices = @transform_0, window_bounds = array<i64: 16, 8>}, {pipeline_mode = #tpu.pipeline_mode<synchronous>, transform_indices = @transform_1, window_bounds = array<i64: 8, 16>}, {pipeline_mode = #tpu.pipeline_mode<synchronous>, transform_indices = @transform_2, window_bounds = array<i64: 1, 16>}, {pipeline_mode = #tpu.pipeline_mode<synchronous>, transform_indices = @transform_3, window_bounds = array<i64: 8, 256>}, {pipeline_mode = #tpu.pipeline_mode<synchronous>, transform_indices = @transform_4, window_bounds = array<i64: 8, 16>}, {transform_indices = @transform_5, window_bounds = array<i64: 16, 16>}, {transform_indices = @transform_6, window_bounds = array<i64: 16, 256>}, {transform_indices = @transform_7, window_bounds = array<i64: 16, 16>}]} {
    %c0 = arith.constant 0 : index
    %c0_0 = arith.constant 0 : index
    %0 = vector.load %arg1[%c0, %c0_0] : memref<16x8xbf16, #tpu.memory_space<vmem>>, vector<16x8xbf16>
    %c0_1 = arith.constant 0 : index
    %c0_2 = arith.constant 0 : index
    %1 = vector.load %arg2[%c0_1, %c0_2] : memref<8x16xbf16, #tpu.memory_space<vmem>>, vector<8x16xbf16>
    %cst = arith.constant dense<0.000000e+00> : vector<16x16xf32>
    %2 = tpu.matmul %0, %1, %cst {dimension_numbers = #tpu.dot_dimension_numbers<[1], [0], [0], [1], [0, 0, 1, 1], [], []>} : vector<16x8xbf16>, vector<8x16xbf16>, vector<16x16xf32> -> vector<16x16xf32>
    %c0_3 = arith.constant 0 : index
    %c0_4 = arith.constant 0 : index
    %3 = vector.load %arg3[%c0_3, %c0_4] : memref<1x16xf32, #tpu.memory_space<vmem>>, vector<1x16xf32>
    %4 = vector.broadcast %3 : vector<1x16xf32> to vector<16x16xf32>
    %5 = arith.addf %2, %4 : vector<16x16xf32>
    %c0_5 = arith.constant 0 : index
    %c0_6 = arith.constant 0 : index
    %6 = vector.load %arg6[%c0_5, %c0_6] : memref<16x16xf32, #tpu.memory_space<vmem>>, vector<16x16xf32>
    tpu.vector_store %arg6[%c0_5, %c0_6], %5 {strides = array<i32>} : memref<16x16xf32, #tpu.memory_space<vmem>>, vector<16x16xf32>,
    %c0_7 = arith.constant 0 : index
    %c0_8 = arith.constant 0 : index
    %7 = vector.load %arg4[%c0_7, %c0_8] : memref<8x256xbf16, #tpu.memory_space<vmem>>, vector<8x256xbf16>
    %cst_9 = arith.constant dense<0.000000e+00> : vector<16x256xf32>
    %8 = tpu.matmul %0, %7, %cst_9 {dimension_numbers = #tpu.dot_dimension_numbers<[1], [0], [0], [1], [0, 0, 1, 1], [], []>} : vector<16x8xbf16>, vector<8x256xbf16>, vector<16x256xf32> -> vector<16x256xf32>
    %9 = arith.truncf %8 : vector<16x256xf32> to vector<16x256xbf16>
    %c0_10 = arith.constant 0 : index
    %c0_11 = arith.constant 0 : index
    %10 = vector.load %arg7[%c0_10, %c0_11] : memref<16x256xbf16, #tpu.memory_space<vmem>>, vector<16x256xbf16>
    tpu.vector_store %arg7[%c0_10, %c0_11], %9 {strides = array<i32>} : memref<16x256xbf16, #tpu.memory_space<vmem>>, vector<16x256xbf16>,
    %c0_12 = arith.constant 0 : index
    %c0_13 = arith.constant 0 : index
    %11 = vector.load %arg5[%c0_12, %c0_13] : memref<8x16xbf16, #tpu.memory_space<vmem>>, vector<8x16xbf16>
    %cst_14 = arith.constant dense<0.000000e+00> : vector<16x16xf32>
    %12 = tpu.matmul %0, %11, %cst_14 {dimension_numbers = #tpu.dot_dimension_numbers<[1], [0], [0], [1], [0, 0, 1, 1], [], []>} : vector<16x8xbf16>, vector<8x16xbf16>, vector<16x16xf32> -> vector<16x16xf32>
    %13 = arith.truncf %12 : vector<16x16xf32> to vector<16x16xbf16>
    %c0_15 = arith.constant 0 : index
    %c0_16 = arith.constant 0 : index
    %14 = vector.load %arg8[%c0_15, %c0_16] : memref<16x16xbf16, #tpu.memory_space<vmem>>, vector<16x16xbf16>
    tpu.vector_store %arg8[%c0_15, %c0_16], %13 {strides = array<i32>} : memref<16x16xbf16, #tpu.memory_space<vmem>>, vector<16x16xbf16>,
    return
  }
  func.func @transform_0(%arg0: i32) -> (i32, i32) {
    %c0_i32 = arith.constant 0 : i32
    %c0_i32_0 = arith.constant 0 : i32
    return %arg0, %c0_i32 : i32, i32
  }
  func.func @transform_1(%arg0: i32) -> (i32, i32) {
    %c0_i32 = arith.constant 0 : i32
    %c0_i32_0 = arith.constant 0 : i32
    %c0_i32_1 = arith.constant 0 : i32
    return %c0_i32, %c0_i32_0 : i32, i32
  }
  func.func @transform_2(%arg0: i32) -> (i32, i32) {
    %c0_i32 = arith.constant 0 : i32
    %c0_i32_0 = arith.constant 0 : i32
    %c0_i32_1 = arith.constant 0 : i32
    return %c0_i32, %c0_i32_0 : i32, i32
  }
  func.func @transform_3(%arg0: i32) -> (i32, i32) {
    %c0_i32 = arith.constant 0 : i32
    %c0_i32_0 = arith.constant 0 : i32
    %c0_i32_1 = arith.constant 0 : i32
    return %c0_i32, %c0_i32_0 : i32, i32
  }
  func.func @transform_4(%arg0: i32) -> (i32, i32) {
    %c0_i32 = arith.constant 0 : i32
    %c0_i32_0 = arith.constant 0 : i32
    %c0_i32_1 = arith.constant 0 : i32
    return %c0_i32, %c0_i32_0 : i32, i32
  }
  func.func @transform_5(%arg0: i32) -> (i32, i32) {
    %c0_i32 = arith.constant 0 : i32
    %c0_i32_0 = arith.constant 0 : i32
    return %arg0, %c0_i32 : i32, i32
  }
  func.func @transform_6(%arg0: i32) -> (i32, i32) {
    %c0_i32 = arith.constant 0 : i32
    %c0_i32_0 = arith.constant 0 : i32
    return %arg0, %c0_i32 : i32, i32
  }
  func.func @transform_7(%arg0: i32) -> (i32, i32) {
    %c0_i32 = arith.constant 0 : i32
    %c0_i32_0 = arith.constant 0 : i32
    return %arg0, %c0_i32 : i32, i32
  }
}

module attributes {stable_mosaic.version = 11 : i64} {
  func.func @kernel(%arg0: i32, %arg1: i32, %arg2: memref<1x8x8x3xbf16, #tpu.memory_space<vmem>>, %arg3: memref<1x8x8x1xbf16, #tpu.memory_space<vmem>>, %arg4: memref<1x8x8xbf16, #tpu.memory_space<vmem>>, %arg5: memref<1x128x16xbf16, #tpu.memory_space<vmem>>, %arg6: memref<1x8x16xbf16, #tpu.memory_space<vmem>>, %arg7: memref<1x8x16xf32, #tpu.memory_space<vmem>>, %arg8: memref<1x8x1xf32, #tpu.memory_space<vmem>>, %arg9: memref<3x16xbf16, #tpu.memory_space<vmem>>, %arg10: memref<16x16xbf16, #tpu.memory_space<vmem>>, %arg11: memref<1x16xf32, #tpu.memory_space<vmem>>, %arg12: memref<1x16xf32, #tpu.memory_space<vmem>>, %arg13: memref<1x8x16xf32, #tpu.memory_space<vmem>>, %arg14: memref<8x128xbf16, #tpu.memory_space<vmem>>) attributes {dimension_semantics = [#tpu.dimension_semantics<parallel>, #tpu.dimension_semantics<parallel>], iteration_bounds = array<i64: 2, 1>, scalar_prefetch = 0 : i64, scratch_operands = 1 : i64, tpu.core_type = #tpu.core_type<tc>, window_params = [{transform_indices = @transform_0, window_bounds = array<i64: 1, 8, 8, 3>}, {transform_indices = @transform_1, window_bounds = array<i64: 1, 8, 8, 1>}, {transform_indices = @transform_2, window_bounds = array<i64: 1, 8, 8>}, {transform_indices = @transform_3, window_bounds = array<i64: 1, 128, 16>}, {transform_indices = @transform_4, window_bounds = array<i64: 1, 8, 16>}, {transform_indices = @transform_5, window_bounds = array<i64: 1, 8, 16>}, {transform_indices = @transform_6, window_bounds = array<i64: 1, 8, 1>}, {pipeline_mode = #tpu.pipeline_mode<synchronous>, transform_indices = @transform_7, window_bounds = array<i64: 3, 16>}, {pipeline_mode = #tpu.pipeline_mode<synchronous>, transform_indices = @transform_8, window_bounds = array<i64: 16, 16>}, {pipeline_mode = #tpu.pipeline_mode<synchronous>, transform_indices = @transform_9, window_bounds = array<i64: 1, 16>}, {pipeline_mode = #tpu.pipeline_mode<synchronous>, transform_indices = @transform_10, window_bounds = array<i64: 1, 16>}, {transform_indices = @transform_11, window_bounds = array<i64: 1, 8, 16>}]} {
    %c0 = arith.constant 0 : index
    %c0_0 = arith.constant 0 : index
    %c0_1 = arith.constant 0 : index
    %c0_2 = arith.constant 0 : index
    %0 = vector.load %arg2[%c0, %c0_0, %c0_1, %c0_2] : memref<1x8x8x3xbf16, #tpu.memory_space<vmem>>, vector<1x1x8x3xbf16>
    %1 = vector.shape_cast %0 : vector<1x1x8x3xbf16> to vector<8x3xbf16>
    %c0_3 = arith.constant 0 : index
    %c0_4 = arith.constant 0 : index
    %2 = vector.load %arg9[%c0_3, %c0_4] : memref<3x16xbf16, #tpu.memory_space<vmem>>, vector<3x16xbf16>
    %cst = arith.constant dense<0.000000e+00> : vector<8x16xf32>
    %3 = tpu.matmul %1, %2, %cst {dimension_numbers = #tpu.dot_dimension_numbers<[1], [0], [0], [1], [0, 0, 1, 1], [], []>} : vector<8x3xbf16>, vector<3x16xbf16>, vector<8x16xf32> -> vector<8x16xf32>
    %c0_5 = arith.constant 0 : index
    %c0_6 = arith.constant 0 : index
    %4 = vector.load %arg11[%c0_5, %c0_6] : memref<1x16xf32, #tpu.memory_space<vmem>>, vector<1x16xf32>
    %5 = vector.broadcast %4 : vector<1x16xf32> to vector<8x16xf32>
    %6 = arith.addf %3, %5 : vector<8x16xf32>
    %cst_7 = arith.constant 0.000000e+00 : f32
    %7 = vector.broadcast %cst_7 : f32 to vector<8x16xf32>
    %8 = arith.maximumf %6, %7 : vector<8x16xf32>
    %9 = arith.truncf %8 : vector<8x16xf32> to vector<8x16xbf16>
    %c0_8 = arith.constant 0 : index
    %c0_9 = arith.constant 0 : index
    %10 = vector.load %arg10[%c0_8, %c0_9] : memref<16x16xbf16, #tpu.memory_space<vmem>>, vector<16x16xbf16>
    %cst_10 = arith.constant dense<0.000000e+00> : vector<8x16xf32>
    %11 = tpu.matmul %9, %10, %cst_10 {dimension_numbers = #tpu.dot_dimension_numbers<[1], [0], [0], [1], [0, 0, 1, 1], [], []>} : vector<8x16xbf16>, vector<16x16xbf16>, vector<8x16xf32> -> vector<8x16xf32>
    %c0_11 = arith.constant 0 : index
    %c0_12 = arith.constant 0 : index
    %12 = vector.load %arg12[%c0_11, %c0_12] : memref<1x16xf32, #tpu.memory_space<vmem>>, vector<1x16xf32>
    %13 = vector.broadcast %12 : vector<1x16xf32> to vector<8x16xf32>
    %14 = arith.addf %11, %13 : vector<8x16xf32>
    %cst_13 = arith.constant 0.000000e+00 : f32
    %15 = vector.broadcast %cst_13 : f32 to vector<8x16xf32>
    %16 = arith.maximumf %14, %15 : vector<8x16xf32>
    %17 = arith.truncf %16 : vector<8x16xf32> to vector<8x16xbf16>
    %c0_14 = arith.constant 0 : index
    %c0_15 = arith.constant 0 : index
    %c0_16 = arith.constant 0 : index
    %c0_17 = arith.constant 0 : index
    %18 = vector.load %arg3[%c0_14, %c0_15, %c0_16, %c0_17] : memref<1x8x8x1xbf16, #tpu.memory_space<vmem>>, vector<1x1x8x1xbf16>
    %19 = vector.shape_cast %18 : vector<1x1x8x1xbf16> to vector<8x1xbf16>
    %20 = vector.broadcast %19 : vector<8x1xbf16> to vector<8x16xbf16>
    %21 = arith.mulf %17, %20 : vector<8x16xbf16>
    %c0_18 = arith.constant 0 : index
    %c0_19 = arith.constant 0 : index
    %22 = vector.load %arg14[%c0_18, %c0_19] : memref<8x128xbf16, #tpu.memory_space<vmem>>, vector<8x16xbf16>
    tpu.vector_store %arg14[%c0_18, %c0_19], %21 {strides = array<i32>} : memref<8x128xbf16, #tpu.memory_space<vmem>>, vector<8x16xbf16>,
    %c0_20 = arith.constant 0 : index
    %c1 = arith.constant 1 : index
    %c0_21 = arith.constant 0 : index
    %c0_22 = arith.constant 0 : index
    %23 = vector.load %arg2[%c0_20, %c1, %c0_21, %c0_22] : memref<1x8x8x3xbf16, #tpu.memory_space<vmem>>, vector<1x1x8x3xbf16>
    %24 = vector.shape_cast %23 : vector<1x1x8x3xbf16> to vector<8x3xbf16>
    %c0_23 = arith.constant 0 : index
    %c0_24 = arith.constant 0 : index
    %25 = vector.load %arg9[%c0_23, %c0_24] : memref<3x16xbf16, #tpu.memory_space<vmem>>, vector<3x16xbf16>
    %cst_25 = arith.constant dense<0.000000e+00> : vector<8x16xf32>
    %26 = tpu.matmul %24, %25, %cst_25 {dimension_numbers = #tpu.dot_dimension_numbers<[1], [0], [0], [1], [0, 0, 1, 1], [], []>} : vector<8x3xbf16>, vector<3x16xbf16>, vector<8x16xf32> -> vector<8x16xf32>
    %c0_26 = arith.constant 0 : index
    %c0_27 = arith.constant 0 : index
    %27 = vector.load %arg11[%c0_26, %c0_27] : memref<1x16xf32, #tpu.memory_space<vmem>>, vector<1x16xf32>
    %28 = vector.broadcast %27 : vector<1x16xf32> to vector<8x16xf32>
    %29 = arith.addf %26, %28 : vector<8x16xf32>
    %cst_28 = arith.constant 0.000000e+00 : f32
    %30 = vector.broadcast %cst_28 : f32 to vector<8x16xf32>
    %31 = arith.maximumf %29, %30 : vector<8x16xf32>
    %32 = arith.truncf %31 : vector<8x16xf32> to vector<8x16xbf16>
    %c0_29 = arith.constant 0 : index
    %c0_30 = arith.constant 0 : index
    %33 = vector.load %arg10[%c0_29, %c0_30] : memref<16x16xbf16, #tpu.memory_space<vmem>>, vector<16x16xbf16>
    %cst_31 = arith.constant dense<0.000000e+00> : vector<8x16xf32>
    %34 = tpu.matmul %32, %33, %cst_31 {dimension_numbers = #tpu.dot_dimension_numbers<[1], [0], [0], [1], [0, 0, 1, 1], [], []>} : vector<8x16xbf16>, vector<16x16xbf16>, vector<8x16xf32> -> vector<8x16xf32>
    %c0_32 = arith.constant 0 : index
    %c0_33 = arith.constant 0 : index
    %35 = vector.load %arg12[%c0_32, %c0_33] : memref<1x16xf32, #tpu.memory_space<vmem>>, vector<1x16xf32>
    %36 = vector.broadcast %35 : vector<1x16xf32> to vector<8x16xf32>
    %37 = arith.addf %34, %36 : vector<8x16xf32>
    %cst_34 = arith.constant 0.000000e+00 : f32
    %38 = vector.broadcast %cst_34 : f32 to vector<8x16xf32>
    %39 = arith.maximumf %37, %38 : vector<8x16xf32>
    %40 = arith.truncf %39 : vector<8x16xf32> to vector<8x16xbf16>
    %c0_35 = arith.constant 0 : index
    %c1_36 = arith.constant 1 : index
    %c0_37 = arith.constant 0 : index
    %c0_38 = arith.constant 0 : index
    %41 = vector.load %arg3[%c0_35, %c1_36, %c0_37, %c0_38] : memref<1x8x8x1xbf16, #tpu.memory_space<vmem>>, vector<1x1x8x1xbf16>
    %42 = vector.shape_cast %41 : vector<1x1x8x1xbf16> to vector<8x1xbf16>
    %43 = vector.broadcast %42 : vector<8x1xbf16> to vector<8x16xbf16>
    %44 = arith.mulf %40, %43 : vector<8x16xbf16>
    %c0_39 = arith.constant 0 : index
    %c16 = arith.constant 16 : index
    %45 = vector.load %arg14[%c0_39, %c16] : memref<8x128xbf16, #tpu.memory_space<vmem>>, vector<8x16xbf16>
    tpu.vector_store %arg14[%c0_39, %c16], %44 {strides = array<i32>} : memref<8x128xbf16, #tpu.memory_space<vmem>>, vector<8x16xbf16>,
    %c0_40 = arith.constant 0 : index
    %c2 = arith.constant 2 : index
    %c0_41 = arith.constant 0 : index
    %c0_42 = arith.constant 0 : index
    %46 = vector.load %arg2[%c0_40, %c2, %c0_41, %c0_42] : memref<1x8x8x3xbf16, #tpu.memory_space<vmem>>, vector<1x1x8x3xbf16>
    %47 = vector.shape_cast %46 : vector<1x1x8x3xbf16> to vector<8x3xbf16>
    %c0_43 = arith.constant 0 : index
    %c0_44 = arith.constant 0 : index
    %48 = vector.load %arg9[%c0_43, %c0_44] : memref<3x16xbf16, #tpu.memory_space<vmem>>, vector<3x16xbf16>
    %cst_45 = arith.constant dense<0.000000e+00> : vector<8x16xf32>
    %49 = tpu.matmul %47, %48, %cst_45 {dimension_numbers = #tpu.dot_dimension_numbers<[1], [0], [0], [1], [0, 0, 1, 1], [], []>} : vector<8x3xbf16>, vector<3x16xbf16>, vector<8x16xf32> -> vector<8x16xf32>
    %c0_46 = arith.constant 0 : index
    %c0_47 = arith.constant 0 : index
    %50 = vector.load %arg11[%c0_46, %c0_47] : memref<1x16xf32, #tpu.memory_space<vmem>>, vector<1x16xf32>
    %51 = vector.broadcast %50 : vector<1x16xf32> to vector<8x16xf32>
    %52 = arith.addf %49, %51 : vector<8x16xf32>
    %cst_48 = arith.constant 0.000000e+00 : f32
    %53 = vector.broadcast %cst_48 : f32 to vector<8x16xf32>
    %54 = arith.maximumf %52, %53 : vector<8x16xf32>
    %55 = arith.truncf %54 : vector<8x16xf32> to vector<8x16xbf16>
    %c0_49 = arith.constant 0 : index
    %c0_50 = arith.constant 0 : index
    %56 = vector.load %arg10[%c0_49, %c0_50] : memref<16x16xbf16, #tpu.memory_space<vmem>>, vector<16x16xbf16>
    %cst_51 = arith.constant dense<0.000000e+00> : vector<8x16xf32>
    %57 = tpu.matmul %55, %56, %cst_51 {dimension_numbers = #tpu.dot_dimension_numbers<[1], [0], [0], [1], [0, 0, 1, 1], [], []>} : vector<8x16xbf16>, vector<16x16xbf16>, vector<8x16xf32> -> vector<8x16xf32>
    %c0_52 = arith.constant 0 : index
    %c0_53 = arith.constant 0 : index
    %58 = vector.load %arg12[%c0_52, %c0_53] : memref<1x16xf32, #tpu.memory_space<vmem>>, vector<1x16xf32>
    %59 = vector.broadcast %58 : vector<1x16xf32> to vector<8x16xf32>
    %60 = arith.addf %57, %59 : vector<8x16xf32>
    %cst_54 = arith.constant 0.000000e+00 : f32
    %61 = vector.broadcast %cst_54 : f32 to vector<8x16xf32>
    %62 = arith.maximumf %60, %61 : vector<8x16xf32>
    %63 = arith.truncf %62 : vector<8x16xf32> to vector<8x16xbf16>
    %c0_55 = arith.constant 0 : index
    %c2_56 = arith.constant 2 : index
    %c0_57 = arith.constant 0 : index
    %c0_58 = arith.constant 0 : index
    %64 = vector.load %arg3[%c0_55, %c2_56, %c0_57, %c0_58] : memref<1x8x8x1xbf16, #tpu.memory_space<vmem>>, vector<1x1x8x1xbf16>
    %65 = vector.shape_cast %64 : vector<1x1x8x1xbf16> to vector<8x1xbf16>
    %66 = vector.broadcast %65 : vector<8x1xbf16> to vector<8x16xbf16>
    %67 = arith.mulf %63, %66 : vector<8x16xbf16>
    %c0_59 = arith.constant 0 : index
    %c32 = arith.constant 32 : index
    %68 = vector.load %arg14[%c0_59, %c32] : memref<8x128xbf16, #tpu.memory_space<vmem>>, vector<8x16xbf16>
    tpu.vector_store %arg14[%c0_59, %c32], %67 {strides = array<i32>} : memref<8x128xbf16, #tpu.memory_space<vmem>>, vector<8x16xbf16>,
    %c0_60 = arith.constant 0 : index
    %c3 = arith.constant 3 : index
    %c0_61 = arith.constant 0 : index
    %c0_62 = arith.constant 0 : index
    %69 = vector.load %arg2[%c0_60, %c3, %c0_61, %c0_62] : memref<1x8x8x3xbf16, #tpu.memory_space<vmem>>, vector<1x1x8x3xbf16>
    %70 = vector.shape_cast %69 : vector<1x1x8x3xbf16> to vector<8x3xbf16>
    %c0_63 = arith.constant 0 : index
    %c0_64 = arith.constant 0 : index
    %71 = vector.load %arg9[%c0_63, %c0_64] : memref<3x16xbf16, #tpu.memory_space<vmem>>, vector<3x16xbf16>
    %cst_65 = arith.constant dense<0.000000e+00> : vector<8x16xf32>
    %72 = tpu.matmul %70, %71, %cst_65 {dimension_numbers = #tpu.dot_dimension_numbers<[1], [0], [0], [1], [0, 0, 1, 1], [], []>} : vector<8x3xbf16>, vector<3x16xbf16>, vector<8x16xf32> -> vector<8x16xf32>
    %c0_66 = arith.constant 0 : index
    %c0_67 = arith.constant 0 : index
    %73 = vector.load %arg11[%c0_66, %c0_67] : memref<1x16xf32, #tpu.memory_space<vmem>>, vector<1x16xf32>
    %74 = vector.broadcast %73 : vector<1x16xf32> to vector<8x16xf32>
    %75 = arith.addf %72, %74 : vector<8x16xf32>
    %cst_68 = arith.constant 0.000000e+00 : f32
    %76 = vector.broadcast %cst_68 : f32 to vector<8x16xf32>
    %77 = arith.maximumf %75, %76 : vector<8x16xf32>
    %78 = arith.truncf %77 : vector<8x16xf32> to vector<8x16xbf16>
    %c0_69 = arith.constant 0 : index
    %c0_70 = arith.constant 0 : index
    %79 = vector.load %arg10[%c0_69, %c0_70] : memref<16x16xbf16, #tpu.memory_space<vmem>>, vector<16x16xbf16>
    %cst_71 = arith.constant dense<0.000000e+00> : vector<8x16xf32>
    %80 = tpu.matmul %78, %79, %cst_71 {dimension_numbers = #tpu.dot_dimension_numbers<[1], [0], [0], [1], [0, 0, 1, 1], [], []>} : vector<8x16xbf16>, vector<16x16xbf16>, vector<8x16xf32> -> vector<8x16xf32>
    %c0_72 = arith.constant 0 : index
    %c0_73 = arith.constant 0 : index
    %81 = vector.load %arg12[%c0_72, %c0_73] : memref<1x16xf32, #tpu.memory_space<vmem>>, vector<1x16xf32>
    %82 = vector.broadcast %81 : vector<1x16xf32> to vector<8x16xf32>
    %83 = arith.addf %80, %82 : vector<8x16xf32>
    %cst_74 = arith.constant 0.000000e+00 : f32
    %84 = vector.broadcast %cst_74 : f32 to vector<8x16xf32>
    %85 = arith.maximumf %83, %84 : vector<8x16xf32>
    %86 = arith.truncf %85 : vector<8x16xf32> to vector<8x16xbf16>
    %c0_75 = arith.constant 0 : index
    %c3_76 = arith.constant 3 : index
    %c0_77 = arith.constant 0 : index
    %c0_78 = arith.constant 0 : index
    %87 = vector.load %arg3[%c0_75, %c3_76, %c0_77, %c0_78] : memref<1x8x8x1xbf16, #tpu.memory_space<vmem>>, vector<1x1x8x1xbf16>
    %88 = vector.shape_cast %87 : vector<1x1x8x1xbf16> to vector<8x1xbf16>
    %89 = vector.broadcast %88 : vector<8x1xbf16> to vector<8x16xbf16>
    %90 = arith.mulf %86, %89 : vector<8x16xbf16>
    %c0_79 = arith.constant 0 : index
    %c48 = arith.constant 48 : index
    %91 = vector.load %arg14[%c0_79, %c48] : memref<8x128xbf16, #tpu.memory_space<vmem>>, vector<8x16xbf16>
    tpu.vector_store %arg14[%c0_79, %c48], %90 {strides = array<i32>} : memref<8x128xbf16, #tpu.memory_space<vmem>>, vector<8x16xbf16>,
    %c0_80 = arith.constant 0 : index
    %c4 = arith.constant 4 : index
    %c0_81 = arith.constant 0 : index
    %c0_82 = arith.constant 0 : index
    %92 = vector.load %arg2[%c0_80, %c4, %c0_81, %c0_82] : memref<1x8x8x3xbf16, #tpu.memory_space<vmem>>, vector<1x1x8x3xbf16>
    %93 = vector.shape_cast %92 : vector<1x1x8x3xbf16> to vector<8x3xbf16>
    %c0_83 = arith.constant 0 : index
    %c0_84 = arith.constant 0 : index
    %94 = vector.load %arg9[%c0_83, %c0_84] : memref<3x16xbf16, #tpu.memory_space<vmem>>, vector<3x16xbf16>
    %cst_85 = arith.constant dense<0.000000e+00> : vector<8x16xf32>
    %95 = tpu.matmul %93, %94, %cst_85 {dimension_numbers = #tpu.dot_dimension_numbers<[1], [0], [0], [1], [0, 0, 1, 1], [], []>} : vector<8x3xbf16>, vector<3x16xbf16>, vector<8x16xf32> -> vector<8x16xf32>
    %c0_86 = arith.constant 0 : index
    %c0_87 = arith.constant 0 : index
    %96 = vector.load %arg11[%c0_86, %c0_87] : memref<1x16xf32, #tpu.memory_space<vmem>>, vector<1x16xf32>
    %97 = vector.broadcast %96 : vector<1x16xf32> to vector<8x16xf32>
    %98 = arith.addf %95, %97 : vector<8x16xf32>
    %cst_88 = arith.constant 0.000000e+00 : f32
    %99 = vector.broadcast %cst_88 : f32 to vector<8x16xf32>
    %100 = arith.maximumf %98, %99 : vector<8x16xf32>
    %101 = arith.truncf %100 : vector<8x16xf32> to vector<8x16xbf16>
    %c0_89 = arith.constant 0 : index
    %c0_90 = arith.constant 0 : index
    %102 = vector.load %arg10[%c0_89, %c0_90] : memref<16x16xbf16, #tpu.memory_space<vmem>>, vector<16x16xbf16>
    %cst_91 = arith.constant dense<0.000000e+00> : vector<8x16xf32>
    %103 = tpu.matmul %101, %102, %cst_91 {dimension_numbers = #tpu.dot_dimension_numbers<[1], [0], [0], [1], [0, 0, 1, 1], [], []>} : vector<8x16xbf16>, vector<16x16xbf16>, vector<8x16xf32> -> vector<8x16xf32>
    %c0_92 = arith.constant 0 : index
    %c0_93 = arith.constant 0 : index
    %104 = vector.load %arg12[%c0_92, %c0_93] : memref<1x16xf32, #tpu.memory_space<vmem>>, vector<1x16xf32>
    %105 = vector.broadcast %104 : vector<1x16xf32> to vector<8x16xf32>
    %106 = arith.addf %103, %105 : vector<8x16xf32>
    %cst_94 = arith.constant 0.000000e+00 : f32
    %107 = vector.broadcast %cst_94 : f32 to vector<8x16xf32>
    %108 = arith.maximumf %106, %107 : vector<8x16xf32>
    %109 = arith.truncf %108 : vector<8x16xf32> to vector<8x16xbf16>
    %c0_95 = arith.constant 0 : index
    %c4_96 = arith.constant 4 : index
    %c0_97 = arith.constant 0 : index
    %c0_98 = arith.constant 0 : index
    %110 = vector.load %arg3[%c0_95, %c4_96, %c0_97, %c0_98] : memref<1x8x8x1xbf16, #tpu.memory_space<vmem>>, vector<1x1x8x1xbf16>
    %111 = vector.shape_cast %110 : vector<1x1x8x1xbf16> to vector<8x1xbf16>
    %112 = vector.broadcast %111 : vector<8x1xbf16> to vector<8x16xbf16>
    %113 = arith.mulf %109, %112 : vector<8x16xbf16>
    %c0_99 = arith.constant 0 : index
    %c64 = arith.constant 64 : index
    %114 = vector.load %arg14[%c0_99, %c64] : memref<8x128xbf16, #tpu.memory_space<vmem>>, vector<8x16xbf16>
    tpu.vector_store %arg14[%c0_99, %c64], %113 {strides = array<i32>} : memref<8x128xbf16, #tpu.memory_space<vmem>>, vector<8x16xbf16>,
    %c0_100 = arith.constant 0 : index
    %c5 = arith.constant 5 : index
    %c0_101 = arith.constant 0 : index
    %c0_102 = arith.constant 0 : index
    %115 = vector.load %arg2[%c0_100, %c5, %c0_101, %c0_102] : memref<1x8x8x3xbf16, #tpu.memory_space<vmem>>, vector<1x1x8x3xbf16>
    %116 = vector.shape_cast %115 : vector<1x1x8x3xbf16> to vector<8x3xbf16>
    %c0_103 = arith.constant 0 : index
    %c0_104 = arith.constant 0 : index
    %117 = vector.load %arg9[%c0_103, %c0_104] : memref<3x16xbf16, #tpu.memory_space<vmem>>, vector<3x16xbf16>
    %cst_105 = arith.constant dense<0.000000e+00> : vector<8x16xf32>
    %118 = tpu.matmul %116, %117, %cst_105 {dimension_numbers = #tpu.dot_dimension_numbers<[1], [0], [0], [1], [0, 0, 1, 1], [], []>} : vector<8x3xbf16>, vector<3x16xbf16>, vector<8x16xf32> -> vector<8x16xf32>
    %c0_106 = arith.constant 0 : index
    %c0_107 = arith.constant 0 : index
    %119 = vector.load %arg11[%c0_106, %c0_107] : memref<1x16xf32, #tpu.memory_space<vmem>>, vector<1x16xf32>
    %120 = vector.broadcast %119 : vector<1x16xf32> to vector<8x16xf32>
    %121 = arith.addf %118, %120 : vector<8x16xf32>
    %cst_108 = arith.constant 0.000000e+00 : f32
    %122 = vector.broadcast %cst_108 : f32 to vector<8x16xf32>
    %123 = arith.maximumf %121, %122 : vector<8x16xf32>
    %124 = arith.truncf %123 : vector<8x16xf32> to vector<8x16xbf16>
    %c0_109 = arith.constant 0 : index
    %c0_110 = arith.constant 0 : index
    %125 = vector.load %arg10[%c0_109, %c0_110] : memref<16x16xbf16, #tpu.memory_space<vmem>>, vector<16x16xbf16>
    %cst_111 = arith.constant dense<0.000000e+00> : vector<8x16xf32>
    %126 = tpu.matmul %124, %125, %cst_111 {dimension_numbers = #tpu.dot_dimension_numbers<[1], [0], [0], [1], [0, 0, 1, 1], [], []>} : vector<8x16xbf16>, vector<16x16xbf16>, vector<8x16xf32> -> vector<8x16xf32>
    %c0_112 = arith.constant 0 : index
    %c0_113 = arith.constant 0 : index
    %127 = vector.load %arg12[%c0_112, %c0_113] : memref<1x16xf32, #tpu.memory_space<vmem>>, vector<1x16xf32>
    %128 = vector.broadcast %127 : vector<1x16xf32> to vector<8x16xf32>
    %129 = arith.addf %126, %128 : vector<8x16xf32>
    %cst_114 = arith.constant 0.000000e+00 : f32
    %130 = vector.broadcast %cst_114 : f32 to vector<8x16xf32>
    %131 = arith.maximumf %129, %130 : vector<8x16xf32>
    %132 = arith.truncf %131 : vector<8x16xf32> to vector<8x16xbf16>
    %c0_115 = arith.constant 0 : index
    %c5_116 = arith.constant 5 : index
    %c0_117 = arith.constant 0 : index
    %c0_118 = arith.constant 0 : index
    %133 = vector.load %arg3[%c0_115, %c5_116, %c0_117, %c0_118] : memref<1x8x8x1xbf16, #tpu.memory_space<vmem>>, vector<1x1x8x1xbf16>
    %134 = vector.shape_cast %133 : vector<1x1x8x1xbf16> to vector<8x1xbf16>
    %135 = vector.broadcast %134 : vector<8x1xbf16> to vector<8x16xbf16>
    %136 = arith.mulf %132, %135 : vector<8x16xbf16>
    %c0_119 = arith.constant 0 : index
    %c80 = arith.constant 80 : index
    %137 = vector.load %arg14[%c0_119, %c80] : memref<8x128xbf16, #tpu.memory_space<vmem>>, vector<8x16xbf16>
    tpu.vector_store %arg14[%c0_119, %c80], %136 {strides = array<i32>} : memref<8x128xbf16, #tpu.memory_space<vmem>>, vector<8x16xbf16>,
    %c0_120 = arith.constant 0 : index
    %c6 = arith.constant 6 : index
    %c0_121 = arith.constant 0 : index
    %c0_122 = arith.constant 0 : index
    %138 = vector.load %arg2[%c0_120, %c6, %c0_121, %c0_122] : memref<1x8x8x3xbf16, #tpu.memory_space<vmem>>, vector<1x1x8x3xbf16>
    %139 = vector.shape_cast %138 : vector<1x1x8x3xbf16> to vector<8x3xbf16>
    %c0_123 = arith.constant 0 : index
    %c0_124 = arith.constant 0 : index
    %140 = vector.load %arg9[%c0_123, %c0_124] : memref<3x16xbf16, #tpu.memory_space<vmem>>, vector<3x16xbf16>
    %cst_125 = arith.constant dense<0.000000e+00> : vector<8x16xf32>
    %141 = tpu.matmul %139, %140, %cst_125 {dimension_numbers = #tpu.dot_dimension_numbers<[1], [0], [0], [1], [0, 0, 1, 1], [], []>} : vector<8x3xbf16>, vector<3x16xbf16>, vector<8x16xf32> -> vector<8x16xf32>
    %c0_126 = arith.constant 0 : index
    %c0_127 = arith.constant 0 : index
    %142 = vector.load %arg11[%c0_126, %c0_127] : memref<1x16xf32, #tpu.memory_space<vmem>>, vector<1x16xf32>
    %143 = vector.broadcast %142 : vector<1x16xf32> to vector<8x16xf32>
    %144 = arith.addf %141, %143 : vector<8x16xf32>
    %cst_128 = arith.constant 0.000000e+00 : f32
    %145 = vector.broadcast %cst_128 : f32 to vector<8x16xf32>
    %146 = arith.maximumf %144, %145 : vector<8x16xf32>
    %147 = arith.truncf %146 : vector<8x16xf32> to vector<8x16xbf16>
    %c0_129 = arith.constant 0 : index
    %c0_130 = arith.constant 0 : index
    %148 = vector.load %arg10[%c0_129, %c0_130] : memref<16x16xbf16, #tpu.memory_space<vmem>>, vector<16x16xbf16>
    %cst_131 = arith.constant dense<0.000000e+00> : vector<8x16xf32>
    %149 = tpu.matmul %147, %148, %cst_131 {dimension_numbers = #tpu.dot_dimension_numbers<[1], [0], [0], [1], [0, 0, 1, 1], [], []>} : vector<8x16xbf16>, vector<16x16xbf16>, vector<8x16xf32> -> vector<8x16xf32>
    %c0_132 = arith.constant 0 : index
    %c0_133 = arith.constant 0 : index
    %150 = vector.load %arg12[%c0_132, %c0_133] : memref<1x16xf32, #tpu.memory_space<vmem>>, vector<1x16xf32>
    %151 = vector.broadcast %150 : vector<1x16xf32> to vector<8x16xf32>
    %152 = arith.addf %149, %151 : vector<8x16xf32>
    %cst_134 = arith.constant 0.000000e+00 : f32
    %153 = vector.broadcast %cst_134 : f32 to vector<8x16xf32>
    %154 = arith.maximumf %152, %153 : vector<8x16xf32>
    %155 = arith.truncf %154 : vector<8x16xf32> to vector<8x16xbf16>
    %c0_135 = arith.constant 0 : index
    %c6_136 = arith.constant 6 : index
    %c0_137 = arith.constant 0 : index
    %c0_138 = arith.constant 0 : index
    %156 = vector.load %arg3[%c0_135, %c6_136, %c0_137, %c0_138] : memref<1x8x8x1xbf16, #tpu.memory_space<vmem>>, vector<1x1x8x1xbf16>
    %157 = vector.shape_cast %156 : vector<1x1x8x1xbf16> to vector<8x1xbf16>
    %158 = vector.broadcast %157 : vector<8x1xbf16> to vector<8x16xbf16>
    %159 = arith.mulf %155, %158 : vector<8x16xbf16>
    %c0_139 = arith.constant 0 : index
    %c96 = arith.constant 96 : index
    %160 = vector.load %arg14[%c0_139, %c96] : memref<8x128xbf16, #tpu.memory_space<vmem>>, vector<8x16xbf16>
    tpu.vector_store %arg14[%c0_139, %c96], %159 {strides = array<i32>} : memref<8x128xbf16, #tpu.memory_space<vmem>>, vector<8x16xbf16>,
    %c0_140 = arith.constant 0 : index
    %c7 = arith.constant 7 : index
    %c0_141 = arith.constant 0 : index
    %c0_142 = arith.constant 0 : index
    %161 = vector.load %arg2[%c0_140, %c7, %c0_141, %c0_142] : memref<1x8x8x3xbf16, #tpu.memory_space<vmem>>, vector<1x1x8x3xbf16>
    %162 = vector.shape_cast %161 : vector<1x1x8x3xbf16> to vector<8x3xbf16>
    %c0_143 = arith.constant 0 : index
    %c0_144 = arith.constant 0 : index
    %163 = vector.load %arg9[%c0_143, %c0_144] : memref<3x16xbf16, #tpu.memory_space<vmem>>, vector<3x16xbf16>
    %cst_145 = arith.constant dense<0.000000e+00> : vector<8x16xf32>
    %164 = tpu.matmul %162, %163, %cst_145 {dimension_numbers = #tpu.dot_dimension_numbers<[1], [0], [0], [1], [0, 0, 1, 1], [], []>} : vector<8x3xbf16>, vector<3x16xbf16>, vector<8x16xf32> -> vector<8x16xf32>
    %c0_146 = arith.constant 0 : index
    %c0_147 = arith.constant 0 : index
    %165 = vector.load %arg11[%c0_146, %c0_147] : memref<1x16xf32, #tpu.memory_space<vmem>>, vector<1x16xf32>
    %166 = vector.broadcast %165 : vector<1x16xf32> to vector<8x16xf32>
    %167 = arith.addf %164, %166 : vector<8x16xf32>
    %cst_148 = arith.constant 0.000000e+00 : f32
    %168 = vector.broadcast %cst_148 : f32 to vector<8x16xf32>
    %169 = arith.maximumf %167, %168 : vector<8x16xf32>
    %170 = arith.truncf %169 : vector<8x16xf32> to vector<8x16xbf16>
    %c0_149 = arith.constant 0 : index
    %c0_150 = arith.constant 0 : index
    %171 = vector.load %arg10[%c0_149, %c0_150] : memref<16x16xbf16, #tpu.memory_space<vmem>>, vector<16x16xbf16>
    %cst_151 = arith.constant dense<0.000000e+00> : vector<8x16xf32>
    %172 = tpu.matmul %170, %171, %cst_151 {dimension_numbers = #tpu.dot_dimension_numbers<[1], [0], [0], [1], [0, 0, 1, 1], [], []>} : vector<8x16xbf16>, vector<16x16xbf16>, vector<8x16xf32> -> vector<8x16xf32>
    %c0_152 = arith.constant 0 : index
    %c0_153 = arith.constant 0 : index
    %173 = vector.load %arg12[%c0_152, %c0_153] : memref<1x16xf32, #tpu.memory_space<vmem>>, vector<1x16xf32>
    %174 = vector.broadcast %173 : vector<1x16xf32> to vector<8x16xf32>
    %175 = arith.addf %172, %174 : vector<8x16xf32>
    %cst_154 = arith.constant 0.000000e+00 : f32
    %176 = vector.broadcast %cst_154 : f32 to vector<8x16xf32>
    %177 = arith.maximumf %175, %176 : vector<8x16xf32>
    %178 = arith.truncf %177 : vector<8x16xf32> to vector<8x16xbf16>
    %c0_155 = arith.constant 0 : index
    %c7_156 = arith.constant 7 : index
    %c0_157 = arith.constant 0 : index
    %c0_158 = arith.constant 0 : index
    %179 = vector.load %arg3[%c0_155, %c7_156, %c0_157, %c0_158] : memref<1x8x8x1xbf16, #tpu.memory_space<vmem>>, vector<1x1x8x1xbf16>
    %180 = vector.shape_cast %179 : vector<1x1x8x1xbf16> to vector<8x1xbf16>
    %181 = vector.broadcast %180 : vector<8x1xbf16> to vector<8x16xbf16>
    %182 = arith.mulf %178, %181 : vector<8x16xbf16>
    %c0_159 = arith.constant 0 : index
    %c112 = arith.constant 112 : index
    %183 = vector.load %arg14[%c0_159, %c112] : memref<8x128xbf16, #tpu.memory_space<vmem>>, vector<8x16xbf16>
    tpu.vector_store %arg14[%c0_159, %c112], %182 {strides = array<i32>} : memref<8x128xbf16, #tpu.memory_space<vmem>>, vector<8x16xbf16>,
    %c0_160 = arith.constant 0 : index
    %c0_161 = arith.constant 0 : index
    %184 = vector.load %arg14[%c0_160, %c0_161] : memref<8x128xbf16, #tpu.memory_space<vmem>>, vector<8x128xbf16>
    %c0_162 = arith.constant 0 : index
    %c0_163 = arith.constant 0 : index
    %c0_164 = arith.constant 0 : index
    %185 = vector.load %arg5[%c0_162, %c0_163, %c0_164] : memref<1x128x16xbf16, #tpu.memory_space<vmem>>, vector<1x128x16xbf16>
    %186 = vector.shape_cast %185 : vector<1x128x16xbf16> to vector<128x16xbf16>
    %cst_165 = arith.constant dense<0.000000e+00> : vector<8x16xf32>
    %187 = tpu.matmul %184, %186, %cst_165 {dimension_numbers = #tpu.dot_dimension_numbers<[1], [0], [0], [1], [0, 0, 1, 1], [], []>} : vector<8x128xbf16>, vector<128x16xbf16>, vector<8x16xf32> -> vector<8x16xf32>
    %c0_166 = arith.constant 0 : index
    %c0_167 = arith.constant 0 : index
    %c0_168 = arith.constant 0 : index
    %188 = vector.load %arg4[%c0_166, %c0_167, %c0_168] : memref<1x8x8xbf16, #tpu.memory_space<vmem>>, vector<1x8x8xbf16>
    %189 = vector.shape_cast %188 : vector<1x8x8xbf16> to vector<8x8xbf16>
    %c0_169 = arith.constant 0 : index
    %c0_170 = arith.constant 0 : index
    %c0_171 = arith.constant 0 : index
    %190 = vector.load %arg6[%c0_169, %c0_170, %c0_171] : memref<1x8x16xbf16, #tpu.memory_space<vmem>>, vector<1x8x16xbf16>
    %191 = vector.shape_cast %190 : vector<1x8x16xbf16> to vector<8x16xbf16>
    %cst_172 = arith.constant dense<0.000000e+00> : vector<8x16xf32>
    %192 = tpu.matmul %189, %191, %cst_172 {dimension_numbers = #tpu.dot_dimension_numbers<[1], [0], [0], [1], [0, 0, 1, 1], [], []>} : vector<8x8xbf16>, vector<8x16xbf16>, vector<8x16xf32> -> vector<8x16xf32>
    %193 = arith.addf %187, %192 : vector<8x16xf32>
    %c0_173 = arith.constant 0 : index
    %c0_174 = arith.constant 0 : index
    %c0_175 = arith.constant 0 : index
    %194 = vector.load %arg8[%c0_173, %c0_174, %c0_175] : memref<1x8x1xf32, #tpu.memory_space<vmem>>, vector<1x8x1xf32>
    %195 = vector.shape_cast %194 : vector<1x8x1xf32> to vector<8x1xf32>
    %c0_176 = arith.constant 0 : index
    %c0_177 = arith.constant 0 : index
    %c0_178 = arith.constant 0 : index
    %196 = vector.load %arg7[%c0_176, %c0_177, %c0_178] : memref<1x8x16xf32, #tpu.memory_space<vmem>>, vector<1x8x16xf32>
    %197 = vector.shape_cast %196 : vector<1x8x16xf32> to vector<8x16xf32>
    %198 = arith.addf %197, %193 : vector<8x16xf32>
    %199 = vector.broadcast %195 : vector<8x1xf32> to vector<8x16xf32>
    %200 = arith.mulf %199, %198 : vector<8x16xf32>
    %cst_179 = arith.constant 0.000000e+00 : f32
    %201 = vector.broadcast %cst_179 : f32 to vector<8x16xf32>
    %202 = arith.maximumf %200, %201 : vector<8x16xf32>
    %c0_180 = arith.constant 0 : index
    %c0_181 = arith.constant 0 : index
    %c0_182 = arith.constant 0 : index
    %203 = vector.load %arg13[%c0_180, %c0_181, %c0_182] : memref<1x8x16xf32, #tpu.memory_space<vmem>>, vector<1x8x16xf32>
    %204 = vector.shape_cast %203 : vector<1x8x16xf32> to vector<8x16xf32>
    %205 = vector.shape_cast %202 : vector<8x16xf32> to vector<1x8x16xf32>
    tpu.vector_store %arg13[%c0_180, %c0_181, %c0_182], %205 {strides = array<i32>} : memref<1x8x16xf32, #tpu.memory_space<vmem>>, vector<1x8x16xf32>,
    return
  }
  func.func @transform_0(%arg0: i32, %arg1: i32) -> (i32, i32, i32, i32) {
    %c0_i32 = arith.constant 0 : i32
    %c0_i32_0 = arith.constant 0 : i32
    %c0_i32_1 = arith.constant 0 : i32
    return %arg0, %c0_i32, %arg1, %c0_i32_0 : i32, i32, i32, i32
  }
  func.func @transform_1(%arg0: i32, %arg1: i32) -> (i32, i32, i32, i32) {
    %c0_i32 = arith.constant 0 : i32
    %c0_i32_0 = arith.constant 0 : i32
    %c0_i32_1 = arith.constant 0 : i32
    return %arg0, %c0_i32, %arg1, %c0_i32_0 : i32, i32, i32, i32
  }
  func.func @transform_2(%arg0: i32, %arg1: i32) -> (i32, i32, i32) {
    %c0_i32 = arith.constant 0 : i32
    %c0_i32_0 = arith.constant 0 : i32
    return %arg0, %arg1, %c0_i32 : i32, i32, i32
  }
  func.func @transform_3(%arg0: i32, %arg1: i32) -> (i32, i32, i32) {
    %c0_i32 = arith.constant 0 : i32
    %c0_i32_0 = arith.constant 0 : i32
    %c0_i32_1 = arith.constant 0 : i32
    return %arg0, %c0_i32, %c0_i32_0 : i32, i32, i32
  }
  func.func @transform_4(%arg0: i32, %arg1: i32) -> (i32, i32, i32) {
    %c0_i32 = arith.constant 0 : i32
    %c0_i32_0 = arith.constant 0 : i32
    %c0_i32_1 = arith.constant 0 : i32
    return %arg0, %c0_i32, %c0_i32_0 : i32, i32, i32
  }
  func.func @transform_5(%arg0: i32, %arg1: i32) -> (i32, i32, i32) {
    %c0_i32 = arith.constant 0 : i32
    %c0_i32_0 = arith.constant 0 : i32
    return %arg0, %arg1, %c0_i32 : i32, i32, i32
  }
  func.func @transform_6(%arg0: i32, %arg1: i32) -> (i32, i32, i32) {
    %c0_i32 = arith.constant 0 : i32
    %c0_i32_0 = arith.constant 0 : i32
    return %arg0, %arg1, %c0_i32 : i32, i32, i32
  }
  func.func @transform_7(%arg0: i32, %arg1: i32) -> (i32, i32) {
    %c0_i32 = arith.constant 0 : i32
    %c0_i32_0 = arith.constant 0 : i32
    %c0_i32_1 = arith.constant 0 : i32
    return %c0_i32, %c0_i32_0 : i32, i32
  }
  func.func @transform_8(%arg0: i32, %arg1: i32) -> (i32, i32) {
    %c0_i32 = arith.constant 0 : i32
    %c0_i32_0 = arith.constant 0 : i32
    %c0_i32_1 = arith.constant 0 : i32
    return %c0_i32, %c0_i32_0 : i32, i32
  }
  func.func @transform_9(%arg0: i32, %arg1: i32) -> (i32, i32) {
    %c0_i32 = arith.constant 0 : i32
    %c0_i32_0 = arith.constant 0 : i32
    %c0_i32_1 = arith.constant 0 : i32
    return %c0_i32, %c0_i32_0 : i32, i32
  }
  func.func @transform_10(%arg0: i32, %arg1: i32) -> (i32, i32) {
    %c0_i32 = arith.constant 0 : i32
    %c0_i32_0 = arith.constant 0 : i32
    %c0_i32_1 = arith.constant 0 : i32
    return %c0_i32, %c0_i32_0 : i32, i32
  }
  func.func @transform_11(%arg0: i32, %arg1: i32) -> (i32, i32, i32) {
    %c0_i32 = arith.constant 0 : i32
    %c0_i32_0 = arith.constant 0 : i32
    return %arg0, %arg1, %c0_i32 : i32, i32, i32
  }
}

module attributes {stable_mosaic.version = 11 : i64} {
  func.func @kernel(%arg0: i32, %arg1: memref<1x8x16xf32, #tpu.memory_space<vmem>>, %arg2: memref<1x1x16xf32, #tpu.memory_space<vmem>>) attributes {dimension_semantics = [#tpu.dimension_semantics<parallel>], iteration_bounds = array<i64: 2>, scalar_prefetch = 0 : i64, scratch_operands = 0 : i64, tpu.core_type = #tpu.core_type<tc>, window_params = [{transform_indices = @transform_0, window_bounds = array<i64: 1, 8, 16>}, {transform_indices = @transform_1, window_bounds = array<i64: 1, 1, 16>}]} {
    %c0 = arith.constant 0 : index
    %c0_0 = arith.constant 0 : index
    %c0_1 = arith.constant 0 : index
    %0 = vector.load %arg1[%c0, %c0_0, %c0_1] : memref<1x8x16xf32, #tpu.memory_space<vmem>>, vector<1x8x16xf32>
    %cst = arith.constant dense<0.000000e+00> : vector<1x16xf32>
    %1 = vector.multi_reduction <add>, %0, %cst [1] : vector<1x8x16xf32> to vector<1x16xf32>
    %2 = vector.shape_cast %1 : vector<1x16xf32> to vector<1x1x16xf32>
    %c0_2 = arith.constant 0 : index
    %c0_3 = arith.constant 0 : index
    %c0_4 = arith.constant 0 : index
    %3 = vector.load %arg2[%c0_2, %c0_3, %c0_4] : memref<1x1x16xf32, #tpu.memory_space<vmem>>, vector<1x1x16xf32>
    tpu.vector_store %arg2[%c0_2, %c0_3, %c0_4], %2 {strides = array<i32>} : memref<1x1x16xf32, #tpu.memory_space<vmem>>, vector<1x1x16xf32>,
    return
  }
  func.func @transform_0(%arg0: i32) -> (i32, i32, i32) {
    %c0_i32 = arith.constant 0 : i32
    %c0_i32_0 = arith.constant 0 : i32
    %c0_i32_1 = arith.constant 0 : i32
    return %arg0, %c0_i32, %c0_i32_0 : i32, i32, i32
  }
  func.func @transform_1(%arg0: i32) -> (i32, i32, i32) {
    %c0_i32 = arith.constant 0 : i32
    %c0_i32_0 = arith.constant 0 : i32
    %c0_i32_1 = arith.constant 0 : i32
    return %arg0, %c0_i32, %c0_i32_0 : i32, i32, i32
  }
}

module attributes {stable_mosaic.version = 11 : i64} {
  func.func @kernel(%arg0: i32, %arg1: memref<2x16xbf16, #tpu.memory_space<vmem>>, %arg2: memref<16x32xbf16, #tpu.memory_space<vmem>>, %arg3: memref<1x32xf32, #tpu.memory_space<vmem>>, %arg4: memref<2x32xf32, #tpu.memory_space<vmem>>) attributes {dimension_semantics = [#tpu.dimension_semantics<parallel>], iteration_bounds = array<i64: 1>, scalar_prefetch = 0 : i64, scratch_operands = 0 : i64, tpu.core_type = #tpu.core_type<tc>, window_params = [{transform_indices = @transform_0, window_bounds = array<i64: 2, 16>}, {pipeline_mode = #tpu.pipeline_mode<synchronous>, transform_indices = @transform_1, window_bounds = array<i64: 16, 32>}, {pipeline_mode = #tpu.pipeline_mode<synchronous>, transform_indices = @transform_2, window_bounds = array<i64: 1, 32>}, {transform_indices = @transform_3, window_bounds = array<i64: 2, 32>}]} {
    %c0 = arith.constant 0 : index
    %c0_0 = arith.constant 0 : index
    %0 = vector.load %arg1[%c0, %c0_0] : memref<2x16xbf16, #tpu.memory_space<vmem>>, vector<2x16xbf16>
    %c0_1 = arith.constant 0 : index
    %c0_2 = arith.constant 0 : index
    %1 = vector.load %arg2[%c0_1, %c0_2] : memref<16x32xbf16, #tpu.memory_space<vmem>>, vector<16x32xbf16>
    %cst = arith.constant dense<0.000000e+00> : vector<2x32xf32>
    %2 = tpu.matmul %0, %1, %cst {dimension_numbers = #tpu.dot_dimension_numbers<[1], [0], [0], [1], [0, 0, 1, 1], [], []>} : vector<2x16xbf16>, vector<16x32xbf16>, vector<2x32xf32> -> vector<2x32xf32>
    %c0_3 = arith.constant 0 : index
    %c0_4 = arith.constant 0 : index
    %3 = vector.load %arg3[%c0_3, %c0_4] : memref<1x32xf32, #tpu.memory_space<vmem>>, vector<1x32xf32>
    %4 = vector.broadcast %3 : vector<1x32xf32> to vector<2x32xf32>
    %5 = arith.addf %2, %4 : vector<2x32xf32>
    %cst_5 = arith.constant 0.000000e+00 : f32
    %6 = vector.broadcast %cst_5 : f32 to vector<2x32xf32>
    %7 = arith.maximumf %5, %6 : vector<2x32xf32>
    %c0_6 = arith.constant 0 : index
    %c0_7 = arith.constant 0 : index
    %8 = vector.load %arg4[%c0_6, %c0_7] : memref<2x32xf32, #tpu.memory_space<vmem>>, vector<2x32xf32>
    tpu.vector_store %arg4[%c0_6, %c0_7], %7 {strides = array<i32>} : memref<2x32xf32, #tpu.memory_space<vmem>>, vector<2x32xf32>,
    return
  }
  func.func @transform_0(%arg0: i32) -> (i32, i32) {
    %c0_i32 = arith.constant 0 : i32
    %c0_i32_0 = arith.constant 0 : i32
    return %arg0, %c0_i32 : i32, i32
  }
  func.func @transform_1(%arg0: i32) -> (i32, i32) {
    %c0_i32 = arith.constant 0 : i32
    %c0_i32_0 = arith.constant 0 : i32
    %c0_i32_1 = arith.constant 0 : i32
    return %c0_i32, %c0_i32_0 : i32, i32
  }
  func.func @transform_2(%arg0: i32) -> (i32, i32) {
    %c0_i32 = arith.constant 0 : i32
    %c0_i32_0 = arith.constant 0 : i32
    %c0_i32_1 = arith.constant 0 : i32
    return %c0_i32, %c0_i32_0 : i32, i32
  }
  func.func @transform_3(%arg0: i32) -> (i32, i32) {
    %c0_i32 = arith.constant 0 : i32
    %c0_i32_0 = arith.constant 0 : i32
    return %arg0, %c0_i32 : i32, i32
  }
}

module attributes {stable_mosaic.version = 11 : i64} {
  func.func @kernel(%arg0: i32, %arg1: memref<2x5xf32, #tpu.memory_space<vmem>>, %arg2: memref<2x5xf32, #tpu.memory_space<vmem>>) attributes {dimension_semantics = [#tpu.dimension_semantics<parallel>], iteration_bounds = array<i64: 1>, scalar_prefetch = 0 : i64, scratch_operands = 0 : i64, tpu.core_type = #tpu.core_type<tc>, window_params = [{transform_indices = @transform_0, window_bounds = array<i64: 2, 5>}, {transform_indices = @transform_1, window_bounds = array<i64: 2, 5>}]} {
    %c0 = arith.constant 0 : index
    %c0_0 = arith.constant 0 : index
    %0 = vector.load %arg1[%c0, %c0_0] : memref<2x5xf32, #tpu.memory_space<vmem>>, vector<2x5xf32>
    %cst = arith.constant dense<0xFF800000> : vector<2xf32>
    %1 = vector.multi_reduction <maximumf>, %0, %cst [1] : vector<2x5xf32> to vector<2xf32>
    %2 = vector.shape_cast %1 : vector<2xf32> to vector<2x1xf32>
    %3 = vector.broadcast %2 : vector<2x1xf32> to vector<2x5xf32>
    %4 = arith.subf %0, %3 : vector<2x5xf32>
    %5 = math.exp %4 : vector<2x5xf32>
    %cst_1 = arith.constant dense<0.000000e+00> : vector<2xf32>
    %6 = vector.multi_reduction <add>, %5, %cst_1 [1] : vector<2x5xf32> to vector<2xf32>
    %7 = vector.shape_cast %6 : vector<2xf32> to vector<2x1xf32>
    %8 = vector.broadcast %7 : vector<2x1xf32> to vector<2x5xf32>
    %9 = arith.divf %5, %8 : vector<2x5xf32>
    %c0_2 = arith.constant 0 : index
    %c0_3 = arith.constant 0 : index
    %10 = vector.load %arg2[%c0_2, %c0_3] : memref<2x5xf32, #tpu.memory_space<vmem>>, vector<2x5xf32>
    tpu.vector_store %arg2[%c0_2, %c0_3], %9 {strides = array<i32>} : memref<2x5xf32, #tpu.memory_space<vmem>>, vector<2x5xf32>,
    return
  }
  func.func @transform_0(%arg0: i32) -> (i32, i32) {
    %c0_i32 = arith.constant 0 : i32
    %c0_i32_0 = arith.constant 0 : i32
    return %arg0, %c0_i32 : i32, i32
  }
  func.func @transform_1(%arg0: i32) -> (i32, i32) {
    %c0_i32 = arith.constant 0 : i32
    %c0_i32_0 = arith.constant 0 : i32
    return %arg0, %c0_i32 : i32, i32
  }
}

module attributes {stable_mosaic.version = 11 : i64} {
  func.func @kernel(%arg0: i32, %arg1: memref<2x32xbf16, #tpu.memory_space<vmem>>, %arg2: memref<32x5xbf16, #tpu.memory_space<vmem>>, %arg3: memref<1x5xf32, #tpu.memory_space<vmem>>, %arg4: memref<2x5xf32, #tpu.memory_space<vmem>>) attributes {dimension_semantics = [#tpu.dimension_semantics<parallel>], iteration_bounds = array<i64: 1>, scalar_prefetch = 0 : i64, scratch_operands = 0 : i64, tpu.core_type = #tpu.core_type<tc>, window_params = [{transform_indices = @transform_0, window_bounds = array<i64: 2, 32>}, {pipeline_mode = #tpu.pipeline_mode<synchronous>, transform_indices = @transform_1, window_bounds = array<i64: 32, 5>}, {pipeline_mode = #tpu.pipeline_mode<synchronous>, transform_indices = @transform_2, window_bounds = array<i64: 1, 5>}, {transform_indices = @transform_3, window_bounds = array<i64: 2, 5>}]} {
    %c0 = arith.constant 0 : index
    %c0_0 = arith.constant 0 : index
    %0 = vector.load %arg1[%c0, %c0_0] : memref<2x32xbf16, #tpu.memory_space<vmem>>, vector<2x32xbf16>
    %c0_1 = arith.constant 0 : index
    %c0_2 = arith.constant 0 : index
    %1 = vector.load %arg2[%c0_1, %c0_2] : memref<32x5xbf16, #tpu.memory_space<vmem>>, vector<32x5xbf16>
    %cst = arith.constant dense<0.000000e+00> : vector<2x5xf32>
    %2 = tpu.matmul %0, %1, %cst {dimension_numbers = #tpu.dot_dimension_numbers<[1], [0], [0], [1], [0, 0, 1, 1], [], []>} : vector<2x32xbf16>, vector<32x5xbf16>, vector<2x5xf32> -> vector<2x5xf32>
    %c0_3 = arith.constant 0 : index
    %c0_4 = arith.constant 0 : index
    %3 = vector.load %arg3[%c0_3, %c0_4] : memref<1x5xf32, #tpu.memory_space<vmem>>, vector<1x5xf32>
    %4 = vector.broadcast %3 : vector<1x5xf32> to vector<2x5xf32>
    %5 = arith.addf %2, %4 : vector<2x5xf32>
    %c0_5 = arith.constant 0 : index
    %c0_6 = arith.constant 0 : index
    %6 = vector.load %arg4[%c0_5, %c0_6] : memref<2x5xf32, #tpu.memory_space<vmem>>, vector<2x5xf32>
    tpu.vector_store %arg4[%c0_5, %c0_6], %5 {strides = array<i32>} : memref<2x5xf32, #tpu.memory_space<vmem>>, vector<2x5xf32>,
    return
  }
  func.func @transform_0(%arg0: i32) -> (i32, i32) {
    %c0_i32 = arith.constant 0 : i32
    %c0_i32_0 = arith.constant 0 : i32
    return %arg0, %c0_i32 : i32, i32
  }
  func.func @transform_1(%arg0: i32) -> (i32, i32) {
    %c0_i32 = arith.constant 0 : i32
    %c0_i32_0 = arith.constant 0 : i32
    %c0_i32_1 = arith.constant 0 : i32
    return %c0_i32, %c0_i32_0 : i32, i32
  }
  func.func @transform_2(%arg0: i32) -> (i32, i32) {
    %c0_i32 = arith.constant 0 : i32
    %c0_i32_0 = arith.constant 0 : i32
    %c0_i32_1 = arith.constant 0 : i32
    return %c0_i32, %c0_i32_0 : i32, i32
  }
  func.func @transform_3(%arg0: i32) -> (i32, i32) {
    %c0_i32 = arith.constant 0 : i32
    %c0_i32_0 = arith.constant 0 : i32
    return %arg0, %c0_i32 : i32, i32
  }
}

</mosaic_0001>

<llo_original>
// kernel: edge_conditioned_conv_forward.8
$region0: #{edge_conditioned_conv_forward.8}
  #allocation0 [shape = 'u32[]', space=smem, size = 0x4, offset = 0x4, fixed_abs, tag = 'smem constant byte address 0x4 - core index']
  #allocation1 [shape = 'u32[144,128]{1,0:T(1,128)}', space=vmem, size = 0x12000, scoped, tag = 'internal scratch']
  %s0 = inlined_call_operand.vmem [shape: bf16[16,4], index: 0, kind: input, shape index: {}]
  %s1 = inlined_call_operand.vmem [shape: bf16[4,8], index: 1, kind: input, shape index: {}]
  %s2 = inlined_call_operand.vmem [shape: f32[1,8], index: 2, kind: input, shape index: {}]
  %s3 = inlined_call_operand.vmem [shape: bf16[4,128], index: 3, kind: input, shape index: {}]
  %s4 = inlined_call_operand.vmem [shape: bf16[4,8], index: 4, kind: input, shape index: {}]
  %s5 = inlined_call_operand.vmem [shape: f32[16,8], index: 5, kind: output, shape index: {0}]
  %s6 = inlined_call_operand.vmem [shape: bf16[16,128], index: 6, kind: output, shape index: {1}]
  %s7 = inlined_call_operand.vmem [shape: bf16[16,8], index: 7, kind: output, shape index: {2}]
  %8 = xla_tuple %s5, %s6, %s7
  %s9 = sld [smem:[#allocation0]]
  $region46: #{edge_conditioned_conv_forward.8} parent=0
    _
  %s11 = ssub.s32 1, %s9
  %s12 = scalar_select 0, %s11, %s9
  // Predicated region
  $region2: #{edge_conditioned_conv_forward.8} parent=0 // pred_check
    _
  $region3: #{edge_conditioned_conv_forward.8} parent=0 // pred_check_branch
    %14 = sbr.rel (0) target = $region5
  $region4: #{edge_conditioned_conv_forward.8} parent=0 // pred_region
    _
  $region5: #{edge_conditioned_conv_forward.8} parent=0 // pred_fallthru
    _
  // Predicated region
  $region6: #{edge_conditioned_conv_forward.8} parent=0 // pred_check
    _
  $region7: #{edge_conditioned_conv_forward.8} parent=0 // pred_check_branch
    %16 = sbr.rel (0) target = $region9
  $region8: #{edge_conditioned_conv_forward.8} parent=0 // pred_region
    _
  $region9: #{edge_conditioned_conv_forward.8} parent=0 // pred_fallthru
    _
  // Predicated region
  $region10: #{edge_conditioned_conv_forward.8} parent=0 // pred_check
    _
  $region11: #{edge_conditioned_conv_forward.8} parent=0 // pred_check_branch
    %18 = sbr.rel (0) target = $region13
  $region12: #{edge_conditioned_conv_forward.8} parent=0 // pred_region
    _
  $region13: #{edge_conditioned_conv_forward.8} parent=0 // pred_fallthru
    _
  // Predicated region
  $region14: #{edge_conditioned_conv_forward.8} parent=0 // pred_check
    _
  $region15: #{edge_conditioned_conv_forward.8} parent=0 // pred_check_branch
    %20 = sbr.rel (0) target = $region17
  $region16: #{edge_conditioned_conv_forward.8} parent=0 // pred_region
    _
  $region17: #{edge_conditioned_conv_forward.8} parent=0 // pred_fallthru
    _
  // Predicated region
  $region18: #{edge_conditioned_conv_forward.8} parent=0 // pred_check
    _
  $region19: #{edge_conditioned_conv_forward.8} parent=0 // pred_check_branch
    %22 = sbr.rel (0) target = $region21
  $region20: #{edge_conditioned_conv_forward.8} parent=0 // pred_region
    _
  $region21: #{edge_conditioned_conv_forward.8} parent=0 // pred_fallthru
    _
  %v24 = vld [vmem:[%s0] sm:$0xf]
  %v25 = vld [vmem:[%s0 + $0x4] sm:$0xf]
  %v26 = vld [vmem:[%s1] sm:$0x3]
  %v27 = vld [vmem:[%s2] sm:$0x1]
  %v29 = vlaneseq
  %v30 = vshrl.u32 %v29, 7
  %v31 = vsub.s32 0, %v30
  %v32 = vrot.slane %v27, %v31
  %v36 = vunpack.c.l.b16 %v24
  %v37 = vunpack.c.l.b16 %v25
  %v38 = vpack.c.b16 %v37, %v36
  %vm39 = vcmask 31744
  %v41 = vsel %vm39, %v38, 0
  %vm43 = vcmask 1041408
  %v45 = vsel %vm43, %v26, 0
  %47 = vmatprep.subr.bf16.mxu0 0
  %48 = vmatpush1.bf16.msra.mxu0 %v45
  %49 = vmatprep.subr.bf16.mxu0 0
  %50 = vmatpush1.bf16.msra.mxu0 0
  %51 = vmatprep.subr.bf16.mxu0 0
  %52 = vmatpush1.bf16.msra.mxu0 0
  %53 = vmatprep.subr.bf16.mxu0 0
  %54 = vmatpush1.bf16.msra.mxu0 0
  %55 = vmatprep.subr.bf16.mxu0 0
  %56 = vmatpush1.bf16.msra.mxu0 0
  %57 = vmatprep.subr.bf16.mxu0 0
  %58 = vmatpush1.bf16.msra.mxu0 0
  %59 = vmatprep.subr.bf16.mxu0 0
  %60 = vmatpush1.bf16.msra.mxu0 0
  %61 = vmatprep.subr.bf16.mxu0 0
  %62 = vmatpush1.bf16.msra.mxu0 0
  %63 = vmatprep.subr.bf16.mxu0 0
  %64 = vmatpush1.bf16.msra.mxu0 0
  %65 = vmatprep.subr.bf16.mxu0 0
  %66 = vmatpush1.bf16.msra.mxu0 0
  %67 = vmatprep.subr.bf16.mxu0 0
  %68 = vmatpush1.bf16.msra.mxu0 0
  %69 = vmatprep.subr.bf16.mxu0 0
  %70 = vmatpush1.bf16.msra.mxu0 0
  %71 = vmatprep.subr.bf16.mxu0 0
  %72 = vmatpush1.bf16.msra.mxu0 0
  %73 = vmatprep.subr.bf16.mxu0 0
  %74 = vmatpush1.bf16.msra.mxu0 0
  %75 = vmatprep.subr.bf16.mxu0 0
  %76 = vmatpush1.bf16.msra.mxu0 0
  %77 = vmatprep.subr.bf16.mxu0 0
  %78 = vmatpush1.bf16.msra.mxu0 0
  %79 = vmatprep.mubr.bf16.mxu0 0
  %80 = vmatmul.mubr.bf16.gmra.mrb[0].mxu0 %v41
  %v81 = vpop.f32.mrb[0].mxu0
  %v82 = vadd.f32 %v32, %v81
  %v83 = vpop.f32.mrb[0].mxu0
  %v84 = vpop.f32.mrb[0].mxu0
  %v85 = vadd.f32 %v32, %v84
  %v86 = vpop.f32.mrb[0].mxu0
  %87 = vdwg.mxu0
  %vm88 = vcmask 64512
  %89 = vst.msk [vmem:[%s5] sm:$0xff] %vm88, %v82
  %90 = vst.msk [vmem:[%s5 + $0x8] sm:$0xff] %vm88, %v85
  %v91 = vld [vmem:[%s3] sm:$0x3]
  %v93 = vsel %vm43, %v91, 0
  %95 = vmatprep.subr.bf16.mxu0 0
  %96 = vmatpush1.bf16.msra.mxu0 %v93
  %97 = vmatprep.subr.bf16.mxu0 0
  %98 = vmatpush1.bf16.msra.mxu0 0
  %99 = vmatprep.subr.bf16.mxu0 0
  %100 = vmatpush1.bf16.msra.mxu0 0
  %101 = vmatprep.subr.bf16.mxu0 0
  %102 = vmatpush1.bf16.msra.mxu0 0
  %103 = vmatprep.subr.bf16.mxu0 0
  %104 = vmatpush1.bf16.msra.mxu0 0
  %105 = vmatprep.subr.bf16.mxu0 0
  %106 = vmatpush1.bf16.msra.mxu0 0
  %107 = vmatprep.subr.bf16.mxu0 0
  %108 = vmatpush1.bf16.msra.mxu0 0
  %109 = vmatprep.subr.bf16.mxu0 0
  %110 = vmatpush1.bf16.msra.mxu0 0
  %111 = vmatprep.subr.bf16.mxu0 0
  %112 = vmatpush1.bf16.msra.mxu0 0
  %113 = vmatprep.subr.bf16.mxu0 0
  %114 = vmatpush1.bf16.msra.mxu0 0
  %115 = vmatprep.subr.bf16.mxu0 0
  %116 = vmatpush1.bf16.msra.mxu0 0
  %117 = vmatprep.subr.bf16.mxu0 0
  %118 = vmatpush1.bf16.msra.mxu0 0
  %119 = vmatprep.subr.bf16.mxu0 0
  %120 = vmatpush1.bf16.msra.mxu0 0
  %121 = vmatprep.subr.bf16.mxu0 0
  %122 = vmatpush1.bf16.msra.mxu0 0
  %123 = vmatprep.subr.bf16.mxu0 0
  %124 = vmatpush1.bf16.msra.mxu0 0
  %125 = vmatprep.subr.bf16.mxu0 0
  %126 = vmatpush1.bf16.msra.mxu0 0
  %127 = vmatprep.mubr.bf16.mxu0 0
  %128 = vmatmul.mubr.bf16.gmra.mrb[0].mxu0 %v41
  %v129 = vpop.f32.mrb[0].mxu0
  %v130 = vadd.f32 0.0, %v129
  %v131 = vpop.f32.mrb[0].mxu0
  %v132 = vpop.f32.mrb[0].mxu0
  %v133 = vadd.f32 0.0, %v132
  %v134 = vpop.f32.mrb[0].mxu0
  %135 = vdwg.mxu0
  %v136 = vpack.c.bf16 %v133, %v130
  %v138 = vunpack.c.l.b16 %v136
  %v139 = vunpack.c.h.b16 %v136
  %v140 = vpack.c.b16 %v138, %v138
  %v141 = vpack.c.b16 %v139, %v139
  %144 = vst [vmem:[%s6] sm:$0xf] %v140
  %145 = vst [vmem:[%s6 + $0x4] sm:$0xf] %v141
  %v146 = vld [vmem:[%s4] sm:$0x3]
  %v148 = vsel %vm43, %v146, 0
  %150 = vmatprep.subr.bf16.mxu0 0
  %151 = vmatpush1.bf16.msra.mxu0 %v148
  %152 = vmatprep.subr.bf16.mxu0 0
  %153 = vmatpush1.bf16.msra.mxu0 0
  %154 = vmatprep.subr.bf16.mxu0 0
  %155 = vmatpush1.bf16.msra.mxu0 0
  %156 = vmatprep.subr.bf16.mxu0 0
  %157 = vmatpush1.bf16.msra.mxu0 0
  %158 = vmatprep.subr.bf16.mxu0 0
  %159 = vmatpush1.bf16.msra.mxu0 0
  %160 = vmatprep.subr.bf16.mxu0 0
  %161 = vmatpush1.bf16.msra.mxu0 0
  %162 = vmatprep.subr.bf16.mxu0 0
  %163 = vmatpush1.bf16.msra.mxu0 0
  %164 = vmatprep.subr.bf16.mxu0 0
  %165 = vmatpush1.bf16.msra.mxu0 0
  %166 = vmatprep.subr.bf16.mxu0 0
  %167 = vmatpush1.bf16.msra.mxu0 0
  %168 = vmatprep.subr.bf16.mxu0 0
  %169 = vmatpush1.bf16.msra.mxu0 0
  %170 = vmatprep.subr.bf16.mxu0 0
  %171 = vmatpush1.bf16.msra.mxu0 0
  %172 = vmatprep.subr.bf16.mxu0 0
  %173 = vmatpush1.bf16.msra.mxu0 0
  %174 = vmatprep.subr.bf16.mxu0 0
  %175 = vmatpush1.bf16.msra.mxu0 0
  %176 = vmatprep.subr.bf16.mxu0 0
  %177 = vmatpush1.bf16.msra.mxu0 0
  %178 = vmatprep.subr.bf16.mxu0 0
  %179 = vmatpush1.bf16.msra.mxu0 0
  %180 = vmatprep.subr.bf16.mxu0 0
  %181 = vmatpush1.bf16.msra.mxu0 0
  %182 = vmatprep.mubr.bf16.mxu0 0
  %183 = vmatmul.mubr.bf16.gmra.mrb[0].mxu0 %v41
  %v184 = vpop.f32.mrb[0].mxu0
  %v185 = vadd.f32 0.0, %v184
  %v186 = vpop.f32.mrb[0].mxu0
  %v187 = vpop.f32.mrb[0].mxu0
  %v188 = vadd.f32 0.0, %v187
  %v189 = vpop.f32.mrb[0].mxu0
  %190 = vdwg.mxu0
  %v191 = vpack.c.bf16 %v188, %v185
  %v193 = vunpack.c.l.b16 %v191
  %v194 = vunpack.c.h.b16 %v191
  %v195 = vpack.c.b16 %v193, %v193
  %v196 = vpack.c.b16 %v194, %v194
  %vm199 = vcmask 60416
  %200 = vst.msk [vmem:[%s7] sm:$0xf] %vm199, %v195
  %201 = vst.msk [vmem:[%s7 + $0x4] sm:$0xf] %vm199, %v196
  // Predicated region
  $region22: #{edge_conditioned_conv_forward.8} parent=0 // pred_check
    _
  $region23: #{edge_conditioned_conv_forward.8} parent=0 // pred_check_branch
    %203 = sbr.rel (0) target = $region25
  $region24: #{edge_conditioned_conv_forward.8} parent=0 // pred_region
    _
  $region25: #{edge_conditioned_conv_forward.8} parent=0 // pred_fallthru
    _
  // Predicated region
  $region26: #{edge_conditioned_conv_forward.8} parent=0 // pred_check
    _
  $region27: #{edge_conditioned_conv_forward.8} parent=0 // pred_check_branch
    %205 = sbr.rel (0) target = $region29
  $region28: #{edge_conditioned_conv_forward.8} parent=0 // pred_region
    _
  $region29: #{edge_conditioned_conv_forward.8} parent=0 // pred_fallthru
    _
  // Predicated region
  $region30: #{edge_conditioned_conv_forward.8} parent=0 // pred_check
    _
  $region31: #{edge_conditioned_conv_forward.8} parent=0 // pred_check_branch
    %207 = sbr.rel (0) target = $region33
  $region32: #{edge_conditioned_conv_forward.8} parent=0 // pred_region
    _
  $region33: #{edge_conditioned_conv_forward.8} parent=0 // pred_fallthru
    _
  // Predicated region
  $region34: #{edge_conditioned_conv_forward.8} parent=0 // pred_check
    _
  $region35: #{edge_conditioned_conv_forward.8} parent=0 // pred_check_branch
    %209 = sbr.rel (0) target = $region37
  $region36: #{edge_conditioned_conv_forward.8} parent=0 // pred_region
    _
  $region37: #{edge_conditioned_conv_forward.8} parent=0 // pred_fallthru
    _
  // Predicated region
  $region38: #{edge_conditioned_conv_forward.8} parent=0 // pred_check
    _
  $region39: #{edge_conditioned_conv_forward.8} parent=0 // pred_check_branch
    %211 = sbr.rel (0) target = $region41
  $region40: #{edge_conditioned_conv_forward.8} parent=0 // pred_region
    _
  $region41: #{edge_conditioned_conv_forward.8} parent=0 // pred_fallthru
    _
  // Predicated region
  $region42: #{edge_conditioned_conv_forward.8} parent=0 // pred_check
    _
  $region43: #{edge_conditioned_conv_forward.8} parent=0 // pred_check_branch
    %213 = sbr.rel (0) target = $region45
  $region44: #{edge_conditioned_conv_forward.8} parent=0 // pred_region
    _
  $region45: #{edge_conditioned_conv_forward.8} parent=0 // pred_fallthru
    _

// kernel: edge_conditioned_conv_forward.10
$region0: #{edge_conditioned_conv_forward.10}
  #allocation0 [shape = 'u32[]', space=smem, size = 0x4, offset = 0x4, fixed_abs, tag = 'smem constant byte address 0x4 - core index']
  #allocation1 [shape = 'u32[144,128]{1,0:T(1,128)}', space=vmem, size = 0x12000, scoped, tag = 'internal scratch']
  %s0 = inlined_call_operand.vmem [shape: bf16[16,8], index: 0, kind: input, shape index: {}]
  %s1 = inlined_call_operand.vmem [shape: bf16[8,16], index: 1, kind: input, shape index: {}]
  %s2 = inlined_call_operand.vmem [shape: f32[1,16], index: 2, kind: input, shape index: {}]
  %s3 = inlined_call_operand.vmem [shape: bf16[8,256], index: 3, kind: input, shape index: {}]
  %s4 = inlined_call_operand.vmem [shape: bf16[8,16], index: 4, kind: input, shape index: {}]
  %s5 = inlined_call_operand.vmem [shape: f32[16,16], index: 5, kind: output, shape index: {0}]
  %s6 = inlined_call_operand.vmem [shape: bf16[16,256], index: 6, kind: output, shape index: {1}]
  %s7 = inlined_call_operand.vmem [shape: bf16[16,16], index: 7, kind: output, shape index: {2}]
  %8 = xla_tuple %s5, %s6, %s7
  %s9 = sld [smem:[#allocation0]]
  $region46: #{edge_conditioned_conv_forward.10} parent=0
    _
  %s11 = ssub.s32 1, %s9
  %s12 = scalar_select 0, %s11, %s9
  // Predicated region
  $region2: #{edge_conditioned_conv_forward.10} parent=0 // pred_check
    _
  $region3: #{edge_conditioned_conv_forward.10} parent=0 // pred_check_branch
    %14 = sbr.rel (0) target = $region5
  $region4: #{edge_conditioned_conv_forward.10} parent=0 // pred_region
    _
  $region5: #{edge_conditioned_conv_forward.10} parent=0 // pred_fallthru
    _
  // Predicated region
  $region6: #{edge_conditioned_conv_forward.10} parent=0 // pred_check
    _
  $region7: #{edge_conditioned_conv_forward.10} parent=0 // pred_check_branch
    %16 = sbr.rel (0) target = $region9
  $region8: #{edge_conditioned_conv_forward.10} parent=0 // pred_region
    _
  $region9: #{edge_conditioned_conv_forward.10} parent=0 // pred_fallthru
    _
  // Predicated region
  $region10: #{edge_conditioned_conv_forward.10} parent=0 // pred_check
    _
  $region11: #{edge_conditioned_conv_forward.10} parent=0 // pred_check_branch
    %18 = sbr.rel (0) target = $region13
  $region12: #{edge_conditioned_conv_forward.10} parent=0 // pred_region
    _
  $region13: #{edge_conditioned_conv_forward.10} parent=0 // pred_fallthru
    _
  // Predicated region
  $region14: #{edge_conditioned_conv_forward.10} parent=0 // pred_check
    _
  $region15: #{edge_conditioned_conv_forward.10} parent=0 // pred_check_branch
    %20 = sbr.rel (0) target = $region17
  $region16: #{edge_conditioned_conv_forward.10} parent=0 // pred_region
    _
  $region17: #{edge_conditioned_conv_forward.10} parent=0 // pred_fallthru
    _
  // Predicated region
  $region18: #{edge_conditioned_conv_forward.10} parent=0 // pred_check
    _
  $region19: #{edge_conditioned_conv_forward.10} parent=0 // pred_check_branch
    %22 = sbr.rel (0) target = $region21
  $region20: #{edge_conditioned_conv_forward.10} parent=0 // pred_region
    _
  $region21: #{edge_conditioned_conv_forward.10} parent=0 // pred_fallthru
    _
  %v24 = vld [vmem:[%s0] sm:$0xf]
  %v25 = vld [vmem:[%s0 + $0x4] sm:$0xf]
  %v26 = vld [vmem:[%s1] sm:$0xf]
  %v27 = vld [vmem:[%s2] sm:$0x1]
  %v29 = vlaneseq
  %v30 = vshrl.u32 %v29, 7
  %v31 = vsub.s32 0, %v30
  %v32 = vrot.slane %v27, %v31
  %v36 = vunpack.c.l.b16 %v24
  %v37 = vunpack.c.l.b16 %v25
  %v38 = vpack.c.b16 %v37, %v36
  %vm39 = vcmask 64512
  %v41 = vsel %vm39, %v38, 0
  %vm43 = vcmask 1043456
  %v45 = vsel %vm43, %v26, 0
  %47 = vmatprep.subr.bf16.mxu0 0
  %48 = vmatpush1.bf16.msra.mxu0 %v45
  %49 = vmatprep.subr.bf16.mxu0 0
  %50 = vmatpush1.bf16.msra.mxu0 0
  %51 = vmatprep.subr.bf16.mxu0 0
  %52 = vmatpush1.bf16.msra.mxu0 0
  %53 = vmatprep.subr.bf16.mxu0 0
  %54 = vmatpush1.bf16.msra.mxu0 0
  %55 = vmatprep.subr.bf16.mxu0 0
  %56 = vmatpush1.bf16.msra.mxu0 0
  %57 = vmatprep.subr.bf16.mxu0 0
  %58 = vmatpush1.bf16.msra.mxu0 0
  %59 = vmatprep.subr.bf16.mxu0 0
  %60 = vmatpush1.bf16.msra.mxu0 0
  %61 = vmatprep.subr.bf16.mxu0 0
  %62 = vmatpush1.bf16.msra.mxu0 0
  %63 = vmatprep.subr.bf16.mxu0 0
  %64 = vmatpush1.bf16.msra.mxu0 0
  %65 = vmatprep.subr.bf16.mxu0 0
  %66 = vmatpush1.bf16.msra.mxu0 0
  %67 = vmatprep.subr.bf16.mxu0 0
  %68 = vmatpush1.bf16.msra.mxu0 0
  %69 = vmatprep.subr.bf16.mxu0 0
  %70 = vmatpush1.bf16.msra.mxu0 0
  %71 = vmatprep.subr.bf16.mxu0 0
  %72 = vmatpush1.bf16.msra.mxu0 0
  %73 = vmatprep.subr.bf16.mxu0 0
  %74 = vmatpush1.bf16.msra.mxu0 0
  %75 = vmatprep.subr.bf16.mxu0 0
  %76 = vmatpush1.bf16.msra.mxu0 0
  %77 = vmatprep.subr.bf16.mxu0 0
  %78 = vmatpush1.bf16.msra.mxu0 0
  %79 = vmatprep.mubr.bf16.mxu0 0
  %80 = vmatmul.mubr.bf16.gmra.mrb[0].mxu0 %v41
  %v81 = vpop.f32.mrb[0].mxu0
  %v82 = vadd.f32 %v32, %v81
  %v83 = vpop.f32.mrb[0].mxu0
  %v84 = vpop.f32.mrb[0].mxu0
  %v85 = vadd.f32 %v32, %v84
  %v86 = vpop.f32.mrb[0].mxu0
  %87 = vdwg.mxu0
  %vm88 = vcmask 130048
  %89 = vst.msk [vmem:[%s5] sm:$0xff] %vm88, %v82
  %90 = vst.msk [vmem:[%s5 + $0x8] sm:$0xff] %vm88, %v85
  %v91 = vld [vmem:[%s3] sm:$0xff]
  %v93 = vunpack.c.l.b16 %v91
  %v94 = vunpack.c.h.b16 %v91
  %v95 = vpack.c.b16 %v93, %v93
  %v96 = vpack.c.b16 %v94, %v94
  %v98 = vsel %vm43, %v95, 0
  %v101 = vsel %vm43, %v96, 0
  %103 = vmatprep.subr.bf16.mxu0 %v101
  %104 = vmatpush1.bf16.msra.mxu0 %v98
  %105 = vmatprep.subr.bf16.mxu0 0
  %106 = vmatpush1.bf16.msra.mxu0 0
  %107 = vmatprep.subr.bf16.mxu0 0
  %108 = vmatpush1.bf16.msra.mxu0 0
  %109 = vmatprep.subr.bf16.mxu0 0
  %110 = vmatpush1.bf16.msra.mxu0 0
  %111 = vmatprep.subr.bf16.mxu0 0
  %112 = vmatpush1.bf16.msra.mxu0 0
  %113 = vmatprep.subr.bf16.mxu0 0
  %114 = vmatpush1.bf16.msra.mxu0 0
  %115 = vmatprep.subr.bf16.mxu0 0
  %116 = vmatpush1.bf16.msra.mxu0 0
  %117 = vmatprep.subr.bf16.mxu0 0
  %118 = vmatpush1.bf16.msra.mxu0 0
  %119 = vmatprep.subr.bf16.mxu0 0
  %120 = vmatpush1.bf16.msra.mxu0 0
  %121 = vmatprep.subr.bf16.mxu0 0
  %122 = vmatpush1.bf16.msra.mxu0 0
  %123 = vmatprep.subr.bf16.mxu0 0
  %124 = vmatpush1.bf16.msra.mxu0 0
  %125 = vmatprep.subr.bf16.mxu0 0
  %126 = vmatpush1.bf16.msra.mxu0 0
  %127 = vmatprep.subr.bf16.mxu0 0
  %128 = vmatpush1.bf16.msra.mxu0 0
  %129 = vmatprep.subr.bf16.mxu0 0
  %130 = vmatpush1.bf16.msra.mxu0 0
  %131 = vmatprep.subr.bf16.mxu0 0
  %132 = vmatpush1.bf16.msra.mxu0 0
  %133 = vmatprep.subr.bf16.mxu0 0
  %134 = vmatpush1.bf16.msra.mxu0 0
  %135 = vmatprep.mubr.bf16.mxu0 0
  %136 = vmatmul.mubr.bf16.gmra.mrb[0].mxu0 %v41
  %v137 = vpop.f32.mrb[0].mxu0
  %v138 = vadd.f32 0.0, %v137
  %v139 = vpop.f32.mrb[0].mxu0
  %v140 = vadd.f32 0.0, %v139
  %v141 = vpop.f32.mrb[0].mxu0
  %v142 = vadd.f32 0.0, %v141
  %v143 = vpop.f32.mrb[0].mxu0
  %v144 = vadd.f32 0.0, %v143
  %145 = vdwg.mxu0
  %v146 = vpack.c.bf16 %v142, %v138
  %v147 = vpack.c.bf16 %v144, %v140
  %v150 = vunpack.c.l.b16 %v146
  %v151 = vunpack.c.l.b16 %v147
  %v152 = vunpack.c.h.b16 %v146
  %v153 = vunpack.c.h.b16 %v147
  %v154 = vpack.c.b16 %v151, %v150
  %v155 = vpack.c.b16 %v153, %v152
  %158 = vst [vmem:[%s6] sm:$0xff] %v154
  %159 = vst [vmem:[%s6 + $0x8] sm:$0xff] %v155
  %v160 = vld [vmem:[%s4] sm:$0xf]
  %v162 = vsel %vm43, %v160, 0
  %164 = vmatprep.subr.bf16.mxu0 0
  %165 = vmatpush1.bf16.msra.mxu0 %v162
  %166 = vmatprep.subr.bf16.mxu0 0
  %167 = vmatpush1.bf16.msra.mxu0 0
  %168 = vmatprep.subr.bf16.mxu0 0
  %169 = vmatpush1.bf16.msra.mxu0 0
  %170 = vmatprep.subr.bf16.mxu0 0
  %171 = vmatpush1.bf16.msra.mxu0 0
  %172 = vmatprep.subr.bf16.mxu0 0
  %173 = vmatpush1.bf16.msra.mxu0 0
  %174 = vmatprep.subr.bf16.mxu0 0
  %175 = vmatpush1.bf16.msra.mxu0 0
  %176 = vmatprep.subr.bf16.mxu0 0
  %177 = vmatpush1.bf16.msra.mxu0 0
  %178 = vmatprep.subr.bf16.mxu0 0
  %179 = vmatpush1.bf16.msra.mxu0 0
  %180 = vmatprep.subr.bf16.mxu0 0
  %181 = vmatpush1.bf16.msra.mxu0 0
  %182 = vmatprep.subr.bf16.mxu0 0
  %183 = vmatpush1.bf16.msra.mxu0 0
  %184 = vmatprep.subr.bf16.mxu0 0
  %185 = vmatpush1.bf16.msra.mxu0 0
  %186 = vmatprep.subr.bf16.mxu0 0
  %187 = vmatpush1.bf16.msra.mxu0 0
  %188 = vmatprep.subr.bf16.mxu0 0
  %189 = vmatpush1.bf16.msra.mxu0 0
  %190 = vmatprep.subr.bf16.mxu0 0
  %191 = vmatpush1.bf16.msra.mxu0 0
  %192 = vmatprep.subr.bf16.mxu0 0
  %193 = vmatpush1.bf16.msra.mxu0 0
  %194 = vmatprep.subr.bf16.mxu0 0
  %195 = vmatpush1.bf16.msra.mxu0 0
  %196 = vmatprep.mubr.bf16.mxu0 0
  %197 = vmatmul.mubr.bf16.gmra.mrb[0].mxu0 %v41
  %v198 = vpop.f32.mrb[0].mxu0
  %v199 = vadd.f32 0.0, %v198
  %v200 = vpop.f32.mrb[0].mxu0
  %v201 = vpop.f32.mrb[0].mxu0
  %v202 = vadd.f32 0.0, %v201
  %v203 = vpop.f32.mrb[0].mxu0
  %204 = vdwg.mxu0
  %v205 = vpack.c.bf16 %v202, %v199
  %v207 = vunpack.c.l.b16 %v205
  %v208 = vunpack.c.h.b16 %v205
  %v209 = vpack.c.b16 %v207, %v207
  %v210 = vpack.c.b16 %v208, %v208
  %vm213 = vcmask 125952
  %214 = vst.msk [vmem:[%s7] sm:$0xf] %vm213, %v209
  %215 = vst.msk [vmem:[%s7 + $0x4] sm:$0xf] %vm213, %v210
  // Predicated region
  $region22: #{edge_conditioned_conv_forward.10} parent=0 // pred_check
    _
  $region23: #{edge_conditioned_conv_forward.10} parent=0 // pred_check_branch
    %217 = sbr.rel (0) target = $region25
  $region24: #{edge_conditioned_conv_forward.10} parent=0 // pred_region
    _
  $region25: #{edge_conditioned_conv_forward.10} parent=0 // pred_fallthru
    _
  // Predicated region
  $region26: #{edge_conditioned_conv_forward.10} parent=0 // pred_check
    _
  $region27: #{edge_conditioned_conv_forward.10} parent=0 // pred_check_branch
    %219 = sbr.rel (0) target = $region29
  $region28: #{edge_conditioned_conv_forward.10} parent=0 // pred_region
    _
  $region29: #{edge_conditioned_conv_forward.10} parent=0 // pred_fallthru
    _
  // Predicated region
  $region30: #{edge_conditioned_conv_forward.10} parent=0 // pred_check
    _
  $region31: #{edge_conditioned_conv_forward.10} parent=0 // pred_check_branch
    %221 = sbr.rel (0) target = $region33
  $region32: #{edge_conditioned_conv_forward.10} parent=0 // pred_region
    _
  $region33: #{edge_conditioned_conv_forward.10} parent=0 // pred_fallthru
    _
  // Predicated region
  $region34: #{edge_conditioned_conv_forward.10} parent=0 // pred_check
    _
  $region35: #{edge_conditioned_conv_forward.10} parent=0 // pred_check_branch
    %223 = sbr.rel (0) target = $region37
  $region36: #{edge_conditioned_conv_forward.10} parent=0 // pred_region
    _
  $region37: #{edge_conditioned_conv_forward.10} parent=0 // pred_fallthru
    _
  // Predicated region
  $region38: #{edge_conditioned_conv_forward.10} parent=0 // pred_check
    _
  $region39: #{edge_conditioned_conv_forward.10} parent=0 // pred_check_branch
    %225 = sbr.rel (0) target = $region41
  $region40: #{edge_conditioned_conv_forward.10} parent=0 // pred_region
    _
  $region41: #{edge_conditioned_conv_forward.10} parent=0 // pred_fallthru
    _
  // Predicated region
  $region42: #{edge_conditioned_conv_forward.10} parent=0 // pred_check
    _
  $region43: #{edge_conditioned_conv_forward.10} parent=0 // pred_check_branch
    %227 = sbr.rel (0) target = $region45
  $region44: #{edge_conditioned_conv_forward.10} parent=0 // pred_region
    _
  $region45: #{edge_conditioned_conv_forward.10} parent=0 // pred_fallthru
    _

// kernel: edge_conditioned_conv_forward.9
$region0: #{edge_conditioned_conv_forward.9}
  #allocation0 [shape = 'u32[]', space=smem, size = 0x4, offset = 0x4, fixed_abs, tag = 'smem constant byte address 0x4 - core index']
  #allocation1 [shape = 'u32[144,128]{1,0:T(1,128)}', space=vmem, size = 0x12000, scoped, tag = 'internal scratch']
  #allocation2 [shape = 'bf16[8,128]{1,0:T(8,128)(2,1)}', space=vmem, size = 0x800, scoped, tag = 'scratch operand']
  %s0 = inlined_call_operand.vmem [shape: bf16[2,8,8,3], index: 0, kind: input, shape index: {}]
  %s1 = inlined_call_operand.vmem [shape: bf16[2,8,8,1], index: 1, kind: input, shape index: {}]
  %s2 = inlined_call_operand.vmem [shape: bf16[2,8,8], index: 2, kind: input, shape index: {}]
  %s3 = inlined_call_operand.vmem [shape: bf16[2,128,8], index: 3, kind: input, shape index: {}]
  %s4 = inlined_call_operand.vmem [shape: bf16[2,8,8], index: 4, kind: input, shape index: {}]
  %s5 = inlined_call_operand.vmem [shape: f32[2,8,8], index: 5, kind: input, shape index: {}]
  %s6 = inlined_call_operand.vmem [shape: f32[2,8,1], index: 6, kind: input, shape index: {}]
  %s7 = inlined_call_operand.vmem [shape: bf16[3,16], index: 7, kind: input, shape index: {}]
  %s8 = inlined_call_operand.vmem [shape: bf16[16,16], index: 8, kind: input, shape index: {}]
  %s9 = inlined_call_operand.vmem [shape: f32[1,16], index: 9, kind: input, shape index: {}]
  %s10 = inlined_call_operand.vmem [shape: f32[1,16], index: 10, kind: input, shape index: {}]
  %s11 = inlined_call_operand.vmem [shape: f32[2,8,8], index: 11, kind: output, shape index: {}]
  %s12 = sld [smem:[#allocation0]]
  $region77: #{edge_conditioned_conv_forward.9} parent=0
    _
  %s14 = ssub.s32 1, %s12
  %s15 = scalar_select 0, %s14, %s12
  loop: start=0, step=1, limit=4
  $region2: #{edge_conditioned_conv_forward.9} parent=0 // loop_pre_header
    _
  $region3: #{edge_conditioned_conv_forward.9} parent=0 // loop_header
    %s17 = sphi 0, %s21
    %p18 = scmp.ge.s32.totalorder %s17, 4
    %s24 = sphi 0, %s36
    %s25 = sphi 0, %s32
    %s26 = sphi 0, %s24
    %s27 = sphi 0, %s25
    %s28 = sphi 0, %s26
    %s29 = sphi 0, %s27
    %s41 = sphi 0, %s43
    %s44 = sphi 0, %s41
    %s45 = sphi 0, %s44
    %s61 = sphi 0, %s45
    %s69 = sphi 0, %s71
    %s72 = sphi 0, %s69
    %s73 = sphi 0, %s72
    %s89 = sphi 0, %s73
    %s97 = sphi 0, %s99
    %s100 = sphi 0, %s97
    %s101 = sphi 0, %s100
    %s117 = sphi 0, %s101
    %s123 = sphi 0, %s125
    %s126 = sphi 0, %s123
    %s127 = sphi 0, %s126
    %s143 = sphi 0, %s127
    %s149 = sphi 0, %s151
    %s152 = sphi 0, %s149
    %s153 = sphi 0, %s152
    %s169 = sphi 0, %s153
    %s177 = sphi 0, %s179
    %s180 = sphi 0, %s177
    %s181 = sphi 0, %s180
    %s197 = sphi 0, %s181
    %s205 = sphi 0, %s207
    %s208 = sphi 0, %s205
    %s209 = sphi 0, %s208
    %s225 = sphi 0, %s209
    %s229 = sphi 0, %s229
    %s231 = sphi 0, %s229
    %s232 = sphi 0, %s231
    %s246 = sphi 0, %s232
    %s250 = sphi 0, %s250
    %s252 = sphi 0, %s250
    %s253 = sphi 0, %s252
    %s267 = sphi 0, %s253
    %s271 = sphi 0, %s271
    %s273 = sphi 0, %s271
    %s274 = sphi 0, %s273
    %s288 = sphi 0, %s274
    %s292 = sphi 0, %s292
    %s294 = sphi 0, %s292
    %s295 = sphi 0, %s294
    %s309 = sphi 0, %s295
    %s317 = sphi 0, %s319
    %s320 = sphi 0, %s317
    %s321 = sphi 0, %s320
    %s337 = sphi 0, %s321
  $region4: #{edge_conditioned_conv_forward.9} parent=0 // loop_header_branch
    %20 = sbr.rel (%p18) target = $region8
  $region5: #{edge_conditioned_conv_forward.9} parent=0 // loop_body
    %s22 = ssub.s32 %s17, 1
    %s23 = ssub.s32 %s17, 2
    %s30 = sadd.s32 1, %s25
    %p31 = scmp.ge.s32.totalorder %s30, 1
    %s32 = scalar_select %p31, 0, %s30
    %s33 = sadd.s32 1, %s24
    %s34 = scalar_select %p31, %s33, %s24
    %p35 = scmp.ge.s32.totalorder %s34, 2
    %s36 = scalar_select %p35, 0, %s34
    %s37 = ssub.s32 %s24, %s36
    %s38 = ssub.s32 %s25, %s32
    %s39 = sor.u32 %s37, %s38
    %p40 = scmp.eq.s32.totalorder %s39, 0
    %s42 = sadd.s32 %s41, 1
    %s43 = scalar_select %p40, %s41, %s42
    %p46 = pneg %p40
    %p47 = scmp.eq.s32.totalorder %s17, 1
    %p48 = por %p46, %p47
    %p49 = scmp.ne.s32.totalorder %s41, %s44
    %p50 = scmp.eq.s32.totalorder %s17, 0
    %p51 = por %p49, %p50
    %p52 = scmp.ne.s32.totalorder %s41, %s44
    %p53 = scmp.eq.s32.totalorder %s22, 1
    %p54 = por %p52, %p53
    %p55 = scmp.ne.s32.totalorder %s44, %s45
    %p56 = scmp.eq.s32.totalorder %s22, 0
    %p57 = por %p55, %p56
    %p58 = scmp.ne.s32.totalorder %s44, %s45
    %p59 = scmp.eq.s32.totalorder %s23, 1
    %p60 = por %p58, %p59
    %p62 = scmp.ne.s32.totalorder %s45, %s61
    %p63 = scmp.eq.s32.totalorder %s23, 0
    %p64 = por %p62, %p63
    %s65 = ssub.s32 %s24, %s36
    %s66 = ssub.s32 %s25, %s32
    %s67 = sor.u32 %s65, %s66
    %p68 = scmp.eq.s32.totalorder %s67, 0
    %s70 = sadd.s32 %s69, 1
    %s71 = scalar_select %p68, %s69, %s70
    %p74 = pneg %p68
    %p75 = scmp.eq.s32.totalorder %s17, 1
    %p76 = por %p74, %p75
    %p77 = scmp.ne.s32.totalorder %s69, %s72
    %p78 = scmp.eq.s32.totalorder %s17, 0
    %p79 = por %p77, %p78
    %p80 = scmp.ne.s32.totalorder %s69, %s72
    %p81 = scmp.eq.s32.totalorder %s22, 1
    %p82 = por %p80, %p81
    %p83 = scmp.ne.s32.totalorder %s72, %s73
    %p84 = scmp.eq.s32.totalorder %s22, 0
    %p85 = por %p83, %p84
    %p86 = scmp.ne.s32.totalorder %s72, %s73
    %p87 = scmp.eq.s32.totalorder %s23, 1
    %p88 = por %p86, %p87
    %p90 = scmp.ne.s32.totalorder %s73, %s89
    %p91 = scmp.eq.s32.totalorder %s23, 0
    %p92 = por %p90, %p91
    %s93 = ssub.s32 %s24, %s36
    %s94 = ssub.s32 %s25, %s32
    %s95 = sor.u32 %s93, %s94
    %p96 = scmp.eq.s32.totalorder %s95, 0
    %s98 = sadd.s32 %s97, 1
    %s99 = scalar_select %p96, %s97, %s98
    %p102 = pneg %p96
    %p103 = scmp.eq.s32.totalorder %s17, 1
    %p104 = por %p102, %p103
    %p105 = scmp.ne.s32.totalorder %s97, %s100
    %p106 = scmp.eq.s32.totalorder %s17, 0
    %p107 = por %p105, %p106
    %p108 = scmp.ne.s32.totalorder %s97, %s100
    %p109 = scmp.eq.s32.totalorder %s22, 1
    %p110 = por %p108, %p109
    %p111 = scmp.ne.s32.totalorder %s100, %s101
    %p112 = scmp.eq.s32.totalorder %s22, 0
    %p113 = por %p111, %p112
    %p114 = scmp.ne.s32.totalorder %s100, %s101
    %p115 = scmp.eq.s32.totalorder %s23, 1
    %p116 = por %p114, %p115
    %p118 = scmp.ne.s32.totalorder %s101, %s117
    %p119 = scmp.eq.s32.totalorder %s23, 0
    %p120 = por %p118, %p119
    %s121 = ssub.s32 %s24, %s36
    %p122 = scmp.eq.s32.totalorder %s121, 0
    %s124 = sadd.s32 %s123, 1
    %s125 = scalar_select %p122, %s123, %s124
    %p128 = pneg %p122
    %p129 = scmp.eq.s32.totalorder %s17, 1
    %p130 = por %p128, %p129
    %p131 = scmp.ne.s32.totalorder %s123, %s126
    %p132 = scmp.eq.s32.totalorder %s17, 0
    %p133 = por %p131, %p132
    %p134 = scmp.ne.s32.totalorder %s123, %s126
    %p135 = scmp.eq.s32.totalorder %s22, 1
    %p136 = por %p134, %p135
    %p137 = scmp.ne.s32.totalorder %s126, %s127
    %p138 = scmp.eq.s32.totalorder %s22, 0
    %p139 = por %p137, %p138
    %p140 = scmp.ne.s32.totalorder %s126, %s127
    %p141 = scmp.eq.s32.totalorder %s23, 1
    %p142 = por %p140, %p141
    %p144 = scmp.ne.s32.totalorder %s127, %s143
    %p145 = scmp.eq.s32.totalorder %s23, 0
    %p146 = por %p144, %p145
    %s147 = ssub.s32 %s24, %s36
    %p148 = scmp.eq.s32.totalorder %s147, 0
    %s150 = sadd.s32 %s149, 1
    %s151 = scalar_select %p148, %s149, %s150
    %p154 = pneg %p148
    %p155 = scmp.eq.s32.totalorder %s17, 1
    %p156 = por %p154, %p155
    %p157 = scmp.ne.s32.totalorder %s149, %s152
    %p158 = scmp.eq.s32.totalorder %s17, 0
    %p159 = por %p157, %p158
    %p160 = scmp.ne.s32.totalorder %s149, %s152
    %p161 = scmp.eq.s32.totalorder %s22, 1
    %p162 = por %p160, %p161
    %p163 = scmp.ne.s32.totalorder %s152, %s153
    %p164 = scmp.eq.s32.totalorder %s22, 0
    %p165 = por %p163, %p164
    %p166 = scmp.ne.s32.totalorder %s152, %s153
    %p167 = scmp.eq.s32.totalorder %s23, 1
    %p168 = por %p166, %p167
    %p170 = scmp.ne.s32.totalorder %s153, %s169
    %p171 = scmp.eq.s32.totalorder %s23, 0
    %p172 = por %p170, %p171
    %s173 = ssub.s32 %s24, %s36
    %s174 = ssub.s32 %s25, %s32
    %s175 = sor.u32 %s173, %s174
    %p176 = scmp.eq.s32.totalorder %s175, 0
    %s178 = sadd.s32 %s177, 1
    %s179 = scalar_select %p176, %s177, %s178
    %p182 = pneg %p176
    %p183 = scmp.eq.s32.totalorder %s17, 1
    %p184 = por %p182, %p183
    %p185 = scmp.ne.s32.totalorder %s177, %s180
    %p186 = scmp.eq.s32.totalorder %s17, 0
    %p187 = por %p185, %p186
    %p188 = scmp.ne.s32.totalorder %s177, %s180
    %p189 = scmp.eq.s32.totalorder %s22, 1
    %p190 = por %p188, %p189
    %p191 = scmp.ne.s32.totalorder %s180, %s181
    %p192 = scmp.eq.s32.totalorder %s22, 0
    %p193 = por %p191, %p192
    %p194 = scmp.ne.s32.totalorder %s180, %s181
    %p195 = scmp.eq.s32.totalorder %s23, 1
    %p196 = por %p194, %p195
    %p198 = scmp.ne.s32.totalorder %s181, %s197
    %p199 = scmp.eq.s32.totalorder %s23, 0
    %p200 = por %p198, %p199
    %s201 = ssub.s32 %s24, %s36
    %s202 = ssub.s32 %s25, %s32
    %s203 = sor.u32 %s201, %s202
    %p204 = scmp.eq.s32.totalorder %s203, 0
    %s206 = sadd.s32 %s205, 1
    %s207 = scalar_select %p204, %s205, %s206
    %p210 = pneg %p204
    %p211 = scmp.eq.s32.totalorder %s17, 1
    %p212 = por %p210, %p211
    %p213 = scmp.ne.s32.totalorder %s205, %s208
    %p214 = scmp.eq.s32.totalorder %s17, 0
    %p215 = por %p213, %p214
    %p216 = scmp.ne.s32.totalorder %s205, %s208
    %p217 = scmp.eq.s32.totalorder %s22, 1
    %p218 = por %p216, %p217
    %p219 = scmp.ne.s32.totalorder %s208, %s209
    %p220 = scmp.eq.s32.totalorder %s22, 0
    %p221 = por %p219, %p220
    %p222 = scmp.ne.s32.totalorder %s208, %s209
    %p223 = scmp.eq.s32.totalorder %s23, 1
    %p224 = por %p222, %p223
    %p226 = scmp.ne.s32.totalorder %s209, %s225
    %p227 = scmp.eq.s32.totalorder %s23, 0
    %p228 = por %p226, %p227
    %s230 = sadd.s32 %s229, 1
    %p233 = scmp.eq.s32.totalorder %s17, 1
    %p234 = scmp.ne.s32.totalorder %s229, %s231
    %p235 = scmp.eq.s32.totalorder %s17, 0
    %p236 = por %p234, %p235
    %p237 = scmp.ne.s32.totalorder %s229, %s231
    %p238 = scmp.eq.s32.totalorder %s22, 1
    %p239 = por %p237, %p238
    %p240 = scmp.ne.s32.totalorder %s231, %s232
    %p241 = scmp.eq.s32.totalorder %s22, 0
    %p242 = por %p240, %p241
    %p243 = scmp.ne.s32.totalorder %s231, %s232
    %p244 = scmp.eq.s32.totalorder %s23, 1
    %p245 = por %p243, %p244
    %p247 = scmp.ne.s32.totalorder %s232, %s246
    %p248 = scmp.eq.s32.totalorder %s23, 0
    %p249 = por %p247, %p248
    %s251 = sadd.s32 %s250, 1
    %p254 = scmp.eq.s32.totalorder %s17, 1
    %p255 = scmp.ne.s32.totalorder %s250, %s252
    %p256 = scmp.eq.s32.totalorder %s17, 0
    %p257 = por %p255, %p256
    %p258 = scmp.ne.s32.totalorder %s250, %s252
    %p259 = scmp.eq.s32.totalorder %s22, 1
    %p260 = por %p258, %p259
    %p261 = scmp.ne.s32.totalorder %s252, %s253
    %p262 = scmp.eq.s32.totalorder %s22, 0
    %p263 = por %p261, %p262
    %p264 = scmp.ne.s32.totalorder %s252, %s253
    %p265 = scmp.eq.s32.totalorder %s23, 1
    %p266 = por %p264, %p265
    %p268 = scmp.ne.s32.totalorder %s253, %s267
    %p269 = scmp.eq.s32.totalorder %s23, 0
    %p270 = por %p268, %p269
    %s272 = sadd.s32 %s271, 1
    %p275 = scmp.eq.s32.totalorder %s17, 1
    %p276 = scmp.ne.s32.totalorder %s271, %s273
    %p277 = scmp.eq.s32.totalorder %s17, 0
    %p278 = por %p276, %p277
    %p279 = scmp.ne.s32.totalorder %s271, %s273
    %p280 = scmp.eq.s32.totalorder %s22, 1
    %p281 = por %p279, %p280
    %p282 = scmp.ne.s32.totalorder %s273, %s274
    %p283 = scmp.eq.s32.totalorder %s22, 0
    %p284 = por %p282, %p283
    %p285 = scmp.ne.s32.totalorder %s273, %s274
    %p286 = scmp.eq.s32.totalorder %s23, 1
    %p287 = por %p285, %p286
    %p289 = scmp.ne.s32.totalorder %s274, %s288
    %p290 = scmp.eq.s32.totalorder %s23, 0
    %p291 = por %p289, %p290
    %s293 = sadd.s32 %s292, 1
    %p296 = scmp.eq.s32.totalorder %s17, 1
    %p297 = scmp.ne.s32.totalorder %s292, %s294
    %p298 = scmp.eq.s32.totalorder %s17, 0
    %p299 = por %p297, %p298
    %p300 = scmp.ne.s32.totalorder %s292, %s294
    %p301 = scmp.eq.s32.totalorder %s22, 1
    %p302 = por %p300, %p301
    %p303 = scmp.ne.s32.totalorder %s294, %s295
    %p304 = scmp.eq.s32.totalorder %s22, 0
    %p305 = por %p303, %p304
    %p306 = scmp.ne.s32.totalorder %s294, %s295
    %p307 = scmp.eq.s32.totalorder %s23, 1
    %p308 = por %p306, %p307
    %p310 = scmp.ne.s32.totalorder %s295, %s309
    %p311 = scmp.eq.s32.totalorder %s23, 0
    %p312 = por %p310, %p311
    %s313 = ssub.s32 %s24, %s36
    %s314 = ssub.s32 %s25, %s32
    %s315 = sor.u32 %s313, %s314
    %p316 = scmp.eq.s32.totalorder %s315, 0
    %s318 = sadd.s32 %s317, 1
    %s319 = scalar_select %p316, %s317, %s318
    %p322 = pneg %p316
    %p323 = scmp.eq.s32.totalorder %s17, 1
    %p324 = por %p322, %p323
    %p325 = scmp.ne.s32.totalorder %s317, %s320
    %p326 = scmp.eq.s32.totalorder %s17, 0
    %p327 = por %p325, %p326
    %p328 = scmp.ne.s32.totalorder %s317, %s320
    %p329 = scmp.eq.s32.totalorder %s22, 1
    %p330 = por %p328, %p329
    %p331 = scmp.ne.s32.totalorder %s320, %s321
    %p332 = scmp.eq.s32.totalorder %s22, 0
    %p333 = por %p331, %p332
    %p334 = scmp.ne.s32.totalorder %s320, %s321
    %p335 = scmp.eq.s32.totalorder %s23, 1
    %p336 = por %p334, %p335
    %p338 = scmp.ne.s32.totalorder %s321, %s337
    %p339 = scmp.eq.s32.totalorder %s23, 0
    %p340 = por %p338, %p339
    %p341 = scmp.le.s32.totalorder 1, %s17
    %p342 = scmp.lt.s32.totalorder %s17, 3
    %p343 = pnand %p341, %p342
    %p344 = pneg %p343
    // Predicated region
    $region9: #{edge_conditioned_conv_forward.9} parent=5 // pred_check
      _
    $region10: #{edge_conditioned_conv_forward.9} parent=5 // pred_check_branch
      %346 = sbr.rel (%p343) target = $region12
    $region11: #{edge_conditioned_conv_forward.9} parent=5 // pred_region
      %s347 = ssub.s32 %s17, 1
      // Predicated region
      $region13: #{edge_conditioned_conv_forward.9} parent=11 // pred_check
        %p348 = pneg %p242
      $region14: #{edge_conditioned_conv_forward.9} parent=11 // pred_check_branch
        %350 = sbr.rel (%p348) target = $region16
      $region15: #{edge_conditioned_conv_forward.9} parent=11 // pred_region
        _
      $region16: #{edge_conditioned_conv_forward.9} parent=11 // pred_fallthru
        _
      // Predicated region
      $region17: #{edge_conditioned_conv_forward.9} parent=11 // pred_check
        %p351 = pneg %p263
      $region18: #{edge_conditioned_conv_forward.9} parent=11 // pred_check_branch
        %353 = sbr.rel (%p351) target = $region20
      $region19: #{edge_conditioned_conv_forward.9} parent=11 // pred_region
        _
      $region20: #{edge_conditioned_conv_forward.9} parent=11 // pred_fallthru
        _
      // Predicated region
      $region21: #{edge_conditioned_conv_forward.9} parent=11 // pred_check
        %p354 = pneg %p284
      $region22: #{edge_conditioned_conv_forward.9} parent=11 // pred_check_branch
        %356 = sbr.rel (%p354) target = $region24
      $region23: #{edge_conditioned_conv_forward.9} parent=11 // pred_region
        _
      $region24: #{edge_conditioned_conv_forward.9} parent=11 // pred_fallthru
        _
      // Predicated region
      $region25: #{edge_conditioned_conv_forward.9} parent=11 // pred_check
        %p357 = pneg %p305
      $region26: #{edge_conditioned_conv_forward.9} parent=11 // pred_check_branch
        %359 = sbr.rel (%p357) target = $region28
      $region27: #{edge_conditioned_conv_forward.9} parent=11 // pred_region
        _
      $region28: #{edge_conditioned_conv_forward.9} parent=11 // pred_fallthru
        _
    $region12: #{edge_conditioned_conv_forward.9} parent=5 // pred_fallthru
      _
    %p360 = scmp.lt.s32.totalorder %s17, 2
    // Predicated region
    $region29: #{edge_conditioned_conv_forward.9} parent=5 // pred_check
      %p361 = pneg %p360
    $region30: #{edge_conditioned_conv_forward.9} parent=5 // pred_check_branch
      %363 = sbr.rel (%p361) target = $region32
    $region31: #{edge_conditioned_conv_forward.9} parent=5 // pred_region
      // Predicated region
      $region33: #{edge_conditioned_conv_forward.9} parent=31 // pred_check
        %p364 = pneg %p51
      $region34: #{edge_conditioned_conv_forward.9} parent=31 // pred_check_branch
        %366 = sbr.rel (%p364) target = $region36
      $region35: #{edge_conditioned_conv_forward.9} parent=31 // pred_region
        %p367 = scmp.lt.s32.totalorder %s24, 1
        %s368 = scalar_select %p367, %s24, 1
        %p369 = scmp.lt.s32.totalorder %s25, 0
        %s370 = scalar_select %p369, %s25, 0
        %s371 = smul.addr %s368, 8
        %s372 = sadd.s32 %s370, %s371
        %s373 = smul.addr %s372, 4
        %s374 = scalar_lea.vmem %s0, %s373
      $region36: #{edge_conditioned_conv_forward.9} parent=31 // pred_fallthru
        _
      // Predicated region
      $region37: #{edge_conditioned_conv_forward.9} parent=31 // pred_check
        %p375 = pneg %p79
      $region38: #{edge_conditioned_conv_forward.9} parent=31 // pred_check_branch
        %377 = sbr.rel (%p375) target = $region40
      $region39: #{edge_conditioned_conv_forward.9} parent=31 // pred_region
        %p378 = scmp.lt.s32.totalorder %s24, 1
        %s379 = scalar_select %p378, %s24, 1
        %p380 = scmp.lt.s32.totalorder %s25, 0
        %s381 = scalar_select %p380, %s25, 0
        %s382 = smul.addr %s379, 8
        %s383 = sadd.s32 %s381, %s382
        %s384 = smul.addr %s383, 4
        %s385 = scalar_lea.vmem %s1, %s384
      $region40: #{edge_conditioned_conv_forward.9} parent=31 // pred_fallthru
        _
      // Predicated region
      $region41: #{edge_conditioned_conv_forward.9} parent=31 // pred_check
        %p386 = pneg %p107
      $region42: #{edge_conditioned_conv_forward.9} parent=31 // pred_check_branch
        %388 = sbr.rel (%p386) target = $region44
      $region43: #{edge_conditioned_conv_forward.9} parent=31 // pred_region
        %p389 = scmp.lt.s32.totalorder %s24, 1
        %s390 = scalar_select %p389, %s24, 1
        %p391 = scmp.lt.s32.totalorder %s25, 0
        %s392 = scalar_select %p391, %s25, 0
        %s393 = sadd.s32 %s392, %s390
        %s394 = smul.addr %s393, 4
        %s395 = scalar_lea.vmem %s2, %s394
      $region44: #{edge_conditioned_conv_forward.9} parent=31 // pred_fallthru
        _
      // Predicated region
      $region45: #{edge_conditioned_conv_forward.9} parent=31 // pred_check
        %p396 = pneg %p133
      $region46: #{edge_conditioned_conv_forward.9} parent=31 // pred_check_branch
        %398 = sbr.rel (%p396) target = $region48
      $region47: #{edge_conditioned_conv_forward.9} parent=31 // pred_region
        %p399 = scmp.lt.s32.totalorder %s24, 1
        %s400 = scalar_select %p399, %s24, 1
        %s401 = smul.addr %s400, 16
        %s402 = smul.addr %s401, 4
        %s403 = scalar_lea.vmem %s3, %s402
      $region48: #{edge_conditioned_conv_forward.9} parent=31 // pred_fallthru
        _
      // Predicated region
      $region49: #{edge_conditioned_conv_forward.9} parent=31 // pred_check
        %p404 = pneg %p159
      $region50: #{edge_conditioned_conv_forward.9} parent=31 // pred_check_branch
        %406 = sbr.rel (%p404) target = $region52
      $region51: #{edge_conditioned_conv_forward.9} parent=31 // pred_region
        %p407 = scmp.lt.s32.totalorder %s24, 1
        %s408 = scalar_select %p407, %s24, 1
        %s409 = smul.addr %s408, 4
        %s410 = scalar_lea.vmem %s4, %s409
      $region52: #{edge_conditioned_conv_forward.9} parent=31 // pred_fallthru
        _
      // Predicated region
      $region53: #{edge_conditioned_conv_forward.9} parent=31 // pred_check
        %p411 = pneg %p187
      $region54: #{edge_conditioned_conv_forward.9} parent=31 // pred_check_branch
        %413 = sbr.rel (%p411) target = $region56
      $region55: #{edge_conditioned_conv_forward.9} parent=31 // pred_region
        %p414 = scmp.lt.s32.totalorder %s24, 1
        %s415 = scalar_select %p414, %s24, 1
        %p416 = scmp.lt.s32.totalorder %s25, 0
        %s417 = scalar_select %p416, %s25, 0
        %s418 = sadd.s32 %s417, %s415
        %s419 = smul.addr %s418, 8
        %s420 = scalar_lea.vmem %s5, %s419
      $region56: #{edge_conditioned_conv_forward.9} parent=31 // pred_fallthru
        _
      // Predicated region
      $region57: #{edge_conditioned_conv_forward.9} parent=31 // pred_check
        %p421 = pneg %p215
      $region58: #{edge_conditioned_conv_forward.9} parent=31 // pred_check_branch
        %423 = sbr.rel (%p421) target = $region60
      $region59: #{edge_conditioned_conv_forward.9} parent=31 // pred_region
        %p424 = scmp.lt.s32.totalorder %s24, 1
        %s425 = scalar_select %p424, %s24, 1
        %p426 = scmp.lt.s32.totalorder %s25, 0
        %s427 = scalar_select %p426, %s25, 0
        %s428 = sadd.s32 %s427, %s425
        %s429 = smul.addr %s428, 8
        %s430 = scalar_lea.vmem %s6, %s429
      $region60: #{edge_conditioned_conv_forward.9} parent=31 // pred_fallthru
        _
    $region32: #{edge_conditioned_conv_forward.9} parent=5 // pred_fallthru
      _
    %p431 = scmp.le.s32.totalorder 1, %s17
    %p432 = scmp.lt.s32.totalorder %s17, 3
    %p433 = pnand %p431, %p432
    %p434 = pneg %p433
    // Predicated region
    $region61: #{edge_conditioned_conv_forward.9} parent=5 // pred_check
      _
    $region62: #{edge_conditioned_conv_forward.9} parent=5 // pred_check_branch
      %436 = sbr.rel (%p433) target = $region64
    $region63: #{edge_conditioned_conv_forward.9} parent=5 // pred_region
      %s437 = ssub.s32 %s17, 1
      %p438 = scmp.lt.s32.totalorder %s26, 1
      %s439 = scalar_select %p438, %s26, 1
      %p440 = scmp.lt.s32.totalorder %s27, 0
      %s441 = scalar_select %p440, %s27, 0
      %s442 = smul.addr %s439, 8
      %s443 = sadd.s32 %s441, %s442
      %s444 = smul.addr %s443, 4
      %s445 = scalar_lea.vmem %s0, %s444
      %p446 = pneg %p57
      %p447 = pneg %p54
      %p448 = scmp.lt.s32.totalorder %s26, 1
      %s449 = scalar_select %p448, %s26, 1
      %p450 = scmp.lt.s32.totalorder %s27, 0
      %s451 = scalar_select %p450, %s27, 0
      %s452 = smul.addr %s449, 8
      %s453 = sadd.s32 %s451, %s452
      %s454 = smul.addr %s453, 4
      %s455 = scalar_lea.vmem %s1, %s454
      %p456 = pneg %p85
      %p457 = pneg %p82
      %p458 = scmp.lt.s32.totalorder %s26, 1
      %s459 = scalar_select %p458, %s26, 1
      %p460 = scmp.lt.s32.totalorder %s27, 0
      %s461 = scalar_select %p460, %s27, 0
      %s462 = sadd.s32 %s461, %s459
      %s463 = smul.addr %s462, 4
      %s464 = scalar_lea.vmem %s2, %s463
      %p465 = pneg %p113
      %p466 = pneg %p110
      %p467 = scmp.lt.s32.totalorder %s26, 1
      %s468 = scalar_select %p467, %s26, 1
      %s469 = smul.addr %s468, 16
      %s470 = smul.addr %s469, 4
      %s471 = scalar_lea.vmem %s3, %s470
      %p472 = pneg %p139
      %p473 = pneg %p136
      %p474 = scmp.lt.s32.totalorder %s26, 1
      %s475 = scalar_select %p474, %s26, 1
      %s476 = smul.addr %s475, 4
      %s477 = scalar_lea.vmem %s4, %s476
      %p478 = pneg %p165
      %p479 = pneg %p162
      %p480 = scmp.lt.s32.totalorder %s26, 1
      %s481 = scalar_select %p480, %s26, 1
      %p482 = scmp.lt.s32.totalorder %s27, 0
      %s483 = scalar_select %p482, %s27, 0
      %s484 = sadd.s32 %s483, %s481
      %s485 = smul.addr %s484, 8
      %s486 = scalar_lea.vmem %s5, %s485
      %p487 = pneg %p193
      %p488 = pneg %p190
      %p489 = scmp.lt.s32.totalorder %s26, 1
      %s490 = scalar_select %p489, %s26, 1
      %p491 = scmp.lt.s32.totalorder %s27, 0
      %s492 = scalar_select %p491, %s27, 0
      %s493 = sadd.s32 %s492, %s490
      %s494 = smul.addr %s493, 8
      %s495 = scalar_lea.vmem %s6, %s494
      %p496 = pneg %p221
      %p497 = pneg %p218
      %p498 = pneg %p242
      %p499 = pneg %p239
      %p500 = pneg %p263
      %p501 = pneg %p260
      %p502 = pneg %p284
      %p503 = pneg %p281
      %p504 = pneg %p305
      %p505 = pneg %p302
      %p506 = pneg %p333
      %p507 = pneg %p330
      %p508 = scmp.lt.s32.totalorder %s26, 1
      %s509 = scalar_select %p508, %s26, 1
      %p510 = scmp.lt.s32.totalorder %s27, 0
      %s511 = scalar_select %p510, %s27, 0
      %s512 = sadd.s32 %s511, %s509
      %s513 = smul.addr %s512, 8
      %s514 = scalar_lea.vmem %s11, %s513
      %p515 = scmp.lt.s32.totalorder %s26, 1
      %s516 = scalar_select %p515, %s26, 1
      %p517 = scmp.lt.s32.totalorder %s27, 0
      %s518 = scalar_select %p517, %s27, 0
      %s519 = smul.addr %s516, 8
      %s520 = sadd.s32 %s518, %s519
      %s521 = smul.addr %s520, 4
      %s522 = scalar_lea.vmem %s0, %s521
      %p523 = scmp.lt.s32.totalorder %s26, 1
      %s524 = scalar_select %p523, %s26, 1
      %p525 = scmp.lt.s32.totalorder %s27, 0
      %s526 = scalar_select %p525, %s27, 0
      %s527 = smul.addr %s524, 8
      %s528 = sadd.s32 %s526, %s527
      %s529 = smul.addr %s528, 4
      %s530 = scalar_lea.vmem %s1, %s529
      %p531 = scmp.lt.s32.totalorder %s26, 1
      %s532 = scalar_select %p531, %s26, 1
      %p533 = scmp.lt.s32.totalorder %s27, 0
      %s534 = scalar_select %p533, %s27, 0
      %s535 = sadd.s32 %s534, %s532
      %s536 = smul.addr %s535, 4
      %s537 = scalar_lea.vmem %s2, %s536
      %p538 = scmp.lt.s32.totalorder %s26, 1
      %s539 = scalar_select %p538, %s26, 1
      %s540 = smul.addr %s539, 16
      %s541 = smul.addr %s540, 4
      %s542 = scalar_lea.vmem %s3, %s541
      %p543 = scmp.lt.s32.totalorder %s26, 1
      %s544 = scalar_select %p543, %s26, 1
      %s545 = smul.addr %s544, 4
      %s546 = scalar_lea.vmem %s4, %s545
      %p547 = scmp.lt.s32.totalorder %s26, 1
      %s548 = scalar_select %p547, %s26, 1
      %p549 = scmp.lt.s32.totalorder %s27, 0
      %s550 = scalar_select %p549, %s27, 0
      %s551 = sadd.s32 %s550, %s548
      %s552 = smul.addr %s551, 8
      %s553 = scalar_lea.vmem %s5, %s552
      %p554 = scmp.lt.s32.totalorder %s26, 1
      %s555 = scalar_select %p554, %s26, 1
      %p556 = scmp.lt.s32.totalorder %s27, 0
      %s557 = scalar_select %p556, %s27, 0
      %s558 = sadd.s32 %s557, %s555
      %s559 = smul.addr %s558, 8
      %s560 = scalar_lea.vmem %s6, %s559
      %p561 = scmp.lt.s32.totalorder %s26, 1
      %s562 = scalar_select %p561, %s26, 1
      %p563 = scmp.lt.s32.totalorder %s27, 0
      %s564 = scalar_select %p563, %s27, 0
      %s565 = sadd.s32 %s564, %s562
      %s566 = smul.addr %s565, 8
      %s567 = scalar_lea.vmem %s11, %s566
      %v569 = vld [vmem:[%s522] sm:$0xf]
      %v570 = vld [vmem:[%s7] sm:$0x3]
      %v571 = vld [vmem:[%s9] sm:$0x1]
      %v573 = vlaneseq
      %v574 = vshrl.u32 %v573, 7
      %v575 = vsub.s32 0, %v574
      %v576 = vrot.slane %v571, %v575
      %vm578 = vcmask 23552
      %v580 = vsel %vm578, %v569, 0
      %vm582 = vcmask 1040384
      %vm583 = vcmask 1041408
      %v584 = vsel %vm582, 4294967295, 65535
      %v585 = vsel %vm583, %v584, 0
      %v587 = vand.u32 %v570, %v585
      %589 = vmatprep.subr.bf16.mxu0 0
      %590 = vmatpush1.bf16.msra.mxu0 %v587
      %591 = vmatprep.subr.bf16.mxu0 0
      %592 = vmatpush1.bf16.msra.mxu0 0
      %593 = vmatprep.subr.bf16.mxu0 0
      %594 = vmatpush1.bf16.msra.mxu0 0
      %595 = vmatprep.subr.bf16.mxu0 0
      %596 = vmatpush1.bf16.msra.mxu0 0
      %597 = vmatprep.subr.bf16.mxu0 0
      %598 = vmatpush1.bf16.msra.mxu0 0
      %599 = vmatprep.subr.bf16.mxu0 0
      %600 = vmatpush1.bf16.msra.mxu0 0
      %601 = vmatprep.subr.bf16.mxu0 0
      %602 = vmatpush1.bf16.msra.mxu0 0
      %603 = vmatprep.subr.bf16.mxu0 0
      %604 = vmatpush1.bf16.msra.mxu0 0
      %605 = vmatprep.subr.bf16.mxu0 0
      %606 = vmatpush1.bf16.msra.mxu0 0
      %607 = vmatprep.subr.bf16.mxu0 0
      %608 = vmatpush1.bf16.msra.mxu0 0
      %609 = vmatprep.subr.bf16.mxu0 0
      %610 = vmatpush1.bf16.msra.mxu0 0
      %611 = vmatprep.subr.bf16.mxu0 0
      %612 = vmatpush1.bf16.msra.mxu0 0
      %613 = vmatprep.subr.bf16.mxu0 0
      %614 = vmatpush1.bf16.msra.mxu0 0
      %615 = vmatprep.subr.bf16.mxu0 0
      %616 = vmatpush1.bf16.msra.mxu0 0
      %617 = vmatprep.subr.bf16.mxu0 0
      %618 = vmatpush1.bf16.msra.mxu0 0
      %619 = vmatprep.subr.bf16.mxu0 0
      %620 = vmatpush1.bf16.msra.mxu0 0
      %621 = vmatprep.mubr.bf16.mxu0 0
      %622 = vmatmul.mubr.bf16.gmra.mrb[0].mxu0 %v580
      %v623 = vpop.f32.mrb[0].mxu0
      %v624 = vadd.f32 %v576, %v623
      %v625 = vpop.f32.mrb[0].mxu0
      %v626 = vpop.f32.mrb[0].mxu0
      %v627 = vpop.f32.mrb[0].mxu0
      %628 = vdwg.mxu0
      %v629 = vmax.f32 %v624, 0.0
      %v630 = vpack.c.bf16 %v629, %v629
      %v631 = vld [vmem:[%s8] sm:$0xf]
      %v632 = vld [vmem:[%s8 + $0x4] sm:$0xf]
      %v633 = vld [vmem:[%s10] sm:$0x1]
      %v635 = vlaneseq
      %v636 = vshrl.u32 %v635, 7
      %v637 = vsub.s32 0, %v636
      %v638 = vrot.slane %v633, %v637
      %v642 = vunpack.c.l.b16 %v631
      %v643 = vunpack.c.l.b16 %v632
      %v644 = vpack.c.b16 %v643, %v642
      %vm646 = vcmask 130048
      %v648 = vsel %vm646, %v630, 0
      %650 = vmatprep.subr.bf16.mxu0 0
      %651 = vmatpush1.bf16.msra.mxu0 %v644
      %652 = vmatprep.subr.bf16.mxu0 0
      %653 = vmatpush1.bf16.msra.mxu0 0
      %654 = vmatprep.subr.bf16.mxu0 0
      %655 = vmatpush1.bf16.msra.mxu0 0
      %656 = vmatprep.subr.bf16.mxu0 0
      %657 = vmatpush1.bf16.msra.mxu0 0
      %658 = vmatprep.subr.bf16.mxu0 0
      %659 = vmatpush1.bf16.msra.mxu0 0
      %660 = vmatprep.subr.bf16.mxu0 0
      %661 = vmatpush1.bf16.msra.mxu0 0
      %662 = vmatprep.subr.bf16.mxu0 0
      %663 = vmatpush1.bf16.msra.mxu0 0
      %664 = vmatprep.subr.bf16.mxu0 0
      %665 = vmatpush1.bf16.msra.mxu0 0
      %666 = vmatprep.subr.bf16.mxu0 0
      %667 = vmatpush1.bf16.msra.mxu0 0
      %668 = vmatprep.subr.bf16.mxu0 0
      %669 = vmatpush1.bf16.msra.mxu0 0
      %670 = vmatprep.subr.bf16.mxu0 0
      %671 = vmatpush1.bf16.msra.mxu0 0
      %672 = vmatprep.subr.bf16.mxu0 0
      %673 = vmatpush1.bf16.msra.mxu0 0
      %674 = vmatprep.subr.bf16.mxu0 0
      %675 = vmatpush1.bf16.msra.mxu0 0
      %676 = vmatprep.subr.bf16.mxu0 0
      %677 = vmatpush1.bf16.msra.mxu0 0
      %678 = vmatprep.subr.bf16.mxu0 0
      %679 = vmatpush1.bf16.msra.mxu0 0
      %680 = vmatprep.subr.bf16.mxu0 0
      %681 = vmatpush1.bf16.msra.mxu0 0
      %682 = vmatprep.mubr.bf16.mxu0 0
      %683 = vmatmul.mubr.bf16.gmra.mrb[0].mxu0 %v648
      %v684 = vpop.f32.mrb[0].mxu0
      %v685 = vadd.f32 %v638, %v684
      %v686 = vpop.f32.mrb[0].mxu0
      %v687 = vpop.f32.mrb[0].mxu0
      %v688 = vpop.f32.mrb[0].mxu0
      %689 = vdwg.mxu0
      %v690 = vmax.f32 %v685, 0.0
      %v691 = vpack.c.bf16 %v690, %v690
      %v692 = vld [vmem:[%s530] sm:$0xf]
      %694 = vset.pattern.permute.xlu0 0
      %695 = vperm.xlu0 %694, %v692
      %v696 = vpop.permute.xlu0 %695
      %v699 = vunpack.c.l.s4 839922192
      %v700 = vunpack.c.0.s8 %v699
      %v701 = vlaneseq
      %v702 = vshrl.u32 %v701, 7
      %v703 = vsub.s32 %v700, %v702
      %v704 = vrot.slane %v696, %v703
      %v705 = vmul.bf16 %v691, %v704
      %vm706 = vcmask 125952
      %707 = vst.msk [vmem:[#allocation2] sm:$0xf] %vm706, %v705
      %s708 = scalar_lea.vmem %s522, 4
      %v709 = vld [vmem:[%s708] sm:$0xf]
      %v710 = vld [vmem:[%s7] sm:$0x3]
      %v711 = vld [vmem:[%s9] sm:$0x1]
      %v713 = vlaneseq
      %v714 = vshrl.u32 %v713, 7
      %v715 = vsub.s32 0, %v714
      %v716 = vrot.slane %v711, %v715
      %v719 = vsel %vm578, %v709, 0
      %v722 = vand.u32 %v710, %v585
      %724 = vmatprep.subr.bf16.mxu0 0
      %725 = vmatpush1.bf16.msra.mxu0 %v722
      %726 = vmatprep.subr.bf16.mxu0 0
      %727 = vmatpush1.bf16.msra.mxu0 0
      %728 = vmatprep.subr.bf16.mxu0 0
      %729 = vmatpush1.bf16.msra.mxu0 0
      %730 = vmatprep.subr.bf16.mxu0 0
      %731 = vmatpush1.bf16.msra.mxu0 0
      %732 = vmatprep.subr.bf16.mxu0 0
      %733 = vmatpush1.bf16.msra.mxu0 0
      %734 = vmatprep.subr.bf16.mxu0 0
      %735 = vmatpush1.bf16.msra.mxu0 0
      %736 = vmatprep.subr.bf16.mxu0 0
      %737 = vmatpush1.bf16.msra.mxu0 0
      %738 = vmatprep.subr.bf16.mxu0 0
      %739 = vmatpush1.bf16.msra.mxu0 0
      %740 = vmatprep.subr.bf16.mxu0 0
      %741 = vmatpush1.bf16.msra.mxu0 0
      %742 = vmatprep.subr.bf16.mxu0 0
      %743 = vmatpush1.bf16.msra.mxu0 0
      %744 = vmatprep.subr.bf16.mxu0 0
      %745 = vmatpush1.bf16.msra.mxu0 0
      %746 = vmatprep.subr.bf16.mxu0 0
      %747 = vmatpush1.bf16.msra.mxu0 0
      %748 = vmatprep.subr.bf16.mxu0 0
      %749 = vmatpush1.bf16.msra.mxu0 0
      %750 = vmatprep.subr.bf16.mxu0 0
      %751 = vmatpush1.bf16.msra.mxu0 0
      %752 = vmatprep.subr.bf16.mxu0 0
      %753 = vmatpush1.bf16.msra.mxu0 0
      %754 = vmatprep.subr.bf16.mxu0 0
      %755 = vmatpush1.bf16.msra.mxu0 0
      %756 = vmatprep.mubr.bf16.mxu0 0
      %757 = vmatmul.mubr.bf16.gmra.mrb[0].mxu0 %v719
      %v758 = vpop.f32.mrb[0].mxu0
      %v759 = vadd.f32 %v716, %v758
      %v760 = vpop.f32.mrb[0].mxu0
      %v761 = vpop.f32.mrb[0].mxu0
      %v762 = vpop.f32.mrb[0].mxu0
      %763 = vdwg.mxu0
      %v764 = vmax.f32 %v759, 0.0
      %v765 = vpack.c.bf16 %v764, %v764
      %v766 = vld [vmem:[%s8] sm:$0xf]
      %v767 = vld [vmem:[%s8 + $0x4] sm:$0xf]
      %v768 = vld [vmem:[%s10] sm:$0x1]
      %v770 = vlaneseq
      %v771 = vshrl.u32 %v770, 7
      %v772 = vsub.s32 0, %v771
      %v773 = vrot.slane %v768, %v772
      %v777 = vunpack.c.l.b16 %v766
      %v778 = vunpack.c.l.b16 %v767
      %v779 = vpack.c.b16 %v778, %v777
      %v782 = vsel %vm646, %v765, 0
      %784 = vmatprep.subr.bf16.mxu0 0
      %785 = vmatpush1.bf16.msra.mxu0 %v779
      %786 = vmatprep.subr.bf16.mxu0 0
      %787 = vmatpush1.bf16.msra.mxu0 0
      %788 = vmatprep.subr.bf16.mxu0 0
      %789 = vmatpush1.bf16.msra.mxu0 0
      %790 = vmatprep.subr.bf16.mxu0 0
      %791 = vmatpush1.bf16.msra.mxu0 0
      %792 = vmatprep.subr.bf16.mxu0 0
      %793 = vmatpush1.bf16.msra.mxu0 0
      %794 = vmatprep.subr.bf16.mxu0 0
      %795 = vmatpush1.bf16.msra.mxu0 0
      %796 = vmatprep.subr.bf16.mxu0 0
      %797 = vmatpush1.bf16.msra.mxu0 0
      %798 = vmatprep.subr.bf16.mxu0 0
      %799 = vmatpush1.bf16.msra.mxu0 0
      %800 = vmatprep.subr.bf16.mxu0 0
      %801 = vmatpush1.bf16.msra.mxu0 0
      %802 = vmatprep.subr.bf16.mxu0 0
      %803 = vmatpush1.bf16.msra.mxu0 0
      %804 = vmatprep.subr.bf16.mxu0 0
      %805 = vmatpush1.bf16.msra.mxu0 0
      %806 = vmatprep.subr.bf16.mxu0 0
      %807 = vmatpush1.bf16.msra.mxu0 0
      %808 = vmatprep.subr.bf16.mxu0 0
      %809 = vmatpush1.bf16.msra.mxu0 0
      %810 = vmatprep.subr.bf16.mxu0 0
      %811 = vmatpush1.bf16.msra.mxu0 0
      %812 = vmatprep.subr.bf16.mxu0 0
      %813 = vmatpush1.bf16.msra.mxu0 0
      %814 = vmatprep.subr.bf16.mxu0 0
      %815 = vmatpush1.bf16.msra.mxu0 0
      %816 = vmatprep.mubr.bf16.mxu0 0
      %817 = vmatmul.mubr.bf16.gmra.mrb[0].mxu0 %v782
      %v818 = vpop.f32.mrb[0].mxu0
      %v819 = vadd.f32 %v773, %v818
      %v820 = vpop.f32.mrb[0].mxu0
      %v821 = vpop.f32.mrb[0].mxu0
      %v822 = vpop.f32.mrb[0].mxu0
      %823 = vdwg.mxu0
      %v824 = vmax.f32 %v819, 0.0
      %v825 = vpack.c.bf16 %v824, %v824
      %s826 = scalar_lea.vmem %s530, 4
      %v827 = vld [vmem:[%s826] sm:$0xf]
      %829 = vset.pattern.permute.xlu0 0
      %830 = vperm.xlu0 %829, %v827
      %v831 = vpop.permute.xlu0 %830
      %v834 = vunpack.c.l.s4 839922192
      %v835 = vunpack.c.0.s8 %v834
      %v836 = vlaneseq
      %v837 = vshrl.u32 %v836, 7
      %v838 = vsub.s32 %v835, %v837
      %v839 = vrot.slane %v831, %v838
      %v840 = vmul.bf16 %v825, %v839
      %v842 = vunpack.c.l.b16 %v840
      %v843 = vpack.c.b16 %v842, %v842
      %844 = vrot.lane.b32.xlu0 %v843, 16
      %v845 = vpop.permute.xlu0 %844
      %vm847 = vcmask 257152
      %848 = vst.msk [vmem:[#allocation2] sm:$0xf] %vm847, %v845
      %s849 = scalar_lea.vmem %s522, 8
      %v850 = vld [vmem:[%s849] sm:$0xf]
      %v851 = vld [vmem:[%s7] sm:$0x3]
      %v852 = vld [vmem:[%s9] sm:$0x1]
      %v854 = vlaneseq
      %v855 = vshrl.u32 %v854, 7
      %v856 = vsub.s32 0, %v855
      %v857 = vrot.slane %v852, %v856
      %v860 = vsel %vm578, %v850, 0
      %v863 = vand.u32 %v851, %v585
      %865 = vmatprep.subr.bf16.mxu0 0
      %866 = vmatpush1.bf16.msra.mxu0 %v863
      %867 = vmatprep.subr.bf16.mxu0 0
      %868 = vmatpush1.bf16.msra.mxu0 0
      %869 = vmatprep.subr.bf16.mxu0 0
      %870 = vmatpush1.bf16.msra.mxu0 0
      %871 = vmatprep.subr.bf16.mxu0 0
      %872 = vmatpush1.bf16.msra.mxu0 0
      %873 = vmatprep.subr.bf16.mxu0 0
      %874 = vmatpush1.bf16.msra.mxu0 0
      %875 = vmatprep.subr.bf16.mxu0 0
      %876 = vmatpush1.bf16.msra.mxu0 0
      %877 = vmatprep.subr.bf16.mxu0 0
      %878 = vmatpush1.bf16.msra.mxu0 0
      %879 = vmatprep.subr.bf16.mxu0 0
      %880 = vmatpush1.bf16.msra.mxu0 0
      %881 = vmatprep.subr.bf16.mxu0 0
      %882 = vmatpush1.bf16.msra.mxu0 0
      %883 = vmatprep.subr.bf16.mxu0 0
      %884 = vmatpush1.bf16.msra.mxu0 0
      %885 = vmatprep.subr.bf16.mxu0 0
      %886 = vmatpush1.bf16.msra.mxu0 0
      %887 = vmatprep.subr.bf16.mxu0 0
      %888 = vmatpush1.bf16.msra.mxu0 0
      %889 = vmatprep.subr.bf16.mxu0 0
      %890 = vmatpush1.bf16.msra.mxu0 0
      %891 = vmatprep.subr.bf16.mxu0 0
      %892 = vmatpush1.bf16.msra.mxu0 0
      %893 = vmatprep.subr.bf16.mxu0 0
      %894 = vmatpush1.bf16.msra.mxu0 0
      %895 = vmatprep.subr.bf16.mxu0 0
      %896 = vmatpush1.bf16.msra.mxu0 0
      %897 = vmatprep.mubr.bf16.mxu0 0
      %898 = vmatmul.mubr.bf16.gmra.mrb[0].mxu0 %v860
      %v899 = vpop.f32.mrb[0].mxu0
      %v900 = vadd.f32 %v857, %v899
      %v901 = vpop.f32.mrb[0].mxu0
      %v902 = vpop.f32.mrb[0].mxu0
      %v903 = vpop.f32.mrb[0].mxu0
      %904 = vdwg.mxu0
      %v905 = vmax.f32 %v900, 0.0
      %v906 = vpack.c.bf16 %v905, %v905
      %v907 = vld [vmem:[%s8] sm:$0xf]
      %v908 = vld [vmem:[%s8 + $0x4] sm:$0xf]
      %v909 = vld [vmem:[%s10] sm:$0x1]
      %v911 = vlaneseq
      %v912 = vshrl.u32 %v911, 7
      %v913 = vsub.s32 0, %v912
      %v914 = vrot.slane %v909, %v913
      %v918 = vunpack.c.l.b16 %v907
      %v919 = vunpack.c.l.b16 %v908
      %v920 = vpack.c.b16 %v919, %v918
      %v923 = vsel %vm646, %v906, 0
      %925 = vmatprep.subr.bf16.mxu0 0
      %926 = vmatpush1.bf16.msra.mxu0 %v920
      %927 = vmatprep.subr.bf16.mxu0 0
      %928 = vmatpush1.bf16.msra.mxu0 0
      %929 = vmatprep.subr.bf16.mxu0 0
      %930 = vmatpush1.bf16.msra.mxu0 0
      %931 = vmatprep.subr.bf16.mxu0 0
      %932 = vmatpush1.bf16.msra.mxu0 0
      %933 = vmatprep.subr.bf16.mxu0 0
      %934 = vmatpush1.bf16.msra.mxu0 0
      %935 = vmatprep.subr.bf16.mxu0 0
      %936 = vmatpush1.bf16.msra.mxu0 0
      %937 = vmatprep.subr.bf16.mxu0 0
      %938 = vmatpush1.bf16.msra.mxu0 0
      %939 = vmatprep.subr.bf16.mxu0 0
      %940 = vmatpush1.bf16.msra.mxu0 0
      %941 = vmatprep.subr.bf16.mxu0 0
      %942 = vmatpush1.bf16.msra.mxu0 0
      %943 = vmatprep.subr.bf16.mxu0 0
      %944 = vmatpush1.bf16.msra.mxu0 0
      %945 = vmatprep.subr.bf16.mxu0 0
      %946 = vmatpush1.bf16.msra.mxu0 0
      %947 = vmatprep.subr.bf16.mxu0 0
      %948 = vmatpush1.bf16.msra.mxu0 0
      %949 = vmatprep.subr.bf16.mxu0 0
      %950 = vmatpush1.bf16.msra.mxu0 0
      %951 = vmatprep.subr.bf16.mxu0 0
      %952 = vmatpush1.bf16.msra.mxu0 0
      %953 = vmatprep.subr.bf16.mxu0 0
      %954 = vmatpush1.bf16.msra.mxu0 0
      %955 = vmatprep.subr.bf16.mxu0 0
      %956 = vmatpush1.bf16.msra.mxu0 0
      %957 = vmatprep.mubr.bf16.mxu0 0
      %958 = vmatmul.mubr.bf16.gmra.mrb[0].mxu0 %v923
      %v959 = vpop.f32.mrb[0].mxu0
      %v960 = vadd.f32 %v914, %v959
      %v961 = vpop.f32.mrb[0].mxu0
      %v962 = vpop.f32.mrb[0].mxu0
      %v963 = vpop.f32.mrb[0].mxu0
      %964 = vdwg.mxu0
      %v965 = vmax.f32 %v960, 0.0
      %v966 = vpack.c.bf16 %v965, %v965
      %s967 = scalar_lea.vmem %s530, 8
      %v968 = vld [vmem:[%s967] sm:$0xf]
      %970 = vset.pattern.permute.xlu0 0
      %971 = vperm.xlu0 %970, %v968
      %v972 = vpop.permute.xlu0 %971
      %v975 = vunpack.c.l.s4 839922192
      %v976 = vunpack.c.0.s8 %v975
      %v977 = vlaneseq
      %v978 = vshrl.u32 %v977, 7
      %v979 = vsub.s32 %v976, %v978
      %v980 = vrot.slane %v972, %v979
      %v981 = vmul.bf16 %v966, %v980
      %v983 = vunpack.c.l.b16 %v981
      %v984 = vpack.c.b16 %v983, %v983
      %985 = vrot.lane.b32.xlu0 %v984, 32
      %v986 = vpop.permute.xlu0 %985
      %vm988 = vcmask 388352
      %989 = vst.msk [vmem:[#allocation2] sm:$0xf] %vm988, %v986
      %s990 = scalar_lea.vmem %s522, 12
      %v991 = vld [vmem:[%s990] sm:$0xf]
      %v992 = vld [vmem:[%s7] sm:$0x3]
      %v993 = vld [vmem:[%s9] sm:$0x1]
      %v995 = vlaneseq
      %v996 = vshrl.u32 %v995, 7
      %v997 = vsub.s32 0, %v996
      %v998 = vrot.slane %v993, %v997
      %v1001 = vsel %vm578, %v991, 0
      %v1004 = vand.u32 %v992, %v585
      %1006 = vmatprep.subr.bf16.mxu0 0
      %1007 = vmatpush1.bf16.msra.mxu0 %v1004
      %1008 = vmatprep.subr.bf16.mxu0 0
      %1009 = vmatpush1.bf16.msra.mxu0 0
      %1010 = vmatprep.subr.bf16.mxu0 0
      %1011 = vmatpush1.bf16.msra.mxu0 0
      %1012 = vmatprep.subr.bf16.mxu0 0
      %1013 = vmatpush1.bf16.msra.mxu0 0
      %1014 = vmatprep.subr.bf16.mxu0 0
      %1015 = vmatpush1.bf16.msra.mxu0 0
      %1016 = vmatprep.subr.bf16.mxu0 0
      %1017 = vmatpush1.bf16.msra.mxu0 0
      %1018 = vmatprep.subr.bf16.mxu0 0
      %1019 = vmatpush1.bf16.msra.mxu0 0
      %1020 = vmatprep.subr.bf16.mxu0 0
      %1021 = vmatpush1.bf16.msra.mxu0 0
      %1022 = vmatprep.subr.bf16.mxu0 0
      %1023 = vmatpush1.bf16.msra.mxu0 0
      %1024 = vmatprep.subr.bf16.mxu0 0
      %1025 = vmatpush1.bf16.msra.mxu0 0
      %1026 = vmatprep.subr.bf16.mxu0 0
      %1027 = vmatpush1.bf16.msra.mxu0 0
      %1028 = vmatprep.subr.bf16.mxu0 0
      %1029 = vmatpush1.bf16.msra.mxu0 0
      %1030 = vmatprep.subr.bf16.mxu0 0
      %1031 = vmatpush1.bf16.msra.mxu0 0
      %1032 = vmatprep.subr.bf16.mxu0 0
      %1033 = vmatpush1.bf16.msra.mxu0 0
      %1034 = vmatprep.subr.bf16.mxu0 0
      %1035 = vmatpush1.bf16.msra.mxu0 0
      %1036 = vmatprep.subr.bf16.mxu0 0
      %1037 = vmatpush1.bf16.msra.mxu0 0
      %1038 = vmatprep.mubr.bf16.mxu0 0
      %1039 = vmatmul.mubr.bf16.gmra.mrb[0].mxu0 %v1001
      %v1040 = vpop.f32.mrb[0].mxu0
      %v1041 = vadd.f32 %v998, %v1040
      %v1042 = vpop.f32.mrb[0].mxu0
      %v1043 = vpop.f32.mrb[0].mxu0
      %v1044 = vpop.f32.mrb[0].mxu0
      %1045 = vdwg.mxu0
      %v1046 = vmax.f32 %v1041, 0.0
      %v1047 = vpack.c.bf16 %v1046, %v1046
      %v1048 = vld [vmem:[%s8] sm:$0xf]
      %v1049 = vld [vmem:[%s8 + $0x4] sm:$0xf]
      %v1050 = vld [vmem:[%s10] sm:$0x1]
      %v1052 = vlaneseq
      %v1053 = vshrl.u32 %v1052, 7
      %v1054 = vsub.s32 0, %v1053
      %v1055 = vrot.slane %v1050, %v1054
      %v1059 = vunpack.c.l.b16 %v1048
      %v1060 = vunpack.c.l.b16 %v1049
      %v1061 = vpack.c.b16 %v1060, %v1059
      %v1064 = vsel %vm646, %v1047, 0
      %1066 = vmatprep.subr.bf16.mxu0 0
      %1067 = vmatpush1.bf16.msra.mxu0 %v1061
      %1068 = vmatprep.subr.bf16.mxu0 0
      %1069 = vmatpush1.bf16.msra.mxu0 0
      %1070 = vmatprep.subr.bf16.mxu0 0
      %1071 = vmatpush1.bf16.msra.mxu0 0
      %1072 = vmatprep.subr.bf16.mxu0 0
      %1073 = vmatpush1.bf16.msra.mxu0 0
      %1074 = vmatprep.subr.bf16.mxu0 0
      %1075 = vmatpush1.bf16.msra.mxu0 0
      %1076 = vmatprep.subr.bf16.mxu0 0
      %1077 = vmatpush1.bf16.msra.mxu0 0
      %1078 = vmatprep.subr.bf16.mxu0 0
      %1079 = vmatpush1.bf16.msra.mxu0 0
      %1080 = vmatprep.subr.bf16.mxu0 0
      %1081 = vmatpush1.bf16.msra.mxu0 0
      %1082 = vmatprep.subr.bf16.mxu0 0
      %1083 = vmatpush1.bf16.msra.mxu0 0
      %1084 = vmatprep.subr.bf16.mxu0 0
      %1085 = vmatpush1.bf16.msra.mxu0 0
      %1086 = vmatprep.subr.bf16.mxu0 0
      %1087 = vmatpush1.bf16.msra.mxu0 0
      %1088 = vmatprep.subr.bf16.mxu0 0
      %1089 = vmatpush1.bf16.msra.mxu0 0
      %1090 = vmatprep.subr.bf16.mxu0 0
      %1091 = vmatpush1.bf16.msra.mxu0 0
      %1092 = vmatprep.subr.bf16.mxu0 0
      %1093 = vmatpush1.bf16.msra.mxu0 0
      %1094 = vmatprep.subr.bf16.mxu0 0
      %1095 = vmatpush1.bf16.msra.mxu0 0
      %1096 = vmatprep.subr.bf16.mxu0 0
      %1097 = vmatpush1.bf16.msra.mxu0 0
      %1098 = vmatprep.mubr.bf16.mxu0 0
      %1099 = vmatmul.mubr.bf16.gmra.mrb[0].mxu0 %v1064
      %v1100 = vpop.f32.mrb[0].mxu0
      %v1101 = vadd.f32 %v1055, %v1100
      %v1102 = vpop.f32.mrb[0].mxu0
      %v1103 = vpop.f32.mrb[0].mxu0
      %v1104 = vpop.f32.mrb[0].mxu0
      %1105 = vdwg.mxu0
      %v1106 = vmax.f32 %v1101, 0.0
      %v1107 = vpack.c.bf16 %v1106, %v1106
      %s1108 = scalar_lea.vmem %s530, 12
      %v1109 = vld [vmem:[%s1108] sm:$0xf]
      %1111 = vset.pattern.permute.xlu0 0
      %1112 = vperm.xlu0 %1111, %v1109
      %v1113 = vpop.permute.xlu0 %1112
      %v1116 = vunpack.c.l.s4 839922192
      %v1117 = vunpack.c.0.s8 %v1116
      %v1118 = vlaneseq
      %v1119 = vshrl.u32 %v1118, 7
      %v1120 = vsub.s32 %v1117, %v1119
      %v1121 = vrot.slane %v1113, %v1120
      %v1122 = vmul.bf16 %v1107, %v1121
      %v1124 = vunpack.c.l.b16 %v1122
      %v1125 = vpack.c.b16 %v1124, %v1124
      %1126 = vrot.lane.b32.xlu0 %v1125, 48
      %v1127 = vpop.permute.xlu0 %1126
      %vm1129 = vcmask 519552
      %1130 = vst.msk [vmem:[#allocation2] sm:$0xf] %vm1129, %v1127
      %s1131 = scalar_lea.vmem %s522, 16
      %v1132 = vld [vmem:[%s1131] sm:$0xf]
      %v1133 = vld [vmem:[%s7] sm:$0x3]
      %v1134 = vld [vmem:[%s9] sm:$0x1]
      %v1136 = vlaneseq
      %v1137 = vshrl.u32 %v1136, 7
      %v1138 = vsub.s32 0, %v1137
      %v1139 = vrot.slane %v1134, %v1138
      %v1142 = vsel %vm578, %v1132, 0
      %v1145 = vand.u32 %v1133, %v585
      %1147 = vmatprep.subr.bf16.mxu0 0
      %1148 = vmatpush1.bf16.msra.mxu0 %v1145
      %1149 = vmatprep.subr.bf16.mxu0 0
      %1150 = vmatpush1.bf16.msra.mxu0 0
      %1151 = vmatprep.subr.bf16.mxu0 0
      %1152 = vmatpush1.bf16.msra.mxu0 0
      %1153 = vmatprep.subr.bf16.mxu0 0
      %1154 = vmatpush1.bf16.msra.mxu0 0
      %1155 = vmatprep.subr.bf16.mxu0 0
      %1156 = vmatpush1.bf16.msra.mxu0 0
      %1157 = vmatprep.subr.bf16.mxu0 0
      %1158 = vmatpush1.bf16.msra.mxu0 0
      %1159 = vmatprep.subr.bf16.mxu0 0
      %1160 = vmatpush1.bf16.msra.mxu0 0
      %1161 = vmatprep.subr.bf16.mxu0 0
      %1162 = vmatpush1.bf16.msra.mxu0 0
      %1163 = vmatprep.subr.bf16.mxu0 0
      %1164 = vmatpush1.bf16.msra.mxu0 0
      %1165 = vmatprep.subr.bf16.mxu0 0
      %1166 = vmatpush1.bf16.msra.mxu0 0
      %1167 = vmatprep.subr.bf16.mxu0 0
      %1168 = vmatpush1.bf16.msra.mxu0 0
      %1169 = vmatprep.subr.bf16.mxu0 0
      %1170 = vmatpush1.bf16.msra.mxu0 0
      %1171 = vmatprep.subr.bf16.mxu0 0
      %1172 = vmatpush1.bf16.msra.mxu0 0
      %1173 = vmatprep.subr.bf16.mxu0 0
      %1174 = vmatpush1.bf16.msra.mxu0 0
      %1175 = vmatprep.subr.bf16.mxu0 0
      %1176 = vmatpush1.bf16.msra.mxu0 0
      %1177 = vmatprep.subr.bf16.mxu0 0
      %1178 = vmatpush1.bf16.msra.mxu0 0
      %1179 = vmatprep.mubr.bf16.mxu0 0
      %1180 = vmatmul.mubr.bf16.gmra.mrb[0].mxu0 %v1142
      %v1181 = vpop.f32.mrb[0].mxu0
      %v1182 = vadd.f32 %v1139, %v1181
      %v1183 = vpop.f32.mrb[0].mxu0
      %v1184 = vpop.f32.mrb[0].mxu0
      %v1185 = vpop.f32.mrb[0].mxu0
      %1186 = vdwg.mxu0
      %v1187 = vmax.f32 %v1182, 0.0
      %v1188 = vpack.c.bf16 %v1187, %v1187
      %v1189 = vld [vmem:[%s8] sm:$0xf]
      %v1190 = vld [vmem:[%s8 + $0x4] sm:$0xf]
      %v1191 = vld [vmem:[%s10] sm:$0x1]
      %v1193 = vlaneseq
      %v1194 = vshrl.u32 %v1193, 7
      %v1195 = vsub.s32 0, %v1194
      %v1196 = vrot.slane %v1191, %v1195
      %v1200 = vunpack.c.l.b16 %v1189
      %v1201 = vunpack.c.l.b16 %v1190
      %v1202 = vpack.c.b16 %v1201, %v1200
      %v1205 = vsel %vm646, %v1188, 0
      %1207 = vmatprep.subr.bf16.mxu0 0
      %1208 = vmatpush1.bf16.msra.mxu0 %v1202
      %1209 = vmatprep.subr.bf16.mxu0 0
      %1210 = vmatpush1.bf16.msra.mxu0 0
      %1211 = vmatprep.subr.bf16.mxu0 0
      %1212 = vmatpush1.bf16.msra.mxu0 0
      %1213 = vmatprep.subr.bf16.mxu0 0
      %1214 = vmatpush1.bf16.msra.mxu0 0
      %1215 = vmatprep.subr.bf16.mxu0 0
      %1216 = vmatpush1.bf16.msra.mxu0 0
      %1217 = vmatprep.subr.bf16.mxu0 0
      %1218 = vmatpush1.bf16.msra.mxu0 0
      %1219 = vmatprep.subr.bf16.mxu0 0
      %1220 = vmatpush1.bf16.msra.mxu0 0
      %1221 = vmatprep.subr.bf16.mxu0 0
      %1222 = vmatpush1.bf16.msra.mxu0 0
      %1223 = vmatprep.subr.bf16.mxu0 0
      %1224 = vmatpush1.bf16.msra.mxu0 0
      %1225 = vmatprep.subr.bf16.mxu0 0
      %1226 = vmatpush1.bf16.msra.mxu0 0
      %1227 = vmatprep.subr.bf16.mxu0 0
      %1228 = vmatpush1.bf16.msra.mxu0 0
      %1229 = vmatprep.subr.bf16.mxu0 0
      %1230 = vmatpush1.bf16.msra.mxu0 0
      %1231 = vmatprep.subr.bf16.mxu0 0
      %1232 = vmatpush1.bf16.msra.mxu0 0
      %1233 = vmatprep.subr.bf16.mxu0 0
      %1234 = vmatpush1.bf16.msra.mxu0 0
      %1235 = vmatprep.subr.bf16.mxu0 0
      %1236 = vmatpush1.bf16.msra.mxu0 0
      %1237 = vmatprep.subr.bf16.mxu0 0
      %1238 = vmatpush1.bf16.msra.mxu0 0
      %1239 = vmatprep.mubr.bf16.mxu0 0
      %1240 = vmatmul.mubr.bf16.gmra.mrb[0].mxu0 %v1205
      %v1241 = vpop.f32.mrb[0].mxu0
      %v1242 = vadd.f32 %v1196, %v1241
      %v1243 = vpop.f32.mrb[0].mxu0
      %v1244 = vpop.f32.mrb[0].mxu0
      %v1245 = vpop.f32.mrb[0].mxu0
      %1246 = vdwg.mxu0
      %v1247 = vmax.f32 %v1242, 0.0
      %v1248 = vpack.c.bf16 %v1247, %v1247
      %s1249 = scalar_lea.vmem %s530, 16
      %v1250 = vld [vmem:[%s1249] sm:$0xf]
      %1252 = vset.pattern.permute.xlu0 0
      %1253 = vperm.xlu0 %1252, %v1250
      %v1254 = vpop.permute.xlu0 %1253
      %v1257 = vunpack.c.l.s4 839922192
      %v1258 = vunpack.c.0.s8 %v1257
      %v1259 = vlaneseq
      %v1260 = vshrl.u32 %v1259, 7
      %v1261 = vsub.s32 %v1258, %v1260
      %v1262 = vrot.slane %v1254, %v1261
      %v1263 = vmul.bf16 %v1248, %v1262
      %v1265 = vunpack.c.l.b16 %v1263
      %v1266 = vpack.c.b16 %v1265, %v1265
      %1267 = vrot.lane.b32.xlu0 %v1266, 64
      %v1268 = vpop.permute.xlu0 %1267
      %vm1270 = vcmask 650752
      %1271 = vst.msk [vmem:[#allocation2] sm:$0xf] %vm1270, %v1268
      %s1272 = scalar_lea.vmem %s522, 20
      %v1273 = vld [vmem:[%s1272] sm:$0xf]
      %v1274 = vld [vmem:[%s7] sm:$0x3]
      %v1275 = vld [vmem:[%s9] sm:$0x1]
      %v1277 = vlaneseq
      %v1278 = vshrl.u32 %v1277, 7
      %v1279 = vsub.s32 0, %v1278
      %v1280 = vrot.slane %v1275, %v1279
      %v1283 = vsel %vm578, %v1273, 0
      %v1286 = vand.u32 %v1274, %v585
      %1288 = vmatprep.subr.bf16.mxu0 0
      %1289 = vmatpush1.bf16.msra.mxu0 %v1286
      %1290 = vmatprep.subr.bf16.mxu0 0
      %1291 = vmatpush1.bf16.msra.mxu0 0
      %1292 = vmatprep.subr.bf16.mxu0 0
      %1293 = vmatpush1.bf16.msra.mxu0 0
      %1294 = vmatprep.subr.bf16.mxu0 0
      %1295 = vmatpush1.bf16.msra.mxu0 0
      %1296 = vmatprep.subr.bf16.mxu0 0
      %1297 = vmatpush1.bf16.msra.mxu0 0
      %1298 = vmatprep.subr.bf16.mxu0 0
      %1299 = vmatpush1.bf16.msra.mxu0 0
      %1300 = vmatprep.subr.bf16.mxu0 0
      %1301 = vmatpush1.bf16.msra.mxu0 0
      %1302 = vmatprep.subr.bf16.mxu0 0
      %1303 = vmatpush1.bf16.msra.mxu0 0
      %1304 = vmatprep.subr.bf16.mxu0 0
      %1305 = vmatpush1.bf16.msra.mxu0 0
      %1306 = vmatprep.subr.bf16.mxu0 0
      %1307 = vmatpush1.bf16.msra.mxu0 0
      %1308 = vmatprep.subr.bf16.mxu0 0
      %1309 = vmatpush1.bf16.msra.mxu0 0
      %1310 = vmatprep.subr.bf16.mxu0 0
      %1311 = vmatpush1.bf16.msra.mxu0 0
      %1312 = vmatprep.subr.bf16.mxu0 0
      %1313 = vmatpush1.bf16.msra.mxu0 0
      %1314 = vmatprep.subr.bf16.mxu0 0
      %1315 = vmatpush1.bf16.msra.mxu0 0
      %1316 = vmatprep.subr.bf16.mxu0 0
      %1317 = vmatpush1.bf16.msra.mxu0 0
      %1318 = vmatprep.subr.bf16.mxu0 0
      %1319 = vmatpush1.bf16.msra.mxu0 0
      %1320 = vmatprep.mubr.bf16.mxu0 0
      %1321 = vmatmul.mubr.bf16.gmra.mrb[0].mxu0 %v1283
      %v1322 = vpop.f32.mrb[0].mxu0
      %v1323 = vadd.f32 %v1280, %v1322
      %v1324 = vpop.f32.mrb[0].mxu0
      %v1325 = vpop.f32.mrb[0].mxu0
      %v1326 = vpop.f32.mrb[0].mxu0
      %1327 = vdwg.mxu0
      %v1328 = vmax.f32 %v1323, 0.0
      %v1329 = vpack.c.bf16 %v1328, %v1328
      %v1330 = vld [vmem:[%s8] sm:$0xf]
      %v1331 = vld [vmem:[%s8 + $0x4] sm:$0xf]
      %v1332 = vld [vmem:[%s10] sm:$0x1]
      %v1334 = vlaneseq
      %v1335 = vshrl.u32 %v1334, 7
      %v1336 = vsub.s32 0, %v1335
      %v1337 = vrot.slane %v1332, %v1336
      %v1341 = vunpack.c.l.b16 %v1330
      %v1342 = vunpack.c.l.b16 %v1331
      %v1343 = vpack.c.b16 %v1342, %v1341
      %v1346 = vsel %vm646, %v1329, 0
      %1348 = vmatprep.subr.bf16.mxu0 0
      %1349 = vmatpush1.bf16.msra.mxu0 %v1343
      %1350 = vmatprep.subr.bf16.mxu0 0
      %1351 = vmatpush1.bf16.msra.mxu0 0
      %1352 = vmatprep.subr.bf16.mxu0 0
      %1353 = vmatpush1.bf16.msra.mxu0 0
      %1354 = vmatprep.subr.bf16.mxu0 0
      %1355 = vmatpush1.bf16.msra.mxu0 0
      %1356 = vmatprep.subr.bf16.mxu0 0
      %1357 = vmatpush1.bf16.msra.mxu0 0
      %1358 = vmatprep.subr.bf16.mxu0 0
      %1359 = vmatpush1.bf16.msra.mxu0 0
      %1360 = vmatprep.subr.bf16.mxu0 0
      %1361 = vmatpush1.bf16.msra.mxu0 0
      %1362 = vmatprep.subr.bf16.mxu0 0
      %1363 = vmatpush1.bf16.msra.mxu0 0
      %1364 = vmatprep.subr.bf16.mxu0 0
      %1365 = vmatpush1.bf16.msra.mxu0 0
      %1366 = vmatprep.subr.bf16.mxu0 0
      %1367 = vmatpush1.bf16.msra.mxu0 0
      %1368 = vmatprep.subr.bf16.mxu0 0
      %1369 = vmatpush1.bf16.msra.mxu0 0
      %1370 = vmatprep.subr.bf16.mxu0 0
      %1371 = vmatpush1.bf16.msra.mxu0 0
      %1372 = vmatprep.subr.bf16.mxu0 0
      %1373 = vmatpush1.bf16.msra.mxu0 0
      %1374 = vmatprep.subr.bf16.mxu0 0
      %1375 = vmatpush1.bf16.msra.mxu0 0
      %1376 = vmatprep.subr.bf16.mxu0 0
      %1377 = vmatpush1.bf16.msra.mxu0 0
      %1378 = vmatprep.subr.bf16.mxu0 0
      %1379 = vmatpush1.bf16.msra.mxu0 0
      %1380 = vmatprep.mubr.bf16.mxu0 0
      %1381 = vmatmul.mubr.bf16.gmra.mrb[0].mxu0 %v1346
      %v1382 = vpop.f32.mrb[0].mxu0
      %v1383 = vadd.f32 %v1337, %v1382
      %v1384 = vpop.f32.mrb[0].mxu0
      %v1385 = vpop.f32.mrb[0].mxu0
      %v1386 = vpop.f32.mrb[0].mxu0
      %1387 = vdwg.mxu0
      %v1388 = vmax.f32 %v1383, 0.0
      %v1389 = vpack.c.bf16 %v1388, %v1388
      %s1390 = scalar_lea.vmem %s530, 20
      %v1391 = vld [vmem:[%s1390] sm:$0xf]
      %1393 = vset.pattern.permute.xlu0 0
      %1394 = vperm.xlu0 %1393, %v1391
      %v1395 = vpop.permute.xlu0 %1394
      %v1398 = vunpack.c.l.s4 839922192
      %v1399 = vunpack.c.0.s8 %v1398
      %v1400 = vlaneseq
      %v1401 = vshrl.u32 %v1400, 7
      %v1402 = vsub.s32 %v1399, %v1401
      %v1403 = vrot.slane %v1395, %v1402
      %v1404 = vmul.bf16 %v1389, %v1403
      %v1406 = vunpack.c.l.b16 %v1404
      %v1407 = vpack.c.b16 %v1406, %v1406
      %1408 = vrot.lane.b32.xlu0 %v1407, 80
      %v1409 = vpop.permute.xlu0 %1408
      %vm1411 = vcmask 781952
      %1412 = vst.msk [vmem:[#allocation2] sm:$0xf] %vm1411, %v1409
      %s1413 = scalar_lea.vmem %s522, 24
      %v1414 = vld [vmem:[%s1413] sm:$0xf]
      %v1415 = vld [vmem:[%s7] sm:$0x3]
      %v1416 = vld [vmem:[%s9] sm:$0x1]
      %v1418 = vlaneseq
      %v1419 = vshrl.u32 %v1418, 7
      %v1420 = vsub.s32 0, %v1419
      %v1421 = vrot.slane %v1416, %v1420
      %v1424 = vsel %vm578, %v1414, 0
      %v1427 = vand.u32 %v1415, %v585
      %1429 = vmatprep.subr.bf16.mxu0 0
      %1430 = vmatpush1.bf16.msra.mxu0 %v1427
      %1431 = vmatprep.subr.bf16.mxu0 0
      %1432 = vmatpush1.bf16.msra.mxu0 0
      %1433 = vmatprep.subr.bf16.mxu0 0
      %1434 = vmatpush1.bf16.msra.mxu0 0
      %1435 = vmatprep.subr.bf16.mxu0 0
      %1436 = vmatpush1.bf16.msra.mxu0 0
      %1437 = vmatprep.subr.bf16.mxu0 0
      %1438 = vmatpush1.bf16.msra.mxu0 0
      %1439 = vmatprep.subr.bf16.mxu0 0
      %1440 = vmatpush1.bf16.msra.mxu0 0
      %1441 = vmatprep.subr.bf16.mxu0 0
      %1442 = vmatpush1.bf16.msra.mxu0 0
      %1443 = vmatprep.subr.bf16.mxu0 0
      %1444 = vmatpush1.bf16.msra.mxu0 0
      %1445 = vmatprep.subr.bf16.mxu0 0
      %1446 = vmatpush1.bf16.msra.mxu0 0
      %1447 = vmatprep.subr.bf16.mxu0 0
      %1448 = vmatpush1.bf16.msra.mxu0 0
      %1449 = vmatprep.subr.bf16.mxu0 0
      %1450 = vmatpush1.bf16.msra.mxu0 0
      %1451 = vmatprep.subr.bf16.mxu0 0
      %1452 = vmatpush1.bf16.msra.mxu0 0
      %1453 = vmatprep.subr.bf16.mxu0 0
      %1454 = vmatpush1.bf16.msra.mxu0 0
      %1455 = vmatprep.subr.bf16.mxu0 0
      %1456 = vmatpush1.bf16.msra.mxu0 0
      %1457 = vmatprep.subr.bf16.mxu0 0
      %1458 = vmatpush1.bf16.msra.mxu0 0
      %1459 = vmatprep.subr.bf16.mxu0 0
      %1460 = vmatpush1.bf16.msra.mxu0 0
      %1461 = vmatprep.mubr.bf16.mxu0 0
      %1462 = vmatmul.mubr.bf16.gmra.mrb[0].mxu0 %v1424
      %v1463 = vpop.f32.mrb[0].mxu0
      %v1464 = vadd.f32 %v1421, %v1463
      %v1465 = vpop.f32.mrb[0].mxu0
      %v1466 = vpop.f32.mrb[0].mxu0
      %v1467 = vpop.f32.mrb[0].mxu0
      %1468 = vdwg.mxu0
      %v1469 = vmax.f32 %v1464, 0.0
      %v1470 = vpack.c.bf16 %v1469, %v1469
      %v1471 = vld [vmem:[%s8] sm:$0xf]
      %v1472 = vld [vmem:[%s8 + $0x4] sm:$0xf]
      %v1473 = vld [vmem:[%s10] sm:$0x1]
      %v1475 = vlaneseq
      %v1476 = vshrl.u32 %v1475, 7
      %v1477 = vsub.s32 0, %v1476
      %v1478 = vrot.slane %v1473, %v1477
      %v1482 = vunpack.c.l.b16 %v1471
      %v1483 = vunpack.c.l.b16 %v1472
      %v1484 = vpack.c.b16 %v1483, %v1482
      %v1487 = vsel %vm646, %v1470, 0
      %1489 = vmatprep.subr.bf16.mxu0 0
      %1490 = vmatpush1.bf16.msra.mxu0 %v1484
      %1491 = vmatprep.subr.bf16.mxu0 0
      %1492 = vmatpush1.bf16.msra.mxu0 0
      %1493 = vmatprep.subr.bf16.mxu0 0
      %1494 = vmatpush1.bf16.msra.mxu0 0
      %1495 = vmatprep.subr.bf16.mxu0 0
      %1496 = vmatpush1.bf16.msra.mxu0 0
      %1497 = vmatprep.subr.bf16.mxu0 0
      %1498 = vmatpush1.bf16.msra.mxu0 0
      %1499 = vmatprep.subr.bf16.mxu0 0
      %1500 = vmatpush1.bf16.msra.mxu0 0
      %1501 = vmatprep.subr.bf16.mxu0 0
      %1502 = vmatpush1.bf16.msra.mxu0 0
      %1503 = vmatprep.subr.bf16.mxu0 0
      %1504 = vmatpush1.bf16.msra.mxu0 0
      %1505 = vmatprep.subr.bf16.mxu0 0
      %1506 = vmatpush1.bf16.msra.mxu0 0
      %1507 = vmatprep.subr.bf16.mxu0 0
      %1508 = vmatpush1.bf16.msra.mxu0 0
      %1509 = vmatprep.subr.bf16.mxu0 0
      %1510 = vmatpush1.bf16.msra.mxu0 0
      %1511 = vmatprep.subr.bf16.mxu0 0
      %1512 = vmatpush1.bf16.msra.mxu0 0
      %1513 = vmatprep.subr.bf16.mxu0 0
      %1514 = vmatpush1.bf16.msra.mxu0 0
      %1515 = vmatprep.subr.bf16.mxu0 0
      %1516 = vmatpush1.bf16.msra.mxu0 0
      %1517 = vmatprep.subr.bf16.mxu0 0
      %1518 = vmatpush1.bf16.msra.mxu0 0
      %1519 = vmatprep.subr.bf16.mxu0 0
      %1520 = vmatpush1.bf16.msra.mxu0 0
      %1521 = vmatprep.mubr.bf16.mxu0 0
      %1522 = vmatmul.mubr.bf16.gmra.mrb[0].mxu0 %v1487
      %v1523 = vpop.f32.mrb[0].mxu0
      %v1524 = vadd.f32 %v1478, %v1523
      %v1525 = vpop.f32.mrb[0].mxu0
      %v1526 = vpop.f32.mrb[0].mxu0
      %v1527 = vpop.f32.mrb[0].mxu0
      %1528 = vdwg.mxu0
      %v1529 = vmax.f32 %v1524, 0.0
      %v1530 = vpack.c.bf16 %v1529, %v1529
      %s1531 = scalar_lea.vmem %s530, 24
      %v1532 = vld [vmem:[%s1531] sm:$0xf]
      %1534 = vset.pattern.permute.xlu0 0
      %1535 = vperm.xlu0 %1534, %v1532
      %v1536 = vpop.permute.xlu0 %1535
      %v1539 = vunpack.c.l.s4 839922192
      %v1540 = vunpack.c.0.s8 %v1539
      %v1541 = vlaneseq
      %v1542 = vshrl.u32 %v1541, 7
      %v1543 = vsub.s32 %v1540, %v1542
      %v1544 = vrot.slane %v1536, %v1543
      %v1545 = vmul.bf16 %v1530, %v1544
      %v1547 = vunpack.c.l.b16 %v1545
      %v1548 = vpack.c.b16 %v1547, %v1547
      %1549 = vrot.lane.b32.xlu0 %v1548, 96
      %v1550 = vpop.permute.xlu0 %1549
      %vm1552 = vcmask 913152
      %1553 = vst.msk [vmem:[#allocation2] sm:$0xf] %vm1552, %v1550
      %s1554 = scalar_lea.vmem %s522, 28
      %v1555 = vld [vmem:[%s1554] sm:$0xf]
      %v1556 = vld [vmem:[%s7] sm:$0x3]
      %v1557 = vld [vmem:[%s9] sm:$0x1]
      %v1559 = vlaneseq
      %v1560 = vshrl.u32 %v1559, 7
      %v1561 = vsub.s32 0, %v1560
      %v1562 = vrot.slane %v1557, %v1561
      %v1565 = vsel %vm578, %v1555, 0
      %v1568 = vand.u32 %v1556, %v585
      %1570 = vmatprep.subr.bf16.mxu0 0
      %1571 = vmatpush1.bf16.msra.mxu0 %v1568
      %1572 = vmatprep.subr.bf16.mxu0 0
      %1573 = vmatpush1.bf16.msra.mxu0 0
      %1574 = vmatprep.subr.bf16.mxu0 0
      %1575 = vmatpush1.bf16.msra.mxu0 0
      %1576 = vmatprep.subr.bf16.mxu0 0
      %1577 = vmatpush1.bf16.msra.mxu0 0
      %1578 = vmatprep.subr.bf16.mxu0 0
      %1579 = vmatpush1.bf16.msra.mxu0 0
      %1580 = vmatprep.subr.bf16.mxu0 0
      %1581 = vmatpush1.bf16.msra.mxu0 0
      %1582 = vmatprep.subr.bf16.mxu0 0
      %1583 = vmatpush1.bf16.msra.mxu0 0
      %1584 = vmatprep.subr.bf16.mxu0 0
      %1585 = vmatpush1.bf16.msra.mxu0 0
      %1586 = vmatprep.subr.bf16.mxu0 0
      %1587 = vmatpush1.bf16.msra.mxu0 0
      %1588 = vmatprep.subr.bf16.mxu0 0
      %1589 = vmatpush1.bf16.msra.mxu0 0
      %1590 = vmatprep.subr.bf16.mxu0 0
      %1591 = vmatpush1.bf16.msra.mxu0 0
      %1592 = vmatprep.subr.bf16.mxu0 0
      %1593 = vmatpush1.bf16.msra.mxu0 0
      %1594 = vmatprep.subr.bf16.mxu0 0
      %1595 = vmatpush1.bf16.msra.mxu0 0
      %1596 = vmatprep.subr.bf16.mxu0 0
      %1597 = vmatpush1.bf16.msra.mxu0 0
      %1598 = vmatprep.subr.bf16.mxu0 0
      %1599 = vmatpush1.bf16.msra.mxu0 0
      %1600 = vmatprep.subr.bf16.mxu0 0
      %1601 = vmatpush1.bf16.msra.mxu0 0
      %1602 = vmatprep.mubr.bf16.mxu0 0
      %1603 = vmatmul.mubr.bf16.gmra.mrb[0].mxu0 %v1565
      %v1604 = vpop.f32.mrb[0].mxu0
      %v1605 = vadd.f32 %v1562, %v1604
      %v1606 = vpop.f32.mrb[0].mxu0
      %v1607 = vpop.f32.mrb[0].mxu0
      %v1608 = vpop.f32.mrb[0].mxu0
      %1609 = vdwg.mxu0
      %v1610 = vmax.f32 %v1605, 0.0
      %v1611 = vpack.c.bf16 %v1610, %v1610
      %v1612 = vld [vmem:[%s8] sm:$0xf]
      %v1613 = vld [vmem:[%s8 + $0x4] sm:$0xf]
      %v1614 = vld [vmem:[%s10] sm:$0x1]
      %v1616 = vlaneseq
      %v1617 = vshrl.u32 %v1616, 7
      %v1618 = vsub.s32 0, %v1617
      %v1619 = vrot.slane %v1614, %v1618
      %v1623 = vunpack.c.l.b16 %v1612
      %v1624 = vunpack.c.l.b16 %v1613
      %v1625 = vpack.c.b16 %v1624, %v1623
      %v1628 = vsel %vm646, %v1611, 0
      %1630 = vmatprep.subr.bf16.mxu0 0
      %1631 = vmatpush1.bf16.msra.mxu0 %v1625
      %1632 = vmatprep.subr.bf16.mxu0 0
      %1633 = vmatpush1.bf16.msra.mxu0 0
      %1634 = vmatprep.subr.bf16.mxu0 0
      %1635 = vmatpush1.bf16.msra.mxu0 0
      %1636 = vmatprep.subr.bf16.mxu0 0
      %1637 = vmatpush1.bf16.msra.mxu0 0
      %1638 = vmatprep.subr.bf16.mxu0 0
      %1639 = vmatpush1.bf16.msra.mxu0 0
      %1640 = vmatprep.subr.bf16.mxu0 0
      %1641 = vmatpush1.bf16.msra.mxu0 0
      %1642 = vmatprep.subr.bf16.mxu0 0
      %1643 = vmatpush1.bf16.msra.mxu0 0
      %1644 = vmatprep.subr.bf16.mxu0 0
      %1645 = vmatpush1.bf16.msra.mxu0 0
      %1646 = vmatprep.subr.bf16.mxu0 0
      %1647 = vmatpush1.bf16.msra.mxu0 0
      %1648 = vmatprep.subr.bf16.mxu0 0
      %1649 = vmatpush1.bf16.msra.mxu0 0
      %1650 = vmatprep.subr.bf16.mxu0 0
      %1651 = vmatpush1.bf16.msra.mxu0 0
      %1652 = vmatprep.subr.bf16.mxu0 0
      %1653 = vmatpush1.bf16.msra.mxu0 0
      %1654 = vmatprep.subr.bf16.mxu0 0
      %1655 = vmatpush1.bf16.msra.mxu0 0
      %1656 = vmatprep.subr.bf16.mxu0 0
      %1657 = vmatpush1.bf16.msra.mxu0 0
      %1658 = vmatprep.subr.bf16.mxu0 0
      %1659 = vmatpush1.bf16.msra.mxu0 0
      %1660 = vmatprep.subr.bf16.mxu0 0
      %1661 = vmatpush1.bf16.msra.mxu0 0
      %1662 = vmatprep.mubr.bf16.mxu0 0
      %1663 = vmatmul.mubr.bf16.gmra.mrb[0].mxu0 %v1628
      %v1664 = vpop.f32.mrb[0].mxu0
      %v1665 = vadd.f32 %v1619, %v1664
      %v1666 = vpop.f32.mrb[0].mxu0
      %v1667 = vpop.f32.mrb[0].mxu0
      %v1668 = vpop.f32.mrb[0].mxu0
      %1669 = vdwg.mxu0
      %v1670 = vmax.f32 %v1665, 0.0
      %v1671 = vpack.c.bf16 %v1670, %v1670
      %s1672 = scalar_lea.vmem %s530, 28
      %v1673 = vld [vmem:[%s1672] sm:$0xf]
      %1675 = vset.pattern.permute.xlu0 0
      %1676 = vperm.xlu0 %1675, %v1673
      %v1677 = vpop.permute.xlu0 %1676
      %v1680 = vunpack.c.l.s4 839922192
      %v1681 = vunpack.c.0.s8 %v1680
      %v1682 = vlaneseq
      %v1683 = vshrl.u32 %v1682, 7
      %v1684 = vsub.s32 %v1681, %v1683
      %v1685 = vrot.slane %v1677, %v1684
      %v1686 = vmul.bf16 %v1671, %v1685
      %v1688 = vunpack.c.l.b16 %v1686
      %v1689 = vpack.c.b16 %v1688, %v1688
      %1690 = vrot.lane.b32.xlu0 %v1689, 112
      %v1691 = vpop.permute.xlu0 %1690
      %vm1693 = vcmask 1044352
      %1694 = vst.msk [vmem:[#allocation2] sm:$0xf] %vm1693, %v1691
      %v1695 = vld [vmem:[#allocation2] sm:$0xf]
      %v1696 = vld [vmem:[%s542] sm:$0xf]
      %v1697 = vld [vmem:[%s542 + $0x4] sm:$0xf]
      %v1698 = vld [vmem:[%s542 + $0x8] sm:$0xf]
      %v1699 = vld [vmem:[%s542 + $0xc] sm:$0xf]
      %v1700 = vld [vmem:[%s542 + $0x10] sm:$0xf]
      %v1701 = vld [vmem:[%s542 + $0x14] sm:$0xf]
      %v1702 = vld [vmem:[%s542 + $0x18] sm:$0xf]
      %v1703 = vld [vmem:[%s542 + $0x1c] sm:$0xf]
      %v1704 = vld [vmem:[%s542 + $0x20] sm:$0xf]
      %v1705 = vld [vmem:[%s542 + $0x24] sm:$0xf]
      %v1706 = vld [vmem:[%s542 + $0x28] sm:$0xf]
      %v1707 = vld [vmem:[%s542 + $0x2c] sm:$0xf]
      %v1708 = vld [vmem:[%s542 + $0x30] sm:$0xf]
      %v1709 = vld [vmem:[%s542 + $0x34] sm:$0xf]
      %v1710 = vld [vmem:[%s542 + $0x38] sm:$0xf]
      %v1711 = vld [vmem:[%s542 + $0x3c] sm:$0xf]
      %v1712 = vld [vmem:[%s537] sm:$0xf]
      %v1713 = vld [vmem:[%s546] sm:$0xf]
      %vm1714 = vcmask 64512
      %v1716 = vsel %vm1714, %v1712, 0
      %vm1718 = vcmask 1043456
      %v1720 = vsel %vm1718, %v1713, 0
      %1722 = vmatprep.subr.bf16.mxu0 0
      %1723 = vmatpush1.bf16.msra.mxu0 %v1720
      %1724 = vmatprep.subr.bf16.mxu0 0
      %1725 = vmatpush1.bf16.msra.mxu0 0
      %1726 = vmatprep.subr.bf16.mxu0 0
      %1727 = vmatpush1.bf16.msra.mxu0 0
      %1728 = vmatprep.subr.bf16.mxu0 0
      %1729 = vmatpush1.bf16.msra.mxu0 0
      %1730 = vmatprep.subr.bf16.mxu0 0
      %1731 = vmatpush1.bf16.msra.mxu0 0
      %1732 = vmatprep.subr.bf16.mxu0 0
      %1733 = vmatpush1.bf16.msra.mxu0 0
      %1734 = vmatprep.subr.bf16.mxu0 0
      %1735 = vmatpush1.bf16.msra.mxu0 0
      %1736 = vmatprep.subr.bf16.mxu0 0
      %1737 = vmatpush1.bf16.msra.mxu0 0
      %1738 = vmatprep.subr.bf16.mxu0 0
      %1739 = vmatpush1.bf16.msra.mxu0 0
      %1740 = vmatprep.subr.bf16.mxu0 0
      %1741 = vmatpush1.bf16.msra.mxu0 0
      %1742 = vmatprep.subr.bf16.mxu0 0
      %1743 = vmatpush1.bf16.msra.mxu0 0
      %1744 = vmatprep.subr.bf16.mxu0 0
      %1745 = vmatpush1.bf16.msra.mxu0 0
      %1746 = vmatprep.subr.bf16.mxu0 0
      %1747 = vmatpush1.bf16.msra.mxu0 0
      %1748 = vmatprep.subr.bf16.mxu0 0
      %1749 = vmatpush1.bf16.msra.mxu0 0
      %1750 = vmatprep.subr.bf16.mxu0 0
      %1751 = vmatpush1.bf16.msra.mxu0 0
      %1752 = vmatprep.subr.bf16.mxu0 0
      %1753 = vmatpush1.bf16.msra.mxu0 0
      %1754 = vmatprep.mubr.bf16.mxu0 0
      %1755 = vmatmul.mubr.bf16.gmra.mrb[0].mxu0 %v1716
      %v1756 = vpop.f32.mrb[0].mxu0
      %v1757 = vadd.f32 0.0, %v1756
      %v1758 = vpop.f32.mrb[0].mxu0
      %v1759 = vpop.f32.mrb[0].mxu0
      %v1760 = vpop.f32.mrb[0].mxu0
      %1761 = vdwg.mxu0
      %v1778 = vunpack.c.l.b16 %v1696
      %v1779 = vunpack.c.l.b16 %v1697
      %v1780 = vunpack.c.l.b16 %v1698
      %v1781 = vunpack.c.l.b16 %v1699
      %v1782 = vunpack.c.l.b16 %v1700
      %v1783 = vunpack.c.l.b16 %v1701
      %v1784 = vunpack.c.l.b16 %v1702
      %v1785 = vunpack.c.l.b16 %v1703
      %v1786 = vunpack.c.l.b16 %v1704
      %v1787 = vunpack.c.l.b16 %v1705
      %v1788 = vunpack.c.l.b16 %v1706
      %v1789 = vunpack.c.l.b16 %v1707
      %v1790 = vunpack.c.l.b16 %v1708
      %v1791 = vunpack.c.l.b16 %v1709
      %v1792 = vunpack.c.l.b16 %v1710
      %v1793 = vunpack.c.l.b16 %v1711
      %v1794 = vpack.c.b16 %v1779, %v1778
      %v1795 = vpack.c.b16 %v1781, %v1780
      %v1796 = vpack.c.b16 %v1783, %v1782
      %v1797 = vpack.c.b16 %v1785, %v1784
      %v1798 = vpack.c.b16 %v1787, %v1786
      %v1799 = vpack.c.b16 %v1789, %v1788
      %v1800 = vpack.c.b16 %v1791, %v1790
      %v1801 = vpack.c.b16 %v1793, %v1792
      %1810 = vmatprep.subr.bf16.mxu0 0
      %1811 = vmatpush1.bf16.msra.mxu0 %v1794
      %1812 = vmatprep.subr.bf16.mxu0 0
      %1813 = vmatpush1.bf16.msra.mxu0 %v1795
      %1814 = vmatprep.subr.bf16.mxu0 0
      %1815 = vmatpush1.bf16.msra.mxu0 %v1796
      %1816 = vmatprep.subr.bf16.mxu0 0
      %1817 = vmatpush1.bf16.msra.mxu0 %v1797
      %1818 = vmatprep.subr.bf16.mxu0 0
      %1819 = vmatpush1.bf16.msra.mxu0 %v1798
      %1820 = vmatprep.subr.bf16.mxu0 0
      %1821 = vmatpush1.bf16.msra.mxu0 %v1799
      %1822 = vmatprep.subr.bf16.mxu0 0
      %1823 = vmatpush1.bf16.msra.mxu0 %v1800
      %1824 = vmatprep.subr.bf16.mxu0 0
      %1825 = vmatpush1.bf16.msra.mxu0 %v1801
      %1826 = vmatprep.subr.bf16.mxu0 0
      %1827 = vmatpush1.bf16.msra.mxu0 0
      %1828 = vmatprep.subr.bf16.mxu0 0
      %1829 = vmatpush1.bf16.msra.mxu0 0
      %1830 = vmatprep.subr.bf16.mxu0 0
      %1831 = vmatpush1.bf16.msra.mxu0 0
      %1832 = vmatprep.subr.bf16.mxu0 0
      %1833 = vmatpush1.bf16.msra.mxu0 0
      %1834 = vmatprep.subr.bf16.mxu0 0
      %1835 = vmatpush1.bf16.msra.mxu0 0
      %1836 = vmatprep.subr.bf16.mxu0 0
      %1837 = vmatpush1.bf16.msra.mxu0 0
      %1838 = vmatprep.subr.bf16.mxu0 0
      %1839 = vmatpush1.bf16.msra.mxu0 0
      %1840 = vmatprep.subr.bf16.mxu0 0
      %1841 = vmatpush1.bf16.msra.mxu0 0
      %1842 = vmatprep.mubr.bf16.mxu0 0
      %1843 = vmatmul.mubr.bf16.gmra.mrb[0].mxu0 %v1695
      %v1844 = vpop.f32.mrb[0].mxu0
      %v1845 = vadd.f32 %v1757, %v1844
      %v1846 = vpop.f32.mrb[0].mxu0
      %v1847 = vpop.f32.mrb[0].mxu0
      %v1848 = vpop.f32.mrb[0].mxu0
      %1849 = vdwg.mxu0
      %v1850 = vld [vmem:[%s560] sm:$0xff]
      %v1851 = vld [vmem:[%s553] sm:$0xff]
      %v1852 = vadd.f32 %v1851, %v1845
      %1854 = vset.pattern.permute.xlu0 0
      %1855 = vperm.xlu0 %1854, %v1850
      %v1856 = vpop.permute.xlu0 %1855
      %v1858 = vmul.f32 %v1856, %v1852
      %v1859 = vmax.f32 %v1858, 0.0
      %1860 = vst.msk [vmem:[%s567] sm:$0xff] %vm1714, %v1859
      %p1861 = scmp.lt.s32.totalorder %s26, 1
      %s1862 = scalar_select %p1861, %s26, 1
      %p1863 = scmp.lt.s32.totalorder %s27, 0
      %s1864 = scalar_select %p1863, %s27, 0
      %s1865 = sadd.s32 %s1864, %s1862
      %s1866 = smul.addr %s1865, 8
      %s1867 = scalar_lea.vmem %s11, %s1866
      // Predicated region
      $region65: #{edge_conditioned_conv_forward.9} parent=63 // pred_check
        %p1868 = pneg %p330
      $region66: #{edge_conditioned_conv_forward.9} parent=63 // pred_check_branch
        %1870 = sbr.rel (%p1868) target = $region68
      $region67: #{edge_conditioned_conv_forward.9} parent=63 // pred_region
        _
      $region68: #{edge_conditioned_conv_forward.9} parent=63 // pred_fallthru
        _
    $region64: #{edge_conditioned_conv_forward.9} parent=5 // pred_fallthru
      _
    %p1871 = scmp.le.s32.totalorder 2, %s17
    // Predicated region
    $region69: #{edge_conditioned_conv_forward.9} parent=5 // pred_check
      %p1872 = pneg %p1871
    $region70: #{edge_conditioned_conv_forward.9} parent=5 // pred_check_branch
      %1874 = sbr.rel (%p1872) target = $region72
    $region71: #{edge_conditioned_conv_forward.9} parent=5 // pred_region
      %s1875 = ssub.s32 %s17, 2
      // Predicated region
      $region73: #{edge_conditioned_conv_forward.9} parent=71 // pred_check
        %p1876 = pneg %p336
      $region74: #{edge_conditioned_conv_forward.9} parent=71 // pred_check_branch
        %1878 = sbr.rel (%p1876) target = $region76
      $region75: #{edge_conditioned_conv_forward.9} parent=71 // pred_region
        %p1879 = scmp.lt.s32.totalorder %s28, 1
        %s1880 = scalar_select %p1879, %s28, 1
        %p1881 = scmp.lt.s32.totalorder %s29, 0
        %s1882 = scalar_select %p1881, %s29, 0
        %s1883 = sadd.s32 %s1882, %s1880
        %s1884 = smul.addr %s1883, 8
        %s1885 = scalar_lea.vmem %s11, %s1884
      $region76: #{edge_conditioned_conv_forward.9} parent=71 // pred_fallthru
        _
    $region72: #{edge_conditioned_conv_forward.9} parent=5 // pred_fallthru
      _
  $region6: #{edge_conditioned_conv_forward.9} parent=0 // loop_footer
    %s21 = sadd.s32 1, %s17
  $region7: #{edge_conditioned_conv_forward.9} parent=0 // loop_footer_branch
    %16 = sbr.rel target = $region3
  $region8: #{edge_conditioned_conv_forward.9} parent=0 // loop_exit
    _

// kernel: edge_conditioned_conv_forward.12
$region0: #{edge_conditioned_conv_forward.12}
  #allocation0 [shape = 'u32[]', space=smem, size = 0x4, offset = 0x4, fixed_abs, tag = 'smem constant byte address 0x4 - core index']
  #allocation1 [shape = 'u32[144,128]{1,0:T(1,128)}', space=vmem, size = 0x12000, scoped, tag = 'internal scratch']
  %s0 = inlined_call_operand.vmem [shape: f32[2,8,16], index: 0, kind: input, shape index: {}]
  %s1 = inlined_call_operand.vmem [shape: f32[2,1,16], index: 1, kind: output, shape index: {}]
  %s2 = sld [smem:[#allocation0]]
  $region37: #{edge_conditioned_conv_forward.12} parent=0
    _
  %s4 = ssub.s32 1, %s2
  %s5 = scalar_select 0, %s4, %s2
  loop: start=0, step=1, limit=4
  $region2: #{edge_conditioned_conv_forward.12} parent=0 // loop_pre_header
    _
  $region3: #{edge_conditioned_conv_forward.12} parent=0 // loop_header
    %s7 = sphi 0, %s11
    %p8 = scmp.ge.s32.totalorder %s7, 4
    %s17 = sphi 0, %s19
    %s20 = sphi 0, %s17
    %s21 = sphi 0, %s20
    %s37 = sphi 0, %s21
    %s43 = sphi 0, %s45
    %s46 = sphi 0, %s43
    %s47 = sphi 0, %s46
    %s63 = sphi 0, %s47
  $region4: #{edge_conditioned_conv_forward.12} parent=0 // loop_header_branch
    %10 = sbr.rel (%p8) target = $region8
  $region5: #{edge_conditioned_conv_forward.12} parent=0 // loop_body
    %s12 = ssub.s32 %s7, 1
    %s13 = ssub.s32 %s7, 2
    %s14 = sadd.s32 %s7, 1
    %s15 = ssub.s32 %s7, %s14
    %p16 = scmp.eq.s32.totalorder %s15, 0
    %s18 = sadd.s32 %s17, 1
    %s19 = scalar_select %p16, %s17, %s18
    %p22 = pneg %p16
    %p23 = scmp.eq.s32.totalorder %s7, 1
    %p24 = por %p22, %p23
    %p25 = scmp.ne.s32.totalorder %s17, %s20
    %p26 = scmp.eq.s32.totalorder %s7, 0
    %p27 = por %p25, %p26
    %p28 = scmp.ne.s32.totalorder %s17, %s20
    %p29 = scmp.eq.s32.totalorder %s12, 1
    %p30 = por %p28, %p29
    %p31 = scmp.ne.s32.totalorder %s20, %s21
    %p32 = scmp.eq.s32.totalorder %s12, 0
    %p33 = por %p31, %p32
    %p34 = scmp.ne.s32.totalorder %s20, %s21
    %p35 = scmp.eq.s32.totalorder %s13, 1
    %p36 = por %p34, %p35
    %p38 = scmp.ne.s32.totalorder %s21, %s37
    %p39 = scmp.eq.s32.totalorder %s13, 0
    %p40 = por %p38, %p39
    %s41 = ssub.s32 %s7, %s14
    %p42 = scmp.eq.s32.totalorder %s41, 0
    %s44 = sadd.s32 %s43, 1
    %s45 = scalar_select %p42, %s43, %s44
    %p48 = pneg %p42
    %p49 = scmp.eq.s32.totalorder %s7, 1
    %p50 = por %p48, %p49
    %p51 = scmp.ne.s32.totalorder %s43, %s46
    %p52 = scmp.eq.s32.totalorder %s7, 0
    %p53 = por %p51, %p52
    %p54 = scmp.ne.s32.totalorder %s43, %s46
    %p55 = scmp.eq.s32.totalorder %s12, 1
    %p56 = por %p54, %p55
    %p57 = scmp.ne.s32.totalorder %s46, %s47
    %p58 = scmp.eq.s32.totalorder %s12, 0
    %p59 = por %p57, %p58
    %p60 = scmp.ne.s32.totalorder %s46, %s47
    %p61 = scmp.eq.s32.totalorder %s13, 1
    %p62 = por %p60, %p61
    %p64 = scmp.ne.s32.totalorder %s47, %s63
    %p65 = scmp.eq.s32.totalorder %s13, 0
    %p66 = por %p64, %p65
    %p67 = scmp.le.s32.totalorder 1, %s7
    %p68 = scmp.lt.s32.totalorder %s7, 3
    %p69 = pnand %p67, %p68
    %p70 = pneg %p69
    // Predicated region
    $region9: #{edge_conditioned_conv_forward.12} parent=5 // pred_check
      _
    $region10: #{edge_conditioned_conv_forward.12} parent=5 // pred_check_branch
      %72 = sbr.rel (%p69) target = $region12
    $region11: #{edge_conditioned_conv_forward.12} parent=5 // pred_region
      %s73 = ssub.s32 %s7, 1
    $region12: #{edge_conditioned_conv_forward.12} parent=5 // pred_fallthru
      _
    %p74 = scmp.lt.s32.totalorder %s7, 2
    // Predicated region
    $region13: #{edge_conditioned_conv_forward.12} parent=5 // pred_check
      %p75 = pneg %p74
    $region14: #{edge_conditioned_conv_forward.12} parent=5 // pred_check_branch
      %77 = sbr.rel (%p75) target = $region16
    $region15: #{edge_conditioned_conv_forward.12} parent=5 // pred_region
      // Predicated region
      $region17: #{edge_conditioned_conv_forward.12} parent=15 // pred_check
        %p78 = pneg %p27
      $region18: #{edge_conditioned_conv_forward.12} parent=15 // pred_check_branch
        %80 = sbr.rel (%p78) target = $region20
      $region19: #{edge_conditioned_conv_forward.12} parent=15 // pred_region
        %p81 = scmp.lt.s32.totalorder %s7, 1
        %s82 = scalar_select %p81, %s7, 1
        %s83 = smul.addr %s82, 8
        %s84 = scalar_lea.vmem %s0, %s83
      $region20: #{edge_conditioned_conv_forward.12} parent=15 // pred_fallthru
        _
    $region16: #{edge_conditioned_conv_forward.12} parent=5 // pred_fallthru
      _
    %p85 = scmp.le.s32.totalorder 1, %s7
    %p86 = scmp.lt.s32.totalorder %s7, 3
    %p87 = pnand %p85, %p86
    %p88 = pneg %p87
    // Predicated region
    $region21: #{edge_conditioned_conv_forward.12} parent=5 // pred_check
      _
    $region22: #{edge_conditioned_conv_forward.12} parent=5 // pred_check_branch
      %90 = sbr.rel (%p87) target = $region24
    $region23: #{edge_conditioned_conv_forward.12} parent=5 // pred_region
      %s91 = ssub.s32 %s7, 1
      %p92 = scmp.lt.s32.totalorder %s12, 1
      %s93 = scalar_select %p92, %s12, 1
      %s94 = smul.addr %s93, 8
      %s95 = scalar_lea.vmem %s0, %s94
      %p96 = pneg %p33
      %p97 = pneg %p30
      %p98 = pneg %p59
      %p99 = pneg %p56
      %p100 = scmp.lt.s32.totalorder %s12, 1
      %s101 = scalar_select %p100, %s12, 1
      %s102 = scalar_lea.vmem %s1, %s101
      %p103 = scmp.lt.s32.totalorder %s12, 1
      %s104 = scalar_select %p103, %s12, 1
      %s105 = smul.addr %s104, 8
      %s106 = scalar_lea.vmem %s0, %s105
      %p107 = scmp.lt.s32.totalorder %s12, 1
      %s108 = scalar_select %p107, %s12, 1
      %s109 = scalar_lea.vmem %s1, %s108
      %v110 = vld [vmem:[%s106] sm:$0xff]
      %vm111 = vcmask 130048
      %v112 = vsel %vm111, %v110, 0.0
      %v113 = vrot.slane %v112, 4
      %v114 = vadd.f32 %v112, %v113
      %v115 = vrot.slane %v114, 2
      %v116 = vadd.f32 %v114, %v115
      %v117 = vrot.slane %v116, 1
      %v118 = vadd.f32 %v116, %v117
      %vm119 = vcmask 122880
      %120 = vst.msk [vmem:[%s109] sm:$0x1] %vm119, %v118
      %p121 = scmp.lt.s32.totalorder %s12, 1
      %s122 = scalar_select %p121, %s12, 1
      %s123 = scalar_lea.vmem %s1, %s122
      // Predicated region
      $region25: #{edge_conditioned_conv_forward.12} parent=23 // pred_check
        %p124 = pneg %p56
      $region26: #{edge_conditioned_conv_forward.12} parent=23 // pred_check_branch
        %126 = sbr.rel (%p124) target = $region28
      $region27: #{edge_conditioned_conv_forward.12} parent=23 // pred_region
        _
      $region28: #{edge_conditioned_conv_forward.12} parent=23 // pred_fallthru
        _
    $region24: #{edge_conditioned_conv_forward.12} parent=5 // pred_fallthru
      _
    %p127 = scmp.le.s32.totalorder 2, %s7
    // Predicated region
    $region29: #{edge_conditioned_conv_forward.12} parent=5 // pred_check
      %p128 = pneg %p127
    $region30: #{edge_conditioned_conv_forward.12} parent=5 // pred_check_branch
      %130 = sbr.rel (%p128) target = $region32
    $region31: #{edge_conditioned_conv_forward.12} parent=5 // pred_region
      %s131 = ssub.s32 %s7, 2
      // Predicated region
      $region33: #{edge_conditioned_conv_forward.12} parent=31 // pred_check
        %p132 = pneg %p62
      $region34: #{edge_conditioned_conv_forward.12} parent=31 // pred_check_branch
        %134 = sbr.rel (%p132) target = $region36
      $region35: #{edge_conditioned_conv_forward.12} parent=31 // pred_region
        %p135 = scmp.lt.s32.totalorder %s13, 1
        %s136 = scalar_select %p135, %s13, 1
        %s137 = scalar_lea.vmem %s1, %s136
      $region36: #{edge_conditioned_conv_forward.12} parent=31 // pred_fallthru
        _
    $region32: #{edge_conditioned_conv_forward.12} parent=5 // pred_fallthru
      _
  $region6: #{edge_conditioned_conv_forward.12} parent=0 // loop_footer
    %s11 = sadd.s32 1, %s7
  $region7: #{edge_conditioned_conv_forward.12} parent=0 // loop_footer_branch
    %6 = sbr.rel target = $region3
  $region8: #{edge_conditioned_conv_forward.12} parent=0 // loop_exit
    _

// kernel: edge_conditioned_conv_forward.13
$region0: #{edge_conditioned_conv_forward.13}
  #allocation0 [shape = 'u32[]', space=smem, size = 0x4, offset = 0x4, fixed_abs, tag = 'smem constant byte address 0x4 - core index']
  #allocation1 [shape = 'u32[144,128]{1,0:T(1,128)}', space=vmem, size = 0x12000, scoped, tag = 'internal scratch']
  %s0 = inlined_call_operand.vmem [shape: bf16[2,16], index: 0, kind: input, shape index: {}]
  %s1 = inlined_call_operand.vmem [shape: bf16[16,32], index: 1, kind: input, shape index: {}]
  %s2 = inlined_call_operand.vmem [shape: f32[1,32], index: 2, kind: input, shape index: {}]
  %s3 = inlined_call_operand.vmem [shape: f32[2,32], index: 3, kind: output, shape index: {}]
  %s4 = sld [smem:[#allocation0]]
  $region22: #{edge_conditioned_conv_forward.13} parent=0
    _
  %s6 = ssub.s32 1, %s4
  %s7 = scalar_select 0, %s6, %s4
  // Predicated region
  $region2: #{edge_conditioned_conv_forward.13} parent=0 // pred_check
    _
  $region3: #{edge_conditioned_conv_forward.13} parent=0 // pred_check_branch
    %9 = sbr.rel (0) target = $region5
  $region4: #{edge_conditioned_conv_forward.13} parent=0 // pred_region
    _
  $region5: #{edge_conditioned_conv_forward.13} parent=0 // pred_fallthru
    _
  // Predicated region
  $region6: #{edge_conditioned_conv_forward.13} parent=0 // pred_check
    _
  $region7: #{edge_conditioned_conv_forward.13} parent=0 // pred_check_branch
    %11 = sbr.rel (0) target = $region9
  $region8: #{edge_conditioned_conv_forward.13} parent=0 // pred_region
    _
  $region9: #{edge_conditioned_conv_forward.13} parent=0 // pred_fallthru
    _
  // Predicated region
  $region10: #{edge_conditioned_conv_forward.13} parent=0 // pred_check
    _
  $region11: #{edge_conditioned_conv_forward.13} parent=0 // pred_check_branch
    %13 = sbr.rel (0) target = $region13
  $region12: #{edge_conditioned_conv_forward.13} parent=0 // pred_region
    _
  $region13: #{edge_conditioned_conv_forward.13} parent=0 // pred_fallthru
    _
  %v15 = vld [vmem:[%s0] sm:$0x1]
  %v16 = vld [vmem:[%s1] sm:$0xf]
  %v17 = vld [vmem:[%s1 + $0x4] sm:$0xf]
  %v18 = vld [vmem:[%s2] sm:$0x1]
  %v20 = vlaneseq
  %v21 = vshrl.u32 %v20, 7
  %v22 = vsub.s32 0, %v21
  %v23 = vrot.slane %v18, %v22
  %v27 = vunpack.c.l.b16 %v16
  %v28 = vunpack.c.l.b16 %v17
  %v29 = vpack.c.b16 %v28, %v27
  %vm31 = vcmask 130048
  %v33 = vsel %vm31, %v15, 0
  %35 = vmatprep.subr.bf16.mxu0 0
  %36 = vmatpush1.bf16.msra.mxu0 %v29
  %37 = vmatprep.subr.bf16.mxu0 0
  %38 = vmatpush1.bf16.msra.mxu0 0
  %39 = vmatprep.subr.bf16.mxu0 0
  %40 = vmatpush1.bf16.msra.mxu0 0
  %41 = vmatprep.subr.bf16.mxu0 0
  %42 = vmatpush1.bf16.msra.mxu0 0
  %43 = vmatprep.subr.bf16.mxu0 0
  %44 = vmatpush1.bf16.msra.mxu0 0
  %45 = vmatprep.subr.bf16.mxu0 0
  %46 = vmatpush1.bf16.msra.mxu0 0
  %47 = vmatprep.subr.bf16.mxu0 0
  %48 = vmatpush1.bf16.msra.mxu0 0
  %49 = vmatprep.subr.bf16.mxu0 0
  %50 = vmatpush1.bf16.msra.mxu0 0
  %51 = vmatprep.subr.bf16.mxu0 0
  %52 = vmatpush1.bf16.msra.mxu0 0
  %53 = vmatprep.subr.bf16.mxu0 0
  %54 = vmatpush1.bf16.msra.mxu0 0
  %55 = vmatprep.subr.bf16.mxu0 0
  %56 = vmatpush1.bf16.msra.mxu0 0
  %57 = vmatprep.subr.bf16.mxu0 0
  %58 = vmatpush1.bf16.msra.mxu0 0
  %59 = vmatprep.subr.bf16.mxu0 0
  %60 = vmatpush1.bf16.msra.mxu0 0
  %61 = vmatprep.subr.bf16.mxu0 0
  %62 = vmatpush1.bf16.msra.mxu0 0
  %63 = vmatprep.subr.bf16.mxu0 0
  %64 = vmatpush1.bf16.msra.mxu0 0
  %65 = vmatprep.subr.bf16.mxu0 0
  %66 = vmatpush1.bf16.msra.mxu0 0
  %67 = vmatprep.mubr.bf16.mxu0 0
  %68 = vmatmul.mubr.bf16.gmra.mrb[0].mxu0 %v33
  %v69 = vpop.f32.mrb[0].mxu0
  %v70 = vadd.f32 %v23, %v69
  %v71 = vpop.f32.mrb[0].mxu0
  %v72 = vpop.f32.mrb[0].mxu0
  %v73 = vpop.f32.mrb[0].mxu0
  %74 = vdwg.mxu0
  %v75 = vmax.f32 %v70, 0.0
  %vm76 = vcmask 254976
  %77 = vst.msk [vmem:[%s3] sm:$0x3] %vm76, %v75
  // Predicated region
  $region14: #{edge_conditioned_conv_forward.13} parent=0 // pred_check
    _
  $region15: #{edge_conditioned_conv_forward.13} parent=0 // pred_check_branch
    %79 = sbr.rel (0) target = $region17
  $region16: #{edge_conditioned_conv_forward.13} parent=0 // pred_region
    _
  $region17: #{edge_conditioned_conv_forward.13} parent=0 // pred_fallthru
    _
  // Predicated region
  $region18: #{edge_conditioned_conv_forward.13} parent=0 // pred_check
    _
  $region19: #{edge_conditioned_conv_forward.13} parent=0 // pred_check_branch
    %81 = sbr.rel (0) target = $region21
  $region20: #{edge_conditioned_conv_forward.13} parent=0 // pred_region
    _
  $region21: #{edge_conditioned_conv_forward.13} parent=0 // pred_fallthru
    _

// kernel: edge_conditioned_conv_forward.11
$region0: #{edge_conditioned_conv_forward.11}
  #allocation0 [shape = 'u32[]', space=smem, size = 0x4, offset = 0x4, fixed_abs, tag = 'smem constant byte address 0x4 - core index']
  #allocation1 [shape = 'u32[144,128]{1,0:T(1,128)}', space=vmem, size = 0x12000, scoped, tag = 'internal scratch']
  #allocation2 [shape = 'bf16[8,128]{1,0:T(8,128)(2,1)}', space=vmem, size = 0x800, scoped, tag = 'scratch operand']
  %s0 = inlined_call_operand.vmem [shape: bf16[2,8,8,3], index: 0, kind: input, shape index: {}]
  %s1 = inlined_call_operand.vmem [shape: bf16[2,8,8,1], index: 1, kind: input, shape index: {}]
  %s2 = inlined_call_operand.vmem [shape: bf16[2,8,8], index: 2, kind: input, shape index: {}]
  %s3 = inlined_call_operand.vmem [shape: bf16[2,128,16], index: 3, kind: input, shape index: {}]
  %s4 = inlined_call_operand.vmem [shape: bf16[2,8,16], index: 4, kind: input, shape index: {}]
  %s5 = inlined_call_operand.vmem [shape: f32[2,8,16], index: 5, kind: input, shape index: {}]
  %s6 = inlined_call_operand.vmem [shape: f32[2,8,1], index: 6, kind: input, shape index: {}]
  %s7 = inlined_call_operand.vmem [shape: bf16[3,16], index: 7, kind: input, shape index: {}]
  %s8 = inlined_call_operand.vmem [shape: bf16[16,16], index: 8, kind: input, shape index: {}]
  %s9 = inlined_call_operand.vmem [shape: f32[1,16], index: 9, kind: input, shape index: {}]
  %s10 = inlined_call_operand.vmem [shape: f32[1,16], index: 10, kind: input, shape index: {}]
  %s11 = inlined_call_operand.vmem [shape: f32[2,8,16], index: 11, kind: output, shape index: {}]
  %s12 = sld [smem:[#allocation0]]
  $region77: #{edge_conditioned_conv_forward.11} parent=0
    _
  %s14 = ssub.s32 1, %s12
  %s15 = scalar_select 0, %s14, %s12
  loop: start=0, step=1, limit=4
  $region2: #{edge_conditioned_conv_forward.11} parent=0 // loop_pre_header
    _
  $region3: #{edge_conditioned_conv_forward.11} parent=0 // loop_header
    %s17 = sphi 0, %s21
    %p18 = scmp.ge.s32.totalorder %s17, 4
    %s24 = sphi 0, %s36
    %s25 = sphi 0, %s32
    %s26 = sphi 0, %s24
    %s27 = sphi 0, %s25
    %s28 = sphi 0, %s26
    %s29 = sphi 0, %s27
    %s41 = sphi 0, %s43
    %s44 = sphi 0, %s41
    %s45 = sphi 0, %s44
    %s61 = sphi 0, %s45
    %s69 = sphi 0, %s71
    %s72 = sphi 0, %s69
    %s73 = sphi 0, %s72
    %s89 = sphi 0, %s73
    %s97 = sphi 0, %s99
    %s100 = sphi 0, %s97
    %s101 = sphi 0, %s100
    %s117 = sphi 0, %s101
    %s123 = sphi 0, %s125
    %s126 = sphi 0, %s123
    %s127 = sphi 0, %s126
    %s143 = sphi 0, %s127
    %s149 = sphi 0, %s151
    %s152 = sphi 0, %s149
    %s153 = sphi 0, %s152
    %s169 = sphi 0, %s153
    %s177 = sphi 0, %s179
    %s180 = sphi 0, %s177
    %s181 = sphi 0, %s180
    %s197 = sphi 0, %s181
    %s205 = sphi 0, %s207
    %s208 = sphi 0, %s205
    %s209 = sphi 0, %s208
    %s225 = sphi 0, %s209
    %s229 = sphi 0, %s229
    %s231 = sphi 0, %s229
    %s232 = sphi 0, %s231
    %s246 = sphi 0, %s232
    %s250 = sphi 0, %s250
    %s252 = sphi 0, %s250
    %s253 = sphi 0, %s252
    %s267 = sphi 0, %s253
    %s271 = sphi 0, %s271
    %s273 = sphi 0, %s271
    %s274 = sphi 0, %s273
    %s288 = sphi 0, %s274
    %s292 = sphi 0, %s292
    %s294 = sphi 0, %s292
    %s295 = sphi 0, %s294
    %s309 = sphi 0, %s295
    %s317 = sphi 0, %s319
    %s320 = sphi 0, %s317
    %s321 = sphi 0, %s320
    %s337 = sphi 0, %s321
  $region4: #{edge_conditioned_conv_forward.11} parent=0 // loop_header_branch
    %20 = sbr.rel (%p18) target = $region8
  $region5: #{edge_conditioned_conv_forward.11} parent=0 // loop_body
    %s22 = ssub.s32 %s17, 1
    %s23 = ssub.s32 %s17, 2
    %s30 = sadd.s32 1, %s25
    %p31 = scmp.ge.s32.totalorder %s30, 1
    %s32 = scalar_select %p31, 0, %s30
    %s33 = sadd.s32 1, %s24
    %s34 = scalar_select %p31, %s33, %s24
    %p35 = scmp.ge.s32.totalorder %s34, 2
    %s36 = scalar_select %p35, 0, %s34
    %s37 = ssub.s32 %s24, %s36
    %s38 = ssub.s32 %s25, %s32
    %s39 = sor.u32 %s37, %s38
    %p40 = scmp.eq.s32.totalorder %s39, 0
    %s42 = sadd.s32 %s41, 1
    %s43 = scalar_select %p40, %s41, %s42
    %p46 = pneg %p40
    %p47 = scmp.eq.s32.totalorder %s17, 1
    %p48 = por %p46, %p47
    %p49 = scmp.ne.s32.totalorder %s41, %s44
    %p50 = scmp.eq.s32.totalorder %s17, 0
    %p51 = por %p49, %p50
    %p52 = scmp.ne.s32.totalorder %s41, %s44
    %p53 = scmp.eq.s32.totalorder %s22, 1
    %p54 = por %p52, %p53
    %p55 = scmp.ne.s32.totalorder %s44, %s45
    %p56 = scmp.eq.s32.totalorder %s22, 0
    %p57 = por %p55, %p56
    %p58 = scmp.ne.s32.totalorder %s44, %s45
    %p59 = scmp.eq.s32.totalorder %s23, 1
    %p60 = por %p58, %p59
    %p62 = scmp.ne.s32.totalorder %s45, %s61
    %p63 = scmp.eq.s32.totalorder %s23, 0
    %p64 = por %p62, %p63
    %s65 = ssub.s32 %s24, %s36
    %s66 = ssub.s32 %s25, %s32
    %s67 = sor.u32 %s65, %s66
    %p68 = scmp.eq.s32.totalorder %s67, 0
    %s70 = sadd.s32 %s69, 1
    %s71 = scalar_select %p68, %s69, %s70
    %p74 = pneg %p68
    %p75 = scmp.eq.s32.totalorder %s17, 1
    %p76 = por %p74, %p75
    %p77 = scmp.ne.s32.totalorder %s69, %s72
    %p78 = scmp.eq.s32.totalorder %s17, 0
    %p79 = por %p77, %p78
    %p80 = scmp.ne.s32.totalorder %s69, %s72
    %p81 = scmp.eq.s32.totalorder %s22, 1
    %p82 = por %p80, %p81
    %p83 = scmp.ne.s32.totalorder %s72, %s73
    %p84 = scmp.eq.s32.totalorder %s22, 0
    %p85 = por %p83, %p84
    %p86 = scmp.ne.s32.totalorder %s72, %s73
    %p87 = scmp.eq.s32.totalorder %s23, 1
    %p88 = por %p86, %p87
    %p90 = scmp.ne.s32.totalorder %s73, %s89
    %p91 = scmp.eq.s32.totalorder %s23, 0
    %p92 = por %p90, %p91
    %s93 = ssub.s32 %s24, %s36
    %s94 = ssub.s32 %s25, %s32
    %s95 = sor.u32 %s93, %s94
    %p96 = scmp.eq.s32.totalorder %s95, 0
    %s98 = sadd.s32 %s97, 1
    %s99 = scalar_select %p96, %s97, %s98
    %p102 = pneg %p96
    %p103 = scmp.eq.s32.totalorder %s17, 1
    %p104 = por %p102, %p103
    %p105 = scmp.ne.s32.totalorder %s97, %s100
    %p106 = scmp.eq.s32.totalorder %s17, 0
    %p107 = por %p105, %p106
    %p108 = scmp.ne.s32.totalorder %s97, %s100
    %p109 = scmp.eq.s32.totalorder %s22, 1
    %p110 = por %p108, %p109
    %p111 = scmp.ne.s32.totalorder %s100, %s101
    %p112 = scmp.eq.s32.totalorder %s22, 0
    %p113 = por %p111, %p112
    %p114 = scmp.ne.s32.totalorder %s100, %s101
    %p115 = scmp.eq.s32.totalorder %s23, 1
    %p116 = por %p114, %p115
    %p118 = scmp.ne.s32.totalorder %s101, %s117
    %p119 = scmp.eq.s32.totalorder %s23, 0
    %p120 = por %p118, %p119
    %s121 = ssub.s32 %s24, %s36
    %p122 = scmp.eq.s32.totalorder %s121, 0
    %s124 = sadd.s32 %s123, 1
    %s125 = scalar_select %p122, %s123, %s124
    %p128 = pneg %p122
    %p129 = scmp.eq.s32.totalorder %s17, 1
    %p130 = por %p128, %p129
    %p131 = scmp.ne.s32.totalorder %s123, %s126
    %p132 = scmp.eq.s32.totalorder %s17, 0
    %p133 = por %p131, %p132
    %p134 = scmp.ne.s32.totalorder %s123, %s126
    %p135 = scmp.eq.s32.totalorder %s22, 1
    %p136 = por %p134, %p135
    %p137 = scmp.ne.s32.totalorder %s126, %s127
    %p138 = scmp.eq.s32.totalorder %s22, 0
    %p139 = por %p137, %p138
    %p140 = scmp.ne.s32.totalorder %s126, %s127
    %p141 = scmp.eq.s32.totalorder %s23, 1
    %p142 = por %p140, %p141
    %p144 = scmp.ne.s32.totalorder %s127, %s143
    %p145 = scmp.eq.s32.totalorder %s23, 0
    %p146 = por %p144, %p145
    %s147 = ssub.s32 %s24, %s36
    %p148 = scmp.eq.s32.totalorder %s147, 0
    %s150 = sadd.s32 %s149, 1
    %s151 = scalar_select %p148, %s149, %s150
    %p154 = pneg %p148
    %p155 = scmp.eq.s32.totalorder %s17, 1
    %p156 = por %p154, %p155
    %p157 = scmp.ne.s32.totalorder %s149, %s152
    %p158 = scmp.eq.s32.totalorder %s17, 0
    %p159 = por %p157, %p158
    %p160 = scmp.ne.s32.totalorder %s149, %s152
    %p161 = scmp.eq.s32.totalorder %s22, 1
    %p162 = por %p160, %p161
    %p163 = scmp.ne.s32.totalorder %s152, %s153
    %p164 = scmp.eq.s32.totalorder %s22, 0
    %p165 = por %p163, %p164
    %p166 = scmp.ne.s32.totalorder %s152, %s153
    %p167 = scmp.eq.s32.totalorder %s23, 1
    %p168 = por %p166, %p167
    %p170 = scmp.ne.s32.totalorder %s153, %s169
    %p171 = scmp.eq.s32.totalorder %s23, 0
    %p172 = por %p170, %p171
    %s173 = ssub.s32 %s24, %s36
    %s174 = ssub.s32 %s25, %s32
    %s175 = sor.u32 %s173, %s174
    %p176 = scmp.eq.s32.totalorder %s175, 0
    %s178 = sadd.s32 %s177, 1
    %s179 = scalar_select %p176, %s177, %s178
    %p182 = pneg %p176
    %p183 = scmp.eq.s32.totalorder %s17, 1
    %p184 = por %p182, %p183
    %p185 = scmp.ne.s32.totalorder %s177, %s180
    %p186 = scmp.eq.s32.totalorder %s17, 0
    %p187 = por %p185, %p186
    %p188 = scmp.ne.s32.totalorder %s177, %s180
    %p189 = scmp.eq.s32.totalorder %s22, 1
    %p190 = por %p188, %p189
    %p191 = scmp.ne.s32.totalorder %s180, %s181
    %p192 = scmp.eq.s32.totalorder %s22, 0
    %p193 = por %p191, %p192
    %p194 = scmp.ne.s32.totalorder %s180, %s181
    %p195 = scmp.eq.s32.totalorder %s23, 1
    %p196 = por %p194, %p195
    %p198 = scmp.ne.s32.totalorder %s181, %s197
    %p199 = scmp.eq.s32.totalorder %s23, 0
    %p200 = por %p198, %p199
    %s201 = ssub.s32 %s24, %s36
    %s202 = ssub.s32 %s25, %s32
    %s203 = sor.u32 %s201, %s202
    %p204 = scmp.eq.s32.totalorder %s203, 0
    %s206 = sadd.s32 %s205, 1
    %s207 = scalar_select %p204, %s205, %s206
    %p210 = pneg %p204
    %p211 = scmp.eq.s32.totalorder %s17, 1
    %p212 = por %p210, %p211
    %p213 = scmp.ne.s32.totalorder %s205, %s208
    %p214 = scmp.eq.s32.totalorder %s17, 0
    %p215 = por %p213, %p214
    %p216 = scmp.ne.s32.totalorder %s205, %s208
    %p217 = scmp.eq.s32.totalorder %s22, 1
    %p218 = por %p216, %p217
    %p219 = scmp.ne.s32.totalorder %s208, %s209
    %p220 = scmp.eq.s32.totalorder %s22, 0
    %p221 = por %p219, %p220
    %p222 = scmp.ne.s32.totalorder %s208, %s209
    %p223 = scmp.eq.s32.totalorder %s23, 1
    %p224 = por %p222, %p223
    %p226 = scmp.ne.s32.totalorder %s209, %s225
    %p227 = scmp.eq.s32.totalorder %s23, 0
    %p228 = por %p226, %p227
    %s230 = sadd.s32 %s229, 1
    %p233 = scmp.eq.s32.totalorder %s17, 1
    %p234 = scmp.ne.s32.totalorder %s229, %s231
    %p235 = scmp.eq.s32.totalorder %s17, 0
    %p236 = por %p234, %p235
    %p237 = scmp.ne.s32.totalorder %s229, %s231
    %p238 = scmp.eq.s32.totalorder %s22, 1
    %p239 = por %p237, %p238
    %p240 = scmp.ne.s32.totalorder %s231, %s232
    %p241 = scmp.eq.s32.totalorder %s22, 0
    %p242 = por %p240, %p241
    %p243 = scmp.ne.s32.totalorder %s231, %s232
    %p244 = scmp.eq.s32.totalorder %s23, 1
    %p245 = por %p243, %p244
    %p247 = scmp.ne.s32.totalorder %s232, %s246
    %p248 = scmp.eq.s32.totalorder %s23, 0
    %p249 = por %p247, %p248
    %s251 = sadd.s32 %s250, 1
    %p254 = scmp.eq.s32.totalorder %s17, 1
    %p255 = scmp.ne.s32.totalorder %s250, %s252
    %p256 = scmp.eq.s32.totalorder %s17, 0
    %p257 = por %p255, %p256
    %p258 = scmp.ne.s32.totalorder %s250, %s252
    %p259 = scmp.eq.s32.totalorder %s22, 1
    %p260 = por %p258, %p259
    %p261 = scmp.ne.s32.totalorder %s252, %s253
    %p262 = scmp.eq.s32.totalorder %s22, 0
    %p263 = por %p261, %p262
    %p264 = scmp.ne.s32.totalorder %s252, %s253
    %p265 = scmp.eq.s32.totalorder %s23, 1
    %p266 = por %p264, %p265
    %p268 = scmp.ne.s32.totalorder %s253, %s267
    %p269 = scmp.eq.s32.totalorder %s23, 0
    %p270 = por %p268, %p269
    %s272 = sadd.s32 %s271, 1
    %p275 = scmp.eq.s32.totalorder %s17, 1
    %p276 = scmp.ne.s32.totalorder %s271, %s273
    %p277 = scmp.eq.s32.totalorder %s17, 0
    %p278 = por %p276, %p277
    %p279 = scmp.ne.s32.totalorder %s271, %s273
    %p280 = scmp.eq.s32.totalorder %s22, 1
    %p281 = por %p279, %p280
    %p282 = scmp.ne.s32.totalorder %s273, %s274
    %p283 = scmp.eq.s32.totalorder %s22, 0
    %p284 = por %p282, %p283
    %p285 = scmp.ne.s32.totalorder %s273, %s274
    %p286 = scmp.eq.s32.totalorder %s23, 1
    %p287 = por %p285, %p286
    %p289 = scmp.ne.s32.totalorder %s274, %s288
    %p290 = scmp.eq.s32.totalorder %s23, 0
    %p291 = por %p289, %p290
    %s293 = sadd.s32 %s292, 1
    %p296 = scmp.eq.s32.totalorder %s17, 1
    %p297 = scmp.ne.s32.totalorder %s292, %s294
    %p298 = scmp.eq.s32.totalorder %s17, 0
    %p299 = por %p297, %p298
    %p300 = scmp.ne.s32.totalorder %s292, %s294
    %p301 = scmp.eq.s32.totalorder %s22, 1
    %p302 = por %p300, %p301
    %p303 = scmp.ne.s32.totalorder %s294, %s295
    %p304 = scmp.eq.s32.totalorder %s22, 0
    %p305 = por %p303, %p304
    %p306 = scmp.ne.s32.totalorder %s294, %s295
    %p307 = scmp.eq.s32.totalorder %s23, 1
    %p308 = por %p306, %p307
    %p310 = scmp.ne.s32.totalorder %s295, %s309
    %p311 = scmp.eq.s32.totalorder %s23, 0
    %p312 = por %p310, %p311
    %s313 = ssub.s32 %s24, %s36
    %s314 = ssub.s32 %s25, %s32
    %s315 = sor.u32 %s313, %s314
    %p316 = scmp.eq.s32.totalorder %s315, 0
    %s318 = sadd.s32 %s317, 1
    %s319 = scalar_select %p316, %s317, %s318
    %p322 = pneg %p316
    %p323 = scmp.eq.s32.totalorder %s17, 1
    %p324 = por %p322, %p323
    %p325 = scmp.ne.s32.totalorder %s317, %s320
    %p326 = scmp.eq.s32.totalorder %s17, 0
    %p327 = por %p325, %p326
    %p328 = scmp.ne.s32.totalorder %s317, %s320
    %p329 = scmp.eq.s32.totalorder %s22, 1
    %p330 = por %p328, %p329
    %p331 = scmp.ne.s32.totalorder %s320, %s321
    %p332 = scmp.eq.s32.totalorder %s22, 0
    %p333 = por %p331, %p332
    %p334 = scmp.ne.s32.totalorder %s320, %s321
    %p335 = scmp.eq.s32.totalorder %s23, 1
    %p336 = por %p334, %p335
    %p338 = scmp.ne.s32.totalorder %s321, %s337
    %p339 = scmp.eq.s32.totalorder %s23, 0
    %p340 = por %p338, %p339
    %p341 = scmp.le.s32.totalorder 1, %s17
    %p342 = scmp.lt.s32.totalorder %s17, 3
    %p343 = pnand %p341, %p342
    %p344 = pneg %p343
    // Predicated region
    $region9: #{edge_conditioned_conv_forward.11} parent=5 // pred_check
      _
    $region10: #{edge_conditioned_conv_forward.11} parent=5 // pred_check_branch
      %346 = sbr.rel (%p343) target = $region12
    $region11: #{edge_conditioned_conv_forward.11} parent=5 // pred_region
      %s347 = ssub.s32 %s17, 1
      // Predicated region
      $region13: #{edge_conditioned_conv_forward.11} parent=11 // pred_check
        %p348 = pneg %p242
      $region14: #{edge_conditioned_conv_forward.11} parent=11 // pred_check_branch
        %350 = sbr.rel (%p348) target = $region16
      $region15: #{edge_conditioned_conv_forward.11} parent=11 // pred_region
        _
      $region16: #{edge_conditioned_conv_forward.11} parent=11 // pred_fallthru
        _
      // Predicated region
      $region17: #{edge_conditioned_conv_forward.11} parent=11 // pred_check
        %p351 = pneg %p263
      $region18: #{edge_conditioned_conv_forward.11} parent=11 // pred_check_branch
        %353 = sbr.rel (%p351) target = $region20
      $region19: #{edge_conditioned_conv_forward.11} parent=11 // pred_region
        _
      $region20: #{edge_conditioned_conv_forward.11} parent=11 // pred_fallthru
        _
      // Predicated region
      $region21: #{edge_conditioned_conv_forward.11} parent=11 // pred_check
        %p354 = pneg %p284
      $region22: #{edge_conditioned_conv_forward.11} parent=11 // pred_check_branch
        %356 = sbr.rel (%p354) target = $region24
      $region23: #{edge_conditioned_conv_forward.11} parent=11 // pred_region
        _
      $region24: #{edge_conditioned_conv_forward.11} parent=11 // pred_fallthru
        _
      // Predicated region
      $region25: #{edge_conditioned_conv_forward.11} parent=11 // pred_check
        %p357 = pneg %p305
      $region26: #{edge_conditioned_conv_forward.11} parent=11 // pred_check_branch
        %359 = sbr.rel (%p357) target = $region28
      $region27: #{edge_conditioned_conv_forward.11} parent=11 // pred_region
        _
      $region28: #{edge_conditioned_conv_forward.11} parent=11 // pred_fallthru
        _
    $region12: #{edge_conditioned_conv_forward.11} parent=5 // pred_fallthru
      _
    %p360 = scmp.lt.s32.totalorder %s17, 2
    // Predicated region
    $region29: #{edge_conditioned_conv_forward.11} parent=5 // pred_check
      %p361 = pneg %p360
    $region30: #{edge_conditioned_conv_forward.11} parent=5 // pred_check_branch
      %363 = sbr.rel (%p361) target = $region32
    $region31: #{edge_conditioned_conv_forward.11} parent=5 // pred_region
      // Predicated region
      $region33: #{edge_conditioned_conv_forward.11} parent=31 // pred_check
        %p364 = pneg %p51
      $region34: #{edge_conditioned_conv_forward.11} parent=31 // pred_check_branch
        %366 = sbr.rel (%p364) target = $region36
      $region35: #{edge_conditioned_conv_forward.11} parent=31 // pred_region
        %p367 = scmp.lt.s32.totalorder %s24, 1
        %s368 = scalar_select %p367, %s24, 1
        %p369 = scmp.lt.s32.totalorder %s25, 0
        %s370 = scalar_select %p369, %s25, 0
        %s371 = smul.addr %s368, 8
        %s372 = sadd.s32 %s370, %s371
        %s373 = smul.addr %s372, 4
        %s374 = scalar_lea.vmem %s0, %s373
      $region36: #{edge_conditioned_conv_forward.11} parent=31 // pred_fallthru
        _
      // Predicated region
      $region37: #{edge_conditioned_conv_forward.11} parent=31 // pred_check
        %p375 = pneg %p79
      $region38: #{edge_conditioned_conv_forward.11} parent=31 // pred_check_branch
        %377 = sbr.rel (%p375) target = $region40
      $region39: #{edge_conditioned_conv_forward.11} parent=31 // pred_region
        %p378 = scmp.lt.s32.totalorder %s24, 1
        %s379 = scalar_select %p378, %s24, 1
        %p380 = scmp.lt.s32.totalorder %s25, 0
        %s381 = scalar_select %p380, %s25, 0
        %s382 = smul.addr %s379, 8
        %s383 = sadd.s32 %s381, %s382
        %s384 = smul.addr %s383, 4
        %s385 = scalar_lea.vmem %s1, %s384
      $region40: #{edge_conditioned_conv_forward.11} parent=31 // pred_fallthru
        _
      // Predicated region
      $region41: #{edge_conditioned_conv_forward.11} parent=31 // pred_check
        %p386 = pneg %p107
      $region42: #{edge_conditioned_conv_forward.11} parent=31 // pred_check_branch
        %388 = sbr.rel (%p386) target = $region44
      $region43: #{edge_conditioned_conv_forward.11} parent=31 // pred_region
        %p389 = scmp.lt.s32.totalorder %s24, 1
        %s390 = scalar_select %p389, %s24, 1
        %p391 = scmp.lt.s32.totalorder %s25, 0
        %s392 = scalar_select %p391, %s25, 0
        %s393 = sadd.s32 %s392, %s390
        %s394 = smul.addr %s393, 4
        %s395 = scalar_lea.vmem %s2, %s394
      $region44: #{edge_conditioned_conv_forward.11} parent=31 // pred_fallthru
        _
      // Predicated region
      $region45: #{edge_conditioned_conv_forward.11} parent=31 // pred_check
        %p396 = pneg %p133
      $region46: #{edge_conditioned_conv_forward.11} parent=31 // pred_check_branch
        %398 = sbr.rel (%p396) target = $region48
      $region47: #{edge_conditioned_conv_forward.11} parent=31 // pred_region
        %p399 = scmp.lt.s32.totalorder %s24, 1
        %s400 = scalar_select %p399, %s24, 1
        %s401 = smul.addr %s400, 16
        %s402 = smul.addr %s401, 4
        %s403 = scalar_lea.vmem %s3, %s402
      $region48: #{edge_conditioned_conv_forward.11} parent=31 // pred_fallthru
        _
      // Predicated region
      $region49: #{edge_conditioned_conv_forward.11} parent=31 // pred_check
        %p404 = pneg %p159
      $region50: #{edge_conditioned_conv_forward.11} parent=31 // pred_check_branch
        %406 = sbr.rel (%p404) target = $region52
      $region51: #{edge_conditioned_conv_forward.11} parent=31 // pred_region
        %p407 = scmp.lt.s32.totalorder %s24, 1
        %s408 = scalar_select %p407, %s24, 1
        %s409 = smul.addr %s408, 4
        %s410 = scalar_lea.vmem %s4, %s409
      $region52: #{edge_conditioned_conv_forward.11} parent=31 // pred_fallthru
        _
      // Predicated region
      $region53: #{edge_conditioned_conv_forward.11} parent=31 // pred_check
        %p411 = pneg %p187
      $region54: #{edge_conditioned_conv_forward.11} parent=31 // pred_check_branch
        %413 = sbr.rel (%p411) target = $region56
      $region55: #{edge_conditioned_conv_forward.11} parent=31 // pred_region
        %p414 = scmp.lt.s32.totalorder %s24, 1
        %s415 = scalar_select %p414, %s24, 1
        %p416 = scmp.lt.s32.totalorder %s25, 0
        %s417 = scalar_select %p416, %s25, 0
        %s418 = sadd.s32 %s417, %s415
        %s419 = smul.addr %s418, 8
        %s420 = scalar_lea.vmem %s5, %s419
      $region56: #{edge_conditioned_conv_forward.11} parent=31 // pred_fallthru
        _
      // Predicated region
      $region57: #{edge_conditioned_conv_forward.11} parent=31 // pred_check
        %p421 = pneg %p215
      $region58: #{edge_conditioned_conv_forward.11} parent=31 // pred_check_branch
        %423 = sbr.rel (%p421) target = $region60
      $region59: #{edge_conditioned_conv_forward.11} parent=31 // pred_region
        %p424 = scmp.lt.s32.totalorder %s24, 1
        %s425 = scalar_select %p424, %s24, 1
        %p426 = scmp.lt.s32.totalorder %s25, 0
        %s427 = scalar_select %p426, %s25, 0
        %s428 = sadd.s32 %s427, %s425
        %s429 = smul.addr %s428, 8
        %s430 = scalar_lea.vmem %s6, %s429
      $region60: #{edge_conditioned_conv_forward.11} parent=31 // pred_fallthru
        _
    $region32: #{edge_conditioned_conv_forward.11} parent=5 // pred_fallthru
      _
    %p431 = scmp.le.s32.totalorder 1, %s17
    %p432 = scmp.lt.s32.totalorder %s17, 3
    %p433 = pnand %p431, %p432
    %p434 = pneg %p433
    // Predicated region
    $region61: #{edge_conditioned_conv_forward.11} parent=5 // pred_check
      _
    $region62: #{edge_conditioned_conv_forward.11} parent=5 // pred_check_branch
      %436 = sbr.rel (%p433) target = $region64
    $region63: #{edge_conditioned_conv_forward.11} parent=5 // pred_region
      %s437 = ssub.s32 %s17, 1
      %p438 = scmp.lt.s32.totalorder %s26, 1
      %s439 = scalar_select %p438, %s26, 1
      %p440 = scmp.lt.s32.totalorder %s27, 0
      %s441 = scalar_select %p440, %s27, 0
      %s442 = smul.addr %s439, 8
      %s443 = sadd.s32 %s441, %s442
      %s444 = smul.addr %s443, 4
      %s445 = scalar_lea.vmem %s0, %s444
      %p446 = pneg %p57
      %p447 = pneg %p54
      %p448 = scmp.lt.s32.totalorder %s26, 1
      %s449 = scalar_select %p448, %s26, 1
      %p450 = scmp.lt.s32.totalorder %s27, 0
      %s451 = scalar_select %p450, %s27, 0
      %s452 = smul.addr %s449, 8
      %s453 = sadd.s32 %s451, %s452
      %s454 = smul.addr %s453, 4
      %s455 = scalar_lea.vmem %s1, %s454
      %p456 = pneg %p85
      %p457 = pneg %p82
      %p458 = scmp.lt.s32.totalorder %s26, 1
      %s459 = scalar_select %p458, %s26, 1
      %p460 = scmp.lt.s32.totalorder %s27, 0
      %s461 = scalar_select %p460, %s27, 0
      %s462 = sadd.s32 %s461, %s459
      %s463 = smul.addr %s462, 4
      %s464 = scalar_lea.vmem %s2, %s463
      %p465 = pneg %p113
      %p466 = pneg %p110
      %p467 = scmp.lt.s32.totalorder %s26, 1
      %s468 = scalar_select %p467, %s26, 1
      %s469 = smul.addr %s468, 16
      %s470 = smul.addr %s469, 4
      %s471 = scalar_lea.vmem %s3, %s470
      %p472 = pneg %p139
      %p473 = pneg %p136
      %p474 = scmp.lt.s32.totalorder %s26, 1
      %s475 = scalar_select %p474, %s26, 1
      %s476 = smul.addr %s475, 4
      %s477 = scalar_lea.vmem %s4, %s476
      %p478 = pneg %p165
      %p479 = pneg %p162
      %p480 = scmp.lt.s32.totalorder %s26, 1
      %s481 = scalar_select %p480, %s26, 1
      %p482 = scmp.lt.s32.totalorder %s27, 0
      %s483 = scalar_select %p482, %s27, 0
      %s484 = sadd.s32 %s483, %s481
      %s485 = smul.addr %s484, 8
      %s486 = scalar_lea.vmem %s5, %s485
      %p487 = pneg %p193
      %p488 = pneg %p190
      %p489 = scmp.lt.s32.totalorder %s26, 1
      %s490 = scalar_select %p489, %s26, 1
      %p491 = scmp.lt.s32.totalorder %s27, 0
      %s492 = scalar_select %p491, %s27, 0
      %s493 = sadd.s32 %s492, %s490
      %s494 = smul.addr %s493, 8
      %s495 = scalar_lea.vmem %s6, %s494
      %p496 = pneg %p221
      %p497 = pneg %p218
      %p498 = pneg %p242
      %p499 = pneg %p239
      %p500 = pneg %p263
      %p501 = pneg %p260
      %p502 = pneg %p284
      %p503 = pneg %p281
      %p504 = pneg %p305
      %p505 = pneg %p302
      %p506 = pneg %p333
      %p507 = pneg %p330
      %p508 = scmp.lt.s32.totalorder %s26, 1
      %s509 = scalar_select %p508, %s26, 1
      %p510 = scmp.lt.s32.totalorder %s27, 0
      %s511 = scalar_select %p510, %s27, 0
      %s512 = sadd.s32 %s511, %s509
      %s513 = smul.addr %s512, 8
      %s514 = scalar_lea.vmem %s11, %s513
      %p515 = scmp.lt.s32.totalorder %s26, 1
      %s516 = scalar_select %p515, %s26, 1
      %p517 = scmp.lt.s32.totalorder %s27, 0
      %s518 = scalar_select %p517, %s27, 0
      %s519 = smul.addr %s516, 8
      %s520 = sadd.s32 %s518, %s519
      %s521 = smul.addr %s520, 4
      %s522 = scalar_lea.vmem %s0, %s521
      %p523 = scmp.lt.s32.totalorder %s26, 1
      %s524 = scalar_select %p523, %s26, 1
      %p525 = scmp.lt.s32.totalorder %s27, 0
      %s526 = scalar_select %p525, %s27, 0
      %s527 = smul.addr %s524, 8
      %s528 = sadd.s32 %s526, %s527
      %s529 = smul.addr %s528, 4
      %s530 = scalar_lea.vmem %s1, %s529
      %p531 = scmp.lt.s32.totalorder %s26, 1
      %s532 = scalar_select %p531, %s26, 1
      %p533 = scmp.lt.s32.totalorder %s27, 0
      %s534 = scalar_select %p533, %s27, 0
      %s535 = sadd.s32 %s534, %s532
      %s536 = smul.addr %s535, 4
      %s537 = scalar_lea.vmem %s2, %s536
      %p538 = scmp.lt.s32.totalorder %s26, 1
      %s539 = scalar_select %p538, %s26, 1
      %s540 = smul.addr %s539, 16
      %s541 = smul.addr %s540, 4
      %s542 = scalar_lea.vmem %s3, %s541
      %p543 = scmp.lt.s32.totalorder %s26, 1
      %s544 = scalar_select %p543, %s26, 1
      %s545 = smul.addr %s544, 4
      %s546 = scalar_lea.vmem %s4, %s545
      %p547 = scmp.lt.s32.totalorder %s26, 1
      %s548 = scalar_select %p547, %s26, 1
      %p549 = scmp.lt.s32.totalorder %s27, 0
      %s550 = scalar_select %p549, %s27, 0
      %s551 = sadd.s32 %s550, %s548
      %s552 = smul.addr %s551, 8
      %s553 = scalar_lea.vmem %s5, %s552
      %p554 = scmp.lt.s32.totalorder %s26, 1
      %s555 = scalar_select %p554, %s26, 1
      %p556 = scmp.lt.s32.totalorder %s27, 0
      %s557 = scalar_select %p556, %s27, 0
      %s558 = sadd.s32 %s557, %s555
      %s559 = smul.addr %s558, 8
      %s560 = scalar_lea.vmem %s6, %s559
      %p561 = scmp.lt.s32.totalorder %s26, 1
      %s562 = scalar_select %p561, %s26, 1
      %p563 = scmp.lt.s32.totalorder %s27, 0
      %s564 = scalar_select %p563, %s27, 0
      %s565 = sadd.s32 %s564, %s562
      %s566 = smul.addr %s565, 8
      %s567 = scalar_lea.vmem %s11, %s566
      %v569 = vld [vmem:[%s522] sm:$0xf]
      %v570 = vld [vmem:[%s7] sm:$0x3]
      %v571 = vld [vmem:[%s9] sm:$0x1]
      %v573 = vlaneseq
      %v574 = vshrl.u32 %v573, 7
      %v575 = vsub.s32 0, %v574
      %v576 = vrot.slane %v571, %v575
      %vm578 = vcmask 23552
      %v580 = vsel %vm578, %v569, 0
      %vm582 = vcmask 1040384
      %vm583 = vcmask 1041408
      %v584 = vsel %vm582, 4294967295, 65535
      %v585 = vsel %vm583, %v584, 0
      %v587 = vand.u32 %v570, %v585
      %589 = vmatprep.subr.bf16.mxu0 0
      %590 = vmatpush1.bf16.msra.mxu0 %v587
      %591 = vmatprep.subr.bf16.mxu0 0
      %592 = vmatpush1.bf16.msra.mxu0 0
      %593 = vmatprep.subr.bf16.mxu0 0
      %594 = vmatpush1.bf16.msra.mxu0 0
      %595 = vmatprep.subr.bf16.mxu0 0
      %596 = vmatpush1.bf16.msra.mxu0 0
      %597 = vmatprep.subr.bf16.mxu0 0
      %598 = vmatpush1.bf16.msra.mxu0 0
      %599 = vmatprep.subr.bf16.mxu0 0
      %600 = vmatpush1.bf16.msra.mxu0 0
      %601 = vmatprep.subr.bf16.mxu0 0
      %602 = vmatpush1.bf16.msra.mxu0 0
      %603 = vmatprep.subr.bf16.mxu0 0
      %604 = vmatpush1.bf16.msra.mxu0 0
      %605 = vmatprep.subr.bf16.mxu0 0
      %606 = vmatpush1.bf16.msra.mxu0 0
      %607 = vmatprep.subr.bf16.mxu0 0
      %608 = vmatpush1.bf16.msra.mxu0 0
      %609 = vmatprep.subr.bf16.mxu0 0
      %610 = vmatpush1.bf16.msra.mxu0 0
      %611 = vmatprep.subr.bf16.mxu0 0
      %612 = vmatpush1.bf16.msra.mxu0 0
      %613 = vmatprep.subr.bf16.mxu0 0
      %614 = vmatpush1.bf16.msra.mxu0 0
      %615 = vmatprep.subr.bf16.mxu0 0
      %616 = vmatpush1.bf16.msra.mxu0 0
      %617 = vmatprep.subr.bf16.mxu0 0
      %618 = vmatpush1.bf16.msra.mxu0 0
      %619 = vmatprep.subr.bf16.mxu0 0
      %620 = vmatpush1.bf16.msra.mxu0 0
      %621 = vmatprep.mubr.bf16.mxu0 0
      %622 = vmatmul.mubr.bf16.gmra.mrb[0].mxu0 %v580
      %v623 = vpop.f32.mrb[0].mxu0
      %v624 = vadd.f32 %v576, %v623
      %v625 = vpop.f32.mrb[0].mxu0
      %v626 = vpop.f32.mrb[0].mxu0
      %v627 = vpop.f32.mrb[0].mxu0
      %628 = vdwg.mxu0
      %v629 = vmax.f32 %v624, 0.0
      %v630 = vpack.c.bf16 %v629, %v629
      %v631 = vld [vmem:[%s8] sm:$0xf]
      %v632 = vld [vmem:[%s8 + $0x4] sm:$0xf]
      %v633 = vld [vmem:[%s10] sm:$0x1]
      %v635 = vlaneseq
      %v636 = vshrl.u32 %v635, 7
      %v637 = vsub.s32 0, %v636
      %v638 = vrot.slane %v633, %v637
      %v642 = vunpack.c.l.b16 %v631
      %v643 = vunpack.c.l.b16 %v632
      %v644 = vpack.c.b16 %v643, %v642
      %vm646 = vcmask 130048
      %v648 = vsel %vm646, %v630, 0
      %650 = vmatprep.subr.bf16.mxu0 0
      %651 = vmatpush1.bf16.msra.mxu0 %v644
      %652 = vmatprep.subr.bf16.mxu0 0
      %653 = vmatpush1.bf16.msra.mxu0 0
      %654 = vmatprep.subr.bf16.mxu0 0
      %655 = vmatpush1.bf16.msra.mxu0 0
      %656 = vmatprep.subr.bf16.mxu0 0
      %657 = vmatpush1.bf16.msra.mxu0 0
      %658 = vmatprep.subr.bf16.mxu0 0
      %659 = vmatpush1.bf16.msra.mxu0 0
      %660 = vmatprep.subr.bf16.mxu0 0
      %661 = vmatpush1.bf16.msra.mxu0 0
      %662 = vmatprep.subr.bf16.mxu0 0
      %663 = vmatpush1.bf16.msra.mxu0 0
      %664 = vmatprep.subr.bf16.mxu0 0
      %665 = vmatpush1.bf16.msra.mxu0 0
      %666 = vmatprep.subr.bf16.mxu0 0
      %667 = vmatpush1.bf16.msra.mxu0 0
      %668 = vmatprep.subr.bf16.mxu0 0
      %669 = vmatpush1.bf16.msra.mxu0 0
      %670 = vmatprep.subr.bf16.mxu0 0
      %671 = vmatpush1.bf16.msra.mxu0 0
      %672 = vmatprep.subr.bf16.mxu0 0
      %673 = vmatpush1.bf16.msra.mxu0 0
      %674 = vmatprep.subr.bf16.mxu0 0
      %675 = vmatpush1.bf16.msra.mxu0 0
      %676 = vmatprep.subr.bf16.mxu0 0
      %677 = vmatpush1.bf16.msra.mxu0 0
      %678 = vmatprep.subr.bf16.mxu0 0
      %679 = vmatpush1.bf16.msra.mxu0 0
      %680 = vmatprep.subr.bf16.mxu0 0
      %681 = vmatpush1.bf16.msra.mxu0 0
      %682 = vmatprep.mubr.bf16.mxu0 0
      %683 = vmatmul.mubr.bf16.gmra.mrb[0].mxu0 %v648
      %v684 = vpop.f32.mrb[0].mxu0
      %v685 = vadd.f32 %v638, %v684
      %v686 = vpop.f32.mrb[0].mxu0
      %v687 = vpop.f32.mrb[0].mxu0
      %v688 = vpop.f32.mrb[0].mxu0
      %689 = vdwg.mxu0
      %v690 = vmax.f32 %v685, 0.0
      %v691 = vpack.c.bf16 %v690, %v690
      %v692 = vld [vmem:[%s530] sm:$0xf]
      %694 = vset.pattern.permute.xlu0 0
      %695 = vperm.xlu0 %694, %v692
      %v696 = vpop.permute.xlu0 %695
      %v699 = vunpack.c.l.s4 839922192
      %v700 = vunpack.c.0.s8 %v699
      %v701 = vlaneseq
      %v702 = vshrl.u32 %v701, 7
      %v703 = vsub.s32 %v700, %v702
      %v704 = vrot.slane %v696, %v703
      %v705 = vmul.bf16 %v691, %v704
      %vm706 = vcmask 125952
      %707 = vst.msk [vmem:[#allocation2] sm:$0xf] %vm706, %v705
      %s708 = scalar_lea.vmem %s522, 4
      %v709 = vld [vmem:[%s708] sm:$0xf]
      %v710 = vld [vmem:[%s7] sm:$0x3]
      %v711 = vld [vmem:[%s9] sm:$0x1]
      %v713 = vlaneseq
      %v714 = vshrl.u32 %v713, 7
      %v715 = vsub.s32 0, %v714
      %v716 = vrot.slane %v711, %v715
      %v719 = vsel %vm578, %v709, 0
      %v722 = vand.u32 %v710, %v585
      %724 = vmatprep.subr.bf16.mxu0 0
      %725 = vmatpush1.bf16.msra.mxu0 %v722
      %726 = vmatprep.subr.bf16.mxu0 0
      %727 = vmatpush1.bf16.msra.mxu0 0
      %728 = vmatprep.subr.bf16.mxu0 0
      %729 = vmatpush1.bf16.msra.mxu0 0
      %730 = vmatprep.subr.bf16.mxu0 0
      %731 = vmatpush1.bf16.msra.mxu0 0
      %732 = vmatprep.subr.bf16.mxu0 0
      %733 = vmatpush1.bf16.msra.mxu0 0
      %734 = vmatprep.subr.bf16.mxu0 0
      %735 = vmatpush1.bf16.msra.mxu0 0
      %736 = vmatprep.subr.bf16.mxu0 0
      %737 = vmatpush1.bf16.msra.mxu0 0
      %738 = vmatprep.subr.bf16.mxu0 0
      %739 = vmatpush1.bf16.msra.mxu0 0
      %740 = vmatprep.subr.bf16.mxu0 0
      %741 = vmatpush1.bf16.msra.mxu0 0
      %742 = vmatprep.subr.bf16.mxu0 0
      %743 = vmatpush1.bf16.msra.mxu0 0
      %744 = vmatprep.subr.bf16.mxu0 0
      %745 = vmatpush1.bf16.msra.mxu0 0
      %746 = vmatprep.subr.bf16.mxu0 0
      %747 = vmatpush1.bf16.msra.mxu0 0
      %748 = vmatprep.subr.bf16.mxu0 0
      %749 = vmatpush1.bf16.msra.mxu0 0
      %750 = vmatprep.subr.bf16.mxu0 0
      %751 = vmatpush1.bf16.msra.mxu0 0
      %752 = vmatprep.subr.bf16.mxu0 0
      %753 = vmatpush1.bf16.msra.mxu0 0
      %754 = vmatprep.subr.bf16.mxu0 0
      %755 = vmatpush1.bf16.msra.mxu0 0
      %756 = vmatprep.mubr.bf16.mxu0 0
      %757 = vmatmul.mubr.bf16.gmra.mrb[0].mxu0 %v719
      %v758 = vpop.f32.mrb[0].mxu0
      %v759 = vadd.f32 %v716, %v758
      %v760 = vpop.f32.mrb[0].mxu0
      %v761 = vpop.f32.mrb[0].mxu0
      %v762 = vpop.f32.mrb[0].mxu0
      %763 = vdwg.mxu0
      %v764 = vmax.f32 %v759, 0.0
      %v765 = vpack.c.bf16 %v764, %v764
      %v766 = vld [vmem:[%s8] sm:$0xf]
      %v767 = vld [vmem:[%s8 + $0x4] sm:$0xf]
      %v768 = vld [vmem:[%s10] sm:$0x1]
      %v770 = vlaneseq
      %v771 = vshrl.u32 %v770, 7
      %v772 = vsub.s32 0, %v771
      %v773 = vrot.slane %v768, %v772
      %v777 = vunpack.c.l.b16 %v766
      %v778 = vunpack.c.l.b16 %v767
      %v779 = vpack.c.b16 %v778, %v777
      %v782 = vsel %vm646, %v765, 0
      %784 = vmatprep.subr.bf16.mxu0 0
      %785 = vmatpush1.bf16.msra.mxu0 %v779
      %786 = vmatprep.subr.bf16.mxu0 0
      %787 = vmatpush1.bf16.msra.mxu0 0
      %788 = vmatprep.subr.bf16.mxu0 0
      %789 = vmatpush1.bf16.msra.mxu0 0
      %790 = vmatprep.subr.bf16.mxu0 0
      %791 = vmatpush1.bf16.msra.mxu0 0
      %792 = vmatprep.subr.bf16.mxu0 0
      %793 = vmatpush1.bf16.msra.mxu0 0
      %794 = vmatprep.subr.bf16.mxu0 0
      %795 = vmatpush1.bf16.msra.mxu0 0
      %796 = vmatprep.subr.bf16.mxu0 0
      %797 = vmatpush1.bf16.msra.mxu0 0
      %798 = vmatprep.subr.bf16.mxu0 0
      %799 = vmatpush1.bf16.msra.mxu0 0
      %800 = vmatprep.subr.bf16.mxu0 0
      %801 = vmatpush1.bf16.msra.mxu0 0
      %802 = vmatprep.subr.bf16.mxu0 0
      %803 = vmatpush1.bf16.msra.mxu0 0
      %804 = vmatprep.subr.bf16.mxu0 0
      %805 = vmatpush1.bf16.msra.mxu0 0
      %806 = vmatprep.subr.bf16.mxu0 0
      %807 = vmatpush1.bf16.msra.mxu0 0
      %808 = vmatprep.subr.bf16.mxu0 0
      %809 = vmatpush1.bf16.msra.mxu0 0
      %810 = vmatprep.subr.bf16.mxu0 0
      %811 = vmatpush1.bf16.msra.mxu0 0
      %812 = vmatprep.subr.bf16.mxu0 0
      %813 = vmatpush1.bf16.msra.mxu0 0
      %814 = vmatprep.subr.bf16.mxu0 0
      %815 = vmatpush1.bf16.msra.mxu0 0
      %816 = vmatprep.mubr.bf16.mxu0 0
      %817 = vmatmul.mubr.bf16.gmra.mrb[0].mxu0 %v782
      %v818 = vpop.f32.mrb[0].mxu0
      %v819 = vadd.f32 %v773, %v818
      %v820 = vpop.f32.mrb[0].mxu0
      %v821 = vpop.f32.mrb[0].mxu0
      %v822 = vpop.f32.mrb[0].mxu0
      %823 = vdwg.mxu0
      %v824 = vmax.f32 %v819, 0.0
      %v825 = vpack.c.bf16 %v824, %v824
      %s826 = scalar_lea.vmem %s530, 4
      %v827 = vld [vmem:[%s826] sm:$0xf]
      %829 = vset.pattern.permute.xlu0 0
      %830 = vperm.xlu0 %829, %v827
      %v831 = vpop.permute.xlu0 %830
      %v834 = vunpack.c.l.s4 839922192
      %v835 = vunpack.c.0.s8 %v834
      %v836 = vlaneseq
      %v837 = vshrl.u32 %v836, 7
      %v838 = vsub.s32 %v835, %v837
      %v839 = vrot.slane %v831, %v838
      %v840 = vmul.bf16 %v825, %v839
      %v842 = vunpack.c.l.b16 %v840
      %v843 = vpack.c.b16 %v842, %v842
      %844 = vrot.lane.b32.xlu0 %v843, 16
      %v845 = vpop.permute.xlu0 %844
      %vm847 = vcmask 257152
      %848 = vst.msk [vmem:[#allocation2] sm:$0xf] %vm847, %v845
      %s849 = scalar_lea.vmem %s522, 8
      %v850 = vld [vmem:[%s849] sm:$0xf]
      %v851 = vld [vmem:[%s7] sm:$0x3]
      %v852 = vld [vmem:[%s9] sm:$0x1]
      %v854 = vlaneseq
      %v855 = vshrl.u32 %v854, 7
      %v856 = vsub.s32 0, %v855
      %v857 = vrot.slane %v852, %v856
      %v860 = vsel %vm578, %v850, 0
      %v863 = vand.u32 %v851, %v585
      %865 = vmatprep.subr.bf16.mxu0 0
      %866 = vmatpush1.bf16.msra.mxu0 %v863
      %867 = vmatprep.subr.bf16.mxu0 0
      %868 = vmatpush1.bf16.msra.mxu0 0
      %869 = vmatprep.subr.bf16.mxu0 0
      %870 = vmatpush1.bf16.msra.mxu0 0
      %871 = vmatprep.subr.bf16.mxu0 0
      %872 = vmatpush1.bf16.msra.mxu0 0
      %873 = vmatprep.subr.bf16.mxu0 0
      %874 = vmatpush1.bf16.msra.mxu0 0
      %875 = vmatprep.subr.bf16.mxu0 0
      %876 = vmatpush1.bf16.msra.mxu0 0
      %877 = vmatprep.subr.bf16.mxu0 0
      %878 = vmatpush1.bf16.msra.mxu0 0
      %879 = vmatprep.subr.bf16.mxu0 0
      %880 = vmatpush1.bf16.msra.mxu0 0
      %881 = vmatprep.subr.bf16.mxu0 0
      %882 = vmatpush1.bf16.msra.mxu0 0
      %883 = vmatprep.subr.bf16.mxu0 0
      %884 = vmatpush1.bf16.msra.mxu0 0
      %885 = vmatprep.subr.bf16.mxu0 0
      %886 = vmatpush1.bf16.msra.mxu0 0
      %887 = vmatprep.subr.bf16.mxu0 0
      %888 = vmatpush1.bf16.msra.mxu0 0
      %889 = vmatprep.subr.bf16.mxu0 0
      %890 = vmatpush1.bf16.msra.mxu0 0
      %891 = vmatprep.subr.bf16.mxu0 0
      %892 = vmatpush1.bf16.msra.mxu0 0
      %893 = vmatprep.subr.bf16.mxu0 0
      %894 = vmatpush1.bf16.msra.mxu0 0
      %895 = vmatprep.subr.bf16.mxu0 0
      %896 = vmatpush1.bf16.msra.mxu0 0
      %897 = vmatprep.mubr.bf16.mxu0 0
      %898 = vmatmul.mubr.bf16.gmra.mrb[0].mxu0 %v860
      %v899 = vpop.f32.mrb[0].mxu0
      %v900 = vadd.f32 %v857, %v899
      %v901 = vpop.f32.mrb[0].mxu0
      %v902 = vpop.f32.mrb[0].mxu0
      %v903 = vpop.f32.mrb[0].mxu0
      %904 = vdwg.mxu0
      %v905 = vmax.f32 %v900, 0.0
      %v906 = vpack.c.bf16 %v905, %v905
      %v907 = vld [vmem:[%s8] sm:$0xf]
      %v908 = vld [vmem:[%s8 + $0x4] sm:$0xf]
      %v909 = vld [vmem:[%s10] sm:$0x1]
      %v911 = vlaneseq
      %v912 = vshrl.u32 %v911, 7
      %v913 = vsub.s32 0, %v912
      %v914 = vrot.slane %v909, %v913
      %v918 = vunpack.c.l.b16 %v907
      %v919 = vunpack.c.l.b16 %v908
      %v920 = vpack.c.b16 %v919, %v918
      %v923 = vsel %vm646, %v906, 0
      %925 = vmatprep.subr.bf16.mxu0 0
      %926 = vmatpush1.bf16.msra.mxu0 %v920
      %927 = vmatprep.subr.bf16.mxu0 0
      %928 = vmatpush1.bf16.msra.mxu0 0
      %929 = vmatprep.subr.bf16.mxu0 0
      %930 = vmatpush1.bf16.msra.mxu0 0
      %931 = vmatprep.subr.bf16.mxu0 0
      %932 = vmatpush1.bf16.msra.mxu0 0
      %933 = vmatprep.subr.bf16.mxu0 0
      %934 = vmatpush1.bf16.msra.mxu0 0
      %935 = vmatprep.subr.bf16.mxu0 0
      %936 = vmatpush1.bf16.msra.mxu0 0
      %937 = vmatprep.subr.bf16.mxu0 0
      %938 = vmatpush1.bf16.msra.mxu0 0
      %939 = vmatprep.subr.bf16.mxu0 0
      %940 = vmatpush1.bf16.msra.mxu0 0
      %941 = vmatprep.subr.bf16.mxu0 0
      %942 = vmatpush1.bf16.msra.mxu0 0
      %943 = vmatprep.subr.bf16.mxu0 0
      %944 = vmatpush1.bf16.msra.mxu0 0
      %945 = vmatprep.subr.bf16.mxu0 0
      %946 = vmatpush1.bf16.msra.mxu0 0
      %947 = vmatprep.subr.bf16.mxu0 0
      %948 = vmatpush1.bf16.msra.mxu0 0
      %949 = vmatprep.subr.bf16.mxu0 0
      %950 = vmatpush1.bf16.msra.mxu0 0
      %951 = vmatprep.subr.bf16.mxu0 0
      %952 = vmatpush1.bf16.msra.mxu0 0
      %953 = vmatprep.subr.bf16.mxu0 0
      %954 = vmatpush1.bf16.msra.mxu0 0
      %955 = vmatprep.subr.bf16.mxu0 0
      %956 = vmatpush1.bf16.msra.mxu0 0
      %957 = vmatprep.mubr.bf16.mxu0 0
      %958 = vmatmul.mubr.bf16.gmra.mrb[0].mxu0 %v923
      %v959 = vpop.f32.mrb[0].mxu0
      %v960 = vadd.f32 %v914, %v959
      %v961 = vpop.f32.mrb[0].mxu0
      %v962 = vpop.f32.mrb[0].mxu0
      %v963 = vpop.f32.mrb[0].mxu0
      %964 = vdwg.mxu0
      %v965 = vmax.f32 %v960, 0.0
      %v966 = vpack.c.bf16 %v965, %v965
      %s967 = scalar_lea.vmem %s530, 8
      %v968 = vld [vmem:[%s967] sm:$0xf]
      %970 = vset.pattern.permute.xlu0 0
      %971 = vperm.xlu0 %970, %v968
      %v972 = vpop.permute.xlu0 %971
      %v975 = vunpack.c.l.s4 839922192
      %v976 = vunpack.c.0.s8 %v975
      %v977 = vlaneseq
      %v978 = vshrl.u32 %v977, 7
      %v979 = vsub.s32 %v976, %v978
      %v980 = vrot.slane %v972, %v979
      %v981 = vmul.bf16 %v966, %v980
      %v983 = vunpack.c.l.b16 %v981
      %v984 = vpack.c.b16 %v983, %v983
      %985 = vrot.lane.b32.xlu0 %v984, 32
      %v986 = vpop.permute.xlu0 %985
      %vm988 = vcmask 388352
      %989 = vst.msk [vmem:[#allocation2] sm:$0xf] %vm988, %v986
      %s990 = scalar_lea.vmem %s522, 12
      %v991 = vld [vmem:[%s990] sm:$0xf]
      %v992 = vld [vmem:[%s7] sm:$0x3]
      %v993 = vld [vmem:[%s9] sm:$0x1]
      %v995 = vlaneseq
      %v996 = vshrl.u32 %v995, 7
      %v997 = vsub.s32 0, %v996
      %v998 = vrot.slane %v993, %v997
      %v1001 = vsel %vm578, %v991, 0
      %v1004 = vand.u32 %v992, %v585
      %1006 = vmatprep.subr.bf16.mxu0 0
      %1007 = vmatpush1.bf16.msra.mxu0 %v1004
      %1008 = vmatprep.subr.bf16.mxu0 0
      %1009 = vmatpush1.bf16.msra.mxu0 0
      %1010 = vmatprep.subr.bf16.mxu0 0
      %1011 = vmatpush1.bf16.msra.mxu0 0
      %1012 = vmatprep.subr.bf16.mxu0 0
      %1013 = vmatpush1.bf16.msra.mxu0 0
      %1014 = vmatprep.subr.bf16.mxu0 0
      %1015 = vmatpush1.bf16.msra.mxu0 0
      %1016 = vmatprep.subr.bf16.mxu0 0
      %1017 = vmatpush1.bf16.msra.mxu0 0
      %1018 = vmatprep.subr.bf16.mxu0 0
      %1019 = vmatpush1.bf16.msra.mxu0 0
      %1020 = vmatprep.subr.bf16.mxu0 0
      %1021 = vmatpush1.bf16.msra.mxu0 0
      %1022 = vmatprep.subr.bf16.mxu0 0
      %1023 = vmatpush1.bf16.msra.mxu0 0
      %1024 = vmatprep.subr.bf16.mxu0 0
      %1025 = vmatpush1.bf16.msra.mxu0 0
      %1026 = vmatprep.subr.bf16.mxu0 0
      %1027 = vmatpush1.bf16.msra.mxu0 0
      %1028 = vmatprep.subr.bf16.mxu0 0
      %1029 = vmatpush1.bf16.msra.mxu0 0
      %1030 = vmatprep.subr.bf16.mxu0 0
      %1031 = vmatpush1.bf16.msra.mxu0 0
      %1032 = vmatprep.subr.bf16.mxu0 0
      %1033 = vmatpush1.bf16.msra.mxu0 0
      %1034 = vmatprep.subr.bf16.mxu0 0
      %1035 = vmatpush1.bf16.msra.mxu0 0
      %1036 = vmatprep.subr.bf16.mxu0 0
      %1037 = vmatpush1.bf16.msra.mxu0 0
      %1038 = vmatprep.mubr.bf16.mxu0 0
      %1039 = vmatmul.mubr.bf16.gmra.mrb[0].mxu0 %v1001
      %v1040 = vpop.f32.mrb[0].mxu0
      %v1041 = vadd.f32 %v998, %v1040
      %v1042 = vpop.f32.mrb[0].mxu0
      %v1043 = vpop.f32.mrb[0].mxu0
      %v1044 = vpop.f32.mrb[0].mxu0
      %1045 = vdwg.mxu0
      %v1046 = vmax.f32 %v1041, 0.0
      %v1047 = vpack.c.bf16 %v1046, %v1046
      %v1048 = vld [vmem:[%s8] sm:$0xf]
      %v1049 = vld [vmem:[%s8 + $0x4] sm:$0xf]
      %v1050 = vld [vmem:[%s10] sm:$0x1]
      %v1052 = vlaneseq
      %v1053 = vshrl.u32 %v1052, 7
      %v1054 = vsub.s32 0, %v1053
      %v1055 = vrot.slane %v1050, %v1054
      %v1059 = vunpack.c.l.b16 %v1048
      %v1060 = vunpack.c.l.b16 %v1049
      %v1061 = vpack.c.b16 %v1060, %v1059
      %v1064 = vsel %vm646, %v1047, 0
      %1066 = vmatprep.subr.bf16.mxu0 0
      %1067 = vmatpush1.bf16.msra.mxu0 %v1061
      %1068 = vmatprep.subr.bf16.mxu0 0
      %1069 = vmatpush1.bf16.msra.mxu0 0
      %1070 = vmatprep.subr.bf16.mxu0 0
      %1071 = vmatpush1.bf16.msra.mxu0 0
      %1072 = vmatprep.subr.bf16.mxu0 0
      %1073 = vmatpush1.bf16.msra.mxu0 0
      %1074 = vmatprep.subr.bf16.mxu0 0
      %1075 = vmatpush1.bf16.msra.mxu0 0
      %1076 = vmatprep.subr.bf16.mxu0 0
      %1077 = vmatpush1.bf16.msra.mxu0 0
      %1078 = vmatprep.subr.bf16.mxu0 0
      %1079 = vmatpush1.bf16.msra.mxu0 0
      %1080 = vmatprep.subr.bf16.mxu0 0
      %1081 = vmatpush1.bf16.msra.mxu0 0
      %1082 = vmatprep.subr.bf16.mxu0 0
      %1083 = vmatpush1.bf16.msra.mxu0 0
      %1084 = vmatprep.subr.bf16.mxu0 0
      %1085 = vmatpush1.bf16.msra.mxu0 0
      %1086 = vmatprep.subr.bf16.mxu0 0
      %1087 = vmatpush1.bf16.msra.mxu0 0
      %1088 = vmatprep.subr.bf16.mxu0 0
      %1089 = vmatpush1.bf16.msra.mxu0 0
      %1090 = vmatprep.subr.bf16.mxu0 0
      %1091 = vmatpush1.bf16.msra.mxu0 0
      %1092 = vmatprep.subr.bf16.mxu0 0
      %1093 = vmatpush1.bf16.msra.mxu0 0
      %1094 = vmatprep.subr.bf16.mxu0 0
      %1095 = vmatpush1.bf16.msra.mxu0 0
      %1096 = vmatprep.subr.bf16.mxu0 0
      %1097 = vmatpush1.bf16.msra.mxu0 0
      %1098 = vmatprep.mubr.bf16.mxu0 0
      %1099 = vmatmul.mubr.bf16.gmra.mrb[0].mxu0 %v1064
      %v1100 = vpop.f32.mrb[0].mxu0
      %v1101 = vadd.f32 %v1055, %v1100
      %v1102 = vpop.f32.mrb[0].mxu0
      %v1103 = vpop.f32.mrb[0].mxu0
      %v1104 = vpop.f32.mrb[0].mxu0
      %1105 = vdwg.mxu0
      %v1106 = vmax.f32 %v1101, 0.0
      %v1107 = vpack.c.bf16 %v1106, %v1106
      %s1108 = scalar_lea.vmem %s530, 12
      %v1109 = vld [vmem:[%s1108] sm:$0xf]
      %1111 = vset.pattern.permute.xlu0 0
      %1112 = vperm.xlu0 %1111, %v1109
      %v1113 = vpop.permute.xlu0 %1112
      %v1116 = vunpack.c.l.s4 839922192
      %v1117 = vunpack.c.0.s8 %v1116
      %v1118 = vlaneseq
      %v1119 = vshrl.u32 %v1118, 7
      %v1120 = vsub.s32 %v1117, %v1119
      %v1121 = vrot.slane %v1113, %v1120
      %v1122 = vmul.bf16 %v1107, %v1121
      %v1124 = vunpack.c.l.b16 %v1122
      %v1125 = vpack.c.b16 %v1124, %v1124
      %1126 = vrot.lane.b32.xlu0 %v1125, 48
      %v1127 = vpop.permute.xlu0 %1126
      %vm1129 = vcmask 519552
      %1130 = vst.msk [vmem:[#allocation2] sm:$0xf] %vm1129, %v1127
      %s1131 = scalar_lea.vmem %s522, 16
      %v1132 = vld [vmem:[%s1131] sm:$0xf]
      %v1133 = vld [vmem:[%s7] sm:$0x3]
      %v1134 = vld [vmem:[%s9] sm:$0x1]
      %v1136 = vlaneseq
      %v1137 = vshrl.u32 %v1136, 7
      %v1138 = vsub.s32 0, %v1137
      %v1139 = vrot.slane %v1134, %v1138
      %v1142 = vsel %vm578, %v1132, 0
      %v1145 = vand.u32 %v1133, %v585
      %1147 = vmatprep.subr.bf16.mxu0 0
      %1148 = vmatpush1.bf16.msra.mxu0 %v1145
      %1149 = vmatprep.subr.bf16.mxu0 0
      %1150 = vmatpush1.bf16.msra.mxu0 0
      %1151 = vmatprep.subr.bf16.mxu0 0
      %1152 = vmatpush1.bf16.msra.mxu0 0
      %1153 = vmatprep.subr.bf16.mxu0 0
      %1154 = vmatpush1.bf16.msra.mxu0 0
      %1155 = vmatprep.subr.bf16.mxu0 0
      %1156 = vmatpush1.bf16.msra.mxu0 0
      %1157 = vmatprep.subr.bf16.mxu0 0
      %1158 = vmatpush1.bf16.msra.mxu0 0
      %1159 = vmatprep.subr.bf16.mxu0 0
      %1160 = vmatpush1.bf16.msra.mxu0 0
      %1161 = vmatprep.subr.bf16.mxu0 0
      %1162 = vmatpush1.bf16.msra.mxu0 0
      %1163 = vmatprep.subr.bf16.mxu0 0
      %1164 = vmatpush1.bf16.msra.mxu0 0
      %1165 = vmatprep.subr.bf16.mxu0 0
      %1166 = vmatpush1.bf16.msra.mxu0 0
      %1167 = vmatprep.subr.bf16.mxu0 0
      %1168 = vmatpush1.bf16.msra.mxu0 0
      %1169 = vmatprep.subr.bf16.mxu0 0
      %1170 = vmatpush1.bf16.msra.mxu0 0
      %1171 = vmatprep.subr.bf16.mxu0 0
      %1172 = vmatpush1.bf16.msra.mxu0 0
      %1173 = vmatprep.subr.bf16.mxu0 0
      %1174 = vmatpush1.bf16.msra.mxu0 0
      %1175 = vmatprep.subr.bf16.mxu0 0
      %1176 = vmatpush1.bf16.msra.mxu0 0
      %1177 = vmatprep.subr.bf16.mxu0 0
      %1178 = vmatpush1.bf16.msra.mxu0 0
      %1179 = vmatprep.mubr.bf16.mxu0 0
      %1180 = vmatmul.mubr.bf16.gmra.mrb[0].mxu0 %v1142
      %v1181 = vpop.f32.mrb[0].mxu0
      %v1182 = vadd.f32 %v1139, %v1181
      %v1183 = vpop.f32.mrb[0].mxu0
      %v1184 = vpop.f32.mrb[0].mxu0
      %v1185 = vpop.f32.mrb[0].mxu0
      %1186 = vdwg.mxu0
      %v1187 = vmax.f32 %v1182, 0.0
      %v1188 = vpack.c.bf16 %v1187, %v1187
      %v1189 = vld [vmem:[%s8] sm:$0xf]
      %v1190 = vld [vmem:[%s8 + $0x4] sm:$0xf]
      %v1191 = vld [vmem:[%s10] sm:$0x1]
      %v1193 = vlaneseq
      %v1194 = vshrl.u32 %v1193, 7
      %v1195 = vsub.s32 0, %v1194
      %v1196 = vrot.slane %v1191, %v1195
      %v1200 = vunpack.c.l.b16 %v1189
      %v1201 = vunpack.c.l.b16 %v1190
      %v1202 = vpack.c.b16 %v1201, %v1200
      %v1205 = vsel %vm646, %v1188, 0
      %1207 = vmatprep.subr.bf16.mxu0 0
      %1208 = vmatpush1.bf16.msra.mxu0 %v1202
      %1209 = vmatprep.subr.bf16.mxu0 0
      %1210 = vmatpush1.bf16.msra.mxu0 0
      %1211 = vmatprep.subr.bf16.mxu0 0
      %1212 = vmatpush1.bf16.msra.mxu0 0
      %1213 = vmatprep.subr.bf16.mxu0 0
      %1214 = vmatpush1.bf16.msra.mxu0 0
      %1215 = vmatprep.subr.bf16.mxu0 0
      %1216 = vmatpush1.bf16.msra.mxu0 0
      %1217 = vmatprep.subr.bf16.mxu0 0
      %1218 = vmatpush1.bf16.msra.mxu0 0
      %1219 = vmatprep.subr.bf16.mxu0 0
      %1220 = vmatpush1.bf16.msra.mxu0 0
      %1221 = vmatprep.subr.bf16.mxu0 0
      %1222 = vmatpush1.bf16.msra.mxu0 0
      %1223 = vmatprep.subr.bf16.mxu0 0
      %1224 = vmatpush1.bf16.msra.mxu0 0
      %1225 = vmatprep.subr.bf16.mxu0 0
      %1226 = vmatpush1.bf16.msra.mxu0 0
      %1227 = vmatprep.subr.bf16.mxu0 0
      %1228 = vmatpush1.bf16.msra.mxu0 0
      %1229 = vmatprep.subr.bf16.mxu0 0
      %1230 = vmatpush1.bf16.msra.mxu0 0
      %1231 = vmatprep.subr.bf16.mxu0 0
      %1232 = vmatpush1.bf16.msra.mxu0 0
      %1233 = vmatprep.subr.bf16.mxu0 0
      %1234 = vmatpush1.bf16.msra.mxu0 0
      %1235 = vmatprep.subr.bf16.mxu0 0
      %1236 = vmatpush1.bf16.msra.mxu0 0
      %1237 = vmatprep.subr.bf16.mxu0 0
      %1238 = vmatpush1.bf16.msra.mxu0 0
      %1239 = vmatprep.mubr.bf16.mxu0 0
      %1240 = vmatmul.mubr.bf16.gmra.mrb[0].mxu0 %v1205
      %v1241 = vpop.f32.mrb[0].mxu0
      %v1242 = vadd.f32 %v1196, %v1241
      %v1243 = vpop.f32.mrb[0].mxu0
      %v1244 = vpop.f32.mrb[0].mxu0
      %v1245 = vpop.f32.mrb[0].mxu0
      %1246 = vdwg.mxu0
      %v1247 = vmax.f32 %v1242, 0.0
      %v1248 = vpack.c.bf16 %v1247, %v1247
      %s1249 = scalar_lea.vmem %s530, 16
      %v1250 = vld [vmem:[%s1249] sm:$0xf]
      %1252 = vset.pattern.permute.xlu0 0
      %1253 = vperm.xlu0 %1252, %v1250
      %v1254 = vpop.permute.xlu0 %1253
      %v1257 = vunpack.c.l.s4 839922192
      %v1258 = vunpack.c.0.s8 %v1257
      %v1259 = vlaneseq
      %v1260 = vshrl.u32 %v1259, 7
      %v1261 = vsub.s32 %v1258, %v1260
      %v1262 = vrot.slane %v1254, %v1261
      %v1263 = vmul.bf16 %v1248, %v1262
      %v1265 = vunpack.c.l.b16 %v1263
      %v1266 = vpack.c.b16 %v1265, %v1265
      %1267 = vrot.lane.b32.xlu0 %v1266, 64
      %v1268 = vpop.permute.xlu0 %1267
      %vm1270 = vcmask 650752
      %1271 = vst.msk [vmem:[#allocation2] sm:$0xf] %vm1270, %v1268
      %s1272 = scalar_lea.vmem %s522, 20
      %v1273 = vld [vmem:[%s1272] sm:$0xf]
      %v1274 = vld [vmem:[%s7] sm:$0x3]
      %v1275 = vld [vmem:[%s9] sm:$0x1]
      %v1277 = vlaneseq
      %v1278 = vshrl.u32 %v1277, 7
      %v1279 = vsub.s32 0, %v1278
      %v1280 = vrot.slane %v1275, %v1279
      %v1283 = vsel %vm578, %v1273, 0
      %v1286 = vand.u32 %v1274, %v585
      %1288 = vmatprep.subr.bf16.mxu0 0
      %1289 = vmatpush1.bf16.msra.mxu0 %v1286
      %1290 = vmatprep.subr.bf16.mxu0 0
      %1291 = vmatpush1.bf16.msra.mxu0 0
      %1292 = vmatprep.subr.bf16.mxu0 0
      %1293 = vmatpush1.bf16.msra.mxu0 0
      %1294 = vmatprep.subr.bf16.mxu0 0
      %1295 = vmatpush1.bf16.msra.mxu0 0
      %1296 = vmatprep.subr.bf16.mxu0 0
      %1297 = vmatpush1.bf16.msra.mxu0 0
      %1298 = vmatprep.subr.bf16.mxu0 0
      %1299 = vmatpush1.bf16.msra.mxu0 0
      %1300 = vmatprep.subr.bf16.mxu0 0
      %1301 = vmatpush1.bf16.msra.mxu0 0
      %1302 = vmatprep.subr.bf16.mxu0 0
      %1303 = vmatpush1.bf16.msra.mxu0 0
      %1304 = vmatprep.subr.bf16.mxu0 0
      %1305 = vmatpush1.bf16.msra.mxu0 0
      %1306 = vmatprep.subr.bf16.mxu0 0
      %1307 = vmatpush1.bf16.msra.mxu0 0
      %1308 = vmatprep.subr.bf16.mxu0 0
      %1309 = vmatpush1.bf16.msra.mxu0 0
      %1310 = vmatprep.subr.bf16.mxu0 0
      %1311 = vmatpush1.bf16.msra.mxu0 0
      %1312 = vmatprep.subr.bf16.mxu0 0
      %1313 = vmatpush1.bf16.msra.mxu0 0
      %1314 = vmatprep.subr.bf16.mxu0 0
      %1315 = vmatpush1.bf16.msra.mxu0 0
      %1316 = vmatprep.subr.bf16.mxu0 0
      %1317 = vmatpush1.bf16.msra.mxu0 0
      %1318 = vmatprep.subr.bf16.mxu0 0
      %1319 = vmatpush1.bf16.msra.mxu0 0
      %1320 = vmatprep.mubr.bf16.mxu0 0
      %1321 = vmatmul.mubr.bf16.gmra.mrb[0].mxu0 %v1283
      %v1322 = vpop.f32.mrb[0].mxu0
      %v1323 = vadd.f32 %v1280, %v1322
      %v1324 = vpop.f32.mrb[0].mxu0
      %v1325 = vpop.f32.mrb[0].mxu0
      %v1326 = vpop.f32.mrb[0].mxu0
      %1327 = vdwg.mxu0
      %v1328 = vmax.f32 %v1323, 0.0
      %v1329 = vpack.c.bf16 %v1328, %v1328
      %v1330 = vld [vmem:[%s8] sm:$0xf]
      %v1331 = vld [vmem:[%s8 + $0x4] sm:$0xf]
      %v1332 = vld [vmem:[%s10] sm:$0x1]
      %v1334 = vlaneseq
      %v1335 = vshrl.u32 %v1334, 7
      %v1336 = vsub.s32 0, %v1335
      %v1337 = vrot.slane %v1332, %v1336
      %v1341 = vunpack.c.l.b16 %v1330
      %v1342 = vunpack.c.l.b16 %v1331
      %v1343 = vpack.c.b16 %v1342, %v1341
      %v1346 = vsel %vm646, %v1329, 0
      %1348 = vmatprep.subr.bf16.mxu0 0
      %1349 = vmatpush1.bf16.msra.mxu0 %v1343
      %1350 = vmatprep.subr.bf16.mxu0 0
      %1351 = vmatpush1.bf16.msra.mxu0 0
      %1352 = vmatprep.subr.bf16.mxu0 0
      %1353 = vmatpush1.bf16.msra.mxu0 0
      %1354 = vmatprep.subr.bf16.mxu0 0
      %1355 = vmatpush1.bf16.msra.mxu0 0
      %1356 = vmatprep.subr.bf16.mxu0 0
      %1357 = vmatpush1.bf16.msra.mxu0 0
      %1358 = vmatprep.subr.bf16.mxu0 0
      %1359 = vmatpush1.bf16.msra.mxu0 0
      %1360 = vmatprep.subr.bf16.mxu0 0
      %1361 = vmatpush1.bf16.msra.mxu0 0
      %1362 = vmatprep.subr.bf16.mxu0 0
      %1363 = vmatpush1.bf16.msra.mxu0 0
      %1364 = vmatprep.subr.bf16.mxu0 0
      %1365 = vmatpush1.bf16.msra.mxu0 0
      %1366 = vmatprep.subr.bf16.mxu0 0
      %1367 = vmatpush1.bf16.msra.mxu0 0
      %1368 = vmatprep.subr.bf16.mxu0 0
      %1369 = vmatpush1.bf16.msra.mxu0 0
      %1370 = vmatprep.subr.bf16.mxu0 0
      %1371 = vmatpush1.bf16.msra.mxu0 0
      %1372 = vmatprep.subr.bf16.mxu0 0
      %1373 = vmatpush1.bf16.msra.mxu0 0
      %1374 = vmatprep.subr.bf16.mxu0 0
      %1375 = vmatpush1.bf16.msra.mxu0 0
      %1376 = vmatprep.subr.bf16.mxu0 0
      %1377 = vmatpush1.bf16.msra.mxu0 0
      %1378 = vmatprep.subr.bf16.mxu0 0
      %1379 = vmatpush1.bf16.msra.mxu0 0
      %1380 = vmatprep.mubr.bf16.mxu0 0
      %1381 = vmatmul.mubr.bf16.gmra.mrb[0].mxu0 %v1346
      %v1382 = vpop.f32.mrb[0].mxu0
      %v1383 = vadd.f32 %v1337, %v1382
      %v1384 = vpop.f32.mrb[0].mxu0
      %v1385 = vpop.f32.mrb[0].mxu0
      %v1386 = vpop.f32.mrb[0].mxu0
      %1387 = vdwg.mxu0
      %v1388 = vmax.f32 %v1383, 0.0
      %v1389 = vpack.c.bf16 %v1388, %v1388
      %s1390 = scalar_lea.vmem %s530, 20
      %v1391 = vld [vmem:[%s1390] sm:$0xf]
      %1393 = vset.pattern.permute.xlu0 0
      %1394 = vperm.xlu0 %1393, %v1391
      %v1395 = vpop.permute.xlu0 %1394
      %v1398 = vunpack.c.l.s4 839922192
      %v1399 = vunpack.c.0.s8 %v1398
      %v1400 = vlaneseq
      %v1401 = vshrl.u32 %v1400, 7
      %v1402 = vsub.s32 %v1399, %v1401
      %v1403 = vrot.slane %v1395, %v1402
      %v1404 = vmul.bf16 %v1389, %v1403
      %v1406 = vunpack.c.l.b16 %v1404
      %v1407 = vpack.c.b16 %v1406, %v1406
      %1408 = vrot.lane.b32.xlu0 %v1407, 80
      %v1409 = vpop.permute.xlu0 %1408
      %vm1411 = vcmask 781952
      %1412 = vst.msk [vmem:[#allocation2] sm:$0xf] %vm1411, %v1409
      %s1413 = scalar_lea.vmem %s522, 24
      %v1414 = vld [vmem:[%s1413] sm:$0xf]
      %v1415 = vld [vmem:[%s7] sm:$0x3]
      %v1416 = vld [vmem:[%s9] sm:$0x1]
      %v1418 = vlaneseq
      %v1419 = vshrl.u32 %v1418, 7
      %v1420 = vsub.s32 0, %v1419
      %v1421 = vrot.slane %v1416, %v1420
      %v1424 = vsel %vm578, %v1414, 0
      %v1427 = vand.u32 %v1415, %v585
      %1429 = vmatprep.subr.bf16.mxu0 0
      %1430 = vmatpush1.bf16.msra.mxu0 %v1427
      %1431 = vmatprep.subr.bf16.mxu0 0
      %1432 = vmatpush1.bf16.msra.mxu0 0
      %1433 = vmatprep.subr.bf16.mxu0 0
      %1434 = vmatpush1.bf16.msra.mxu0 0
      %1435 = vmatprep.subr.bf16.mxu0 0
      %1436 = vmatpush1.bf16.msra.mxu0 0
      %1437 = vmatprep.subr.bf16.mxu0 0
      %1438 = vmatpush1.bf16.msra.mxu0 0
      %1439 = vmatprep.subr.bf16.mxu0 0
      %1440 = vmatpush1.bf16.msra.mxu0 0
      %1441 = vmatprep.subr.bf16.mxu0 0
      %1442 = vmatpush1.bf16.msra.mxu0 0
      %1443 = vmatprep.subr.bf16.mxu0 0
      %1444 = vmatpush1.bf16.msra.mxu0 0
      %1445 = vmatprep.subr.bf16.mxu0 0
      %1446 = vmatpush1.bf16.msra.mxu0 0
      %1447 = vmatprep.subr.bf16.mxu0 0
      %1448 = vmatpush1.bf16.msra.mxu0 0
      %1449 = vmatprep.subr.bf16.mxu0 0
      %1450 = vmatpush1.bf16.msra.mxu0 0
      %1451 = vmatprep.subr.bf16.mxu0 0
      %1452 = vmatpush1.bf16.msra.mxu0 0
      %1453 = vmatprep.subr.bf16.mxu0 0
      %1454 = vmatpush1.bf16.msra.mxu0 0
      %1455 = vmatprep.subr.bf16.mxu0 0
      %1456 = vmatpush1.bf16.msra.mxu0 0
      %1457 = vmatprep.subr.bf16.mxu0 0
      %1458 = vmatpush1.bf16.msra.mxu0 0
      %1459 = vmatprep.subr.bf16.mxu0 0
      %1460 = vmatpush1.bf16.msra.mxu0 0
      %1461 = vmatprep.mubr.bf16.mxu0 0
      %1462 = vmatmul.mubr.bf16.gmra.mrb[0].mxu0 %v1424
      %v1463 = vpop.f32.mrb[0].mxu0
      %v1464 = vadd.f32 %v1421, %v1463
      %v1465 = vpop.f32.mrb[0].mxu0
      %v1466 = vpop.f32.mrb[0].mxu0
      %v1467 = vpop.f32.mrb[0].mxu0
      %1468 = vdwg.mxu0
      %v1469 = vmax.f32 %v1464, 0.0
      %v1470 = vpack.c.bf16 %v1469, %v1469
      %v1471 = vld [vmem:[%s8] sm:$0xf]
      %v1472 = vld [vmem:[%s8 + $0x4] sm:$0xf]
      %v1473 = vld [vmem:[%s10] sm:$0x1]
      %v1475 = vlaneseq
      %v1476 = vshrl.u32 %v1475, 7
      %v1477 = vsub.s32 0, %v1476
      %v1478 = vrot.slane %v1473, %v1477
      %v1482 = vunpack.c.l.b16 %v1471
      %v1483 = vunpack.c.l.b16 %v1472
      %v1484 = vpack.c.b16 %v1483, %v1482
      %v1487 = vsel %vm646, %v1470, 0
      %1489 = vmatprep.subr.bf16.mxu0 0
      %1490 = vmatpush1.bf16.msra.mxu0 %v1484
      %1491 = vmatprep.subr.bf16.mxu0 0
      %1492 = vmatpush1.bf16.msra.mxu0 0
      %1493 = vmatprep.subr.bf16.mxu0 0
      %1494 = vmatpush1.bf16.msra.mxu0 0
      %1495 = vmatprep.subr.bf16.mxu0 0
      %1496 = vmatpush1.bf16.msra.mxu0 0
      %1497 = vmatprep.subr.bf16.mxu0 0
      %1498 = vmatpush1.bf16.msra.mxu0 0
      %1499 = vmatprep.subr.bf16.mxu0 0
      %1500 = vmatpush1.bf16.msra.mxu0 0
      %1501 = vmatprep.subr.bf16.mxu0 0
      %1502 = vmatpush1.bf16.msra.mxu0 0
      %1503 = vmatprep.subr.bf16.mxu0 0
      %1504 = vmatpush1.bf16.msra.mxu0 0
      %1505 = vmatprep.subr.bf16.mxu0 0
      %1506 = vmatpush1.bf16.msra.mxu0 0
      %1507 = vmatprep.subr.bf16.mxu0 0
      %1508 = vmatpush1.bf16.msra.mxu0 0
      %1509 = vmatprep.subr.bf16.mxu0 0
      %1510 = vmatpush1.bf16.msra.mxu0 0
      %1511 = vmatprep.subr.bf16.mxu0 0
      %1512 = vmatpush1.bf16.msra.mxu0 0
      %1513 = vmatprep.subr.bf16.mxu0 0
      %1514 = vmatpush1.bf16.msra.mxu0 0
      %1515 = vmatprep.subr.bf16.mxu0 0
      %1516 = vmatpush1.bf16.msra.mxu0 0
      %1517 = vmatprep.subr.bf16.mxu0 0
      %1518 = vmatpush1.bf16.msra.mxu0 0
      %1519 = vmatprep.subr.bf16.mxu0 0
      %1520 = vmatpush1.bf16.msra.mxu0 0
      %1521 = vmatprep.mubr.bf16.mxu0 0
      %1522 = vmatmul.mubr.bf16.gmra.mrb[0].mxu0 %v1487
      %v1523 = vpop.f32.mrb[0].mxu0
      %v1524 = vadd.f32 %v1478, %v1523
      %v1525 = vpop.f32.mrb[0].mxu0
      %v1526 = vpop.f32.mrb[0].mxu0
      %v1527 = vpop.f32.mrb[0].mxu0
      %1528 = vdwg.mxu0
      %v1529 = vmax.f32 %v1524, 0.0
      %v1530 = vpack.c.bf16 %v1529, %v1529
      %s1531 = scalar_lea.vmem %s530, 24
      %v1532 = vld [vmem:[%s1531] sm:$0xf]
      %1534 = vset.pattern.permute.xlu0 0
      %1535 = vperm.xlu0 %1534, %v1532
      %v1536 = vpop.permute.xlu0 %1535
      %v1539 = vunpack.c.l.s4 839922192
      %v1540 = vunpack.c.0.s8 %v1539
      %v1541 = vlaneseq
      %v1542 = vshrl.u32 %v1541, 7
      %v1543 = vsub.s32 %v1540, %v1542
      %v1544 = vrot.slane %v1536, %v1543
      %v1545 = vmul.bf16 %v1530, %v1544
      %v1547 = vunpack.c.l.b16 %v1545
      %v1548 = vpack.c.b16 %v1547, %v1547
      %1549 = vrot.lane.b32.xlu0 %v1548, 96
      %v1550 = vpop.permute.xlu0 %1549
      %vm1552 = vcmask 913152
      %1553 = vst.msk [vmem:[#allocation2] sm:$0xf] %vm1552, %v1550
      %s1554 = scalar_lea.vmem %s522, 28
      %v1555 = vld [vmem:[%s1554] sm:$0xf]
      %v1556 = vld [vmem:[%s7] sm:$0x3]
      %v1557 = vld [vmem:[%s9] sm:$0x1]
      %v1559 = vlaneseq
      %v1560 = vshrl.u32 %v1559, 7
      %v1561 = vsub.s32 0, %v1560
      %v1562 = vrot.slane %v1557, %v1561
      %v1565 = vsel %vm578, %v1555, 0
      %v1568 = vand.u32 %v1556, %v585
      %1570 = vmatprep.subr.bf16.mxu0 0
      %1571 = vmatpush1.bf16.msra.mxu0 %v1568
      %1572 = vmatprep.subr.bf16.mxu0 0
      %1573 = vmatpush1.bf16.msra.mxu0 0
      %1574 = vmatprep.subr.bf16.mxu0 0
      %1575 = vmatpush1.bf16.msra.mxu0 0
      %1576 = vmatprep.subr.bf16.mxu0 0
      %1577 = vmatpush1.bf16.msra.mxu0 0
      %1578 = vmatprep.subr.bf16.mxu0 0
      %1579 = vmatpush1.bf16.msra.mxu0 0
      %1580 = vmatprep.subr.bf16.mxu0 0
      %1581 = vmatpush1.bf16.msra.mxu0 0
      %1582 = vmatprep.subr.bf16.mxu0 0
      %1583 = vmatpush1.bf16.msra.mxu0 0
      %1584 = vmatprep.subr.bf16.mxu0 0
      %1585 = vmatpush1.bf16.msra.mxu0 0
      %1586 = vmatprep.subr.bf16.mxu0 0
      %1587 = vmatpush1.bf16.msra.mxu0 0
      %1588 = vmatprep.subr.bf16.mxu0 0
      %1589 = vmatpush1.bf16.msra.mxu0 0
      %1590 = vmatprep.subr.bf16.mxu0 0
      %1591 = vmatpush1.bf16.msra.mxu0 0
      %1592 = vmatprep.subr.bf16.mxu0 0
      %1593 = vmatpush1.bf16.msra.mxu0 0
      %1594 = vmatprep.subr.bf16.mxu0 0
      %1595 = vmatpush1.bf16.msra.mxu0 0
      %1596 = vmatprep.subr.bf16.mxu0 0
      %1597 = vmatpush1.bf16.msra.mxu0 0
      %1598 = vmatprep.subr.bf16.mxu0 0
      %1599 = vmatpush1.bf16.msra.mxu0 0
      %1600 = vmatprep.subr.bf16.mxu0 0
      %1601 = vmatpush1.bf16.msra.mxu0 0
      %1602 = vmatprep.mubr.bf16.mxu0 0
      %1603 = vmatmul.mubr.bf16.gmra.mrb[0].mxu0 %v1565
      %v1604 = vpop.f32.mrb[0].mxu0
      %v1605 = vadd.f32 %v1562, %v1604
      %v1606 = vpop.f32.mrb[0].mxu0
      %v1607 = vpop.f32.mrb[0].mxu0
      %v1608 = vpop.f32.mrb[0].mxu0
      %1609 = vdwg.mxu0
      %v1610 = vmax.f32 %v1605, 0.0
      %v1611 = vpack.c.bf16 %v1610, %v1610
      %v1612 = vld [vmem:[%s8] sm:$0xf]
      %v1613 = vld [vmem:[%s8 + $0x4] sm:$0xf]
      %v1614 = vld [vmem:[%s10] sm:$0x1]
      %v1616 = vlaneseq
      %v1617 = vshrl.u32 %v1616, 7
      %v1618 = vsub.s32 0, %v1617
      %v1619 = vrot.slane %v1614, %v1618
      %v1623 = vunpack.c.l.b16 %v1612
      %v1624 = vunpack.c.l.b16 %v1613
      %v1625 = vpack.c.b16 %v1624, %v1623
      %v1628 = vsel %vm646, %v1611, 0
      %1630 = vmatprep.subr.bf16.mxu0 0
      %1631 = vmatpush1.bf16.msra.mxu0 %v1625
      %1632 = vmatprep.subr.bf16.mxu0 0
      %1633 = vmatpush1.bf16.msra.mxu0 0
      %1634 = vmatprep.subr.bf16.mxu0 0
      %1635 = vmatpush1.bf16.msra.mxu0 0
      %1636 = vmatprep.subr.bf16.mxu0 0
      %1637 = vmatpush1.bf16.msra.mxu0 0
      %1638 = vmatprep.subr.bf16.mxu0 0
      %1639 = vmatpush1.bf16.msra.mxu0 0
      %1640 = vmatprep.subr.bf16.mxu0 0
      %1641 = vmatpush1.bf16.msra.mxu0 0
      %1642 = vmatprep.subr.bf16.mxu0 0
      %1643 = vmatpush1.bf16.msra.mxu0 0
      %1644 = vmatprep.subr.bf16.mxu0 0
      %1645 = vmatpush1.bf16.msra.mxu0 0
      %1646 = vmatprep.subr.bf16.mxu0 0
      %1647 = vmatpush1.bf16.msra.mxu0 0
      %1648 = vmatprep.subr.bf16.mxu0 0
      %1649 = vmatpush1.bf16.msra.mxu0 0
      %1650 = vmatprep.subr.bf16.mxu0 0
      %1651 = vmatpush1.bf16.msra.mxu0 0
      %1652 = vmatprep.subr.bf16.mxu0 0
      %1653 = vmatpush1.bf16.msra.mxu0 0
      %1654 = vmatprep.subr.bf16.mxu0 0
      %1655 = vmatpush1.bf16.msra.mxu0 0
      %1656 = vmatprep.subr.bf16.mxu0 0
      %1657 = vmatpush1.bf16.msra.mxu0 0
      %1658 = vmatprep.subr.bf16.mxu0 0
      %1659 = vmatpush1.bf16.msra.mxu0 0
      %1660 = vmatprep.subr.bf16.mxu0 0
      %1661 = vmatpush1.bf16.msra.mxu0 0
      %1662 = vmatprep.mubr.bf16.mxu0 0
      %1663 = vmatmul.mubr.bf16.gmra.mrb[0].mxu0 %v1628
      %v1664 = vpop.f32.mrb[0].mxu0
      %v1665 = vadd.f32 %v1619, %v1664
      %v1666 = vpop.f32.mrb[0].mxu0
      %v1667 = vpop.f32.mrb[0].mxu0
      %v1668 = vpop.f32.mrb[0].mxu0
      %1669 = vdwg.mxu0
      %v1670 = vmax.f32 %v1665, 0.0
      %v1671 = vpack.c.bf16 %v1670, %v1670
      %s1672 = scalar_lea.vmem %s530, 28
      %v1673 = vld [vmem:[%s1672] sm:$0xf]
      %1675 = vset.pattern.permute.xlu0 0
      %1676 = vperm.xlu0 %1675, %v1673
      %v1677 = vpop.permute.xlu0 %1676
      %v1680 = vunpack.c.l.s4 839922192
      %v1681 = vunpack.c.0.s8 %v1680
      %v1682 = vlaneseq
      %v1683 = vshrl.u32 %v1682, 7
      %v1684 = vsub.s32 %v1681, %v1683
      %v1685 = vrot.slane %v1677, %v1684
      %v1686 = vmul.bf16 %v1671, %v1685
      %v1688 = vunpack.c.l.b16 %v1686
      %v1689 = vpack.c.b16 %v1688, %v1688
      %1690 = vrot.lane.b32.xlu0 %v1689, 112
      %v1691 = vpop.permute.xlu0 %1690
      %vm1693 = vcmask 1044352
      %1694 = vst.msk [vmem:[#allocation2] sm:$0xf] %vm1693, %v1691
      %v1695 = vld [vmem:[#allocation2] sm:$0xf]
      %v1696 = vld [vmem:[%s542] sm:$0xf]
      %v1697 = vld [vmem:[%s542 + $0x4] sm:$0xf]
      %v1698 = vld [vmem:[%s542 + $0x8] sm:$0xf]
      %v1699 = vld [vmem:[%s542 + $0xc] sm:$0xf]
      %v1700 = vld [vmem:[%s542 + $0x10] sm:$0xf]
      %v1701 = vld [vmem:[%s542 + $0x14] sm:$0xf]
      %v1702 = vld [vmem:[%s542 + $0x18] sm:$0xf]
      %v1703 = vld [vmem:[%s542 + $0x1c] sm:$0xf]
      %v1704 = vld [vmem:[%s542 + $0x20] sm:$0xf]
      %v1705 = vld [vmem:[%s542 + $0x24] sm:$0xf]
      %v1706 = vld [vmem:[%s542 + $0x28] sm:$0xf]
      %v1707 = vld [vmem:[%s542 + $0x2c] sm:$0xf]
      %v1708 = vld [vmem:[%s542 + $0x30] sm:$0xf]
      %v1709 = vld [vmem:[%s542 + $0x34] sm:$0xf]
      %v1710 = vld [vmem:[%s542 + $0x38] sm:$0xf]
      %v1711 = vld [vmem:[%s542 + $0x3c] sm:$0xf]
      %v1712 = vld [vmem:[%s537] sm:$0xf]
      %v1713 = vld [vmem:[%s546] sm:$0xf]
      %vm1714 = vcmask 64512
      %v1716 = vsel %vm1714, %v1712, 0
      %vm1718 = vcmask 1043456
      %v1720 = vsel %vm1718, %v1713, 0
      %1722 = vmatprep.subr.bf16.mxu0 0
      %1723 = vmatpush1.bf16.msra.mxu0 %v1720
      %1724 = vmatprep.subr.bf16.mxu0 0
      %1725 = vmatpush1.bf16.msra.mxu0 0
      %1726 = vmatprep.subr.bf16.mxu0 0
      %1727 = vmatpush1.bf16.msra.mxu0 0
      %1728 = vmatprep.subr.bf16.mxu0 0
      %1729 = vmatpush1.bf16.msra.mxu0 0
      %1730 = vmatprep.subr.bf16.mxu0 0
      %1731 = vmatpush1.bf16.msra.mxu0 0
      %1732 = vmatprep.subr.bf16.mxu0 0
      %1733 = vmatpush1.bf16.msra.mxu0 0
      %1734 = vmatprep.subr.bf16.mxu0 0
      %1735 = vmatpush1.bf16.msra.mxu0 0
      %1736 = vmatprep.subr.bf16.mxu0 0
      %1737 = vmatpush1.bf16.msra.mxu0 0
      %1738 = vmatprep.subr.bf16.mxu0 0
      %1739 = vmatpush1.bf16.msra.mxu0 0
      %1740 = vmatprep.subr.bf16.mxu0 0
      %1741 = vmatpush1.bf16.msra.mxu0 0
      %1742 = vmatprep.subr.bf16.mxu0 0
      %1743 = vmatpush1.bf16.msra.mxu0 0
      %1744 = vmatprep.subr.bf16.mxu0 0
      %1745 = vmatpush1.bf16.msra.mxu0 0
      %1746 = vmatprep.subr.bf16.mxu0 0
      %1747 = vmatpush1.bf16.msra.mxu0 0
      %1748 = vmatprep.subr.bf16.mxu0 0
      %1749 = vmatpush1.bf16.msra.mxu0 0
      %1750 = vmatprep.subr.bf16.mxu0 0
      %1751 = vmatpush1.bf16.msra.mxu0 0
      %1752 = vmatprep.subr.bf16.mxu0 0
      %1753 = vmatpush1.bf16.msra.mxu0 0
      %1754 = vmatprep.mubr.bf16.mxu0 0
      %1755 = vmatmul.mubr.bf16.gmra.mrb[0].mxu0 %v1716
      %v1756 = vpop.f32.mrb[0].mxu0
      %v1757 = vadd.f32 0.0, %v1756
      %v1758 = vpop.f32.mrb[0].mxu0
      %v1759 = vpop.f32.mrb[0].mxu0
      %v1760 = vpop.f32.mrb[0].mxu0
      %1761 = vdwg.mxu0
      %v1778 = vunpack.c.l.b16 %v1696
      %v1779 = vunpack.c.l.b16 %v1697
      %v1780 = vunpack.c.l.b16 %v1698
      %v1781 = vunpack.c.l.b16 %v1699
      %v1782 = vunpack.c.l.b16 %v1700
      %v1783 = vunpack.c.l.b16 %v1701
      %v1784 = vunpack.c.l.b16 %v1702
      %v1785 = vunpack.c.l.b16 %v1703
      %v1786 = vunpack.c.l.b16 %v1704
      %v1787 = vunpack.c.l.b16 %v1705
      %v1788 = vunpack.c.l.b16 %v1706
      %v1789 = vunpack.c.l.b16 %v1707
      %v1790 = vunpack.c.l.b16 %v1708
      %v1791 = vunpack.c.l.b16 %v1709
      %v1792 = vunpack.c.l.b16 %v1710
      %v1793 = vunpack.c.l.b16 %v1711
      %v1794 = vpack.c.b16 %v1779, %v1778
      %v1795 = vpack.c.b16 %v1781, %v1780
      %v1796 = vpack.c.b16 %v1783, %v1782
      %v1797 = vpack.c.b16 %v1785, %v1784
      %v1798 = vpack.c.b16 %v1787, %v1786
      %v1799 = vpack.c.b16 %v1789, %v1788
      %v1800 = vpack.c.b16 %v1791, %v1790
      %v1801 = vpack.c.b16 %v1793, %v1792
      %1810 = vmatprep.subr.bf16.mxu0 0
      %1811 = vmatpush1.bf16.msra.mxu0 %v1794
      %1812 = vmatprep.subr.bf16.mxu0 0
      %1813 = vmatpush1.bf16.msra.mxu0 %v1795
      %1814 = vmatprep.subr.bf16.mxu0 0
      %1815 = vmatpush1.bf16.msra.mxu0 %v1796
      %1816 = vmatprep.subr.bf16.mxu0 0
      %1817 = vmatpush1.bf16.msra.mxu0 %v1797
      %1818 = vmatprep.subr.bf16.mxu0 0
      %1819 = vmatpush1.bf16.msra.mxu0 %v1798
      %1820 = vmatprep.subr.bf16.mxu0 0
      %1821 = vmatpush1.bf16.msra.mxu0 %v1799
      %1822 = vmatprep.subr.bf16.mxu0 0
      %1823 = vmatpush1.bf16.msra.mxu0 %v1800
      %1824 = vmatprep.subr.bf16.mxu0 0
      %1825 = vmatpush1.bf16.msra.mxu0 %v1801
      %1826 = vmatprep.subr.bf16.mxu0 0
      %1827 = vmatpush1.bf16.msra.mxu0 0
      %1828 = vmatprep.subr.bf16.mxu0 0
      %1829 = vmatpush1.bf16.msra.mxu0 0
      %1830 = vmatprep.subr.bf16.mxu0 0
      %1831 = vmatpush1.bf16.msra.mxu0 0
      %1832 = vmatprep.subr.bf16.mxu0 0
      %1833 = vmatpush1.bf16.msra.mxu0 0
      %1834 = vmatprep.subr.bf16.mxu0 0
      %1835 = vmatpush1.bf16.msra.mxu0 0
      %1836 = vmatprep.subr.bf16.mxu0 0
      %1837 = vmatpush1.bf16.msra.mxu0 0
      %1838 = vmatprep.subr.bf16.mxu0 0
      %1839 = vmatpush1.bf16.msra.mxu0 0
      %1840 = vmatprep.subr.bf16.mxu0 0
      %1841 = vmatpush1.bf16.msra.mxu0 0
      %1842 = vmatprep.mubr.bf16.mxu0 0
      %1843 = vmatmul.mubr.bf16.gmra.mrb[0].mxu0 %v1695
      %v1844 = vpop.f32.mrb[0].mxu0
      %v1845 = vadd.f32 %v1757, %v1844
      %v1846 = vpop.f32.mrb[0].mxu0
      %v1847 = vpop.f32.mrb[0].mxu0
      %v1848 = vpop.f32.mrb[0].mxu0
      %1849 = vdwg.mxu0
      %v1850 = vld [vmem:[%s560] sm:$0xff]
      %v1851 = vld [vmem:[%s553] sm:$0xff]
      %v1852 = vadd.f32 %v1851, %v1845
      %1854 = vset.pattern.permute.xlu0 0
      %1855 = vperm.xlu0 %1854, %v1850
      %v1856 = vpop.permute.xlu0 %1855
      %v1858 = vmul.f32 %v1856, %v1852
      %v1859 = vmax.f32 %v1858, 0.0
      %1860 = vst.msk [vmem:[%s567] sm:$0xff] %vm646, %v1859
      %p1861 = scmp.lt.s32.totalorder %s26, 1
      %s1862 = scalar_select %p1861, %s26, 1
      %p1863 = scmp.lt.s32.totalorder %s27, 0
      %s1864 = scalar_select %p1863, %s27, 0
      %s1865 = sadd.s32 %s1864, %s1862
      %s1866 = smul.addr %s1865, 8
      %s1867 = scalar_lea.vmem %s11, %s1866
      // Predicated region
      $region65: #{edge_conditioned_conv_forward.11} parent=63 // pred_check
        %p1868 = pneg %p330
      $region66: #{edge_conditioned_conv_forward.11} parent=63 // pred_check_branch
        %1870 = sbr.rel (%p1868) target = $region68
      $region67: #{edge_conditioned_conv_forward.11} parent=63 // pred_region
        _
      $region68: #{edge_conditioned_conv_forward.11} parent=63 // pred_fallthru
        _
    $region64: #{edge_conditioned_conv_forward.11} parent=5 // pred_fallthru
      _
    %p1871 = scmp.le.s32.totalorder 2, %s17
    // Predicated region
    $region69: #{edge_conditioned_conv_forward.11} parent=5 // pred_check
      %p1872 = pneg %p1871
    $region70: #{edge_conditioned_conv_forward.11} parent=5 // pred_check_branch
      %1874 = sbr.rel (%p1872) target = $region72
    $region71: #{edge_conditioned_conv_forward.11} parent=5 // pred_region
      %s1875 = ssub.s32 %s17, 2
      // Predicated region
      $region73: #{edge_conditioned_conv_forward.11} parent=71 // pred_check
        %p1876 = pneg %p336
      $region74: #{edge_conditioned_conv_forward.11} parent=71 // pred_check_branch
        %1878 = sbr.rel (%p1876) target = $region76
      $region75: #{edge_conditioned_conv_forward.11} parent=71 // pred_region
        %p1879 = scmp.lt.s32.totalorder %s28, 1
        %s1880 = scalar_select %p1879, %s28, 1
        %p1881 = scmp.lt.s32.totalorder %s29, 0
        %s1882 = scalar_select %p1881, %s29, 0
        %s1883 = sadd.s32 %s1882, %s1880
        %s1884 = smul.addr %s1883, 8
        %s1885 = scalar_lea.vmem %s11, %s1884
      $region76: #{edge_conditioned_conv_forward.11} parent=71 // pred_fallthru
        _
    $region72: #{edge_conditioned_conv_forward.11} parent=5 // pred_fallthru
      _
  $region6: #{edge_conditioned_conv_forward.11} parent=0 // loop_footer
    %s21 = sadd.s32 1, %s17
  $region7: #{edge_conditioned_conv_forward.11} parent=0 // loop_footer_branch
    %16 = sbr.rel target = $region3
  $region8: #{edge_conditioned_conv_forward.11} parent=0 // loop_exit
    _

// kernel: edge_conditioned_conv_forward.15
$region0: #{edge_conditioned_conv_forward.15}
  #allocation0 [shape = 'u32[]', space=smem, size = 0x4, offset = 0x4, fixed_abs, tag = 'smem constant byte address 0x4 - core index']
  #allocation1 [shape = 'u32[144,128]{1,0:T(1,128)}', space=vmem, size = 0x12000, scoped, tag = 'internal scratch']
  %s0 = inlined_call_operand.vmem [shape: f32[2,5], index: 0, kind: input, shape index: {}]
  %s1 = inlined_call_operand.hbm [shape: f32[2,5], index: 1, kind: output, shape index: {}]
  %s2 = sld [smem:[#allocation0]]
  $region14: #{edge_conditioned_conv_forward.15} parent=0
    _
  %s4 = ssub.s32 1, %s2
  %s5 = scalar_select 0, %s4, %s2
  $region1: #{edge_conditioned_conv_forward.15} parent=0
    #allocation2 [shape = 'u8[1024]{0}', space=vmem, size = 0x400, scoped, tag = 'output window, operand 0, single buffered']
    #allocation3 [shape = 's32[1]{0}', space=sflag, size = 0x4, scoped, tag = 'scoped memory for edge_conditioned_conv_forward.15']
    %6 = vsyncpa [#allocation3], 0
    // Predicated region
    $region2: #{edge_conditioned_conv_forward.15} parent=1 // pred_check
      _
    $region3: #{edge_conditioned_conv_forward.15} parent=1 // pred_check_branch
      %8 = sbr.rel (0) target = $region5
    $region4: #{edge_conditioned_conv_forward.15} parent=1 // pred_region
      _
    $region5: #{edge_conditioned_conv_forward.15} parent=1 // pred_fallthru
      _
    %v9 = vld [vmem:[%s0] sm:$0x3]
    %vm10 = vcmask 33792
    %v11 = vsel %vm10, %v9, -inf
    %12 = vmax.xlane.f32.xlu0 %v11
    %v13 = vpop.xlane.xlu0 %12
    %v14 = vsub.f32 %v9, %v13
    %v15 = vmul.f32 %v14, 1.442695
    %v16 = vpow.pop %v15
    %v17 = vsel %vm10, %v16, 0.0
    %18 = vadd.xlane.f32.xlu0 %v17
    %v19 = vpop.xlane.xlu0 %18
    %v20 = vrcp.pop %v19
    %v21 = vmul.f32 %v16, %v20
    %22 = vst.msk [vmem:[#allocation2] sm:$0x3] %vm10, %v21
    // Predicated region
    $region6: #{edge_conditioned_conv_forward.15} parent=1 // pred_check
      _
    $region7: #{edge_conditioned_conv_forward.15} parent=1 // pred_check_branch
      %24 = sbr.rel (0) target = $region9
    $region8: #{edge_conditioned_conv_forward.15} parent=1 // pred_region
      %s26 = ssub.s32 32, 32
      %27 = vsyncadd [#allocation3], %s26
      %s29 = sshll.u32 [#allocation2], 4
      %s30 = int_to_ptr.vmem [resolvable:$true] %s29
      %32 = dma.vmem_to_hbm [thread:$0]  %s30, 32, %s1, [#allocation3]
    $region9: #{edge_conditioned_conv_forward.15} parent=1 // pred_fallthru
      _
    // Predicated region
    $region10: #{edge_conditioned_conv_forward.15} parent=1 // pred_check
      _
    $region11: #{edge_conditioned_conv_forward.15} parent=1 // pred_check_branch
      %34 = sbr.rel (0) target = $region13
    $region12: #{edge_conditioned_conv_forward.15} parent=1 // pred_region
      %35 = dma.done [#allocation3], 32
    $region13: #{edge_conditioned_conv_forward.15} parent=1 // pred_fallthru
      _
    %36 = vsyncpa [#allocation3], 1

// kernel: edge_conditioned_conv_forward.14
$region0: #{edge_conditioned_conv_forward.14}
  #allocation0 [shape = 'u32[]', space=smem, size = 0x4, offset = 0x4, fixed_abs, tag = 'smem constant byte address 0x4 - core index']
  #allocation1 [shape = 'u32[144,128]{1,0:T(1,128)}', space=vmem, size = 0x12000, scoped, tag = 'internal scratch']
  %s0 = inlined_call_operand.vmem [shape: bf16[2,32], index: 0, kind: input, shape index: {}]
  %s1 = inlined_call_operand.vmem [shape: bf16[32,5], index: 1, kind: input, shape index: {}]
  %s2 = inlined_call_operand.vmem [shape: f32[1,5], index: 2, kind: input, shape index: {}]
  %s3 = inlined_call_operand.vmem [shape: f32[2,5], index: 3, kind: output, shape index: {}]
  %s4 = sld [smem:[#allocation0]]
  $region22: #{edge_conditioned_conv_forward.14} parent=0
    _
  %s6 = ssub.s32 1, %s4
  %s7 = scalar_select 0, %s6, %s4
  // Predicated region
  $region2: #{edge_conditioned_conv_forward.14} parent=0 // pred_check
    _
  $region3: #{edge_conditioned_conv_forward.14} parent=0 // pred_check_branch
    %9 = sbr.rel (0) target = $region5
  $region4: #{edge_conditioned_conv_forward.14} parent=0 // pred_region
    _
  $region5: #{edge_conditioned_conv_forward.14} parent=0 // pred_fallthru
    _
  // Predicated region
  $region6: #{edge_conditioned_conv_forward.14} parent=0 // pred_check
    _
  $region7: #{edge_conditioned_conv_forward.14} parent=0 // pred_check_branch
    %11 = sbr.rel (0) target = $region9
  $region8: #{edge_conditioned_conv_forward.14} parent=0 // pred_region
    _
  $region9: #{edge_conditioned_conv_forward.14} parent=0 // pred_fallthru
    _
  // Predicated region
  $region10: #{edge_conditioned_conv_forward.14} parent=0 // pred_check
    _
  $region11: #{edge_conditioned_conv_forward.14} parent=0 // pred_check_branch
    %13 = sbr.rel (0) target = $region13
  $region12: #{edge_conditioned_conv_forward.14} parent=0 // pred_region
    _
  $region13: #{edge_conditioned_conv_forward.14} parent=0 // pred_fallthru
    _
  %v15 = vld [vmem:[%s0] sm:$0x1]
  %v16 = vld [vmem:[%s1] sm:$0xf]
  %v17 = vld [vmem:[%s1 + $0x4] sm:$0xf]
  %v18 = vld [vmem:[%s1 + $0x8] sm:$0xf]
  %v19 = vld [vmem:[%s1 + $0xc] sm:$0xf]
  %v20 = vld [vmem:[%s2] sm:$0x1]
  %v22 = vlaneseq
  %v23 = vshrl.u32 %v22, 7
  %v24 = vsub.s32 0, %v23
  %v25 = vrot.slane %v20, %v24
  %v31 = vunpack.c.l.b16 %v16
  %v32 = vunpack.c.l.b16 %v17
  %v33 = vunpack.c.l.b16 %v18
  %v34 = vunpack.c.l.b16 %v19
  %v35 = vpack.c.b16 %v32, %v31
  %v36 = vpack.c.b16 %v34, %v33
  %vm39 = vcmask 261120
  %v41 = vsel %vm39, %v15, 0
  %43 = vmatprep.subr.bf16.mxu0 0
  %44 = vmatpush1.bf16.msra.mxu0 %v35
  %45 = vmatprep.subr.bf16.mxu0 0
  %46 = vmatpush1.bf16.msra.mxu0 %v36
  %47 = vmatprep.subr.bf16.mxu0 0
  %48 = vmatpush1.bf16.msra.mxu0 0
  %49 = vmatprep.subr.bf16.mxu0 0
  %50 = vmatpush1.bf16.msra.mxu0 0
  %51 = vmatprep.subr.bf16.mxu0 0
  %52 = vmatpush1.bf16.msra.mxu0 0
  %53 = vmatprep.subr.bf16.mxu0 0
  %54 = vmatpush1.bf16.msra.mxu0 0
  %55 = vmatprep.subr.bf16.mxu0 0
  %56 = vmatpush1.bf16.msra.mxu0 0
  %57 = vmatprep.subr.bf16.mxu0 0
  %58 = vmatpush1.bf16.msra.mxu0 0
  %59 = vmatprep.subr.bf16.mxu0 0
  %60 = vmatpush1.bf16.msra.mxu0 0
  %61 = vmatprep.subr.bf16.mxu0 0
  %62 = vmatpush1.bf16.msra.mxu0 0
  %63 = vmatprep.subr.bf16.mxu0 0
  %64 = vmatpush1.bf16.msra.mxu0 0
  %65 = vmatprep.subr.bf16.mxu0 0
  %66 = vmatpush1.bf16.msra.mxu0 0
  %67 = vmatprep.subr.bf16.mxu0 0
  %68 = vmatpush1.bf16.msra.mxu0 0
  %69 = vmatprep.subr.bf16.mxu0 0
  %70 = vmatpush1.bf16.msra.mxu0 0
  %71 = vmatprep.subr.bf16.mxu0 0
  %72 = vmatpush1.bf16.msra.mxu0 0
  %73 = vmatprep.subr.bf16.mxu0 0
  %74 = vmatpush1.bf16.msra.mxu0 0
  %75 = vmatprep.mubr.bf16.mxu0 0
  %76 = vmatmul.mubr.bf16.gmra.mrb[0].mxu0 %v41
  %v77 = vpop.f32.mrb[0].mxu0
  %v78 = vadd.f32 %v25, %v77
  %v79 = vpop.f32.mrb[0].mxu0
  %v80 = vpop.f32.mrb[0].mxu0
  %v81 = vpop.f32.mrb[0].mxu0
  %82 = vdwg.mxu0
  %vm83 = vcmask 33792
  %84 = vst.msk [vmem:[%s3] sm:$0x3] %vm83, %v78
  // Predicated region
  $region14: #{edge_conditioned_conv_forward.14} parent=0 // pred_check
    _
  $region15: #{edge_conditioned_conv_forward.14} parent=0 // pred_check_branch
    %86 = sbr.rel (0) target = $region17
  $region16: #{edge_conditioned_conv_forward.14} parent=0 // pred_region
    _
  $region17: #{edge_conditioned_conv_forward.14} parent=0 // pred_fallthru
    _
  // Predicated region
  $region18: #{edge_conditioned_conv_forward.14} parent=0 // pred_check
    _
  $region19: #{edge_conditioned_conv_forward.14} parent=0 // pred_check_branch
    %88 = sbr.rel (0) target = $region21
  $region20: #{edge_conditioned_conv_forward.14} parent=0 // pred_region
    _
  $region21: #{edge_conditioned_conv_forward.14} parent=0 // pred_fallthru
    _

</llo_original>
